<compile_context>
chip_gen: v7x
topology: tpu7x:2x2x1
jax: 0.10.0
libtpu: 0.0.40
codegen_flags: <defaults>
</compile_context>

<pallas_src>
import math
import functools

import jax
import jax.numpy as jnp
from jax import lax
from jax.experimental import pallas as pl
from jax.experimental.pallas import tpu as pltpu


def _round_up(x, m):
    return (x + m - 1) // m * m


def _pick(dim, pref, align):
    """(padded_dim, tile): tile divides padded_dim; pick the candidate with least padding."""
    if dim <= pref:
        p = _round_up(dim, align)
        return p, p
    cands = [pref]
    if pref // 2 >= align:
        cands.append(pref // 2)
    best = None
    for t in cands:
        p = _round_up(dim, t)
        if best is None or p < best[0]:
            best = (p, t)
    return best


_VMEM_HINT = 48 * 1024 * 1024  # raise over the 16/32 MiB scoped defaults, stay < v7x's 64 MiB


def _cp(*sem):
    return pltpu.CompilerParams(dimension_semantics=sem, vmem_limit_bytes=_VMEM_HINT)


# ----------------------------------------------------------------------------
# in-kernel activations (tanh-GELU -> EUP slot; sigmoid/SiLU -> EUP)
# ----------------------------------------------------------------------------
def _gelu(x):
    c = 0.7978845608028654
    return 0.5 * x * (1.0 + jnp.tanh(c * (x + 0.044715 * x * x * x)))


def _apply_act(y, act):
    if act == "gelu":
        return _gelu(y)
    if act == "silu":
        return y * jax.nn.sigmoid(y)
    if act == "sigmoid":
        return jax.nn.sigmoid(y)
    return y


# ----------------------------------------------------------------------------
# Kernel 1: tiled matmul, fused bias + activation epilogue, bf16 MXU / f32 acc,
#           selectable output dtype (bf16 for chained activations)
# ----------------------------------------------------------------------------
def _mm_kernel(a_ref, b_ref, bias_ref, o_ref, acc_ref, *, act):
    @pl.when(pl.program_id(2) == 0)
    def _():
        acc_ref[...] = jnp.zeros_like(acc_ref)

    a = a_ref[...]
    if a.dtype != jnp.bfloat16:
        a = a.astype(jnp.bfloat16)
    acc_ref[...] += jnp.dot(a, b_ref[...], preferred_element_type=jnp.float32)

    @pl.when(pl.program_id(2) == pl.num_programs(2) - 1)
    def _():
        y = acc_ref[...] + bias_ref[...]
        o_ref[...] = _apply_act(y, act).astype(o_ref.dtype)


def matmul(a, b_t, bias=None, act=None, out_dtype=jnp.float32):
    """act(a @ b_t + bias). a: (M, K) f32/bf16 activations, b_t: (K, N) pre-transposed bf16."""
    M, K = a.shape
    K2, N = b_t.shape
    assert K == K2
    Mp, tm = _pick(M, 256, 8)
    Np, tn = _pick(N, 256, 128)
    Kp, tk = _pick(K, 512, 128)
    if (Mp, Kp) != (M, K):
        a = jnp.pad(a, ((0, Mp - M), (0, Kp - K)))
    if (Kp, Np) != (K, N):
        b_t = jnp.pad(b_t, ((0, Kp - K), (0, Np - N)))
    if bias is None:
        bias_row = jnp.zeros((1, Np), jnp.float32)
    else:
        bias_row = jnp.pad(bias.reshape(1, N).astype(jnp.float32), ((0, 0), (0, Np - N)))

    out = pl.pallas_call(
        functools.partial(_mm_kernel, act=act),
        out_shape=jax.ShapeDtypeStruct((Mp, Np), out_dtype),
        grid=(Mp // tm, Np // tn, Kp // tk),
        in_specs=[pl.BlockSpec((tm, tk), lambda i, j, k: (i, k)),
                  pl.BlockSpec((tk, tn), lambda i, j, k: (k, j)),
                  pl.BlockSpec((1, tn), lambda i, j, k: (0, j))],
        out_specs=pl.BlockSpec((tm, tn), lambda i, j, k: (i, j)),
        scratch_shapes=[pltpu.VMEM((tm, tn), jnp.float32)],
        compiler_params=_cp("parallel", "parallel", "arbitrary"),
    )(a, b_t, bias_row)
    if (Mp, Np) != (M, N):
        out = out[:M, :N]
    return out


# ----------------------------------------------------------------------------
# Kernel 1b: two-operand accumulated matmul (act(a1@b1 + a2@b2 + bias)) — avoids
#            materializing concat([a1, a2]) in HBM (q_proj / k_proj paths)
# ----------------------------------------------------------------------------
def _mm2_kernel(a1_ref, b1_ref, a2_ref, b2_ref, bias_ref, o_ref, acc_ref, *, act):
    @pl.when(pl.program_id(2) == 0)
    def _():
        acc_ref[...] = jnp.zeros_like(acc_ref)

    a1 = a1_ref[...]
    a2 = a2_ref[...]
    if a1.dtype != jnp.bfloat16:
        a1 = a1.astype(jnp.bfloat16)
    if a2.dtype != jnp.bfloat16:
        a2 = a2.astype(jnp.bfloat16)
    acc_ref[...] += (jnp.dot(a1, b1_ref[...], preferred_element_type=jnp.float32)
                     + jnp.dot(a2, b2_ref[...], preferred_element_type=jnp.float32))

    @pl.when(pl.program_id(2) == pl.num_programs(2) - 1)
    def _():
        y = acc_ref[...] + bias_ref[...]
        o_ref[...] = _apply_act(y, act).astype(o_ref.dtype)


def matmul_acc2(a1, a2, b1_t, b2_t, bias=None, act=None, out_dtype=jnp.float32):
    M, K = a1.shape
    _, N = b1_t.shape
    Mp, tm = _pick(M, 256, 8)
    Np, tn = _pick(N, 256, 128)
    Kp, tk = _pick(K, 512, 128)

    def pA(a):
        return jnp.pad(a, ((0, Mp - M), (0, Kp - K))) if (Mp, Kp) != (M, K) else a

    def pB(b):
        return jnp.pad(b, ((0, Kp - K), (0, Np - N))) if (Kp, Np) != (K, N) else b

    a1, a2, b1_t, b2_t = pA(a1), pA(a2), pB(b1_t), pB(b2_t)
    if bias is None:
        bias_row = jnp.zeros((1, Np), jnp.float32)
    else:
        bias_row = jnp.pad(bias.reshape(1, N).astype(jnp.float32), ((0, 0), (0, Np - N)))

    out = pl.pallas_call(
        functools.partial(_mm2_kernel, act=act),
        out_shape=jax.ShapeDtypeStruct((Mp, Np), out_dtype),
        grid=(Mp // tm, Np // tn, Kp // tk),
        in_specs=[pl.BlockSpec((tm, tk), lambda i, j, k: (i, k)),
                  pl.BlockSpec((tk, tn), lambda i, j, k: (k, j)),
                  pl.BlockSpec((tm, tk), lambda i, j, k: (i, k)),
                  pl.BlockSpec((tk, tn), lambda i, j, k: (k, j)),
                  pl.BlockSpec((1, tn), lambda i, j, k: (0, j))],
        out_specs=pl.BlockSpec((tm, tn), lambda i, j, k: (i, j)),
        scratch_shapes=[pltpu.VMEM((tm, tn), jnp.float32)],
        compiler_params=_cp("parallel", "parallel", "arbitrary"),
    )(a1, b1_t, a2, b2_t, bias_row)
    if (Mp, Np) != (M, N):
        out = out[:M, :N]
    return out


# ----------------------------------------------------------------------------
# Kernel 2: LayerNorm (one-pass variance, optional fused residual add)
# ----------------------------------------------------------------------------
def _ln_kernel(x_ref, g_ref, b_ref, o_ref, *, eps):
    x = x_ref[...].astype(jnp.float32)
    mu = jnp.mean(x, axis=-1, keepdims=True)
    ms = jnp.mean(x * x, axis=-1, keepdims=True)
    o_ref[...] = (x - mu) * lax.rsqrt(ms - mu * mu + eps) * g_ref[...] + b_ref[...]


def _ln_res_kernel(x_ref, r_ref, g_ref, b_ref, o_ref, *, eps):
    x = x_ref[...].astype(jnp.float32) + r_ref[...].astype(jnp.float32)
    mu = jnp.mean(x, axis=-1, keepdims=True)
    ms = jnp.mean(x * x, axis=-1, keepdims=True)
    o_ref[...] = (x - mu) * lax.rsqrt(ms - mu * mu + eps) * g_ref[...] + b_ref[...]


def layernorm(x2d, gamma, beta, residual=None, eps=1e-5):
    # TODO(synk): when one N-tile covers the full feature dim, fuse LN (+residual) into the
    # producing matmul's epilogue to drop a full (M, D) f32 HBM round-trip.
    M, D = x2d.shape
    tr = _round_up(M, 8) if M <= 1024 else 512
    Mp = _round_up(M, tr)
    xp = jnp.pad(x2d, ((0, Mp - M), (0, 0))) if Mp != M else x2d
    g = gamma.reshape(1, D).astype(jnp.float32)
    b = beta.reshape(1, D).astype(jnp.float32)
    row = pl.BlockSpec((tr, D), lambda i: (i, 0))
    vec = pl.BlockSpec((1, D), lambda i: (0, 0))
    if residual is not None:
        rp = jnp.pad(residual, ((0, Mp - M), (0, 0))) if Mp != M else residual
        out = pl.pallas_call(
            functools.partial(_ln_res_kernel, eps=eps),
            out_shape=jax.ShapeDtypeStruct((Mp, D), jnp.float32),
            grid=(Mp // tr,), in_specs=[row, row, vec, vec], out_specs=row,
            compiler_params=_cp("parallel"))(xp, rp, g, b)
    else:
        out = pl.pallas_call(
            functools.partial(_ln_kernel, eps=eps),
            out_shape=jax.ShapeDtypeStruct((Mp, D), jnp.float32),
            grid=(Mp // tr,), in_specs=[row, vec, vec], out_specs=row,
            compiler_params=_cp("parallel"))(xp, g, b)
    return out[:M] if Mp != M else out


# ----------------------------------------------------------------------------
# Kernel 3: depthwise conv along L (J outputs/channel, in-kernel zero padding,
#           fused activation) — used for tau/delta grouped conv and the 5-tap dwconv
# ----------------------------------------------------------------------------
def _dwconv_kernel(x_ref, w_ref, b_ref, o_ref, xpad_sc, *, ktaps, n_out, seqlen,
                   pad_left, act):
    xpad_sc[...] = jnp.zeros_like(xpad_sc)
    xpad_sc[pad_left:pad_left + seqlen, :] = x_ref[0].astype(jnp.float32)
    C = xpad_sc.shape[1]
    for j in range(n_out):
        acc = jnp.zeros((seqlen, C), jnp.float32)
        for k in range(ktaps):
            acc = acc + xpad_sc[k:k + seqlen, :] * w_ref[j * ktaps + k:j * ktaps + k + 1, :]
        acc = acc + b_ref[j:j + 1, :]
        o_ref[0, :, j * C:(j + 1) * C] = _apply_act(acc, act).astype(o_ref.dtype)


def depthwise_conv_multi(x_blc, w_jkc, b_jc, pad_left, pad_right, act=None,
                         out_dtype=jnp.float32):
    """x: (B, L, C), w: (J*K, C), b: (J, C) -> (B, L, J*C)  ('same'-length conv)."""
    B, L, C = x_blc.shape
    J = b_jc.shape[0]
    K = w_jkc.shape[0] // J
    assert pad_left + pad_right == K - 1
    # TODO(synk): tile the channel axis (extra grid dim over C) for production C to bound VMEM.
    return pl.pallas_call(
        functools.partial(_dwconv_kernel, ktaps=K, n_out=J, seqlen=L,
                          pad_left=pad_left, act=act),
        out_shape=jax.ShapeDtypeStruct((B, L, J * C), out_dtype),
        grid=(B,),
        in_specs=[pl.BlockSpec((1, L, C), lambda b: (b, 0, 0)),
                  pl.BlockSpec((J * K, C), lambda b: (0, 0)),
                  pl.BlockSpec((J, C), lambda b: (0, 0))],
        out_specs=pl.BlockSpec((1, L, J * C), lambda b: (b, 0, 0)),
        scratch_shapes=[pltpu.VMEM((L + K - 1, C), jnp.float32)],
        compiler_params=_cp("parallel"),
    )(x_blc, w_jkc.astype(jnp.float32), b_jc.astype(jnp.float32))


# ----------------------------------------------------------------------------
# Kernel 4: dense Conv1d('same') as K accumulated VMEM matmuls (in-kernel padding)
# ----------------------------------------------------------------------------
def _conv1d_mm_kernel(x_ref, w_ref, b_ref, o_ref, xpad_sc, *, ktaps, seqlen, pad, cin):
    xpad_sc[...] = jnp.zeros_like(xpad_sc)
    xpad_sc[pad:pad + seqlen, :] = x_ref[0].astype(jnp.float32)
    acc = jnp.zeros((seqlen, w_ref.shape[1]), jnp.float32)
    for k in range(ktaps):
        acc = acc + jnp.dot(xpad_sc[k:k + seqlen, :].astype(jnp.bfloat16),
                            w_ref[k * cin:(k + 1) * cin, :],
                            preferred_element_type=jnp.float32)
    o_ref[0] = (acc + b_ref[...]).astype(o_ref.dtype)


def conv1d_taps(x_bld, w_col, bias, out_dtype=jnp.float32):
    """x: (B, L, Din); w_col: (K*Din, Dout) bf16; bias: (Dout,)."""
    B, L, Din = x_bld.shape
    KD, Dout = w_col.shape
    K = KD // Din
    pad = (K - 1) // 2
    return pl.pallas_call(
        functools.partial(_conv1d_mm_kernel, ktaps=K, seqlen=L, pad=pad, cin=Din),
        out_shape=jax.ShapeDtypeStruct((B, L, Dout), out_dtype),
        grid=(B,),
        in_specs=[pl.BlockSpec((1, L, Din), lambda b: (b, 0, 0)),
                  pl.BlockSpec((KD, Dout), lambda b: (0, 0)),
                  pl.BlockSpec((1, Dout), lambda b: (0, 0))],
        out_specs=pl.BlockSpec((1, L, Dout), lambda b: (b, 0, 0)),
        scratch_shapes=[pltpu.VMEM((L + 2 * pad, Din), jnp.float32)],
        compiler_params=_cp("parallel"),
    )(x_bld, w_col, bias.reshape(1, Dout).astype(jnp.float32))


# ----------------------------------------------------------------------------
# Kernel 5: DCAttention core — head split/merge, tau/delta scaling and softmax
#           all in-kernel (no host-side (B,H,L,dk) transposes), bf16 MXU, f32 scores
# ----------------------------------------------------------------------------
def _dcattn_kernel(q_ref, k_ref, v_ref, tau_ref, delta_ref, o_ref, *, n_heads, d_k, scale):
    # TODO(synk): for long production L, switch to a KV-tiled online-softmax (flash) variant.
    q = q_ref[0]
    k = k_ref[0]
    v = v_ref[0]
    tau = tau_ref[0].astype(jnp.float32)       # (L, H): per-query scale
    delta = delta_ref[0].astype(jnp.float32)   # (H, L): per-key offset
    outs = []
    for h in range(n_heads):
        sl = slice(h * d_k, (h + 1) * d_k)
        s = jnp.einsum('qd,kd->qk', q[:, sl], k[:, sl],
                       preferred_element_type=jnp.float32)
        s = s * (tau[:, h:h + 1] * scale) + delta[h:h + 1, :]
        s = s - jnp.max(s, axis=-1, keepdims=True)
        p = jnp.exp(s)
        p = p * pl.reciprocal(jnp.sum(p, axis=-1, keepdims=True), approx=True)
        outs.append(jnp.dot(p.astype(jnp.bfloat16), v[:, sl],
                            preferred_element_type=jnp.float32))
    o_ref[0] = jnp.concatenate(outs, axis=-1).astype(o_ref.dtype)


def dc_attention_core(Q, K, V, tau, delta, n_heads):
    """Q, K, V: (B, L, D) bf16; tau: (B, L, H) f32; delta: (B, H, L) f32."""
    B, L, D = Q.shape
    d_k = D // n_heads
    blk = pl.BlockSpec((1, L, D), lambda b: (b, 0, 0))
    # TODO(synk): for B == 1 production inference, split L across grid steps so v7x megacore
    # has a >=2-block parallel axis.
    return pl.pallas_call(
        functools.partial(_dcattn_kernel, n_heads=n_heads, d_k=d_k,
                          scale=1.0 / math.sqrt(d_k)),
        out_shape=jax.ShapeDtypeStruct((B, L, D), jnp.bfloat16),
        grid=(B,),
        in_specs=[blk, blk, blk,
                  pl.BlockSpec((1, L, n_heads), lambda b: (b, 0, 0)),
                  pl.BlockSpec((1, n_heads, L), lambda b: (b, 0, 0))],
        out_specs=blk,
        compiler_params=_cp("parallel"),
    )(Q, K, V, tau, delta)


# ----------------------------------------------------------------------------
# Kernel 6: Mamba selective scan — lane-dense (L, d) layout, hoisted exp, unrolled
#           recurrence, hidden states written in place over the consumed dBu buffer
# ----------------------------------------------------------------------------
def _selective_scan_kernel(u_ref, dt_ref, z_ref, B_ref, C_ref, A_ref, D_ref, dtb_ref,
                           y_ref, dA_sc, dBu_sc, *, seqlen, d_state):
    u = u_ref[...].astype(jnp.float32)                    # (L, d)
    s = dt_ref[...].astype(jnp.float32) + dtb_ref[...].astype(jnp.float32)
    # overflow-safe softplus (torch threshold 20)
    delta = jnp.where(s > 20.0, s, jnp.log1p(jnp.exp(jnp.minimum(s, 20.0))))
    A = A_ref[...].astype(jnp.float32)                    # (n, d)
    Bm = B_ref[...].astype(jnp.float32)                   # (L, n)

    # hoisted EUP / VPU work (single vectorized pass each)
    dA_sc[...] = jnp.exp(delta[:, None, :] * A[None, :, :])      # (L, n, d)
    dBu_sc[...] = (delta * u)[:, None, :] * Bm[:, :, None]       # (L, n, d)

    def step(t, h):
        h = dA_sc[t] * h + dBu_sc[t]
        dBu_sc[t] = h      # reuse dBu storage for hidden states (saves a third (L,n,d) scratch)
        return h

    unroll = 8 if seqlen % 8 == 0 else (4 if seqlen % 4 == 0 else 1)
    lax.fori_loop(0, seqlen, step,
                  jnp.zeros((d_state, u.shape[1]), jnp.float32), unroll=unroll)

    Cm = C_ref[...].astype(jnp.float32)                   # (L, n)
    y = jnp.sum(dBu_sc[...] * Cm[:, :, None], axis=1)     # (L, d)
    y = y + u * D_ref[...].astype(jnp.float32)
    z = z_ref[...].astype(jnp.float32)
    y_ref[...] = y * (z * jax.nn.sigmoid(z))


def selective_scan(u, dt, z, Bm, Cm, A_nd, D_row, dtb_row):
    """u, dt, z: (B, L, d); Bm, Cm: (B, L, n); A_nd: (n, d); D_row, dtb_row: (1, d)."""
    B, L, d = u.shape
    n = A_nd.shape[0]
    blk = lambda c: pl.BlockSpec((None, L, c), lambda b: (b, 0, 0))
    # TODO(synk): chunk L across grid steps (carry the (n, d) state in a persistent VMEM
    # scratch, reduction axis 'arbitrary') so the (L, n, d) blocks fit v7x's 64 MiB at prod L.
    return pl.pallas_call(
        functools.partial(_selective_scan_kernel, seqlen=L, d_state=n),
        out_shape=jax.ShapeDtypeStruct((B, L, d), jnp.float32),
        grid=(B,),
        in_specs=[blk(d), blk(d), blk(d), blk(n), blk(n),
                  pl.BlockSpec((n, d), lambda b: (0, 0)),
                  pl.BlockSpec((1, d), lambda b: (0, 0)),
                  pl.BlockSpec((1, d), lambda b: (0, 0))],
        out_specs=blk(d),
        scratch_shapes=[pltpu.VMEM((L, n, d), jnp.float32)] * 2,
        compiler_params=_cp("parallel"),
    )(u, dt, z, Bm, Cm, A_nd, D_row, dtb_row)


# ----------------------------------------------------------------------------
# Kernel 7: fused ChannelAttention * x, SpatialAttention * z, causal dwconv (+SiLU)
#           (one kernel per batch — removes two (B, L, d_inner) f32 HBM round trips)
# ----------------------------------------------------------------------------
def _gate_kernel(xz_ref, w1_ref, w2_ref, band_ref, cw_ref, cb_ref,
                 u_ref, z_ref, xpad_sc, *, d_in, ktaps, seqlen):
    xz = xz_ref[0].astype(jnp.float32)            # (L, 2*d_in)
    x = xz[:, :d_in]
    z = xz[:, d_in:]

    # channel attention gate on x: pool over L + 2-layer MLP + sigmoid
    avg = jnp.mean(x, axis=0, keepdims=True)      # (1, d_in)
    mx = jnp.max(x, axis=0, keepdims=True)

    def mlp(p):
        h = jnp.dot(p.astype(jnp.bfloat16), w1_ref[...], preferred_element_type=jnp.float32)
        h = h * jax.nn.sigmoid(h)
        return jnp.dot(h.astype(jnp.bfloat16), w2_ref[...], preferred_element_type=jnp.float32)

    x = x * jax.nn.sigmoid(mlp(avg) + mlp(mx))

    # spatial attention gate on z: channel pools + 7-tap conv as banded-matrix matmuls
    zavg = jnp.mean(z, axis=1, keepdims=True)     # (L, 1)
    zmx = jnp.max(z, axis=1, keepdims=True)
    att = (jnp.dot(band_ref[0], zavg, preferred_element_type=jnp.float32)
           + jnp.dot(band_ref[1], zmx, preferred_element_type=jnp.float32))
    z_ref[0] = (z * jax.nn.sigmoid(att)).astype(z_ref.dtype)

    # causal depthwise conv (left pad ktaps-1) + SiLU on the channel-gated x
    pad = ktaps - 1
    xpad_sc[...] = jnp.zeros_like(xpad_sc)
    xpad_sc[pad:pad + seqlen, :] = x
    acc = jnp.zeros((seqlen, d_in), jnp.float32)
    for k in range(ktaps):
        acc = acc + xpad_sc[k:k + seqlen, :] * cw_ref[k:k + 1, :]
    acc = acc + cb_ref[...]
    u_ref[0] = (acc * jax.nn.sigmoid(acc)).astype(u_ref.dtype)


def _spatial_band(w_2k, L):
    """(2, K) conv taps -> (2, L, L) banded matrices: att = band[0] @ avg + band[1] @ mx."""
    Kk = w_2k.shape[1]
    pad = (Kk - 1) // 2
    off = jnp.arange(L)[None, :] - jnp.arange(L)[:, None] + pad      # (L, L) tap index
    valid = (off >= 0) & (off < Kk)
    taps = jnp.clip(off, 0, Kk - 1)
    return jnp.where(valid[None, :, :], w_2k[:, taps], 0.0).astype(jnp.float32)


def gated_causal_conv(xz, ca_w1, ca_w2, sa_w, c1d_w, c1d_b, d_in, d_conv):
    """xz: (B, L, 2*d_in) -> (u, z), both (B, L, d_in) f32."""
    B, L, _ = xz.shape
    band = _spatial_band(sa_w, L)                 # built once at trace time
    dr = ca_w1.shape[1]
    blk = pl.BlockSpec((1, L, d_in), lambda b: (b, 0, 0))
    return pl.pallas_call(
        functools.partial(_gate_kernel, d_in=d_in, ktaps=d_conv, seqlen=L),
        out_shape=(jax.ShapeDtypeStruct((B, L, d_in), jnp.float32),
                   jax.ShapeDtypeStruct((B, L, d_in), jnp.float32)),
        grid=(B,),
        in_specs=[pl.BlockSpec((1, L, 2 * d_in), lambda b: (b, 0, 0)),
                  pl.BlockSpec((d_in, dr), lambda b: (0, 0)),
                  pl.BlockSpec((dr, d_in), lambda b: (0, 0)),
                  pl.BlockSpec((2, L, L), lambda b: (0, 0, 0)),
                  pl.BlockSpec((d_conv, d_in), lambda b: (0, 0)),
                  pl.BlockSpec((1, d_in), lambda b: (0, 0))],
        out_specs=(blk, blk),
        scratch_shapes=[pltpu.VMEM((L + d_conv - 1, d_in), jnp.float32)],
        compiler_params=_cp("parallel"),
    )(xz, ca_w1, ca_w2, band, c1d_w, c1d_b)


# ----------------------------------------------------------------------------
# Model glue (XLA-level reshapes only; all compute in Pallas kernels)
# ----------------------------------------------------------------------------
def dc_attention(x_bld, p, H):
    B, L, D = x_bld.shape
    x2 = x_bld.reshape(B * L, D)

    qkv = matmul(x2, p['wqkv_t'], p['bqkv'], out_dtype=jnp.bfloat16)       # fused Q|K|V
    rawQ, rawK, V = qkv[:, :D], qkv[:, D:2 * D], qkv[:, 2 * D:]

    Q3 = conv1d_taps(rawQ.reshape(B, L, D), p['convq3_t'], p['convq3_b'],
                     out_dtype=jnp.bfloat16).reshape(B * L, D)
    K3 = conv1d_taps(rawK.reshape(B, L, D), p['convk3_t'], p['convk3_b'],
                     out_dtype=jnp.bfloat16).reshape(B * L, D)

    # q_proj / k_proj over [raw | conv3] without materializing the concat
    Q = matmul_acc2(rawQ, Q3, p['qproj_t1'], p['qproj_t2'], p['qproj_b'],
                    out_dtype=jnp.bfloat16)
    K = matmul_acc2(rawK, K3, p['kproj_t1'], p['kproj_t2'], p['kproj_b'],
                    out_dtype=jnp.bfloat16)

    # fused tau/delta path: grouped depthwise conv (GELU) + block-diag 1x1 (sigmoid)
    g = depthwise_conv_multi(x_bld, p['td_g_w'], p['td_g_b'], 1, 1, act='gelu',
                             out_dtype=jnp.bfloat16)                       # (B, L, 4D)
    td = matmul(g.reshape(B * L, 4 * D), p['td_p_t'], p['td_p_b'], act='sigmoid')
    tau = td[:, :H].reshape(B, L, H)                                       # per-query scale
    delta = td[:, H:2 * H].reshape(B, L, H).transpose(0, 2, 1)             # (B, H, L), tiny

    out = dc_attention_core(Q.reshape(B, L, D), K.reshape(B, L, D),
                            V.reshape(B, L, D), tau, delta, H)             # bf16 (B, L, D)
    return matmul(out.reshape(B * L, D), p['out_t'], p['out_b']).reshape(B, L, D)


def transformer_layer(x_bld, p, H):
    B, L, D = x_bld.shape
    attn = dc_attention(x_bld, p, H)
    x = layernorm(attn.reshape(B * L, D), p['ln1_g'], p['ln1_b'],
                  residual=x_bld.reshape(B * L, D))                        # fused residual + LN
    h = matmul(x, p['fc1_t'], p['fc1_b'], act='gelu', out_dtype=jnp.bfloat16)
    ffn = matmul(h, p['fc2_t'], p['fc2_b'])
    x = layernorm(ffn, p['ln2_g'], p['ln2_b'], residual=x)
    return x.reshape(B, L, D)


def mamba_forward(x_bld, p, cfg):
    B, L, D = x_bld.shape
    d_in, n = cfg['d_inner'], cfg['d_state']

    # in_proj (1x1 Conv2d, no bias) then depthwise 5x5 Conv2d (width-1 input -> 5-tap conv, kw=2)
    xz = matmul(x_bld.reshape(B * L, D), p['in_proj_t'],
                out_dtype=jnp.bfloat16).reshape(B, L, 2 * d_in)
    xz = depthwise_conv_multi(xz, p['dw5_w'], p['dw5_b'], 2, 2, act=None)

    # fused: channel-attention * x, spatial-attention * z, causal dwconv + SiLU
    u, z = gated_causal_conv(xz, p['ca_w1'], p['ca_w2'], p['sa_w'],
                             p['c1d_w'], p['c1d_b'], d_in, cfg['d_conv'])

    # fused x_proj + dt_proj (exact linear composition): one matmul -> [dt | B | C]
    proj = matmul(u.reshape(B * L, d_in), p['scan_in_t'])
    dt = proj[:, :d_in].reshape(B, L, d_in)
    Bm = proj[:, d_in:d_in + n].reshape(B, L, n)
    Cm = proj[:, d_in + n:].reshape(B, L, n)

    y = selective_scan(u, dt, z, Bm, Cm, p['A_nd'], p['D_row'], p['dtb_row'])
    return matmul(y.reshape(B * L, d_in), p['outproj_t']).reshape(B, L, D)


def morf_prediction_branch2(x_bld, params, cfg):
    for lp in params['layers']:
        x_bld = transformer_layer(x_bld, lp, cfg['n_heads'])
    x_bld = mamba_forward(x_bld, params['mamba'], cfg)        # 'b l d -> b d l 1 -> ... -> b l d'
    B, L, D = x_bld.shape
    h = matmul(x_bld.reshape(B * L, D), params['op1_t'], params['op1_b'],
               act='gelu', out_dtype=jnp.bfloat16)
    h = matmul(h, params['op2_t'], params['op2_b'])
    h = layernorm(h, params['ln_g'], params['ln_b'])
    return h.reshape(B, L, -1)


# ----------------------------------------------------------------------------
# Parameter init (torch layout) + one-time preparation (transpose / fuse / bf16)
# ----------------------------------------------------------------------------
class KeyGen:
    def __init__(self, key):
        self.key = key

    def next(self):
        self.key, sub = jax.random.split(self.key)
        return sub


def init_raw_params(key, cfg):
    kg = KeyGen(key)
    D, H, d_ff = cfg['d_model'], cfg['n_heads'], cfg['d_ff']
    d_in, n, dt_rank = cfg['d_inner'], cfg['d_state'], cfg['dt_rank']

    def w(shape, scale=0.05):
        return jax.random.normal(kg.next(), shape, jnp.float32) * scale

    def b(shape):
        return jax.random.normal(kg.next(), shape, jnp.float32) * 0.01

    layers = []
    for _ in range(cfg['n_layers']):
        layers.append(dict(
            Wq_w=w((D, D)), Wq_b=b((D,)), Wk_w=w((D, D)), Wk_b=b((D,)),
            Wv_w=w((D, D)), Wv_b=b((D,)),
            convq3_w=w((D, D, 3)), convq3_b=b((D,)),
            convk3_w=w((D, D, 3)), convk3_b=b((D,)),
            qproj_w=w((D, 2 * D)), qproj_b=b((D,)),
            kproj_w=w((D, 2 * D)), kproj_b=b((D,)),
            tau_g_w=w((2 * D, 1, 3)), tau_g_b=b((2 * D,)),
            tau_p_w=w((H, 2 * D)), tau_p_b=b((H,)),
            del_g_w=w((2 * D, 1, 3)), del_g_b=b((2 * D,)),
            del_p_w=w((H, 2 * D)), del_p_b=b((H,)),
            out_w=w((D, D)), out_b=b((D,)),
            fc1_w=w((d_ff, D)), fc1_b=b((d_ff,)),
            fc2_w=w((D, d_ff)), fc2_b=b((D,)),
            ln1_g=jnp.ones((D,), jnp.float32), ln1_b=jnp.zeros((D,), jnp.float32),
            ln2_g=jnp.ones((D,), jnp.float32), ln2_b=jnp.zeros((D,), jnp.float32),
        ))

    dt_std = dt_rank ** -0.5
    dt = jnp.exp(jax.random.uniform(kg.next(), (d_in,), jnp.float32)
                 * (math.log(0.1) - math.log(0.001)) + math.log(0.001))
    dt = jnp.maximum(dt, 1e-4)
    inv_dt = dt + jnp.log(-jnp.expm1(-dt))
    A = jnp.broadcast_to(jnp.arange(1, n + 1, dtype=jnp.float32)[None, :], (d_in, n))

    mamba = dict(
        in_proj_w=w((2 * d_in, D)),
        dwconv_w=w((2 * d_in, 1, 5, 5)),
        conv1d_w=w((d_in, 1, 3)), conv1d_b=b((d_in,)),
        xproj_w=w((dt_rank + 2 * n, d_in)),
        dtproj_w=jax.random.uniform(kg.next(), (d_in, dt_rank), jnp.float32, -dt_std, dt_std),
        dtproj_b=inv_dt,
        A_log=jnp.log(A),
        D=jnp.ones((d_in,), jnp.float32),
        outproj_w=w((D, d_in)),
        ca_fc1_w=w((d_in // 16, d_in)), ca_fc2_w=w((d_in, d_in // 16)),
        sa_conv_w=w((1, 2, 7)),
    )

    d1, d2 = cfg['out_dims']
    return dict(layers=layers, mamba=mamba,
                op1_w=w((d1, D)), op1_b=b((d1,)),
                op2_w=w((d2, d1)), op2_b=b((d2,)),
                ln_g=jnp.ones((d2,), jnp.float32), ln_b=jnp.zeros((d2,), jnp.float32))


def prepare_params(raw, cfg):
    """One-time weight preparation: pre-transpose, pre-fuse, pre-cast to bf16."""
    D, H = cfg['d_model'], cfg['n_heads']
    d_in, n, dt_rank = cfg['d_inner'], cfg['d_state'], cfg['dt_rank']

    def t(w):
        return w.T.astype(jnp.bfloat16)

    def conv_col(w_oik):                       # (O, I, K) -> (K*I, O)
        return jnp.transpose(w_oik, (2, 1, 0)).reshape(-1, w_oik.shape[0]).astype(jnp.bfloat16)

    def grouped_w(gw):                         # (2D, 1, 3): channel 2i+j -> [(3, D)] for j=0,1
        w = gw.reshape(D, 2, 3)
        return [jnp.transpose(w[:, j, :]) for j in range(2)]

    def grouped_b(gb):
        bb = gb.reshape(D, 2)
        return [bb[:, j] for j in range(2)]

    def permute_point(pw):                     # columns 2i+j -> j*D+i (matches kernel output order)
        return pw.reshape(H, D, 2).transpose(0, 2, 1).reshape(H, 2 * D)

    layers = []
    for lp in raw['layers']:
        tg, dg = grouped_w(lp['tau_g_w']), grouped_w(lp['del_g_w'])
        tb, db = grouped_b(lp['tau_g_b']), grouped_b(lp['del_g_b'])
        tp, dp = permute_point(lp['tau_p_w']), permute_point(lp['del_p_w'])
        zeros = jnp.zeros((H, 2 * D), jnp.float32)
        td_big = jnp.concatenate([jnp.concatenate([tp, zeros], axis=1),
                                  jnp.concatenate([zeros, dp], axis=1)], axis=0)   # (2H, 4D)
        layers.append(dict(
            wqkv_t=jnp.concatenate([lp['Wq_w'], lp['Wk_w'], lp['Wv_w']], axis=0).T.astype(jnp.bfloat16),
            bqkv=jnp.concatenate([lp['Wq_b'], lp['Wk_b'], lp['Wv_b']], axis=0),
            convq3_t=conv_col(lp['convq3_w']), convq3_b=lp['convq3_b'],
            convk3_t=conv_col(lp['convk3_w']), convk3_b=lp['convk3_b'],
            qproj_t1=lp['qproj_w'][:, :D].T.astype(jnp.bfloat16),
            qproj_t2=lp['qproj_w'][:, D:].T.astype(jnp.bfloat16),
            qproj_b=lp['qproj_b'],
            kproj_t1=lp['kproj_w'][:, :D].T.astype(jnp.bfloat16),
            kproj_t2=lp['kproj_w'][:, D:].T.astype(jnp.bfloat16),
            kproj_b=lp['kproj_b'],
            td_g_w=jnp.concatenate(tg + dg, axis=0),          # (12, D)
            td_g_b=jnp.stack(tb + db, axis=0),                # (4, D)
            td_p_t=td_big.T.astype(jnp.bfloat16),             # (4D, 2H), block-diagonal
            td_p_b=jnp.concatenate([lp['tau_p_b'], lp['del_p_b']], axis=0),
            out_t=t(lp['out_w']), out_b=lp['out_b'],
            fc1_t=t(lp['fc1_w']), fc1_b=lp['fc1_b'],
            fc2_t=t(lp['fc2_w']), fc2_b=lp['fc2_b'],
            ln1_g=lp['ln1_g'], ln1_b=lp['ln1_b'],
            ln2_g=lp['ln2_g'], ln2_b=lp['ln2_b'],
        ))

    mp = raw['mamba']
    Wx = mp['xproj_w']
    Wdt_eff = mp['dtproj_w'] @ Wx[:dt_rank]                   # compose dt_proj o x_proj
    scan_in = jnp.concatenate([Wdt_eff, Wx[dt_rank:]], axis=0)   # (d_in + 2n, d_in)
    mamba = dict(
        in_proj_t=mp['in_proj_w'].T.astype(jnp.bfloat16),
        dw5_w=jnp.transpose(mp['dwconv_w'][:, 0, :, 2]),      # 5x5 kernel column kw=2 (width-1 input)
        dw5_b=jnp.zeros((1, 2 * d_in), jnp.float32),          # dwconv has bias=False
        c1d_w=jnp.transpose(mp['conv1d_w'][:, 0, :]),         # (d_conv, d_in)
        c1d_b=mp['conv1d_b'].reshape(1, d_in),
        scan_in_t=scan_in.T.astype(jnp.bfloat16),
        A_nd=(-jnp.exp(mp['A_log'])).T,                       # (n, d_in), lane-dense along d_in
        D_row=mp['D'].reshape(1, d_in),
        dtb_row=mp['dtproj_b'].reshape(1, d_in),
        outproj_t=mp['outproj_w'].T.astype(jnp.bfloat16),
        ca_w1=mp['ca_fc1_w'].T.astype(jnp.bfloat16),
        ca_w2=mp['ca_fc2_w'].T.astype(jnp.bfloat16),
        sa_w=mp['sa_conv_w'][0],                              # (2, 7)
    )

    return dict(layers=layers, mamba=mamba,
                op1_t=t(raw['op1_w']), op1_b=raw['op1_b'],
                op2_t=t(raw['op2_w']), op2_b=raw['op2_b'],
                ln_g=raw['ln_g'], ln_b=raw['ln_b'])


if __name__ == "__main__":
    cfg = dict(d_model=128, n_heads=4, d_ff=256, n_layers=2,
               d_inner=64, d_state=16, d_conv=3,
               dt_rank=math.ceil(128 / 16),
               out_dims=(96, 64))

    key = jax.random.PRNGKey(0)
    pkey, xkey = jax.random.split(key)
    params = prepare_params(init_raw_params(pkey, cfg), cfg)

    B, L = 2, 8
    x = jax.random.normal(xkey, (B, L, cfg['d_model']), jnp.float32)

    fwd = jax.jit(functools.partial(morf_prediction_branch2, cfg=cfg))
    out = jax.block_until_ready(fwd(x, params))

    assert out.shape == (B, L, cfg['out_dims'][1]), out.shape
    assert bool(jnp.all(jnp.isfinite(out)))
    print("KERNEL_OK")
</pallas_src>

<mosaic_0001>
module attributes {stable_mosaic.version = 11 : i64} {
  func.func @_conv1d_mm_kernel(%arg0: i32, %arg1: memref<1x8x128xbf16, #tpu.memory_space<vmem>>, %arg2: memref<384x128xbf16, #tpu.memory_space<vmem>>, %arg3: memref<1x128xf32, #tpu.memory_space<vmem>>, %arg4: memref<1x8x128xbf16, #tpu.memory_space<vmem>>, %arg5: memref<10x128xf32, #tpu.memory_space<vmem>>) attributes {dimension_semantics = [#tpu.dimension_semantics<parallel>], iteration_bounds = array<i64: 2>, scalar_prefetch = 0 : i64, scratch_operands = 1 : i64, tpu.core_type = #tpu.core_type<tc>, window_params = [{transform_indices = @transform_0, window_bounds = array<i64: 1, 8, 128>}, {pipeline_mode = #tpu.pipeline_mode<synchronous>, transform_indices = @transform_1, window_bounds = array<i64: 384, 128>}, {pipeline_mode = #tpu.pipeline_mode<synchronous>, transform_indices = @transform_2, window_bounds = array<i64: 1, 128>}, {transform_indices = @transform_3, window_bounds = array<i64: 1, 8, 128>}]} {
    %cst = arith.constant 0.000000e+00 : f32
    %0 = vector.broadcast %cst : f32 to vector<10x128xf32>
    %c0 = arith.constant 0 : index
    %c0_0 = arith.constant 0 : index
    %1 = vector.load %arg5[%c0, %c0_0] : memref<10x128xf32, #tpu.memory_space<vmem>>, vector<10x128xf32>
    tpu.vector_store %arg5[%c0, %c0_0], %0 {strides = array<i32>} : memref<10x128xf32, #tpu.memory_space<vmem>>, vector<10x128xf32>,
    %c0_1 = arith.constant 0 : index
    %c0_2 = arith.constant 0 : index
    %c0_3 = arith.constant 0 : index
    %2 = vector.load %arg1[%c0_1, %c0_2, %c0_3] : memref<1x8x128xbf16, #tpu.memory_space<vmem>>, vector<1x8x128xbf16>
    %3 = vector.shape_cast %2 : vector<1x8x128xbf16> to vector<8x128xbf16>
    %4 = arith.extf %3 : vector<8x128xbf16> to vector<8x128xf32>
    %c1 = arith.constant 1 : index
    %c0_4 = arith.constant 0 : index
    %5 = vector.load %arg5[%c1, %c0_4] : memref<10x128xf32, #tpu.memory_space<vmem>>, vector<8x128xf32>
    tpu.vector_store %arg5[%c1, %c0_4], %4 {strides = array<i32>} : memref<10x128xf32, #tpu.memory_space<vmem>>, vector<8x128xf32>,
    %cst_5 = arith.constant 0.000000e+00 : f32
    %6 = vector.broadcast %cst_5 : f32 to vector<8x128xf32>
    %c0_6 = arith.constant 0 : index
    %c0_7 = arith.constant 0 : index
    %7 = vector.load %arg5[%c0_6, %c0_7] : memref<10x128xf32, #tpu.memory_space<vmem>>, vector<8x128xf32>
    %8 = arith.truncf %7 : vector<8x128xf32> to vector<8x128xbf16>
    %c0_8 = arith.constant 0 : index
    %c0_9 = arith.constant 0 : index
    %9 = vector.load %arg2[%c0_8, %c0_9] : memref<384x128xbf16, #tpu.memory_space<vmem>>, vector<128x128xbf16>
    %cst_10 = arith.constant dense<0.000000e+00> : vector<8x128xf32>
    %10 = tpu.matmul %8, %9, %cst_10 {dimension_numbers = #tpu.dot_dimension_numbers<[1], [0], [0], [1], [0, 0, 1, 1], [], []>} : vector<8x128xbf16>, vector<128x128xbf16>, vector<8x128xf32> -> vector<8x128xf32>
    %11 = arith.addf %6, %10 : vector<8x128xf32>
    %c1_11 = arith.constant 1 : index
    %c0_12 = arith.constant 0 : index
    %12 = vector.load %arg5[%c1_11, %c0_12] : memref<10x128xf32, #tpu.memory_space<vmem>>, vector<8x128xf32>
    %13 = arith.truncf %12 : vector<8x128xf32> to vector<8x128xbf16>
    %c128 = arith.constant 128 : index
    %c0_13 = arith.constant 0 : index
    %14 = vector.load %arg2[%c128, %c0_13] : memref<384x128xbf16, #tpu.memory_space<vmem>>, vector<128x128xbf16>
    %cst_14 = arith.constant dense<0.000000e+00> : vector<8x128xf32>
    %15 = tpu.matmul %13, %14, %cst_14 {dimension_numbers = #tpu.dot_dimension_numbers<[1], [0], [0], [1], [0, 0, 1, 1], [], []>} : vector<8x128xbf16>, vector<128x128xbf16>, vector<8x128xf32> -> vector<8x128xf32>
    %16 = arith.addf %11, %15 : vector<8x128xf32>
    %c2 = arith.constant 2 : index
    %c0_15 = arith.constant 0 : index
    %17 = vector.load %arg5[%c2, %c0_15] : memref<10x128xf32, #tpu.memory_space<vmem>>, vector<8x128xf32>
    %18 = arith.truncf %17 : vector<8x128xf32> to vector<8x128xbf16>
    %c256 = arith.constant 256 : index
    %c0_16 = arith.constant 0 : index
    %19 = vector.load %arg2[%c256, %c0_16] : memref<384x128xbf16, #tpu.memory_space<vmem>>, vector<128x128xbf16>
    %cst_17 = arith.constant dense<0.000000e+00> : vector<8x128xf32>
    %20 = tpu.matmul %18, %19, %cst_17 {dimension_numbers = #tpu.dot_dimension_numbers<[1], [0], [0], [1], [0, 0, 1, 1], [], []>} : vector<8x128xbf16>, vector<128x128xbf16>, vector<8x128xf32> -> vector<8x128xf32>
    %21 = arith.addf %16, %20 : vector<8x128xf32>
    %c0_18 = arith.constant 0 : index
    %c0_19 = arith.constant 0 : index
    %22 = vector.load %arg3[%c0_18, %c0_19] : memref<1x128xf32, #tpu.memory_space<vmem>>, vector<1x128xf32>
    %23 = vector.broadcast %22 : vector<1x128xf32> to vector<8x128xf32>
    %24 = arith.addf %21, %23 : vector<8x128xf32>
    %25 = arith.truncf %24 : vector<8x128xf32> to vector<8x128xbf16>
    %c0_20 = arith.constant 0 : index
    %c0_21 = arith.constant 0 : index
    %c0_22 = arith.constant 0 : index
    %26 = vector.load %arg4[%c0_20, %c0_21, %c0_22] : memref<1x8x128xbf16, #tpu.memory_space<vmem>>, vector<1x8x128xbf16>
    %27 = vector.shape_cast %26 : vector<1x8x128xbf16> to vector<8x128xbf16>
    %28 = vector.shape_cast %25 : vector<8x128xbf16> to vector<1x8x128xbf16>
    tpu.vector_store %arg4[%c0_20, %c0_21, %c0_22], %28 {strides = array<i32>} : memref<1x8x128xbf16, #tpu.memory_space<vmem>>, vector<1x8x128xbf16>,
    return
  }
  func.func @transform_0(%arg0: i32) -> (i32, i32, i32) {
    %c0_i32 = arith.constant 0 : i32
    %c0_i32_0 = arith.constant 0 : i32
    %c0_i32_1 = arith.constant 0 : i32
    return %arg0, %c0_i32, %c0_i32_0 : i32, i32, i32
  }
  func.func @transform_1(%arg0: i32) -> (i32, i32) {
    %c0_i32 = arith.constant 0 : i32
    %c0_i32_0 = arith.constant 0 : i32
    %c0_i32_1 = arith.constant 0 : i32
    return %c0_i32, %c0_i32_0 : i32, i32
  }
  func.func @transform_2(%arg0: i32) -> (i32, i32) {
    %c0_i32 = arith.constant 0 : i32
    %c0_i32_0 = arith.constant 0 : i32
    %c0_i32_1 = arith.constant 0 : i32
    return %c0_i32, %c0_i32_0 : i32, i32
  }
  func.func @transform_3(%arg0: i32) -> (i32, i32, i32) {
    %c0_i32 = arith.constant 0 : i32
    %c0_i32_0 = arith.constant 0 : i32
    %c0_i32_1 = arith.constant 0 : i32
    return %arg0, %c0_i32, %c0_i32_0 : i32, i32, i32
  }
}

module attributes {stable_mosaic.version = 11 : i64} {
  func.func @_mm_kernel(%arg0: i32, %arg1: i32, %arg2: i32, %arg3: memref<16x128xf32, #tpu.memory_space<vmem>>, %arg4: memref<128x128xbf16, #tpu.memory_space<vmem>>, %arg5: memref<1x128xf32, #tpu.memory_space<vmem>>, %arg6: memref<16x128xbf16, #tpu.memory_space<vmem>>, %arg7: memref<16x128xf32, #tpu.memory_space<vmem>>) attributes {dimension_semantics = [#tpu.dimension_semantics<parallel>, #tpu.dimension_semantics<parallel>, #tpu.dimension_semantics<arbitrary>], iteration_bounds = array<i64: 1, 3, 1>, scalar_prefetch = 0 : i64, scratch_operands = 1 : i64, tpu.core_type = #tpu.core_type<tc>, window_params = [{transform_indices = @transform_0, window_bounds = array<i64: 16, 128>}, {transform_indices = @transform_1, window_bounds = array<i64: 128, 128>}, {transform_indices = @transform_2, window_bounds = array<i64: 1, 128>}, {transform_indices = @transform_3, window_bounds = array<i64: 16, 128>}]} {
    %c0_i32 = arith.constant 0 : i32
    %0 = arith.cmpi eq, %arg2, %c0_i32 : i32
    %1 = arith.extui %0 : i1 to i32
    %c0_i32_0 = arith.constant 0 : i32
    %2 = arith.cmpi ne, %1, %c0_i32_0 : i32
    scf.if %2 {
      %cst_10 = arith.constant 0.000000e+00 : f32
      %13 = vector.broadcast %cst_10 : f32 to vector<16x128xf32>
      %c0_11 = arith.constant 0 : index
      %c0_12 = arith.constant 0 : index
      %14 = vector.load %arg7[%c0_11, %c0_12] : memref<16x128xf32, #tpu.memory_space<vmem>>, vector<16x128xf32>
      tpu.vector_store %arg7[%c0_11, %c0_12], %13 {strides = array<i32>} : memref<16x128xf32, #tpu.memory_space<vmem>>, vector<16x128xf32>,
    } else {
    }
    %c0 = arith.constant 0 : index
    %c0_1 = arith.constant 0 : index
    %3 = vector.load %arg3[%c0, %c0_1] : memref<16x128xf32, #tpu.memory_space<vmem>>, vector<16x128xf32>
    %4 = arith.truncf %3 : vector<16x128xf32> to vector<16x128xbf16>
    %c0_2 = arith.constant 0 : index
    %c0_3 = arith.constant 0 : index
    %5 = vector.load %arg7[%c0_2, %c0_3] : memref<16x128xf32, #tpu.memory_space<vmem>>, vector<16x128xf32>
    %c0_4 = arith.constant 0 : index
    %c0_5 = arith.constant 0 : index
    %6 = vector.load %arg4[%c0_4, %c0_5] : memref<128x128xbf16, #tpu.memory_space<vmem>>, vector<128x128xbf16>
    %cst = arith.constant dense<0.000000e+00> : vector<16x128xf32>
    %7 = tpu.matmul %4, %6, %cst {dimension_numbers = #tpu.dot_dimension_numbers<[1], [0], [0], [1], [0, 0, 1, 1], [], []>} : vector<16x128xbf16>, vector<128x128xbf16>, vector<16x128xf32> -> vector<16x128xf32>
    %8 = arith.addf %5, %7 : vector<16x128xf32>
    %c0_6 = arith.constant 0 : index
    %c0_7 = arith.constant 0 : index
    %9 = vector.load %arg7[%c0_6, %c0_7] : memref<16x128xf32, #tpu.memory_space<vmem>>, vector<16x128xf32>
    tpu.vector_store %arg7[%c0_6, %c0_7], %8 {strides = array<i32>} : memref<16x128xf32, #tpu.memory_space<vmem>>, vector<16x128xf32>,
    %c0_i32_8 = arith.constant 0 : i32
    %10 = arith.cmpi eq, %arg2, %c0_i32_8 : i32
    %11 = arith.extui %10 : i1 to i32
    %c0_i32_9 = arith.constant 0 : i32
    %12 = arith.cmpi ne, %11, %c0_i32_9 : i32
    scf.if %12 {
      %c0_10 = arith.constant 0 : index
      %c0_11 = arith.constant 0 : index
      %13 = vector.load %arg7[%c0_10, %c0_11] : memref<16x128xf32, #tpu.memory_space<vmem>>, vector<16x128xf32>
      %c0_12 = arith.constant 0 : index
      %c0_13 = arith.constant 0 : index
      %14 = vector.load %arg5[%c0_12, %c0_13] : memref<1x128xf32, #tpu.memory_space<vmem>>, vector<1x128xf32>
      %15 = vector.broadcast %14 : vector<1x128xf32> to vector<16x128xf32>
      %16 = arith.addf %13, %15 : vector<16x128xf32>
      %17 = arith.truncf %16 : vector<16x128xf32> to vector<16x128xbf16>
      %c0_14 = arith.constant 0 : index
      %c0_15 = arith.constant 0 : index
      %18 = vector.load %arg6[%c0_14, %c0_15] : memref<16x128xbf16, #tpu.memory_space<vmem>>, vector<16x128xbf16>
      tpu.vector_store %arg6[%c0_14, %c0_15], %17 {strides = array<i32>} : memref<16x128xbf16, #tpu.memory_space<vmem>>, vector<16x128xbf16>,
    } else {
    }
    return
  }
  func.func @transform_0(%arg0: i32, %arg1: i32, %arg2: i32) -> (i32, i32) {
    %c0_i32 = arith.constant 0 : i32
    return %arg0, %arg2 : i32, i32
  }
  func.func @transform_1(%arg0: i32, %arg1: i32, %arg2: i32) -> (i32, i32) {
    %c0_i32 = arith.constant 0 : i32
    return %arg2, %arg1 : i32, i32
  }
  func.func @transform_2(%arg0: i32, %arg1: i32, %arg2: i32) -> (i32, i32) {
    %c0_i32 = arith.constant 0 : i32
    %c0_i32_0 = arith.constant 0 : i32
    return %c0_i32, %arg1 : i32, i32
  }
  func.func @transform_3(%arg0: i32, %arg1: i32, %arg2: i32) -> (i32, i32) {
    %c0_i32 = arith.constant 0 : i32
    return %arg0, %arg1 : i32, i32
  }
}

module attributes {stable_mosaic.version = 11 : i64} {
  func.func @_mm2_kernel(%arg0: i32, %arg1: i32, %arg2: i32, %arg3: memref<16x128xbf16, #tpu.memory_space<vmem>>, %arg4: memref<128x128xbf16, #tpu.memory_space<vmem>>, %arg5: memref<16x128xbf16, #tpu.memory_space<vmem>>, %arg6: memref<128x128xbf16, #tpu.memory_space<vmem>>, %arg7: memref<1x128xf32, #tpu.memory_space<vmem>>, %arg8: memref<16x128xbf16, #tpu.memory_space<vmem>>, %arg9: memref<16x128xf32, #tpu.memory_space<vmem>>) attributes {dimension_semantics = [#tpu.dimension_semantics<parallel>, #tpu.dimension_semantics<parallel>, #tpu.dimension_semantics<arbitrary>], iteration_bounds = array<i64: 1, 1, 1>, scalar_prefetch = 0 : i64, scratch_operands = 1 : i64, tpu.core_type = #tpu.core_type<tc>, window_params = [{transform_indices = @transform_0, window_bounds = array<i64: 16, 128>}, {transform_indices = @transform_1, window_bounds = array<i64: 128, 128>}, {transform_indices = @transform_2, window_bounds = array<i64: 16, 128>}, {transform_indices = @transform_3, window_bounds = array<i64: 128, 128>}, {transform_indices = @transform_4, window_bounds = array<i64: 1, 128>}, {transform_indices = @transform_5, window_bounds = array<i64: 16, 128>}]} {
    %c0_i32 = arith.constant 0 : i32
    %0 = arith.cmpi eq, %arg2, %c0_i32 : i32
    %1 = arith.extui %0 : i1 to i32
    %c0_i32_0 = arith.constant 0 : i32
    %2 = arith.cmpi ne, %1, %c0_i32_0 : i32
    scf.if %2 {
      %cst_15 = arith.constant 0.000000e+00 : f32
      %16 = vector.broadcast %cst_15 : f32 to vector<16x128xf32>
      %c0_16 = arith.constant 0 : index
      %c0_17 = arith.constant 0 : index
      %17 = vector.load %arg9[%c0_16, %c0_17] : memref<16x128xf32, #tpu.memory_space<vmem>>, vector<16x128xf32>
      tpu.vector_store %arg9[%c0_16, %c0_17], %16 {strides = array<i32>} : memref<16x128xf32, #tpu.memory_space<vmem>>, vector<16x128xf32>,
    } else {
    }
    %c0 = arith.constant 0 : index
    %c0_1 = arith.constant 0 : index
    %3 = vector.load %arg3[%c0, %c0_1] : memref<16x128xbf16, #tpu.memory_space<vmem>>, vector<16x128xbf16>
    %c0_2 = arith.constant 0 : index
    %c0_3 = arith.constant 0 : index
    %4 = vector.load %arg5[%c0_2, %c0_3] : memref<16x128xbf16, #tpu.memory_space<vmem>>, vector<16x128xbf16>
    %c0_4 = arith.constant 0 : index
    %c0_5 = arith.constant 0 : index
    %5 = vector.load %arg9[%c0_4, %c0_5] : memref<16x128xf32, #tpu.memory_space<vmem>>, vector<16x128xf32>
    %c0_6 = arith.constant 0 : index
    %c0_7 = arith.constant 0 : index
    %6 = vector.load %arg4[%c0_6, %c0_7] : memref<128x128xbf16, #tpu.memory_space<vmem>>, vector<128x128xbf16>
    %cst = arith.constant dense<0.000000e+00> : vector<16x128xf32>
    %7 = tpu.matmul %3, %6, %cst {dimension_numbers = #tpu.dot_dimension_numbers<[1], [0], [0], [1], [0, 0, 1, 1], [], []>} : vector<16x128xbf16>, vector<128x128xbf16>, vector<16x128xf32> -> vector<16x128xf32>
    %c0_8 = arith.constant 0 : index
    %c0_9 = arith.constant 0 : index
    %8 = vector.load %arg6[%c0_8, %c0_9] : memref<128x128xbf16, #tpu.memory_space<vmem>>, vector<128x128xbf16>
    %cst_10 = arith.constant dense<0.000000e+00> : vector<16x128xf32>
    %9 = tpu.matmul %4, %8, %cst_10 {dimension_numbers = #tpu.dot_dimension_numbers<[1], [0], [0], [1], [0, 0, 1, 1], [], []>} : vector<16x128xbf16>, vector<128x128xbf16>, vector<16x128xf32> -> vector<16x128xf32>
    %10 = arith.addf %7, %9 : vector<16x128xf32>
    %11 = arith.addf %5, %10 : vector<16x128xf32>
    %c0_11 = arith.constant 0 : index
    %c0_12 = arith.constant 0 : index
    %12 = vector.load %arg9[%c0_11, %c0_12] : memref<16x128xf32, #tpu.memory_space<vmem>>, vector<16x128xf32>
    tpu.vector_store %arg9[%c0_11, %c0_12], %11 {strides = array<i32>} : memref<16x128xf32, #tpu.memory_space<vmem>>, vector<16x128xf32>,
    %c0_i32_13 = arith.constant 0 : i32
    %13 = arith.cmpi eq, %arg2, %c0_i32_13 : i32
    %14 = arith.extui %13 : i1 to i32
    %c0_i32_14 = arith.constant 0 : i32
    %15 = arith.cmpi ne, %14, %c0_i32_14 : i32
    scf.if %15 {
      %c0_15 = arith.constant 0 : index
      %c0_16 = arith.constant 0 : index
      %16 = vector.load %arg9[%c0_15, %c0_16] : memref<16x128xf32, #tpu.memory_space<vmem>>, vector<16x128xf32>
      %c0_17 = arith.constant 0 : index
      %c0_18 = arith.constant 0 : index
      %17 = vector.load %arg7[%c0_17, %c0_18] : memref<1x128xf32, #tpu.memory_space<vmem>>, vector<1x128xf32>
      %18 = vector.broadcast %17 : vector<1x128xf32> to vector<16x128xf32>
      %19 = arith.addf %16, %18 : vector<16x128xf32>
      %20 = arith.truncf %19 : vector<16x128xf32> to vector<16x128xbf16>
      %c0_19 = arith.constant 0 : index
      %c0_20 = arith.constant 0 : index
      %21 = vector.load %arg8[%c0_19, %c0_20] : memref<16x128xbf16, #tpu.memory_space<vmem>>, vector<16x128xbf16>
      tpu.vector_store %arg8[%c0_19, %c0_20], %20 {strides = array<i32>} : memref<16x128xbf16, #tpu.memory_space<vmem>>, vector<16x128xbf16>,
    } else {
    }
    return
  }
  func.func @transform_0(%arg0: i32, %arg1: i32, %arg2: i32) -> (i32, i32) {
    %c0_i32 = arith.constant 0 : i32
    return %arg0, %arg2 : i32, i32
  }
  func.func @transform_1(%arg0: i32, %arg1: i32, %arg2: i32) -> (i32, i32) {
    %c0_i32 = arith.constant 0 : i32
    return %arg2, %arg1 : i32, i32
  }
  func.func @transform_2(%arg0: i32, %arg1: i32, %arg2: i32) -> (i32, i32) {
    %c0_i32 = arith.constant 0 : i32
    return %arg0, %arg2 : i32, i32
  }
  func.func @transform_3(%arg0: i32, %arg1: i32, %arg2: i32) -> (i32, i32) {
    %c0_i32 = arith.constant 0 : i32
    return %arg2, %arg1 : i32, i32
  }
  func.func @transform_4(%arg0: i32, %arg1: i32, %arg2: i32) -> (i32, i32) {
    %c0_i32 = arith.constant 0 : i32
    %c0_i32_0 = arith.constant 0 : i32
    return %c0_i32, %arg1 : i32, i32
  }
  func.func @transform_5(%arg0: i32, %arg1: i32, %arg2: i32) -> (i32, i32) {
    %c0_i32 = arith.constant 0 : i32
    return %arg0, %arg1 : i32, i32
  }
}

module attributes {stable_mosaic.version = 11 : i64} {
  func.func @_dwconv_kernel(%arg0: i32, %arg1: memref<1x8x128xf32, #tpu.memory_space<vmem>>, %arg2: memref<12x128xf32, #tpu.memory_space<vmem>>, %arg3: memref<4x128xf32, #tpu.memory_space<vmem>>, %arg4: memref<1x8x512xbf16, #tpu.memory_space<vmem>>, %arg5: memref<10x128xf32, #tpu.memory_space<vmem>>) attributes {dimension_semantics = [#tpu.dimension_semantics<parallel>], iteration_bounds = array<i64: 2>, scalar_prefetch = 0 : i64, scratch_operands = 1 : i64, tpu.core_type = #tpu.core_type<tc>, window_params = [{transform_indices = @transform_0, window_bounds = array<i64: 1, 8, 128>}, {pipeline_mode = #tpu.pipeline_mode<synchronous>, transform_indices = @transform_1, window_bounds = array<i64: 12, 128>}, {pipeline_mode = #tpu.pipeline_mode<synchronous>, transform_indices = @transform_2, window_bounds = array<i64: 4, 128>}, {transform_indices = @transform_3, window_bounds = array<i64: 1, 8, 512>}]} {
    %cst = arith.constant 0.000000e+00 : f32
    %0 = vector.broadcast %cst : f32 to vector<10x128xf32>
    %c0 = arith.constant 0 : index
    %c0_0 = arith.constant 0 : index
    %1 = vector.load %arg5[%c0, %c0_0] : memref<10x128xf32, #tpu.memory_space<vmem>>, vector<10x128xf32>
    tpu.vector_store %arg5[%c0, %c0_0], %0 {strides = array<i32>} : memref<10x128xf32, #tpu.memory_space<vmem>>, vector<10x128xf32>,
    %c0_1 = arith.constant 0 : index
    %c0_2 = arith.constant 0 : index
    %c0_3 = arith.constant 0 : index
    %2 = vector.load %arg1[%c0_1, %c0_2, %c0_3] : memref<1x8x128xf32, #tpu.memory_space<vmem>>, vector<1x8x128xf32>
    %3 = vector.shape_cast %2 : vector<1x8x128xf32> to vector<8x128xf32>
    %c1 = arith.constant 1 : index
    %c0_4 = arith.constant 0 : index
    %4 = vector.load %arg5[%c1, %c0_4] : memref<10x128xf32, #tpu.memory_space<vmem>>, vector<8x128xf32>
    tpu.vector_store %arg5[%c1, %c0_4], %3 {strides = array<i32>} : memref<10x128xf32, #tpu.memory_space<vmem>>, vector<8x128xf32>,
    %cst_5 = arith.constant 0.000000e+00 : f32
    %5 = vector.broadcast %cst_5 : f32 to vector<8x128xf32>
    %c0_6 = arith.constant 0 : index
    %c0_7 = arith.constant 0 : index
    %6 = vector.load %arg5[%c0_6, %c0_7] : memref<10x128xf32, #tpu.memory_space<vmem>>, vector<8x128xf32>
    %c0_8 = arith.constant 0 : index
    %c0_9 = arith.constant 0 : index
    %7 = vector.load %arg2[%c0_8, %c0_9] : memref<12x128xf32, #tpu.memory_space<vmem>>, vector<1x128xf32>
    %8 = vector.broadcast %7 : vector<1x128xf32> to vector<8x128xf32>
    %9 = arith.mulf %6, %8 : vector<8x128xf32>
    %10 = arith.addf %5, %9 : vector<8x128xf32>
    %c1_10 = arith.constant 1 : index
    %c0_11 = arith.constant 0 : index
    %11 = vector.load %arg5[%c1_10, %c0_11] : memref<10x128xf32, #tpu.memory_space<vmem>>, vector<8x128xf32>
    %c1_12 = arith.constant 1 : index
    %c0_13 = arith.constant 0 : index
    %12 = vector.load %arg2[%c1_12, %c0_13] : memref<12x128xf32, #tpu.memory_space<vmem>>, vector<1x128xf32>
    %13 = vector.broadcast %12 : vector<1x128xf32> to vector<8x128xf32>
    %14 = arith.mulf %11, %13 : vector<8x128xf32>
    %15 = arith.addf %10, %14 : vector<8x128xf32>
    %c2 = arith.constant 2 : index
    %c0_14 = arith.constant 0 : index
    %16 = vector.load %arg5[%c2, %c0_14] : memref<10x128xf32, #tpu.memory_space<vmem>>, vector<8x128xf32>
    %c2_15 = arith.constant 2 : index
    %c0_16 = arith.constant 0 : index
    %17 = vector.load %arg2[%c2_15, %c0_16] : memref<12x128xf32, #tpu.memory_space<vmem>>, vector<1x128xf32>
    %18 = vector.broadcast %17 : vector<1x128xf32> to vector<8x128xf32>
    %19 = arith.mulf %16, %18 : vector<8x128xf32>
    %20 = arith.addf %15, %19 : vector<8x128xf32>
    %c0_17 = arith.constant 0 : index
    %c0_18 = arith.constant 0 : index
    %21 = vector.load %arg3[%c0_17, %c0_18] : memref<4x128xf32, #tpu.memory_space<vmem>>, vector<1x128xf32>
    %22 = vector.broadcast %21 : vector<1x128xf32> to vector<8x128xf32>
    %23 = arith.addf %20, %22 : vector<8x128xf32>
    %cst_19 = arith.constant 5.000000e-01 : f32
    %24 = vector.broadcast %cst_19 : f32 to vector<8x128xf32>
    %25 = arith.mulf %24, %23 : vector<8x128xf32>
    %cst_20 = arith.constant 4.471500e-02 : f32
    %26 = vector.broadcast %cst_20 : f32 to vector<8x128xf32>
    %27 = arith.mulf %26, %23 : vector<8x128xf32>
    %28 = arith.mulf %27, %23 : vector<8x128xf32>
    %29 = arith.mulf %28, %23 : vector<8x128xf32>
    %30 = arith.addf %23, %29 : vector<8x128xf32>
    %cst_21 = arith.constant 0.797884583 : f32
    %31 = vector.broadcast %cst_21 : f32 to vector<8x128xf32>
    %32 = arith.mulf %31, %30 : vector<8x128xf32>
    %33 = math.tanh %32 : vector<8x128xf32>
    %cst_22 = arith.constant 1.000000e+00 : f32
    %34 = vector.broadcast %cst_22 : f32 to vector<8x128xf32>
    %35 = arith.addf %34, %33 : vector<8x128xf32>
    %36 = arith.mulf %25, %35 : vector<8x128xf32>
    %37 = arith.truncf %36 : vector<8x128xf32> to vector<8x128xbf16>
    %c0_23 = arith.constant 0 : index
    %c0_24 = arith.constant 0 : index
    %c0_25 = arith.constant 0 : index
    %38 = vector.load %arg4[%c0_23, %c0_24, %c0_25] : memref<1x8x512xbf16, #tpu.memory_space<vmem>>, vector<1x8x128xbf16>
    %39 = vector.shape_cast %38 : vector<1x8x128xbf16> to vector<8x128xbf16>
    %40 = vector.shape_cast %37 : vector<8x128xbf16> to vector<1x8x128xbf16>
    tpu.vector_store %arg4[%c0_23, %c0_24, %c0_25], %40 {strides = array<i32>} : memref<1x8x512xbf16, #tpu.memory_space<vmem>>, vector<1x8x128xbf16>,
    %cst_26 = arith.constant 0.000000e+00 : f32
    %41 = vector.broadcast %cst_26 : f32 to vector<8x128xf32>
    %c0_27 = arith.constant 0 : index
    %c0_28 = arith.constant 0 : index
    %42 = vector.load %arg5[%c0_27, %c0_28] : memref<10x128xf32, #tpu.memory_space<vmem>>, vector<8x128xf32>
    %c3 = arith.constant 3 : index
    %c0_29 = arith.constant 0 : index
    %43 = vector.load %arg2[%c3, %c0_29] : memref<12x128xf32, #tpu.memory_space<vmem>>, vector<1x128xf32>
    %44 = vector.broadcast %43 : vector<1x128xf32> to vector<8x128xf32>
    %45 = arith.mulf %42, %44 : vector<8x128xf32>
    %46 = arith.addf %41, %45 : vector<8x128xf32>
    %c1_30 = arith.constant 1 : index
    %c0_31 = arith.constant 0 : index
    %47 = vector.load %arg5[%c1_30, %c0_31] : memref<10x128xf32, #tpu.memory_space<vmem>>, vector<8x128xf32>
    %c4 = arith.constant 4 : index
    %c0_32 = arith.constant 0 : index
    %48 = vector.load %arg2[%c4, %c0_32] : memref<12x128xf32, #tpu.memory_space<vmem>>, vector<1x128xf32>
    %49 = vector.broadcast %48 : vector<1x128xf32> to vector<8x128xf32>
    %50 = arith.mulf %47, %49 : vector<8x128xf32>
    %51 = arith.addf %46, %50 : vector<8x128xf32>
    %c2_33 = arith.constant 2 : index
    %c0_34 = arith.constant 0 : index
    %52 = vector.load %arg5[%c2_33, %c0_34] : memref<10x128xf32, #tpu.memory_space<vmem>>, vector<8x128xf32>
    %c5 = arith.constant 5 : index
    %c0_35 = arith.constant 0 : index
    %53 = vector.load %arg2[%c5, %c0_35] : memref<12x128xf32, #tpu.memory_space<vmem>>, vector<1x128xf32>
    %54 = vector.broadcast %53 : vector<1x128xf32> to vector<8x128xf32>
    %55 = arith.mulf %52, %54 : vector<8x128xf32>
    %56 = arith.addf %51, %55 : vector<8x128xf32>
    %c1_36 = arith.constant 1 : index
    %c0_37 = arith.constant 0 : index
    %57 = vector.load %arg3[%c1_36, %c0_37] : memref<4x128xf32, #tpu.memory_space<vmem>>, vector<1x128xf32>
    %58 = vector.broadcast %57 : vector<1x128xf32> to vector<8x128xf32>
    %59 = arith.addf %56, %58 : vector<8x128xf32>
    %cst_38 = arith.constant 5.000000e-01 : f32
    %60 = vector.broadcast %cst_38 : f32 to vector<8x128xf32>
    %61 = arith.mulf %60, %59 : vector<8x128xf32>
    %cst_39 = arith.constant 4.471500e-02 : f32
    %62 = vector.broadcast %cst_39 : f32 to vector<8x128xf32>
    %63 = arith.mulf %62, %59 : vector<8x128xf32>
    %64 = arith.mulf %63, %59 : vector<8x128xf32>
    %65 = arith.mulf %64, %59 : vector<8x128xf32>
    %66 = arith.addf %59, %65 : vector<8x128xf32>
    %cst_40 = arith.constant 0.797884583 : f32
    %67 = vector.broadcast %cst_40 : f32 to vector<8x128xf32>
    %68 = arith.mulf %67, %66 : vector<8x128xf32>
    %69 = math.tanh %68 : vector<8x128xf32>
    %cst_41 = arith.constant 1.000000e+00 : f32
    %70 = vector.broadcast %cst_41 : f32 to vector<8x128xf32>
    %71 = arith.addf %70, %69 : vector<8x128xf32>
    %72 = arith.mulf %61, %71 : vector<8x128xf32>
    %73 = arith.truncf %72 : vector<8x128xf32> to vector<8x128xbf16>
    %c0_42 = arith.constant 0 : index
    %c0_43 = arith.constant 0 : index
    %c128 = arith.constant 128 : index
    %74 = vector.load %arg4[%c0_42, %c0_43, %c128] : memref<1x8x512xbf16, #tpu.memory_space<vmem>>, vector<1x8x128xbf16>
    %75 = vector.shape_cast %74 : vector<1x8x128xbf16> to vector<8x128xbf16>
    %76 = vector.shape_cast %73 : vector<8x128xbf16> to vector<1x8x128xbf16>
    tpu.vector_store %arg4[%c0_42, %c0_43, %c128], %76 {strides = array<i32>} : memref<1x8x512xbf16, #tpu.memory_space<vmem>>, vector<1x8x128xbf16>,
    %cst_44 = arith.constant 0.000000e+00 : f32
    %77 = vector.broadcast %cst_44 : f32 to vector<8x128xf32>
    %c0_45 = arith.constant 0 : index
    %c0_46 = arith.constant 0 : index
    %78 = vector.load %arg5[%c0_45, %c0_46] : memref<10x128xf32, #tpu.memory_space<vmem>>, vector<8x128xf32>
    %c6 = arith.constant 6 : index
    %c0_47 = arith.constant 0 : index
    %79 = vector.load %arg2[%c6, %c0_47] : memref<12x128xf32, #tpu.memory_space<vmem>>, vector<1x128xf32>
    %80 = vector.broadcast %79 : vector<1x128xf32> to vector<8x128xf32>
    %81 = arith.mulf %78, %80 : vector<8x128xf32>
    %82 = arith.addf %77, %81 : vector<8x128xf32>
    %c1_48 = arith.constant 1 : index
    %c0_49 = arith.constant 0 : index
    %83 = vector.load %arg5[%c1_48, %c0_49] : memref<10x128xf32, #tpu.memory_space<vmem>>, vector<8x128xf32>
    %c7 = arith.constant 7 : index
    %c0_50 = arith.constant 0 : index
    %84 = vector.load %arg2[%c7, %c0_50] : memref<12x128xf32, #tpu.memory_space<vmem>>, vector<1x128xf32>
    %85 = vector.broadcast %84 : vector<1x128xf32> to vector<8x128xf32>
    %86 = arith.mulf %83, %85 : vector<8x128xf32>
    %87 = arith.addf %82, %86 : vector<8x128xf32>
    %c2_51 = arith.constant 2 : index
    %c0_52 = arith.constant 0 : index
    %88 = vector.load %arg5[%c2_51, %c0_52] : memref<10x128xf32, #tpu.memory_space<vmem>>, vector<8x128xf32>
    %c8 = arith.constant 8 : index
    %c0_53 = arith.constant 0 : index
    %89 = vector.load %arg2[%c8, %c0_53] : memref<12x128xf32, #tpu.memory_space<vmem>>, vector<1x128xf32>
    %90 = vector.broadcast %89 : vector<1x128xf32> to vector<8x128xf32>
    %91 = arith.mulf %88, %90 : vector<8x128xf32>
    %92 = arith.addf %87, %91 : vector<8x128xf32>
    %c2_54 = arith.constant 2 : index
    %c0_55 = arith.constant 0 : index
    %93 = vector.load %arg3[%c2_54, %c0_55] : memref<4x128xf32, #tpu.memory_space<vmem>>, vector<1x128xf32>
    %94 = vector.broadcast %93 : vector<1x128xf32> to vector<8x128xf32>
    %95 = arith.addf %92, %94 : vector<8x128xf32>
    %cst_56 = arith.constant 5.000000e-01 : f32
    %96 = vector.broadcast %cst_56 : f32 to vector<8x128xf32>
    %97 = arith.mulf %96, %95 : vector<8x128xf32>
    %cst_57 = arith.constant 4.471500e-02 : f32
    %98 = vector.broadcast %cst_57 : f32 to vector<8x128xf32>
    %99 = arith.mulf %98, %95 : vector<8x128xf32>
    %100 = arith.mulf %99, %95 : vector<8x128xf32>
    %101 = arith.mulf %100, %95 : vector<8x128xf32>
    %102 = arith.addf %95, %101 : vector<8x128xf32>
    %cst_58 = arith.constant 0.797884583 : f32
    %103 = vector.broadcast %cst_58 : f32 to vector<8x128xf32>
    %104 = arith.mulf %103, %102 : vector<8x128xf32>
    %105 = math.tanh %104 : vector<8x128xf32>
    %cst_59 = arith.constant 1.000000e+00 : f32
    %106 = vector.broadcast %cst_59 : f32 to vector<8x128xf32>
    %107 = arith.addf %106, %105 : vector<8x128xf32>
    %108 = arith.mulf %97, %107 : vector<8x128xf32>
    %109 = arith.truncf %108 : vector<8x128xf32> to vector<8x128xbf16>
    %c0_60 = arith.constant 0 : index
    %c0_61 = arith.constant 0 : index
    %c256 = arith.constant 256 : index
    %110 = vector.load %arg4[%c0_60, %c0_61, %c256] : memref<1x8x512xbf16, #tpu.memory_space<vmem>>, vector<1x8x128xbf16>
    %111 = vector.shape_cast %110 : vector<1x8x128xbf16> to vector<8x128xbf16>
    %112 = vector.shape_cast %109 : vector<8x128xbf16> to vector<1x8x128xbf16>
    tpu.vector_store %arg4[%c0_60, %c0_61, %c256], %112 {strides = array<i32>} : memref<1x8x512xbf16, #tpu.memory_space<vmem>>, vector<1x8x128xbf16>,
    %cst_62 = arith.constant 0.000000e+00 : f32
    %113 = vector.broadcast %cst_62 : f32 to vector<8x128xf32>
    %c0_63 = arith.constant 0 : index
    %c0_64 = arith.constant 0 : index
    %114 = vector.load %arg5[%c0_63, %c0_64] : memref<10x128xf32, #tpu.memory_space<vmem>>, vector<8x128xf32>
    %c9 = arith.constant 9 : index
    %c0_65 = arith.constant 0 : index
    %115 = vector.load %arg2[%c9, %c0_65] : memref<12x128xf32, #tpu.memory_space<vmem>>, vector<1x128xf32>
    %116 = vector.broadcast %115 : vector<1x128xf32> to vector<8x128xf32>
    %117 = arith.mulf %114, %116 : vector<8x128xf32>
    %118 = arith.addf %113, %117 : vector<8x128xf32>
    %c1_66 = arith.constant 1 : index
    %c0_67 = arith.constant 0 : index
    %119 = vector.load %arg5[%c1_66, %c0_67] : memref<10x128xf32, #tpu.memory_space<vmem>>, vector<8x128xf32>
    %c10 = arith.constant 10 : index
    %c0_68 = arith.constant 0 : index
    %120 = vector.load %arg2[%c10, %c0_68] : memref<12x128xf32, #tpu.memory_space<vmem>>, vector<1x128xf32>
    %121 = vector.broadcast %120 : vector<1x128xf32> to vector<8x128xf32>
    %122 = arith.mulf %119, %121 : vector<8x128xf32>
    %123 = arith.addf %118, %122 : vector<8x128xf32>
    %c2_69 = arith.constant 2 : index
    %c0_70 = arith.constant 0 : index
    %124 = vector.load %arg5[%c2_69, %c0_70] : memref<10x128xf32, #tpu.memory_space<vmem>>, vector<8x128xf32>
    %c11 = arith.constant 11 : index
    %c0_71 = arith.constant 0 : index
    %125 = vector.load %arg2[%c11, %c0_71] : memref<12x128xf32, #tpu.memory_space<vmem>>, vector<1x128xf32>
    %126 = vector.broadcast %125 : vector<1x128xf32> to vector<8x128xf32>
    %127 = arith.mulf %124, %126 : vector<8x128xf32>
    %128 = arith.addf %123, %127 : vector<8x128xf32>
    %c3_72 = arith.constant 3 : index
    %c0_73 = arith.constant 0 : index
    %129 = vector.load %arg3[%c3_72, %c0_73] : memref<4x128xf32, #tpu.memory_space<vmem>>, vector<1x128xf32>
    %130 = vector.broadcast %129 : vector<1x128xf32> to vector<8x128xf32>
    %131 = arith.addf %128, %130 : vector<8x128xf32>
    %cst_74 = arith.constant 5.000000e-01 : f32
    %132 = vector.broadcast %cst_74 : f32 to vector<8x128xf32>
    %133 = arith.mulf %132, %131 : vector<8x128xf32>
    %cst_75 = arith.constant 4.471500e-02 : f32
    %134 = vector.broadcast %cst_75 : f32 to vector<8x128xf32>
    %135 = arith.mulf %134, %131 : vector<8x128xf32>
    %136 = arith.mulf %135, %131 : vector<8x128xf32>
    %137 = arith.mulf %136, %131 : vector<8x128xf32>
    %138 = arith.addf %131, %137 : vector<8x128xf32>
    %cst_76 = arith.constant 0.797884583 : f32
    %139 = vector.broadcast %cst_76 : f32 to vector<8x128xf32>
    %140 = arith.mulf %139, %138 : vector<8x128xf32>
    %141 = math.tanh %140 : vector<8x128xf32>
    %cst_77 = arith.constant 1.000000e+00 : f32
    %142 = vector.broadcast %cst_77 : f32 to vector<8x128xf32>
    %143 = arith.addf %142, %141 : vector<8x128xf32>
    %144 = arith.mulf %133, %143 : vector<8x128xf32>
    %145 = arith.truncf %144 : vector<8x128xf32> to vector<8x128xbf16>
    %c0_78 = arith.constant 0 : index
    %c0_79 = arith.constant 0 : index
    %c384 = arith.constant 384 : index
    %146 = vector.load %arg4[%c0_78, %c0_79, %c384] : memref<1x8x512xbf16, #tpu.memory_space<vmem>>, vector<1x8x128xbf16>
    %147 = vector.shape_cast %146 : vector<1x8x128xbf16> to vector<8x128xbf16>
    %148 = vector.shape_cast %145 : vector<8x128xbf16> to vector<1x8x128xbf16>
    tpu.vector_store %arg4[%c0_78, %c0_79, %c384], %148 {strides = array<i32>} : memref<1x8x512xbf16, #tpu.memory_space<vmem>>, vector<1x8x128xbf16>,
    return
  }
  func.func @transform_0(%arg0: i32) -> (i32, i32, i32) {
    %c0_i32 = arith.constant 0 : i32
    %c0_i32_0 = arith.constant 0 : i32
    %c0_i32_1 = arith.constant 0 : i32
    return %arg0, %c0_i32, %c0_i32_0 : i32, i32, i32
  }
  func.func @transform_1(%arg0: i32) -> (i32, i32) {
    %c0_i32 = arith.constant 0 : i32
    %c0_i32_0 = arith.constant 0 : i32
    %c0_i32_1 = arith.constant 0 : i32
    return %c0_i32, %c0_i32_0 : i32, i32
  }
  func.func @transform_2(%arg0: i32) -> (i32, i32) {
    %c0_i32 = arith.constant 0 : i32
    %c0_i32_0 = arith.constant 0 : i32
    %c0_i32_1 = arith.constant 0 : i32
    return %c0_i32, %c0_i32_0 : i32, i32
  }
  func.func @transform_3(%arg0: i32) -> (i32, i32, i32) {
    %c0_i32 = arith.constant 0 : i32
    %c0_i32_0 = arith.constant 0 : i32
    %c0_i32_1 = arith.constant 0 : i32
    return %arg0, %c0_i32, %c0_i32_0 : i32, i32, i32
  }
}

module attributes {stable_mosaic.version = 11 : i64} {
  func.func @_mm_kernel(%arg0: i32, %arg1: i32, %arg2: i32, %arg3: memref<16x512xbf16, #tpu.memory_space<vmem>>, %arg4: memref<512x128xbf16, #tpu.memory_space<vmem>>, %arg5: memref<1x128xf32, #tpu.memory_space<vmem>>, %arg6: memref<16x128xf32, #tpu.memory_space<vmem>>, %arg7: memref<16x128xf32, #tpu.memory_space<vmem>>) attributes {dimension_semantics = [#tpu.dimension_semantics<parallel>, #tpu.dimension_semantics<parallel>, #tpu.dimension_semantics<arbitrary>], iteration_bounds = array<i64: 1, 1, 1>, scalar_prefetch = 0 : i64, scratch_operands = 1 : i64, tpu.core_type = #tpu.core_type<tc>, window_params = [{transform_indices = @transform_0, window_bounds = array<i64: 16, 512>}, {transform_indices = @transform_1, window_bounds = array<i64: 512, 128>}, {transform_indices = @transform_2, window_bounds = array<i64: 1, 128>}, {transform_indices = @transform_3, window_bounds = array<i64: 16, 128>}]} {
    %c0_i32 = arith.constant 0 : i32
    %0 = arith.cmpi eq, %arg2, %c0_i32 : i32
    %1 = arith.extui %0 : i1 to i32
    %c0_i32_0 = arith.constant 0 : i32
    %2 = arith.cmpi ne, %1, %c0_i32_0 : i32
    scf.if %2 {
      %cst_10 = arith.constant 0.000000e+00 : f32
      %12 = vector.broadcast %cst_10 : f32 to vector<16x128xf32>
      %c0_11 = arith.constant 0 : index
      %c0_12 = arith.constant 0 : index
      %13 = vector.load %arg7[%c0_11, %c0_12] : memref<16x128xf32, #tpu.memory_space<vmem>>, vector<16x128xf32>
      tpu.vector_store %arg7[%c0_11, %c0_12], %12 {strides = array<i32>} : memref<16x128xf32, #tpu.memory_space<vmem>>, vector<16x128xf32>,
    } else {
    }
    %c0 = arith.constant 0 : index
    %c0_1 = arith.constant 0 : index
    %3 = vector.load %arg3[%c0, %c0_1] : memref<16x512xbf16, #tpu.memory_space<vmem>>, vector<16x512xbf16>
    %c0_2 = arith.constant 0 : index
    %c0_3 = arith.constant 0 : index
    %4 = vector.load %arg7[%c0_2, %c0_3] : memref<16x128xf32, #tpu.memory_space<vmem>>, vector<16x128xf32>
    %c0_4 = arith.constant 0 : index
    %c0_5 = arith.constant 0 : index
    %5 = vector.load %arg4[%c0_4, %c0_5] : memref<512x128xbf16, #tpu.memory_space<vmem>>, vector<512x128xbf16>
    %cst = arith.constant dense<0.000000e+00> : vector<16x128xf32>
    %6 = tpu.matmul %3, %5, %cst {dimension_numbers = #tpu.dot_dimension_numbers<[1], [0], [0], [1], [0, 0, 1, 1], [], []>} : vector<16x512xbf16>, vector<512x128xbf16>, vector<16x128xf32> -> vector<16x128xf32>
    %7 = arith.addf %4, %6 : vector<16x128xf32>
    %c0_6 = arith.constant 0 : index
    %c0_7 = arith.constant 0 : index
    %8 = vector.load %arg7[%c0_6, %c0_7] : memref<16x128xf32, #tpu.memory_space<vmem>>, vector<16x128xf32>
    tpu.vector_store %arg7[%c0_6, %c0_7], %7 {strides = array<i32>} : memref<16x128xf32, #tpu.memory_space<vmem>>, vector<16x128xf32>,
    %c0_i32_8 = arith.constant 0 : i32
    %9 = arith.cmpi eq, %arg2, %c0_i32_8 : i32
    %10 = arith.extui %9 : i1 to i32
    %c0_i32_9 = arith.constant 0 : i32
    %11 = arith.cmpi ne, %10, %c0_i32_9 : i32
    scf.if %11 {
      %c0_10 = arith.constant 0 : index
      %c0_11 = arith.constant 0 : index
      %12 = vector.load %arg7[%c0_10, %c0_11] : memref<16x128xf32, #tpu.memory_space<vmem>>, vector<16x128xf32>
      %c0_12 = arith.constant 0 : index
      %c0_13 = arith.constant 0 : index
      %13 = vector.load %arg5[%c0_12, %c0_13] : memref<1x128xf32, #tpu.memory_space<vmem>>, vector<1x128xf32>
      %14 = vector.broadcast %13 : vector<1x128xf32> to vector<16x128xf32>
      %15 = arith.addf %12, %14 : vector<16x128xf32>
      %16 = arith.negf %15 : vector<16x128xf32>
      %17 = math.exp %16 : vector<16x128xf32>
      %cst_14 = arith.constant 1.000000e+00 : f32
      %18 = vector.broadcast %cst_14 : f32 to vector<16x128xf32>
      %19 = arith.addf %18, %17 : vector<16x128xf32>
      %20 = arith.divf %18, %19 : vector<16x128xf32>
      %c0_15 = arith.constant 0 : index
      %c0_16 = arith.constant 0 : index
      %21 = vector.load %arg6[%c0_15, %c0_16] : memref<16x128xf32, #tpu.memory_space<vmem>>, vector<16x128xf32>
      tpu.vector_store %arg6[%c0_15, %c0_16], %20 {strides = array<i32>} : memref<16x128xf32, #tpu.memory_space<vmem>>, vector<16x128xf32>,
    } else {
    }
    return
  }
  func.func @transform_0(%arg0: i32, %arg1: i32, %arg2: i32) -> (i32, i32) {
    %c0_i32 = arith.constant 0 : i32
    return %arg0, %arg2 : i32, i32
  }
  func.func @transform_1(%arg0: i32, %arg1: i32, %arg2: i32) -> (i32, i32) {
    %c0_i32 = arith.constant 0 : i32
    return %arg2, %arg1 : i32, i32
  }
  func.func @transform_2(%arg0: i32, %arg1: i32, %arg2: i32) -> (i32, i32) {
    %c0_i32 = arith.constant 0 : i32
    %c0_i32_0 = arith.constant 0 : i32
    return %c0_i32, %arg1 : i32, i32
  }
  func.func @transform_3(%arg0: i32, %arg1: i32, %arg2: i32) -> (i32, i32) {
    %c0_i32 = arith.constant 0 : i32
    return %arg0, %arg1 : i32, i32
  }
}

module attributes {stable_mosaic.version = 11 : i64} {
  func.func @_mm_kernel(%arg0: i32, %arg1: i32, %arg2: i32, %arg3: memref<16x128xbf16, #tpu.memory_space<vmem>>, %arg4: memref<128x128xbf16, #tpu.memory_space<vmem>>, %arg5: memref<1x128xf32, #tpu.memory_space<vmem>>, %arg6: memref<16x128xf32, #tpu.memory_space<vmem>>, %arg7: memref<16x128xf32, #tpu.memory_space<vmem>>) attributes {dimension_semantics = [#tpu.dimension_semantics<parallel>, #tpu.dimension_semantics<parallel>, #tpu.dimension_semantics<arbitrary>], iteration_bounds = array<i64: 1, 1, 1>, scalar_prefetch = 0 : i64, scratch_operands = 1 : i64, tpu.core_type = #tpu.core_type<tc>, window_params = [{transform_indices = @transform_0, window_bounds = array<i64: 16, 128>}, {transform_indices = @transform_1, window_bounds = array<i64: 128, 128>}, {transform_indices = @transform_2, window_bounds = array<i64: 1, 128>}, {transform_indices = @transform_3, window_bounds = array<i64: 16, 128>}]} {
    %c0_i32 = arith.constant 0 : i32
    %0 = arith.cmpi eq, %arg2, %c0_i32 : i32
    %1 = arith.extui %0 : i1 to i32
    %c0_i32_0 = arith.constant 0 : i32
    %2 = arith.cmpi ne, %1, %c0_i32_0 : i32
    scf.if %2 {
      %cst_10 = arith.constant 0.000000e+00 : f32
      %12 = vector.broadcast %cst_10 : f32 to vector<16x128xf32>
      %c0_11 = arith.constant 0 : index
      %c0_12 = arith.constant 0 : index
      %13 = vector.load %arg7[%c0_11, %c0_12] : memref<16x128xf32, #tpu.memory_space<vmem>>, vector<16x128xf32>
      tpu.vector_store %arg7[%c0_11, %c0_12], %12 {strides = array<i32>} : memref<16x128xf32, #tpu.memory_space<vmem>>, vector<16x128xf32>,
    } else {
    }
    %c0 = arith.constant 0 : index
    %c0_1 = arith.constant 0 : index
    %3 = vector.load %arg3[%c0, %c0_1] : memref<16x128xbf16, #tpu.memory_space<vmem>>, vector<16x128xbf16>
    %c0_2 = arith.constant 0 : index
    %c0_3 = arith.constant 0 : index
    %4 = vector.load %arg7[%c0_2, %c0_3] : memref<16x128xf32, #tpu.memory_space<vmem>>, vector<16x128xf32>
    %c0_4 = arith.constant 0 : index
    %c0_5 = arith.constant 0 : index
    %5 = vector.load %arg4[%c0_4, %c0_5] : memref<128x128xbf16, #tpu.memory_space<vmem>>, vector<128x128xbf16>
    %cst = arith.constant dense<0.000000e+00> : vector<16x128xf32>
    %6 = tpu.matmul %3, %5, %cst {dimension_numbers = #tpu.dot_dimension_numbers<[1], [0], [0], [1], [0, 0, 1, 1], [], []>} : vector<16x128xbf16>, vector<128x128xbf16>, vector<16x128xf32> -> vector<16x128xf32>
    %7 = arith.addf %4, %6 : vector<16x128xf32>
    %c0_6 = arith.constant 0 : index
    %c0_7 = arith.constant 0 : index
    %8 = vector.load %arg7[%c0_6, %c0_7] : memref<16x128xf32, #tpu.memory_space<vmem>>, vector<16x128xf32>
    tpu.vector_store %arg7[%c0_6, %c0_7], %7 {strides = array<i32>} : memref<16x128xf32, #tpu.memory_space<vmem>>, vector<16x128xf32>,
    %c0_i32_8 = arith.constant 0 : i32
    %9 = arith.cmpi eq, %arg2, %c0_i32_8 : i32
    %10 = arith.extui %9 : i1 to i32
    %c0_i32_9 = arith.constant 0 : i32
    %11 = arith.cmpi ne, %10, %c0_i32_9 : i32
    scf.if %11 {
      %c0_10 = arith.constant 0 : index
      %c0_11 = arith.constant 0 : index
      %12 = vector.load %arg7[%c0_10, %c0_11] : memref<16x128xf32, #tpu.memory_space<vmem>>, vector<16x128xf32>
      %c0_12 = arith.constant 0 : index
      %c0_13 = arith.constant 0 : index
      %13 = vector.load %arg5[%c0_12, %c0_13] : memref<1x128xf32, #tpu.memory_space<vmem>>, vector<1x128xf32>
      %14 = vector.broadcast %13 : vector<1x128xf32> to vector<16x128xf32>
      %15 = arith.addf %12, %14 : vector<16x128xf32>
      %c0_14 = arith.constant 0 : index
      %c0_15 = arith.constant 0 : index
      %16 = vector.load %arg6[%c0_14, %c0_15] : memref<16x128xf32, #tpu.memory_space<vmem>>, vector<16x128xf32>
      tpu.vector_store %arg6[%c0_14, %c0_15], %15 {strides = array<i32>} : memref<16x128xf32, #tpu.memory_space<vmem>>, vector<16x128xf32>,
    } else {
    }
    return
  }
  func.func @transform_0(%arg0: i32, %arg1: i32, %arg2: i32) -> (i32, i32) {
    %c0_i32 = arith.constant 0 : i32
    return %arg0, %arg2 : i32, i32
  }
  func.func @transform_1(%arg0: i32, %arg1: i32, %arg2: i32) -> (i32, i32) {
    %c0_i32 = arith.constant 0 : i32
    return %arg2, %arg1 : i32, i32
  }
  func.func @transform_2(%arg0: i32, %arg1: i32, %arg2: i32) -> (i32, i32) {
    %c0_i32 = arith.constant 0 : i32
    %c0_i32_0 = arith.constant 0 : i32
    return %c0_i32, %arg1 : i32, i32
  }
  func.func @transform_3(%arg0: i32, %arg1: i32, %arg2: i32) -> (i32, i32) {
    %c0_i32 = arith.constant 0 : i32
    return %arg0, %arg1 : i32, i32
  }
}

module attributes {stable_mosaic.version = 11 : i64} {
  func.func @_dcattn_kernel(%arg0: i32, %arg1: memref<1x8x128xbf16, #tpu.memory_space<vmem>>, %arg2: memref<1x8x128xbf16, #tpu.memory_space<vmem>>, %arg3: memref<1x8x128xbf16, #tpu.memory_space<vmem>>, %arg4: memref<1x8x4xf32, #tpu.memory_space<vmem>>, %arg5: memref<1x4x8xf32, #tpu.memory_space<vmem>>, %arg6: memref<1x8x128xbf16, #tpu.memory_space<vmem>>) attributes {dimension_semantics = [#tpu.dimension_semantics<parallel>], iteration_bounds = array<i64: 2>, scalar_prefetch = 0 : i64, scratch_operands = 0 : i64, tpu.core_type = #tpu.core_type<tc>, window_params = [{transform_indices = @transform_0, window_bounds = array<i64: 1, 8, 128>}, {transform_indices = @transform_1, window_bounds = array<i64: 1, 8, 128>}, {transform_indices = @transform_2, window_bounds = array<i64: 1, 8, 128>}, {transform_indices = @transform_3, window_bounds = array<i64: 1, 8, 4>}, {transform_indices = @transform_4, window_bounds = array<i64: 1, 4, 8>}, {transform_indices = @transform_5, window_bounds = array<i64: 1, 8, 128>}]} {
    %c0 = arith.constant 0 : index
    %c0_0 = arith.constant 0 : index
    %c0_1 = arith.constant 0 : index
    %0 = vector.load %arg1[%c0, %c0_0, %c0_1] : memref<1x8x128xbf16, #tpu.memory_space<vmem>>, vector<1x8x128xbf16>
    %1 = vector.shape_cast %0 : vector<1x8x128xbf16> to vector<8x128xbf16>
    %c0_2 = arith.constant 0 : index
    %c0_3 = arith.constant 0 : index
    %c0_4 = arith.constant 0 : index
    %2 = vector.load %arg2[%c0_2, %c0_3, %c0_4] : memref<1x8x128xbf16, #tpu.memory_space<vmem>>, vector<1x8x128xbf16>
    %3 = vector.shape_cast %2 : vector<1x8x128xbf16> to vector<8x128xbf16>
    %c0_5 = arith.constant 0 : index
    %c0_6 = arith.constant 0 : index
    %c0_7 = arith.constant 0 : index
    %4 = vector.load %arg3[%c0_5, %c0_6, %c0_7] : memref<1x8x128xbf16, #tpu.memory_space<vmem>>, vector<1x8x128xbf16>
    %5 = vector.shape_cast %4 : vector<1x8x128xbf16> to vector<8x128xbf16>
    %c0_8 = arith.constant 0 : index
    %c0_9 = arith.constant 0 : index
    %c0_10 = arith.constant 0 : index
    %6 = vector.load %arg4[%c0_8, %c0_9, %c0_10] : memref<1x8x4xf32, #tpu.memory_space<vmem>>, vector<1x8x4xf32>
    %7 = vector.shape_cast %6 : vector<1x8x4xf32> to vector<8x4xf32>
    %c0_11 = arith.constant 0 : index
    %c0_12 = arith.constant 0 : index
    %c0_13 = arith.constant 0 : index
    %8 = vector.load %arg5[%c0_11, %c0_12, %c0_13] : memref<1x4x8xf32, #tpu.memory_space<vmem>>, vector<1x4x8xf32>
    %9 = vector.shape_cast %8 : vector<1x4x8xf32> to vector<4x8xf32>
    %10 = vector.extract_strided_slice %1 {offsets = [0, 0], sizes = [8, 32], strides = [1, 1]} : vector<8x128xbf16> to vector<8x32xbf16>
    %11 = vector.extract_strided_slice %3 {offsets = [0, 0], sizes = [8, 32], strides = [1, 1]} : vector<8x128xbf16> to vector<8x32xbf16>
    "tpu.trace_start"() <{level = 10 : i32, message = "qd,kd->qk"}> : () -> ()
    %cst = arith.constant dense<0.000000e+00> : vector<8x8xf32>
    %12 = tpu.matmul %10, %11, %cst {dimension_numbers = #tpu.dot_dimension_numbers<[1], [1], [0], [0], [0, 0, 1, 0], [], []>} : vector<8x32xbf16>, vector<8x32xbf16>, vector<8x8xf32> -> vector<8x8xf32>
    "tpu.trace_stop"() : () -> ()
    %13 = vector.extract_strided_slice %7 {offsets = [0, 0], sizes = [8, 1], strides = [1, 1]} : vector<8x4xf32> to vector<8x1xf32>
    %cst_14 = arith.constant 0.176776692 : f32
    %14 = vector.broadcast %cst_14 : f32 to vector<8x1xf32>
    %15 = arith.mulf %13, %14 : vector<8x1xf32>
    %16 = vector.broadcast %15 : vector<8x1xf32> to vector<8x8xf32>
    %17 = arith.mulf %12, %16 : vector<8x8xf32>
    %18 = vector.extract_strided_slice %9 {offsets = [0, 0], sizes = [1, 8], strides = [1, 1]} : vector<4x8xf32> to vector<1x8xf32>
    %19 = vector.broadcast %18 : vector<1x8xf32> to vector<8x8xf32>
    %20 = arith.addf %17, %19 : vector<8x8xf32>
    %cst_15 = arith.constant dense<0xFF800000> : vector<8xf32>
    %21 = vector.multi_reduction <maximumf>, %20, %cst_15 [1] : vector<8x8xf32> to vector<8xf32>
    %22 = vector.shape_cast %21 : vector<8xf32> to vector<8x1xf32>
    %23 = vector.broadcast %22 : vector<8x1xf32> to vector<8x8xf32>
    %24 = arith.subf %20, %23 : vector<8x8xf32>
    %25 = math.exp %24 : vector<8x8xf32>
    %cst_16 = arith.constant dense<0.000000e+00> : vector<8xf32>
    %26 = vector.multi_reduction <add>, %25, %cst_16 [1] : vector<8x8xf32> to vector<8xf32>
    %27 = vector.shape_cast %26 : vector<8xf32> to vector<8x1xf32>
    %28 = tpu.reciprocal %27 {approx = true} : vector<8x1xf32> -> vector<8x1xf32>
    %29 = vector.broadcast %28 : vector<8x1xf32> to vector<8x8xf32>
    %30 = arith.mulf %25, %29 : vector<8x8xf32>
    %31 = arith.truncf %30 : vector<8x8xf32> to vector<8x8xbf16>
    %32 = vector.extract_strided_slice %5 {offsets = [0, 0], sizes = [8, 32], strides = [1, 1]} : vector<8x128xbf16> to vector<8x32xbf16>
    %cst_17 = arith.constant dense<0.000000e+00> : vector<8x32xf32>
    %33 = tpu.matmul %31, %32, %cst_17 {dimension_numbers = #tpu.dot_dimension_numbers<[1], [0], [0], [1], [0, 0, 1, 1], [], []>} : vector<8x8xbf16>, vector<8x32xbf16>, vector<8x32xf32> -> vector<8x32xf32>
    %34 = vector.extract_strided_slice %1 {offsets = [0, 32], sizes = [8, 32], strides = [1, 1]} : vector<8x128xbf16> to vector<8x32xbf16>
    %35 = vector.extract_strided_slice %3 {offsets = [0, 32], sizes = [8, 32], strides = [1, 1]} : vector<8x128xbf16> to vector<8x32xbf16>
    "tpu.trace_start"() <{level = 10 : i32, message = "qd,kd->qk"}> : () -> ()
    %cst_18 = arith.constant dense<0.000000e+00> : vector<8x8xf32>
    %36 = tpu.matmul %34, %35, %cst_18 {dimension_numbers = #tpu.dot_dimension_numbers<[1], [1], [0], [0], [0, 0, 1, 0], [], []>} : vector<8x32xbf16>, vector<8x32xbf16>, vector<8x8xf32> -> vector<8x8xf32>
    "tpu.trace_stop"() : () -> ()
    %37 = vector.extract_strided_slice %7 {offsets = [0, 1], sizes = [8, 1], strides = [1, 1]} : vector<8x4xf32> to vector<8x1xf32>
    %cst_19 = arith.constant 0.176776692 : f32
    %38 = vector.broadcast %cst_19 : f32 to vector<8x1xf32>
    %39 = arith.mulf %37, %38 : vector<8x1xf32>
    %40 = vector.broadcast %39 : vector<8x1xf32> to vector<8x8xf32>
    %41 = arith.mulf %36, %40 : vector<8x8xf32>
    %42 = vector.extract_strided_slice %9 {offsets = [1, 0], sizes = [1, 8], strides = [1, 1]} : vector<4x8xf32> to vector<1x8xf32>
    %43 = vector.broadcast %42 : vector<1x8xf32> to vector<8x8xf32>
    %44 = arith.addf %41, %43 : vector<8x8xf32>
    %cst_20 = arith.constant dense<0xFF800000> : vector<8xf32>
    %45 = vector.multi_reduction <maximumf>, %44, %cst_20 [1] : vector<8x8xf32> to vector<8xf32>
    %46 = vector.shape_cast %45 : vector<8xf32> to vector<8x1xf32>
    %47 = vector.broadcast %46 : vector<8x1xf32> to vector<8x8xf32>
    %48 = arith.subf %44, %47 : vector<8x8xf32>
    %49 = math.exp %48 : vector<8x8xf32>
    %cst_21 = arith.constant dense<0.000000e+00> : vector<8xf32>
    %50 = vector.multi_reduction <add>, %49, %cst_21 [1] : vector<8x8xf32> to vector<8xf32>
    %51 = vector.shape_cast %50 : vector<8xf32> to vector<8x1xf32>
    %52 = tpu.reciprocal %51 {approx = true} : vector<8x1xf32> -> vector<8x1xf32>
    %53 = vector.broadcast %52 : vector<8x1xf32> to vector<8x8xf32>
    %54 = arith.mulf %49, %53 : vector<8x8xf32>
    %55 = arith.truncf %54 : vector<8x8xf32> to vector<8x8xbf16>
    %56 = vector.extract_strided_slice %5 {offsets = [0, 32], sizes = [8, 32], strides = [1, 1]} : vector<8x128xbf16> to vector<8x32xbf16>
    %cst_22 = arith.constant dense<0.000000e+00> : vector<8x32xf32>
    %57 = tpu.matmul %55, %56, %cst_22 {dimension_numbers = #tpu.dot_dimension_numbers<[1], [0], [0], [1], [0, 0, 1, 1], [], []>} : vector<8x8xbf16>, vector<8x32xbf16>, vector<8x32xf32> -> vector<8x32xf32>
    %58 = vector.extract_strided_slice %1 {offsets = [0, 64], sizes = [8, 32], strides = [1, 1]} : vector<8x128xbf16> to vector<8x32xbf16>
    %59 = vector.extract_strided_slice %3 {offsets = [0, 64], sizes = [8, 32], strides = [1, 1]} : vector<8x128xbf16> to vector<8x32xbf16>
    "tpu.trace_start"() <{level = 10 : i32, message = "qd,kd->qk"}> : () -> ()
    %cst_23 = arith.constant dense<0.000000e+00> : vector<8x8xf32>
    %60 = tpu.matmul %58, %59, %cst_23 {dimension_numbers = #tpu.dot_dimension_numbers<[1], [1], [0], [0], [0, 0, 1, 0], [], []>} : vector<8x32xbf16>, vector<8x32xbf16>, vector<8x8xf32> -> vector<8x8xf32>
    "tpu.trace_stop"() : () -> ()
    %61 = vector.extract_strided_slice %7 {offsets = [0, 2], sizes = [8, 1], strides = [1, 1]} : vector<8x4xf32> to vector<8x1xf32>
    %cst_24 = arith.constant 0.176776692 : f32
    %62 = vector.broadcast %cst_24 : f32 to vector<8x1xf32>
    %63 = arith.mulf %61, %62 : vector<8x1xf32>
    %64 = vector.broadcast %63 : vector<8x1xf32> to vector<8x8xf32>
    %65 = arith.mulf %60, %64 : vector<8x8xf32>
    %66 = vector.extract_strided_slice %9 {offsets = [2, 0], sizes = [1, 8], strides = [1, 1]} : vector<4x8xf32> to vector<1x8xf32>
    %67 = vector.broadcast %66 : vector<1x8xf32> to vector<8x8xf32>
    %68 = arith.addf %65, %67 : vector<8x8xf32>
    %cst_25 = arith.constant dense<0xFF800000> : vector<8xf32>
    %69 = vector.multi_reduction <maximumf>, %68, %cst_25 [1] : vector<8x8xf32> to vector<8xf32>
    %70 = vector.shape_cast %69 : vector<8xf32> to vector<8x1xf32>
    %71 = vector.broadcast %70 : vector<8x1xf32> to vector<8x8xf32>
    %72 = arith.subf %68, %71 : vector<8x8xf32>
    %73 = math.exp %72 : vector<8x8xf32>
    %cst_26 = arith.constant dense<0.000000e+00> : vector<8xf32>
    %74 = vector.multi_reduction <add>, %73, %cst_26 [1] : vector<8x8xf32> to vector<8xf32>
    %75 = vector.shape_cast %74 : vector<8xf32> to vector<8x1xf32>
    %76 = tpu.reciprocal %75 {approx = true} : vector<8x1xf32> -> vector<8x1xf32>
    %77 = vector.broadcast %76 : vector<8x1xf32> to vector<8x8xf32>
    %78 = arith.mulf %73, %77 : vector<8x8xf32>
    %79 = arith.truncf %78 : vector<8x8xf32> to vector<8x8xbf16>
    %80 = vector.extract_strided_slice %5 {offsets = [0, 64], sizes = [8, 32], strides = [1, 1]} : vector<8x128xbf16> to vector<8x32xbf16>
    %cst_27 = arith.constant dense<0.000000e+00> : vector<8x32xf32>
    %81 = tpu.matmul %79, %80, %cst_27 {dimension_numbers = #tpu.dot_dimension_numbers<[1], [0], [0], [1], [0, 0, 1, 1], [], []>} : vector<8x8xbf16>, vector<8x32xbf16>, vector<8x32xf32> -> vector<8x32xf32>
    %82 = vector.extract_strided_slice %1 {offsets = [0, 96], sizes = [8, 32], strides = [1, 1]} : vector<8x128xbf16> to vector<8x32xbf16>
    %83 = vector.extract_strided_slice %3 {offsets = [0, 96], sizes = [8, 32], strides = [1, 1]} : vector<8x128xbf16> to vector<8x32xbf16>
    "tpu.trace_start"() <{level = 10 : i32, message = "qd,kd->qk"}> : () -> ()
    %cst_28 = arith.constant dense<0.000000e+00> : vector<8x8xf32>
    %84 = tpu.matmul %82, %83, %cst_28 {dimension_numbers = #tpu.dot_dimension_numbers<[1], [1], [0], [0], [0, 0, 1, 0], [], []>} : vector<8x32xbf16>, vector<8x32xbf16>, vector<8x8xf32> -> vector<8x8xf32>
    "tpu.trace_stop"() : () -> ()
    %85 = vector.extract_strided_slice %7 {offsets = [0, 3], sizes = [8, 1], strides = [1, 1]} : vector<8x4xf32> to vector<8x1xf32>
    %cst_29 = arith.constant 0.176776692 : f32
    %86 = vector.broadcast %cst_29 : f32 to vector<8x1xf32>
    %87 = arith.mulf %85, %86 : vector<8x1xf32>
    %88 = vector.broadcast %87 : vector<8x1xf32> to vector<8x8xf32>
    %89 = arith.mulf %84, %88 : vector<8x8xf32>
    %90 = vector.extract_strided_slice %9 {offsets = [3, 0], sizes = [1, 8], strides = [1, 1]} : vector<4x8xf32> to vector<1x8xf32>
    %91 = vector.broadcast %90 : vector<1x8xf32> to vector<8x8xf32>
    %92 = arith.addf %89, %91 : vector<8x8xf32>
    %cst_30 = arith.constant dense<0xFF800000> : vector<8xf32>
    %93 = vector.multi_reduction <maximumf>, %92, %cst_30 [1] : vector<8x8xf32> to vector<8xf32>
    %94 = vector.shape_cast %93 : vector<8xf32> to vector<8x1xf32>
    %95 = vector.broadcast %94 : vector<8x1xf32> to vector<8x8xf32>
    %96 = arith.subf %92, %95 : vector<8x8xf32>
    %97 = math.exp %96 : vector<8x8xf32>
    %cst_31 = arith.constant dense<0.000000e+00> : vector<8xf32>
    %98 = vector.multi_reduction <add>, %97, %cst_31 [1] : vector<8x8xf32> to vector<8xf32>
    %99 = vector.shape_cast %98 : vector<8xf32> to vector<8x1xf32>
    %100 = tpu.reciprocal %99 {approx = true} : vector<8x1xf32> -> vector<8x1xf32>
    %101 = vector.broadcast %100 : vector<8x1xf32> to vector<8x8xf32>
    %102 = arith.mulf %97, %101 : vector<8x8xf32>
    %103 = arith.truncf %102 : vector<8x8xf32> to vector<8x8xbf16>
    %104 = vector.extract_strided_slice %5 {offsets = [0, 96], sizes = [8, 32], strides = [1, 1]} : vector<8x128xbf16> to vector<8x32xbf16>
    %cst_32 = arith.constant dense<0.000000e+00> : vector<8x32xf32>
    %105 = tpu.matmul %103, %104, %cst_32 {dimension_numbers = #tpu.dot_dimension_numbers<[1], [0], [0], [1], [0, 0, 1, 1], [], []>} : vector<8x8xbf16>, vector<8x32xbf16>, vector<8x32xf32> -> vector<8x32xf32>
    %106 = tpu.concatenate %33, %57, %81, %105 in 1 : vector<8x32xf32>, vector<8x32xf32>, vector<8x32xf32>, vector<8x32xf32> -> vector<8x128xf32>
    %107 = arith.truncf %106 : vector<8x128xf32> to vector<8x128xbf16>
    %c0_33 = arith.constant 0 : index
    %c0_34 = arith.constant 0 : index
    %c0_35 = arith.constant 0 : index
    %108 = vector.load %arg6[%c0_33, %c0_34, %c0_35] : memref<1x8x128xbf16, #tpu.memory_space<vmem>>, vector<1x8x128xbf16>
    %109 = vector.shape_cast %108 : vector<1x8x128xbf16> to vector<8x128xbf16>
    %110 = vector.shape_cast %107 : vector<8x128xbf16> to vector<1x8x128xbf16>
    tpu.vector_store %arg6[%c0_33, %c0_34, %c0_35], %110 {strides = array<i32>} : memref<1x8x128xbf16, #tpu.memory_space<vmem>>, vector<1x8x128xbf16>,
    return
  }
  func.func @transform_0(%arg0: i32) -> (i32, i32, i32) {
    %c0_i32 = arith.constant 0 : i32
    %c0_i32_0 = arith.constant 0 : i32
    %c0_i32_1 = arith.constant 0 : i32
    return %arg0, %c0_i32, %c0_i32_0 : i32, i32, i32
  }
  func.func @transform_1(%arg0: i32) -> (i32, i32, i32) {
    %c0_i32 = arith.constant 0 : i32
    %c0_i32_0 = arith.constant 0 : i32
    %c0_i32_1 = arith.constant 0 : i32
    return %arg0, %c0_i32, %c0_i32_0 : i32, i32, i32
  }
  func.func @transform_2(%arg0: i32) -> (i32, i32, i32) {
    %c0_i32 = arith.constant 0 : i32
    %c0_i32_0 = arith.constant 0 : i32
    %c0_i32_1 = arith.constant 0 : i32
    return %arg0, %c0_i32, %c0_i32_0 : i32, i32, i32
  }
  func.func @transform_3(%arg0: i32) -> (i32, i32, i32) {
    %c0_i32 = arith.constant 0 : i32
    %c0_i32_0 = arith.constant 0 : i32
    %c0_i32_1 = arith.constant 0 : i32
    return %arg0, %c0_i32, %c0_i32_0 : i32, i32, i32
  }
  func.func @transform_4(%arg0: i32) -> (i32, i32, i32) {
    %c0_i32 = arith.constant 0 : i32
    %c0_i32_0 = arith.constant 0 : i32
    %c0_i32_1 = arith.constant 0 : i32
    return %arg0, %c0_i32, %c0_i32_0 : i32, i32, i32
  }
  func.func @transform_5(%arg0: i32) -> (i32, i32, i32) {
    %c0_i32 = arith.constant 0 : i32
    %c0_i32_0 = arith.constant 0 : i32
    %c0_i32_1 = arith.constant 0 : i32
    return %arg0, %c0_i32, %c0_i32_0 : i32, i32, i32
  }
}

module attributes {stable_mosaic.version = 11 : i64} {
  func.func @_ln_res_kernel(%arg0: i32, %arg1: memref<16x128xf32, #tpu.memory_space<vmem>>, %arg2: memref<16x128xf32, #tpu.memory_space<vmem>>, %arg3: memref<1x128xf32, #tpu.memory_space<vmem>>, %arg4: memref<1x128xf32, #tpu.memory_space<vmem>>, %arg5: memref<16x128xf32, #tpu.memory_space<vmem>>) attributes {dimension_semantics = [#tpu.dimension_semantics<parallel>], iteration_bounds = array<i64: 1>, scalar_prefetch = 0 : i64, scratch_operands = 0 : i64, tpu.core_type = #tpu.core_type<tc>, window_params = [{transform_indices = @transform_0, window_bounds = array<i64: 16, 128>}, {transform_indices = @transform_1, window_bounds = array<i64: 16, 128>}, {pipeline_mode = #tpu.pipeline_mode<synchronous>, transform_indices = @transform_2, window_bounds = array<i64: 1, 128>}, {pipeline_mode = #tpu.pipeline_mode<synchronous>, transform_indices = @transform_3, window_bounds = array<i64: 1, 128>}, {transform_indices = @transform_4, window_bounds = array<i64: 16, 128>}]} {
    %c0 = arith.constant 0 : index
    %c0_0 = arith.constant 0 : index
    %0 = vector.load %arg1[%c0, %c0_0] : memref<16x128xf32, #tpu.memory_space<vmem>>, vector<16x128xf32>
    %c0_1 = arith.constant 0 : index
    %c0_2 = arith.constant 0 : index
    %1 = vector.load %arg2[%c0_1, %c0_2] : memref<16x128xf32, #tpu.memory_space<vmem>>, vector<16x128xf32>
    %2 = arith.addf %0, %1 : vector<16x128xf32>
    %cst = arith.constant dense<0.000000e+00> : vector<16xf32>
    %3 = vector.multi_reduction <add>, %2, %cst [1] : vector<16x128xf32> to vector<16xf32>
    %4 = vector.shape_cast %3 : vector<16xf32> to vector<16x1xf32>
    %cst_3 = arith.constant 1.280000e+02 : f32
    %5 = vector.broadcast %cst_3 : f32 to vector<16x1xf32>
    %6 = arith.divf %4, %5 : vector<16x1xf32>
    %7 = arith.mulf %2, %2 : vector<16x128xf32>
    %cst_4 = arith.constant dense<0.000000e+00> : vector<16xf32>
    %8 = vector.multi_reduction <add>, %7, %cst_4 [1] : vector<16x128xf32> to vector<16xf32>
    %9 = vector.shape_cast %8 : vector<16xf32> to vector<16x1xf32>
    %cst_5 = arith.constant 1.280000e+02 : f32
    %10 = vector.broadcast %cst_5 : f32 to vector<16x1xf32>
    %11 = arith.divf %9, %10 : vector<16x1xf32>
    %12 = vector.broadcast %6 : vector<16x1xf32> to vector<16x128xf32>
    %13 = arith.subf %2, %12 : vector<16x128xf32>
    %14 = arith.mulf %6, %6 : vector<16x1xf32>
    %15 = arith.subf %11, %14 : vector<16x1xf32>
    %cst_6 = arith.constant 9.99999974E-6 : f32
    %16 = vector.broadcast %cst_6 : f32 to vector<16x1xf32>
    %17 = arith.addf %15, %16 : vector<16x1xf32>
    %18 = math.rsqrt %17 : vector<16x1xf32>
    %19 = vector.broadcast %18 : vector<16x1xf32> to vector<16x128xf32>
    %20 = arith.mulf %13, %19 : vector<16x128xf32>
    %c0_7 = arith.constant 0 : index
    %c0_8 = arith.constant 0 : index
    %21 = vector.load %arg3[%c0_7, %c0_8] : memref<1x128xf32, #tpu.memory_space<vmem>>, vector<1x128xf32>
    %22 = vector.broadcast %21 : vector<1x128xf32> to vector<16x128xf32>
    %23 = arith.mulf %20, %22 : vector<16x128xf32>
    %c0_9 = arith.constant 0 : index
    %c0_10 = arith.constant 0 : index
    %24 = vector.load %arg4[%c0_9, %c0_10] : memref<1x128xf32, #tpu.memory_space<vmem>>, vector<1x128xf32>
    %25 = vector.broadcast %24 : vector<1x128xf32> to vector<16x128xf32>
    %26 = arith.addf %23, %25 : vector<16x128xf32>
    %c0_11 = arith.constant 0 : index
    %c0_12 = arith.constant 0 : index
    %27 = vector.load %arg5[%c0_11, %c0_12] : memref<16x128xf32, #tpu.memory_space<vmem>>, vector<16x128xf32>
    tpu.vector_store %arg5[%c0_11, %c0_12], %26 {strides = array<i32>} : memref<16x128xf32, #tpu.memory_space<vmem>>, vector<16x128xf32>,
    return
  }
  func.func @transform_0(%arg0: i32) -> (i32, i32) {
    %c0_i32 = arith.constant 0 : i32
    %c0_i32_0 = arith.constant 0 : i32
    return %arg0, %c0_i32 : i32, i32
  }
  func.func @transform_1(%arg0: i32) -> (i32, i32) {
    %c0_i32 = arith.constant 0 : i32
    %c0_i32_0 = arith.constant 0 : i32
    return %arg0, %c0_i32 : i32, i32
  }
  func.func @transform_2(%arg0: i32) -> (i32, i32) {
    %c0_i32 = arith.constant 0 : i32
    %c0_i32_0 = arith.constant 0 : i32
    %c0_i32_1 = arith.constant 0 : i32
    return %c0_i32, %c0_i32_0 : i32, i32
  }
  func.func @transform_3(%arg0: i32) -> (i32, i32) {
    %c0_i32 = arith.constant 0 : i32
    %c0_i32_0 = arith.constant 0 : i32
    %c0_i32_1 = arith.constant 0 : i32
    return %c0_i32, %c0_i32_0 : i32, i32
  }
  func.func @transform_4(%arg0: i32) -> (i32, i32) {
    %c0_i32 = arith.constant 0 : i32
    %c0_i32_0 = arith.constant 0 : i32
    return %arg0, %c0_i32 : i32, i32
  }
}

module attributes {stable_mosaic.version = 11 : i64} {
  func.func @_mm_kernel(%arg0: i32, %arg1: i32, %arg2: i32, %arg3: memref<16x128xf32, #tpu.memory_space<vmem>>, %arg4: memref<128x256xbf16, #tpu.memory_space<vmem>>, %arg5: memref<1x256xf32, #tpu.memory_space<vmem>>, %arg6: memref<16x256xbf16, #tpu.memory_space<vmem>>, %arg7: memref<16x256xf32, #tpu.memory_space<vmem>>) attributes {dimension_semantics = [#tpu.dimension_semantics<parallel>, #tpu.dimension_semantics<parallel>, #tpu.dimension_semantics<arbitrary>], iteration_bounds = array<i64: 1, 1, 1>, scalar_prefetch = 0 : i64, scratch_operands = 1 : i64, tpu.core_type = #tpu.core_type<tc>, window_params = [{transform_indices = @transform_0, window_bounds = array<i64: 16, 128>}, {transform_indices = @transform_1, window_bounds = array<i64: 128, 256>}, {transform_indices = @transform_2, window_bounds = array<i64: 1, 256>}, {transform_indices = @transform_3, window_bounds = array<i64: 16, 256>}]} {
    %c0_i32 = arith.constant 0 : i32
    %0 = arith.cmpi eq, %arg2, %c0_i32 : i32
    %1 = arith.extui %0 : i1 to i32
    %c0_i32_0 = arith.constant 0 : i32
    %2 = arith.cmpi ne, %1, %c0_i32_0 : i32
    scf.if %2 {
      %cst_10 = arith.constant 0.000000e+00 : f32
      %13 = vector.broadcast %cst_10 : f32 to vector<16x256xf32>
      %c0_11 = arith.constant 0 : index
      %c0_12 = arith.constant 0 : index
      %14 = vector.load %arg7[%c0_11, %c0_12] : memref<16x256xf32, #tpu.memory_space<vmem>>, vector<16x256xf32>
      tpu.vector_store %arg7[%c0_11, %c0_12], %13 {strides = array<i32>} : memref<16x256xf32, #tpu.memory_space<vmem>>, vector<16x256xf32>,
    } else {
    }
    %c0 = arith.constant 0 : index
    %c0_1 = arith.constant 0 : index
    %3 = vector.load %arg3[%c0, %c0_1] : memref<16x128xf32, #tpu.memory_space<vmem>>, vector<16x128xf32>
    %4 = arith.truncf %3 : vector<16x128xf32> to vector<16x128xbf16>
    %c0_2 = arith.constant 0 : index
    %c0_3 = arith.constant 0 : index
    %5 = vector.load %arg7[%c0_2, %c0_3] : memref<16x256xf32, #tpu.memory_space<vmem>>, vector<16x256xf32>
    %c0_4 = arith.constant 0 : index
    %c0_5 = arith.constant 0 : index
    %6 = vector.load %arg4[%c0_4, %c0_5] : memref<128x256xbf16, #tpu.memory_space<vmem>>, vector<128x256xbf16>
    %cst = arith.constant dense<0.000000e+00> : vector<16x256xf32>
    %7 = tpu.matmul %4, %6, %cst {dimension_numbers = #tpu.dot_dimension_numbers<[1], [0], [0], [1], [0, 0, 1, 1], [], []>} : vector<16x128xbf16>, vector<128x256xbf16>, vector<16x256xf32> -> vector<16x256xf32>
    %8 = arith.addf %5, %7 : vector<16x256xf32>
    %c0_6 = arith.constant 0 : index
    %c0_7 = arith.constant 0 : index
    %9 = vector.load %arg7[%c0_6, %c0_7] : memref<16x256xf32, #tpu.memory_space<vmem>>, vector<16x256xf32>
    tpu.vector_store %arg7[%c0_6, %c0_7], %8 {strides = array<i32>} : memref<16x256xf32, #tpu.memory_space<vmem>>, vector<16x256xf32>,
    %c0_i32_8 = arith.constant 0 : i32
    %10 = arith.cmpi eq, %arg2, %c0_i32_8 : i32
    %11 = arith.extui %10 : i1 to i32
    %c0_i32_9 = arith.constant 0 : i32
    %12 = arith.cmpi ne, %11, %c0_i32_9 : i32
    scf.if %12 {
      %c0_10 = arith.constant 0 : index
      %c0_11 = arith.constant 0 : index
      %13 = vector.load %arg7[%c0_10, %c0_11] : memref<16x256xf32, #tpu.memory_space<vmem>>, vector<16x256xf32>
      %c0_12 = arith.constant 0 : index
      %c0_13 = arith.constant 0 : index
      %14 = vector.load %arg5[%c0_12, %c0_13] : memref<1x256xf32, #tpu.memory_space<vmem>>, vector<1x256xf32>
      %15 = vector.broadcast %14 : vector<1x256xf32> to vector<16x256xf32>
      %16 = arith.addf %13, %15 : vector<16x256xf32>
      %cst_14 = arith.constant 5.000000e-01 : f32
      %17 = vector.broadcast %cst_14 : f32 to vector<16x256xf32>
      %18 = arith.mulf %17, %16 : vector<16x256xf32>
      %cst_15 = arith.constant 4.471500e-02 : f32
      %19 = vector.broadcast %cst_15 : f32 to vector<16x256xf32>
      %20 = arith.mulf %19, %16 : vector<16x256xf32>
      %21 = arith.mulf %20, %16 : vector<16x256xf32>
      %22 = arith.mulf %21, %16 : vector<16x256xf32>
      %23 = arith.addf %16, %22 : vector<16x256xf32>
      %cst_16 = arith.constant 0.797884583 : f32
      %24 = vector.broadcast %cst_16 : f32 to vector<16x256xf32>
      %25 = arith.mulf %24, %23 : vector<16x256xf32>
      %26 = math.tanh %25 : vector<16x256xf32>
      %cst_17 = arith.constant 1.000000e+00 : f32
      %27 = vector.broadcast %cst_17 : f32 to vector<16x256xf32>
      %28 = arith.addf %27, %26 : vector<16x256xf32>
      %29 = arith.mulf %18, %28 : vector<16x256xf32>
      %30 = arith.truncf %29 : vector<16x256xf32> to vector<16x256xbf16>
      %c0_18 = arith.constant 0 : index
      %c0_19 = arith.constant 0 : index
      %31 = vector.load %arg6[%c0_18, %c0_19] : memref<16x256xbf16, #tpu.memory_space<vmem>>, vector<16x256xbf16>
      tpu.vector_store %arg6[%c0_18, %c0_19], %30 {strides = array<i32>} : memref<16x256xbf16, #tpu.memory_space<vmem>>, vector<16x256xbf16>,
    } else {
    }
    return
  }
  func.func @transform_0(%arg0: i32, %arg1: i32, %arg2: i32) -> (i32, i32) {
    %c0_i32 = arith.constant 0 : i32
    return %arg0, %arg2 : i32, i32
  }
  func.func @transform_1(%arg0: i32, %arg1: i32, %arg2: i32) -> (i32, i32) {
    %c0_i32 = arith.constant 0 : i32
    return %arg2, %arg1 : i32, i32
  }
  func.func @transform_2(%arg0: i32, %arg1: i32, %arg2: i32) -> (i32, i32) {
    %c0_i32 = arith.constant 0 : i32
    %c0_i32_0 = arith.constant 0 : i32
    return %c0_i32, %arg1 : i32, i32
  }
  func.func @transform_3(%arg0: i32, %arg1: i32, %arg2: i32) -> (i32, i32) {
    %c0_i32 = arith.constant 0 : i32
    return %arg0, %arg1 : i32, i32
  }
}

module attributes {stable_mosaic.version = 11 : i64} {
  func.func @_mm_kernel(%arg0: i32, %arg1: i32, %arg2: i32, %arg3: memref<16x256xbf16, #tpu.memory_space<vmem>>, %arg4: memref<256x128xbf16, #tpu.memory_space<vmem>>, %arg5: memref<1x128xf32, #tpu.memory_space<vmem>>, %arg6: memref<16x128xf32, #tpu.memory_space<vmem>>, %arg7: memref<16x128xf32, #tpu.memory_space<vmem>>) attributes {dimension_semantics = [#tpu.dimension_semantics<parallel>, #tpu.dimension_semantics<parallel>, #tpu.dimension_semantics<arbitrary>], iteration_bounds = array<i64: 1, 1, 1>, scalar_prefetch = 0 : i64, scratch_operands = 1 : i64, tpu.core_type = #tpu.core_type<tc>, window_params = [{transform_indices = @transform_0, window_bounds = array<i64: 16, 256>}, {transform_indices = @transform_1, window_bounds = array<i64: 256, 128>}, {transform_indices = @transform_2, window_bounds = array<i64: 1, 128>}, {transform_indices = @transform_3, window_bounds = array<i64: 16, 128>}]} {
    %c0_i32 = arith.constant 0 : i32
    %0 = arith.cmpi eq, %arg2, %c0_i32 : i32
    %1 = arith.extui %0 : i1 to i32
    %c0_i32_0 = arith.constant 0 : i32
    %2 = arith.cmpi ne, %1, %c0_i32_0 : i32
    scf.if %2 {
      %cst_10 = arith.constant 0.000000e+00 : f32
      %12 = vector.broadcast %cst_10 : f32 to vector<16x128xf32>
      %c0_11 = arith.constant 0 : index
      %c0_12 = arith.constant 0 : index
      %13 = vector.load %arg7[%c0_11, %c0_12] : memref<16x128xf32, #tpu.memory_space<vmem>>, vector<16x128xf32>
      tpu.vector_store %arg7[%c0_11, %c0_12], %12 {strides = array<i32>} : memref<16x128xf32, #tpu.memory_space<vmem>>, vector<16x128xf32>,
    } else {
    }
    %c0 = arith.constant 0 : index
    %c0_1 = arith.constant 0 : index
    %3 = vector.load %arg3[%c0, %c0_1] : memref<16x256xbf16, #tpu.memory_space<vmem>>, vector<16x256xbf16>
    %c0_2 = arith.constant 0 : index
    %c0_3 = arith.constant 0 : index
    %4 = vector.load %arg7[%c0_2, %c0_3] : memref<16x128xf32, #tpu.memory_space<vmem>>, vector<16x128xf32>
    %c0_4 = arith.constant 0 : index
    %c0_5 = arith.constant 0 : index
    %5 = vector.load %arg4[%c0_4, %c0_5] : memref<256x128xbf16, #tpu.memory_space<vmem>>, vector<256x128xbf16>
    %cst = arith.constant dense<0.000000e+00> : vector<16x128xf32>
    %6 = tpu.matmul %3, %5, %cst {dimension_numbers = #tpu.dot_dimension_numbers<[1], [0], [0], [1], [0, 0, 1, 1], [], []>} : vector<16x256xbf16>, vector<256x128xbf16>, vector<16x128xf32> -> vector<16x128xf32>
    %7 = arith.addf %4, %6 : vector<16x128xf32>
    %c0_6 = arith.constant 0 : index
    %c0_7 = arith.constant 0 : index
    %8 = vector.load %arg7[%c0_6, %c0_7] : memref<16x128xf32, #tpu.memory_space<vmem>>, vector<16x128xf32>
    tpu.vector_store %arg7[%c0_6, %c0_7], %7 {strides = array<i32>} : memref<16x128xf32, #tpu.memory_space<vmem>>, vector<16x128xf32>,
    %c0_i32_8 = arith.constant 0 : i32
    %9 = arith.cmpi eq, %arg2, %c0_i32_8 : i32
    %10 = arith.extui %9 : i1 to i32
    %c0_i32_9 = arith.constant 0 : i32
    %11 = arith.cmpi ne, %10, %c0_i32_9 : i32
    scf.if %11 {
      %c0_10 = arith.constant 0 : index
      %c0_11 = arith.constant 0 : index
      %12 = vector.load %arg7[%c0_10, %c0_11] : memref<16x128xf32, #tpu.memory_space<vmem>>, vector<16x128xf32>
      %c0_12 = arith.constant 0 : index
      %c0_13 = arith.constant 0 : index
      %13 = vector.load %arg5[%c0_12, %c0_13] : memref<1x128xf32, #tpu.memory_space<vmem>>, vector<1x128xf32>
      %14 = vector.broadcast %13 : vector<1x128xf32> to vector<16x128xf32>
      %15 = arith.addf %12, %14 : vector<16x128xf32>
      %c0_14 = arith.constant 0 : index
      %c0_15 = arith.constant 0 : index
      %16 = vector.load %arg6[%c0_14, %c0_15] : memref<16x128xf32, #tpu.memory_space<vmem>>, vector<16x128xf32>
      tpu.vector_store %arg6[%c0_14, %c0_15], %15 {strides = array<i32>} : memref<16x128xf32, #tpu.memory_space<vmem>>, vector<16x128xf32>,
    } else {
    }
    return
  }
  func.func @transform_0(%arg0: i32, %arg1: i32, %arg2: i32) -> (i32, i32) {
    %c0_i32 = arith.constant 0 : i32
    return %arg0, %arg2 : i32, i32
  }
  func.func @transform_1(%arg0: i32, %arg1: i32, %arg2: i32) -> (i32, i32) {
    %c0_i32 = arith.constant 0 : i32
    return %arg2, %arg1 : i32, i32
  }
  func.func @transform_2(%arg0: i32, %arg1: i32, %arg2: i32) -> (i32, i32) {
    %c0_i32 = arith.constant 0 : i32
    %c0_i32_0 = arith.constant 0 : i32
    return %c0_i32, %arg1 : i32, i32
  }
  func.func @transform_3(%arg0: i32, %arg1: i32, %arg2: i32) -> (i32, i32) {
    %c0_i32 = arith.constant 0 : i32
    return %arg0, %arg1 : i32, i32
  }
}

module attributes {stable_mosaic.version = 11 : i64} {
  func.func @_mm_kernel(%arg0: i32, %arg1: i32, %arg2: i32, %arg3: memref<16x128xf32, #tpu.memory_space<vmem>>, %arg4: memref<128x128xbf16, #tpu.memory_space<vmem>>, %arg5: memref<1x128xf32, #tpu.memory_space<vmem>>, %arg6: memref<16x128xbf16, #tpu.memory_space<vmem>>, %arg7: memref<16x128xf32, #tpu.memory_space<vmem>>) attributes {dimension_semantics = [#tpu.dimension_semantics<parallel>, #tpu.dimension_semantics<parallel>, #tpu.dimension_semantics<arbitrary>], iteration_bounds = array<i64: 1, 1, 1>, scalar_prefetch = 0 : i64, scratch_operands = 1 : i64, tpu.core_type = #tpu.core_type<tc>, window_params = [{transform_indices = @transform_0, window_bounds = array<i64: 16, 128>}, {transform_indices = @transform_1, window_bounds = array<i64: 128, 128>}, {transform_indices = @transform_2, window_bounds = array<i64: 1, 128>}, {transform_indices = @transform_3, window_bounds = array<i64: 16, 128>}]} {
    %c0_i32 = arith.constant 0 : i32
    %0 = arith.cmpi eq, %arg2, %c0_i32 : i32
    %1 = arith.extui %0 : i1 to i32
    %c0_i32_0 = arith.constant 0 : i32
    %2 = arith.cmpi ne, %1, %c0_i32_0 : i32
    scf.if %2 {
      %cst_10 = arith.constant 0.000000e+00 : f32
      %13 = vector.broadcast %cst_10 : f32 to vector<16x128xf32>
      %c0_11 = arith.constant 0 : index
      %c0_12 = arith.constant 0 : index
      %14 = vector.load %arg7[%c0_11, %c0_12] : memref<16x128xf32, #tpu.memory_space<vmem>>, vector<16x128xf32>
      tpu.vector_store %arg7[%c0_11, %c0_12], %13 {strides = array<i32>} : memref<16x128xf32, #tpu.memory_space<vmem>>, vector<16x128xf32>,
    } else {
    }
    %c0 = arith.constant 0 : index
    %c0_1 = arith.constant 0 : index
    %3 = vector.load %arg3[%c0, %c0_1] : memref<16x128xf32, #tpu.memory_space<vmem>>, vector<16x128xf32>
    %4 = arith.truncf %3 : vector<16x128xf32> to vector<16x128xbf16>
    %c0_2 = arith.constant 0 : index
    %c0_3 = arith.constant 0 : index
    %5 = vector.load %arg7[%c0_2, %c0_3] : memref<16x128xf32, #tpu.memory_space<vmem>>, vector<16x128xf32>
    %c0_4 = arith.constant 0 : index
    %c0_5 = arith.constant 0 : index
    %6 = vector.load %arg4[%c0_4, %c0_5] : memref<128x128xbf16, #tpu.memory_space<vmem>>, vector<128x128xbf16>
    %cst = arith.constant dense<0.000000e+00> : vector<16x128xf32>
    %7 = tpu.matmul %4, %6, %cst {dimension_numbers = #tpu.dot_dimension_numbers<[1], [0], [0], [1], [0, 0, 1, 1], [], []>} : vector<16x128xbf16>, vector<128x128xbf16>, vector<16x128xf32> -> vector<16x128xf32>
    %8 = arith.addf %5, %7 : vector<16x128xf32>
    %c0_6 = arith.constant 0 : index
    %c0_7 = arith.constant 0 : index
    %9 = vector.load %arg7[%c0_6, %c0_7] : memref<16x128xf32, #tpu.memory_space<vmem>>, vector<16x128xf32>
    tpu.vector_store %arg7[%c0_6, %c0_7], %8 {strides = array<i32>} : memref<16x128xf32, #tpu.memory_space<vmem>>, vector<16x128xf32>,
    %c0_i32_8 = arith.constant 0 : i32
    %10 = arith.cmpi eq, %arg2, %c0_i32_8 : i32
    %11 = arith.extui %10 : i1 to i32
    %c0_i32_9 = arith.constant 0 : i32
    %12 = arith.cmpi ne, %11, %c0_i32_9 : i32
    scf.if %12 {
      %c0_10 = arith.constant 0 : index
      %c0_11 = arith.constant 0 : index
      %13 = vector.load %arg7[%c0_10, %c0_11] : memref<16x128xf32, #tpu.memory_space<vmem>>, vector<16x128xf32>
      %c0_12 = arith.constant 0 : index
      %c0_13 = arith.constant 0 : index
      %14 = vector.load %arg5[%c0_12, %c0_13] : memref<1x128xf32, #tpu.memory_space<vmem>>, vector<1x128xf32>
      %15 = vector.broadcast %14 : vector<1x128xf32> to vector<16x128xf32>
      %16 = arith.addf %13, %15 : vector<16x128xf32>
      %17 = arith.truncf %16 : vector<16x128xf32> to vector<16x128xbf16>
      %c0_14 = arith.constant 0 : index
      %c0_15 = arith.constant 0 : index
      %18 = vector.load %arg6[%c0_14, %c0_15] : memref<16x128xbf16, #tpu.memory_space<vmem>>, vector<16x128xbf16>
      tpu.vector_store %arg6[%c0_14, %c0_15], %17 {strides = array<i32>} : memref<16x128xbf16, #tpu.memory_space<vmem>>, vector<16x128xbf16>,
    } else {
    }
    return
  }
  func.func @transform_0(%arg0: i32, %arg1: i32, %arg2: i32) -> (i32, i32) {
    %c0_i32 = arith.constant 0 : i32
    return %arg0, %arg2 : i32, i32
  }
  func.func @transform_1(%arg0: i32, %arg1: i32, %arg2: i32) -> (i32, i32) {
    %c0_i32 = arith.constant 0 : i32
    return %arg2, %arg1 : i32, i32
  }
  func.func @transform_2(%arg0: i32, %arg1: i32, %arg2: i32) -> (i32, i32) {
    %c0_i32 = arith.constant 0 : i32
    %c0_i32_0 = arith.constant 0 : i32
    return %c0_i32, %arg1 : i32, i32
  }
  func.func @transform_3(%arg0: i32, %arg1: i32, %arg2: i32) -> (i32, i32) {
    %c0_i32 = arith.constant 0 : i32
    return %arg0, %arg1 : i32, i32
  }
}

module attributes {stable_mosaic.version = 11 : i64} {
  func.func @_dwconv_kernel(%arg0: i32, %arg1: memref<1x8x128xbf16, #tpu.memory_space<vmem>>, %arg2: memref<5x128xf32, #tpu.memory_space<vmem>>, %arg3: memref<1x128xf32, #tpu.memory_space<vmem>>, %arg4: memref<1x8x128xf32, #tpu.memory_space<vmem>>, %arg5: memref<12x128xf32, #tpu.memory_space<vmem>>) attributes {dimension_semantics = [#tpu.dimension_semantics<parallel>], iteration_bounds = array<i64: 2>, scalar_prefetch = 0 : i64, scratch_operands = 1 : i64, tpu.core_type = #tpu.core_type<tc>, window_params = [{transform_indices = @transform_0, window_bounds = array<i64: 1, 8, 128>}, {pipeline_mode = #tpu.pipeline_mode<synchronous>, transform_indices = @transform_1, window_bounds = array<i64: 5, 128>}, {pipeline_mode = #tpu.pipeline_mode<synchronous>, transform_indices = @transform_2, window_bounds = array<i64: 1, 128>}, {transform_indices = @transform_3, window_bounds = array<i64: 1, 8, 128>}]} {
    %cst = arith.constant 0.000000e+00 : f32
    %0 = vector.broadcast %cst : f32 to vector<12x128xf32>
    %c0 = arith.constant 0 : index
    %c0_0 = arith.constant 0 : index
    %1 = vector.load %arg5[%c0, %c0_0] : memref<12x128xf32, #tpu.memory_space<vmem>>, vector<12x128xf32>
    tpu.vector_store %arg5[%c0, %c0_0], %0 {strides = array<i32>} : memref<12x128xf32, #tpu.memory_space<vmem>>, vector<12x128xf32>,
    %c0_1 = arith.constant 0 : index
    %c0_2 = arith.constant 0 : index
    %c0_3 = arith.constant 0 : index
    %2 = vector.load %arg1[%c0_1, %c0_2, %c0_3] : memref<1x8x128xbf16, #tpu.memory_space<vmem>>, vector<1x8x128xbf16>
    %3 = vector.shape_cast %2 : vector<1x8x128xbf16> to vector<8x128xbf16>
    %4 = arith.extf %3 : vector<8x128xbf16> to vector<8x128xf32>
    %c2 = arith.constant 2 : index
    %c0_4 = arith.constant 0 : index
    %5 = vector.load %arg5[%c2, %c0_4] : memref<12x128xf32, #tpu.memory_space<vmem>>, vector<8x128xf32>
    tpu.vector_store %arg5[%c2, %c0_4], %4 {strides = array<i32>} : memref<12x128xf32, #tpu.memory_space<vmem>>, vector<8x128xf32>,
    %cst_5 = arith.constant 0.000000e+00 : f32
    %6 = vector.broadcast %cst_5 : f32 to vector<8x128xf32>
    %c0_6 = arith.constant 0 : index
    %c0_7 = arith.constant 0 : index
    %7 = vector.load %arg5[%c0_6, %c0_7] : memref<12x128xf32, #tpu.memory_space<vmem>>, vector<8x128xf32>
    %c0_8 = arith.constant 0 : index
    %c0_9 = arith.constant 0 : index
    %8 = vector.load %arg2[%c0_8, %c0_9] : memref<5x128xf32, #tpu.memory_space<vmem>>, vector<1x128xf32>
    %9 = vector.broadcast %8 : vector<1x128xf32> to vector<8x128xf32>
    %10 = arith.mulf %7, %9 : vector<8x128xf32>
    %11 = arith.addf %6, %10 : vector<8x128xf32>
    %c1 = arith.constant 1 : index
    %c0_10 = arith.constant 0 : index
    %12 = vector.load %arg5[%c1, %c0_10] : memref<12x128xf32, #tpu.memory_space<vmem>>, vector<8x128xf32>
    %c1_11 = arith.constant 1 : index
    %c0_12 = arith.constant 0 : index
    %13 = vector.load %arg2[%c1_11, %c0_12] : memref<5x128xf32, #tpu.memory_space<vmem>>, vector<1x128xf32>
    %14 = vector.broadcast %13 : vector<1x128xf32> to vector<8x128xf32>
    %15 = arith.mulf %12, %14 : vector<8x128xf32>
    %16 = arith.addf %11, %15 : vector<8x128xf32>
    %c2_13 = arith.constant 2 : index
    %c0_14 = arith.constant 0 : index
    %17 = vector.load %arg5[%c2_13, %c0_14] : memref<12x128xf32, #tpu.memory_space<vmem>>, vector<8x128xf32>
    %c2_15 = arith.constant 2 : index
    %c0_16 = arith.constant 0 : index
    %18 = vector.load %arg2[%c2_15, %c0_16] : memref<5x128xf32, #tpu.memory_space<vmem>>, vector<1x128xf32>
    %19 = vector.broadcast %18 : vector<1x128xf32> to vector<8x128xf32>
    %20 = arith.mulf %17, %19 : vector<8x128xf32>
    %21 = arith.addf %16, %20 : vector<8x128xf32>
    %c3 = arith.constant 3 : index
    %c0_17 = arith.constant 0 : index
    %22 = vector.load %arg5[%c3, %c0_17] : memref<12x128xf32, #tpu.memory_space<vmem>>, vector<8x128xf32>
    %c3_18 = arith.constant 3 : index
    %c0_19 = arith.constant 0 : index
    %23 = vector.load %arg2[%c3_18, %c0_19] : memref<5x128xf32, #tpu.memory_space<vmem>>, vector<1x128xf32>
    %24 = vector.broadcast %23 : vector<1x128xf32> to vector<8x128xf32>
    %25 = arith.mulf %22, %24 : vector<8x128xf32>
    %26 = arith.addf %21, %25 : vector<8x128xf32>
    %c4 = arith.constant 4 : index
    %c0_20 = arith.constant 0 : index
    %27 = vector.load %arg5[%c4, %c0_20] : memref<12x128xf32, #tpu.memory_space<vmem>>, vector<8x128xf32>
    %c4_21 = arith.constant 4 : index
    %c0_22 = arith.constant 0 : index
    %28 = vector.load %arg2[%c4_21, %c0_22] : memref<5x128xf32, #tpu.memory_space<vmem>>, vector<1x128xf32>
    %29 = vector.broadcast %28 : vector<1x128xf32> to vector<8x128xf32>
    %30 = arith.mulf %27, %29 : vector<8x128xf32>
    %31 = arith.addf %26, %30 : vector<8x128xf32>
    %c0_23 = arith.constant 0 : index
    %c0_24 = arith.constant 0 : index
    %32 = vector.load %arg3[%c0_23, %c0_24] : memref<1x128xf32, #tpu.memory_space<vmem>>, vector<1x128xf32>
    %33 = vector.broadcast %32 : vector<1x128xf32> to vector<8x128xf32>
    %34 = arith.addf %31, %33 : vector<8x128xf32>
    %c0_25 = arith.constant 0 : index
    %c0_26 = arith.constant 0 : index
    %c0_27 = arith.constant 0 : index
    %35 = vector.load %arg4[%c0_25, %c0_26, %c0_27] : memref<1x8x128xf32, #tpu.memory_space<vmem>>, vector<1x8x128xf32>
    %36 = vector.shape_cast %35 : vector<1x8x128xf32> to vector<8x128xf32>
    %37 = vector.shape_cast %34 : vector<8x128xf32> to vector<1x8x128xf32>
    tpu.vector_store %arg4[%c0_25, %c0_26, %c0_27], %37 {strides = array<i32>} : memref<1x8x128xf32, #tpu.memory_space<vmem>>, vector<1x8x128xf32>,
    return
  }
  func.func @transform_0(%arg0: i32) -> (i32, i32, i32) {
    %c0_i32 = arith.constant 0 : i32
    %c0_i32_0 = arith.constant 0 : i32
    %c0_i32_1 = arith.constant 0 : i32
    return %arg0, %c0_i32, %c0_i32_0 : i32, i32, i32
  }
  func.func @transform_1(%arg0: i32) -> (i32, i32) {
    %c0_i32 = arith.constant 0 : i32
    %c0_i32_0 = arith.constant 0 : i32
    %c0_i32_1 = arith.constant 0 : i32
    return %c0_i32, %c0_i32_0 : i32, i32
  }
  func.func @transform_2(%arg0: i32) -> (i32, i32) {
    %c0_i32 = arith.constant 0 : i32
    %c0_i32_0 = arith.constant 0 : i32
    %c0_i32_1 = arith.constant 0 : i32
    return %c0_i32, %c0_i32_0 : i32, i32
  }
  func.func @transform_3(%arg0: i32) -> (i32, i32, i32) {
    %c0_i32 = arith.constant 0 : i32
    %c0_i32_0 = arith.constant 0 : i32
    %c0_i32_1 = arith.constant 0 : i32
    return %arg0, %c0_i32, %c0_i32_0 : i32, i32, i32
  }
}

module attributes {stable_mosaic.version = 11 : i64} {
  func.func @_gate_kernel(%arg0: i32, %arg1: memref<1x8x128xf32, #tpu.memory_space<vmem>>, %arg2: memref<64x4xbf16, #tpu.memory_space<vmem>>, %arg3: memref<4x64xbf16, #tpu.memory_space<vmem>>, %arg4: memref<2x8x8xf32, #tpu.memory_space<vmem>>, %arg5: memref<3x64xf32, #tpu.memory_space<vmem>>, %arg6: memref<1x64xf32, #tpu.memory_space<vmem>>, %arg7: memref<1x8x64xf32, #tpu.memory_space<vmem>>, %arg8: memref<1x8x64xf32, #tpu.memory_space<vmem>>, %arg9: memref<10x64xf32, #tpu.memory_space<vmem>>) attributes {dimension_semantics = [#tpu.dimension_semantics<parallel>], iteration_bounds = array<i64: 2>, scalar_prefetch = 0 : i64, scratch_operands = 1 : i64, tpu.core_type = #tpu.core_type<tc>, window_params = [{transform_indices = @transform_0, window_bounds = array<i64: 1, 8, 128>}, {pipeline_mode = #tpu.pipeline_mode<synchronous>, transform_indices = @transform_1, window_bounds = array<i64: 64, 4>}, {pipeline_mode = #tpu.pipeline_mode<synchronous>, transform_indices = @transform_2, window_bounds = array<i64: 4, 64>}, {pipeline_mode = #tpu.pipeline_mode<synchronous>, transform_indices = @transform_3, window_bounds = array<i64: 2, 8, 8>}, {pipeline_mode = #tpu.pipeline_mode<synchronous>, transform_indices = @transform_4, window_bounds = array<i64: 3, 64>}, {pipeline_mode = #tpu.pipeline_mode<synchronous>, transform_indices = @transform_5, window_bounds = array<i64: 1, 64>}, {transform_indices = @transform_6, window_bounds = array<i64: 1, 8, 64>}, {transform_indices = @transform_7, window_bounds = array<i64: 1, 8, 64>}]} {
    %c0 = arith.constant 0 : index
    %c0_0 = arith.constant 0 : index
    %c0_1 = arith.constant 0 : index
    %0 = vector.load %arg1[%c0, %c0_0, %c0_1] : memref<1x8x128xf32, #tpu.memory_space<vmem>>, vector<1x8x128xf32>
    %1 = vector.shape_cast %0 : vector<1x8x128xf32> to vector<8x128xf32>
    %2 = vector.extract_strided_slice %1 {offsets = [0, 0], sizes = [8, 64], strides = [1, 1]} : vector<8x128xf32> to vector<8x64xf32>
    %3 = vector.extract_strided_slice %1 {offsets = [0, 64], sizes = [8, 64], strides = [1, 1]} : vector<8x128xf32> to vector<8x64xf32>
    %cst = arith.constant dense<0.000000e+00> : vector<64xf32>
    %4 = vector.multi_reduction <add>, %2, %cst [0] : vector<8x64xf32> to vector<64xf32>
    %5 = vector.shape_cast %4 : vector<64xf32> to vector<1x64xf32>
    %cst_2 = arith.constant 8.000000e+00 : f32
    %6 = vector.broadcast %cst_2 : f32 to vector<1x64xf32>
    %7 = arith.divf %5, %6 : vector<1x64xf32>
    %cst_3 = arith.constant dense<0xFF800000> : vector<64xf32>
    %8 = vector.multi_reduction <maximumf>, %2, %cst_3 [0] : vector<8x64xf32> to vector<64xf32>
    %9 = vector.shape_cast %8 : vector<64xf32> to vector<1x64xf32>
    %10 = arith.truncf %7 : vector<1x64xf32> to vector<1x64xbf16>
    %c0_4 = arith.constant 0 : index
    %c0_5 = arith.constant 0 : index
    %11 = vector.load %arg2[%c0_4, %c0_5] : memref<64x4xbf16, #tpu.memory_space<vmem>>, vector<64x4xbf16>
    %cst_6 = arith.constant dense<0.000000e+00> : vector<1x4xf32>
    %12 = tpu.matmul %10, %11, %cst_6 {dimension_numbers = #tpu.dot_dimension_numbers<[1], [0], [0], [1], [0, 0, 1, 1], [], []>} : vector<1x64xbf16>, vector<64x4xbf16>, vector<1x4xf32> -> vector<1x4xf32>
    %13 = arith.negf %12 : vector<1x4xf32>
    %14 = math.exp %13 : vector<1x4xf32>
    %cst_7 = arith.constant 1.000000e+00 : f32
    %15 = vector.broadcast %cst_7 : f32 to vector<1x4xf32>
    %16 = arith.addf %15, %14 : vector<1x4xf32>
    %17 = arith.divf %15, %16 : vector<1x4xf32>
    %18 = arith.mulf %12, %17 : vector<1x4xf32>
    %19 = arith.truncf %18 : vector<1x4xf32> to vector<1x4xbf16>
    %c0_8 = arith.constant 0 : index
    %c0_9 = arith.constant 0 : index
    %20 = vector.load %arg3[%c0_8, %c0_9] : memref<4x64xbf16, #tpu.memory_space<vmem>>, vector<4x64xbf16>
    %cst_10 = arith.constant dense<0.000000e+00> : vector<1x64xf32>
    %21 = tpu.matmul %19, %20, %cst_10 {dimension_numbers = #tpu.dot_dimension_numbers<[1], [0], [0], [1], [0, 0, 1, 1], [], []>} : vector<1x4xbf16>, vector<4x64xbf16>, vector<1x64xf32> -> vector<1x64xf32>
    %22 = arith.truncf %9 : vector<1x64xf32> to vector<1x64xbf16>
    %c0_11 = arith.constant 0 : index
    %c0_12 = arith.constant 0 : index
    %23 = vector.load %arg2[%c0_11, %c0_12] : memref<64x4xbf16, #tpu.memory_space<vmem>>, vector<64x4xbf16>
    %cst_13 = arith.constant dense<0.000000e+00> : vector<1x4xf32>
    %24 = tpu.matmul %22, %23, %cst_13 {dimension_numbers = #tpu.dot_dimension_numbers<[1], [0], [0], [1], [0, 0, 1, 1], [], []>} : vector<1x64xbf16>, vector<64x4xbf16>, vector<1x4xf32> -> vector<1x4xf32>
    %25 = arith.negf %24 : vector<1x4xf32>
    %26 = math.exp %25 : vector<1x4xf32>
    %cst_14 = arith.constant 1.000000e+00 : f32
    %27 = vector.broadcast %cst_14 : f32 to vector<1x4xf32>
    %28 = arith.addf %27, %26 : vector<1x4xf32>
    %29 = arith.divf %27, %28 : vector<1x4xf32>
    %30 = arith.mulf %24, %29 : vector<1x4xf32>
    %31 = arith.truncf %30 : vector<1x4xf32> to vector<1x4xbf16>
    %c0_15 = arith.constant 0 : index
    %c0_16 = arith.constant 0 : index
    %32 = vector.load %arg3[%c0_15, %c0_16] : memref<4x64xbf16, #tpu.memory_space<vmem>>, vector<4x64xbf16>
    %cst_17 = arith.constant dense<0.000000e+00> : vector<1x64xf32>
    %33 = tpu.matmul %31, %32, %cst_17 {dimension_numbers = #tpu.dot_dimension_numbers<[1], [0], [0], [1], [0, 0, 1, 1], [], []>} : vector<1x4xbf16>, vector<4x64xbf16>, vector<1x64xf32> -> vector<1x64xf32>
    %34 = arith.addf %21, %33 : vector<1x64xf32>
    %35 = arith.negf %34 : vector<1x64xf32>
    %36 = math.exp %35 : vector<1x64xf32>
    %cst_18 = arith.constant 1.000000e+00 : f32
    %37 = vector.broadcast %cst_18 : f32 to vector<1x64xf32>
    %38 = arith.addf %37, %36 : vector<1x64xf32>
    %39 = arith.divf %37, %38 : vector<1x64xf32>
    %40 = vector.broadcast %39 : vector<1x64xf32> to vector<8x64xf32>
    %41 = arith.mulf %2, %40 : vector<8x64xf32>
    %cst_19 = arith.constant dense<0.000000e+00> : vector<8xf32>
    %42 = vector.multi_reduction <add>, %3, %cst_19 [1] : vector<8x64xf32> to vector<8xf32>
    %43 = vector.shape_cast %42 : vector<8xf32> to vector<8x1xf32>
    %cst_20 = arith.constant 6.400000e+01 : f32
    %44 = vector.broadcast %cst_20 : f32 to vector<8x1xf32>
    %45 = arith.divf %43, %44 : vector<8x1xf32>
    %cst_21 = arith.constant dense<0xFF800000> : vector<8xf32>
    %46 = vector.multi_reduction <maximumf>, %3, %cst_21 [1] : vector<8x64xf32> to vector<8xf32>
    %47 = vector.shape_cast %46 : vector<8xf32> to vector<8x1xf32>
    %c0_22 = arith.constant 0 : index
    %c0_23 = arith.constant 0 : index
    %c0_24 = arith.constant 0 : index
    %48 = vector.load %arg4[%c0_22, %c0_23, %c0_24] : memref<2x8x8xf32, #tpu.memory_space<vmem>>, vector<1x8x8xf32>
    %49 = vector.shape_cast %48 : vector<1x8x8xf32> to vector<8x8xf32>
    %cst_25 = arith.constant dense<0.000000e+00> : vector<8x1xf32>
    %50 = tpu.matmul %49, %45, %cst_25 {dimension_numbers = #tpu.dot_dimension_numbers<[1], [0], [0], [1], [0, 0, 1, 1], [], []>} : vector<8x8xf32>, vector<8x1xf32>, vector<8x1xf32> -> vector<8x1xf32>
    %c1 = arith.constant 1 : index
    %c0_26 = arith.constant 0 : index
    %c0_27 = arith.constant 0 : index
    %51 = vector.load %arg4[%c1, %c0_26, %c0_27] : memref<2x8x8xf32, #tpu.memory_space<vmem>>, vector<1x8x8xf32>
    %52 = vector.shape_cast %51 : vector<1x8x8xf32> to vector<8x8xf32>
    %cst_28 = arith.constant dense<0.000000e+00> : vector<8x1xf32>
    %53 = tpu.matmul %52, %47, %cst_28 {dimension_numbers = #tpu.dot_dimension_numbers<[1], [0], [0], [1], [0, 0, 1, 1], [], []>} : vector<8x8xf32>, vector<8x1xf32>, vector<8x1xf32> -> vector<8x1xf32>
    %54 = arith.addf %50, %53 : vector<8x1xf32>
    %55 = arith.negf %54 : vector<8x1xf32>
    %56 = math.exp %55 : vector<8x1xf32>
    %cst_29 = arith.constant 1.000000e+00 : f32
    %57 = vector.broadcast %cst_29 : f32 to vector<8x1xf32>
    %58 = arith.addf %57, %56 : vector<8x1xf32>
    %59 = arith.divf %57, %58 : vector<8x1xf32>
    %60 = vector.broadcast %59 : vector<8x1xf32> to vector<8x64xf32>
    %61 = arith.mulf %3, %60 : vector<8x64xf32>
    %c0_30 = arith.constant 0 : index
    %c0_31 = arith.constant 0 : index
    %c0_32 = arith.constant 0 : index
    %62 = vector.load %arg8[%c0_30, %c0_31, %c0_32] : memref<1x8x64xf32, #tpu.memory_space<vmem>>, vector<1x8x64xf32>
    %63 = vector.shape_cast %62 : vector<1x8x64xf32> to vector<8x64xf32>
    %64 = vector.shape_cast %61 : vector<8x64xf32> to vector<1x8x64xf32>
    tpu.vector_store %arg8[%c0_30, %c0_31, %c0_32], %64 {strides = array<i32>} : memref<1x8x64xf32, #tpu.memory_space<vmem>>, vector<1x8x64xf32>,
    %cst_33 = arith.constant 0.000000e+00 : f32
    %65 = vector.broadcast %cst_33 : f32 to vector<10x64xf32>
    %c0_34 = arith.constant 0 : index
    %c0_35 = arith.constant 0 : index
    %66 = vector.load %arg9[%c0_34, %c0_35] : memref<10x64xf32, #tpu.memory_space<vmem>>, vector<10x64xf32>
    tpu.vector_store %arg9[%c0_34, %c0_35], %65 {strides = array<i32>} : memref<10x64xf32, #tpu.memory_space<vmem>>, vector<10x64xf32>,
    %c2 = arith.constant 2 : index
    %c0_36 = arith.constant 0 : index
    %67 = vector.load %arg9[%c2, %c0_36] : memref<10x64xf32, #tpu.memory_space<vmem>>, vector<8x64xf32>
    tpu.vector_store %arg9[%c2, %c0_36], %41 {strides = array<i32>} : memref<10x64xf32, #tpu.memory_space<vmem>>, vector<8x64xf32>,
    %cst_37 = arith.constant 0.000000e+00 : f32
    %68 = vector.broadcast %cst_37 : f32 to vector<8x64xf32>
    %c0_38 = arith.constant 0 : index
    %c0_39 = arith.constant 0 : index
    %69 = vector.load %arg9[%c0_38, %c0_39] : memref<10x64xf32, #tpu.memory_space<vmem>>, vector<8x64xf32>
    %c0_40 = arith.constant 0 : index
    %c0_41 = arith.constant 0 : index
    %70 = vector.load %arg5[%c0_40, %c0_41] : memref<3x64xf32, #tpu.memory_space<vmem>>, vector<1x64xf32>
    %71 = vector.broadcast %70 : vector<1x64xf32> to vector<8x64xf32>
    %72 = arith.mulf %69, %71 : vector<8x64xf32>
    %73 = arith.addf %68, %72 : vector<8x64xf32>
    %c1_42 = arith.constant 1 : index
    %c0_43 = arith.constant 0 : index
    %74 = vector.load %arg9[%c1_42, %c0_43] : memref<10x64xf32, #tpu.memory_space<vmem>>, vector<8x64xf32>
    %c1_44 = arith.constant 1 : index
    %c0_45 = arith.constant 0 : index
    %75 = vector.load %arg5[%c1_44, %c0_45] : memref<3x64xf32, #tpu.memory_space<vmem>>, vector<1x64xf32>
    %76 = vector.broadcast %75 : vector<1x64xf32> to vector<8x64xf32>
    %77 = arith.mulf %74, %76 : vector<8x64xf32>
    %78 = arith.addf %73, %77 : vector<8x64xf32>
    %c2_46 = arith.constant 2 : index
    %c0_47 = arith.constant 0 : index
    %79 = vector.load %arg9[%c2_46, %c0_47] : memref<10x64xf32, #tpu.memory_space<vmem>>, vector<8x64xf32>
    %c2_48 = arith.constant 2 : index
    %c0_49 = arith.constant 0 : index
    %80 = vector.load %arg5[%c2_48, %c0_49] : memref<3x64xf32, #tpu.memory_space<vmem>>, vector<1x64xf32>
    %81 = vector.broadcast %80 : vector<1x64xf32> to vector<8x64xf32>
    %82 = arith.mulf %79, %81 : vector<8x64xf32>
    %83 = arith.addf %78, %82 : vector<8x64xf32>
    %c0_50 = arith.constant 0 : index
    %c0_51 = arith.constant 0 : index
    %84 = vector.load %arg6[%c0_50, %c0_51] : memref<1x64xf32, #tpu.memory_space<vmem>>, vector<1x64xf32>
    %85 = vector.broadcast %84 : vector<1x64xf32> to vector<8x64xf32>
    %86 = arith.addf %83, %85 : vector<8x64xf32>
    %87 = arith.negf %86 : vector<8x64xf32>
    %88 = math.exp %87 : vector<8x64xf32>
    %cst_52 = arith.constant 1.000000e+00 : f32
    %89 = vector.broadcast %cst_52 : f32 to vector<8x64xf32>
    %90 = arith.addf %89, %88 : vector<8x64xf32>
    %91 = arith.divf %89, %90 : vector<8x64xf32>
    %92 = arith.mulf %86, %91 : vector<8x64xf32>
    %c0_53 = arith.constant 0 : index
    %c0_54 = arith.constant 0 : index
    %c0_55 = arith.constant 0 : index
    %93 = vector.load %arg7[%c0_53, %c0_54, %c0_55] : memref<1x8x64xf32, #tpu.memory_space<vmem>>, vector<1x8x64xf32>
    %94 = vector.shape_cast %93 : vector<1x8x64xf32> to vector<8x64xf32>
    %95 = vector.shape_cast %92 : vector<8x64xf32> to vector<1x8x64xf32>
    tpu.vector_store %arg7[%c0_53, %c0_54, %c0_55], %95 {strides = array<i32>} : memref<1x8x64xf32, #tpu.memory_space<vmem>>, vector<1x8x64xf32>,
    return
  }
  func.func @transform_0(%arg0: i32) -> (i32, i32, i32) {
    %c0_i32 = arith.constant 0 : i32
    %c0_i32_0 = arith.constant 0 : i32
    %c0_i32_1 = arith.constant 0 : i32
    return %arg0, %c0_i32, %c0_i32_0 : i32, i32, i32
  }
  func.func @transform_1(%arg0: i32) -> (i32, i32) {
    %c0_i32 = arith.constant 0 : i32
    %c0_i32_0 = arith.constant 0 : i32
    %c0_i32_1 = arith.constant 0 : i32
    return %c0_i32, %c0_i32_0 : i32, i32
  }
  func.func @transform_2(%arg0: i32) -> (i32, i32) {
    %c0_i32 = arith.constant 0 : i32
    %c0_i32_0 = arith.constant 0 : i32
    %c0_i32_1 = arith.constant 0 : i32
    return %c0_i32, %c0_i32_0 : i32, i32
  }
  func.func @transform_3(%arg0: i32) -> (i32, i32, i32) {
    %c0_i32 = arith.constant 0 : i32
    %c0_i32_0 = arith.constant 0 : i32
    %c0_i32_1 = arith.constant 0 : i32
    %c0_i32_2 = arith.constant 0 : i32
    return %c0_i32, %c0_i32_0, %c0_i32_1 : i32, i32, i32
  }
  func.func @transform_4(%arg0: i32) -> (i32, i32) {
    %c0_i32 = arith.constant 0 : i32
    %c0_i32_0 = arith.constant 0 : i32
    %c0_i32_1 = arith.constant 0 : i32
    return %c0_i32, %c0_i32_0 : i32, i32
  }
  func.func @transform_5(%arg0: i32) -> (i32, i32) {
    %c0_i32 = arith.constant 0 : i32
    %c0_i32_0 = arith.constant 0 : i32
    %c0_i32_1 = arith.constant 0 : i32
    return %c0_i32, %c0_i32_0 : i32, i32
  }
  func.func @transform_6(%arg0: i32) -> (i32, i32, i32) {
    %c0_i32 = arith.constant 0 : i32
    %c0_i32_0 = arith.constant 0 : i32
    %c0_i32_1 = arith.constant 0 : i32
    return %arg0, %c0_i32, %c0_i32_0 : i32, i32, i32
  }
  func.func @transform_7(%arg0: i32) -> (i32, i32, i32) {
    %c0_i32 = arith.constant 0 : i32
    %c0_i32_0 = arith.constant 0 : i32
    %c0_i32_1 = arith.constant 0 : i32
    return %arg0, %c0_i32, %c0_i32_0 : i32, i32, i32
  }
}

module attributes {stable_mosaic.version = 11 : i64} {
  func.func @_mm_kernel(%arg0: i32, %arg1: i32, %arg2: i32, %arg3: memref<16x128xf32, #tpu.memory_space<vmem>>, %arg4: memref<128x128xbf16, #tpu.memory_space<vmem>>, %arg5: memref<1x128xf32, #tpu.memory_space<vmem>>, %arg6: memref<16x128xf32, #tpu.memory_space<vmem>>, %arg7: memref<16x128xf32, #tpu.memory_space<vmem>>) attributes {dimension_semantics = [#tpu.dimension_semantics<parallel>, #tpu.dimension_semantics<parallel>, #tpu.dimension_semantics<arbitrary>], iteration_bounds = array<i64: 1, 1, 1>, scalar_prefetch = 0 : i64, scratch_operands = 1 : i64, tpu.core_type = #tpu.core_type<tc>, window_params = [{transform_indices = @transform_0, window_bounds = array<i64: 16, 128>}, {transform_indices = @transform_1, window_bounds = array<i64: 128, 128>}, {transform_indices = @transform_2, window_bounds = array<i64: 1, 128>}, {transform_indices = @transform_3, window_bounds = array<i64: 16, 128>}]} {
    %c0_i32 = arith.constant 0 : i32
    %0 = arith.cmpi eq, %arg2, %c0_i32 : i32
    %1 = arith.extui %0 : i1 to i32
    %c0_i32_0 = arith.constant 0 : i32
    %2 = arith.cmpi ne, %1, %c0_i32_0 : i32
    scf.if %2 {
      %cst_10 = arith.constant 0.000000e+00 : f32
      %13 = vector.broadcast %cst_10 : f32 to vector<16x128xf32>
      %c0_11 = arith.constant 0 : index
      %c0_12 = arith.constant 0 : index
      %14 = vector.load %arg7[%c0_11, %c0_12] : memref<16x128xf32, #tpu.memory_space<vmem>>, vector<16x128xf32>
      tpu.vector_store %arg7[%c0_11, %c0_12], %13 {strides = array<i32>} : memref<16x128xf32, #tpu.memory_space<vmem>>, vector<16x128xf32>,
    } else {
    }
    %c0 = arith.constant 0 : index
    %c0_1 = arith.constant 0 : index
    %3 = vector.load %arg3[%c0, %c0_1] : memref<16x128xf32, #tpu.memory_space<vmem>>, vector<16x128xf32>
    %4 = arith.truncf %3 : vector<16x128xf32> to vector<16x128xbf16>
    %c0_2 = arith.constant 0 : index
    %c0_3 = arith.constant 0 : index
    %5 = vector.load %arg7[%c0_2, %c0_3] : memref<16x128xf32, #tpu.memory_space<vmem>>, vector<16x128xf32>
    %c0_4 = arith.constant 0 : index
    %c0_5 = arith.constant 0 : index
    %6 = vector.load %arg4[%c0_4, %c0_5] : memref<128x128xbf16, #tpu.memory_space<vmem>>, vector<128x128xbf16>
    %cst = arith.constant dense<0.000000e+00> : vector<16x128xf32>
    %7 = tpu.matmul %4, %6, %cst {dimension_numbers = #tpu.dot_dimension_numbers<[1], [0], [0], [1], [0, 0, 1, 1], [], []>} : vector<16x128xbf16>, vector<128x128xbf16>, vector<16x128xf32> -> vector<16x128xf32>
    %8 = arith.addf %5, %7 : vector<16x128xf32>
    %c0_6 = arith.constant 0 : index
    %c0_7 = arith.constant 0 : index
    %9 = vector.load %arg7[%c0_6, %c0_7] : memref<16x128xf32, #tpu.memory_space<vmem>>, vector<16x128xf32>
    tpu.vector_store %arg7[%c0_6, %c0_7], %8 {strides = array<i32>} : memref<16x128xf32, #tpu.memory_space<vmem>>, vector<16x128xf32>,
    %c0_i32_8 = arith.constant 0 : i32
    %10 = arith.cmpi eq, %arg2, %c0_i32_8 : i32
    %11 = arith.extui %10 : i1 to i32
    %c0_i32_9 = arith.constant 0 : i32
    %12 = arith.cmpi ne, %11, %c0_i32_9 : i32
    scf.if %12 {
      %c0_10 = arith.constant 0 : index
      %c0_11 = arith.constant 0 : index
      %13 = vector.load %arg7[%c0_10, %c0_11] : memref<16x128xf32, #tpu.memory_space<vmem>>, vector<16x128xf32>
      %c0_12 = arith.constant 0 : index
      %c0_13 = arith.constant 0 : index
      %14 = vector.load %arg5[%c0_12, %c0_13] : memref<1x128xf32, #tpu.memory_space<vmem>>, vector<1x128xf32>
      %15 = vector.broadcast %14 : vector<1x128xf32> to vector<16x128xf32>
      %16 = arith.addf %13, %15 : vector<16x128xf32>
      %c0_14 = arith.constant 0 : index
      %c0_15 = arith.constant 0 : index
      %17 = vector.load %arg6[%c0_14, %c0_15] : memref<16x128xf32, #tpu.memory_space<vmem>>, vector<16x128xf32>
      tpu.vector_store %arg6[%c0_14, %c0_15], %16 {strides = array<i32>} : memref<16x128xf32, #tpu.memory_space<vmem>>, vector<16x128xf32>,
    } else {
    }
    return
  }
  func.func @transform_0(%arg0: i32, %arg1: i32, %arg2: i32) -> (i32, i32) {
    %c0_i32 = arith.constant 0 : i32
    return %arg0, %arg2 : i32, i32
  }
  func.func @transform_1(%arg0: i32, %arg1: i32, %arg2: i32) -> (i32, i32) {
    %c0_i32 = arith.constant 0 : i32
    return %arg2, %arg1 : i32, i32
  }
  func.func @transform_2(%arg0: i32, %arg1: i32, %arg2: i32) -> (i32, i32) {
    %c0_i32 = arith.constant 0 : i32
    %c0_i32_0 = arith.constant 0 : i32
    return %c0_i32, %arg1 : i32, i32
  }
  func.func @transform_3(%arg0: i32, %arg1: i32, %arg2: i32) -> (i32, i32) {
    %c0_i32 = arith.constant 0 : i32
    return %arg0, %arg1 : i32, i32
  }
}

module attributes {stable_mosaic.version = 11 : i64} {
  func.func @_selective_scan_kernel(%arg0: i32, %arg1: memref<1x8x64xf32, #tpu.memory_space<vmem>>, %arg2: memref<1x8x64xf32, #tpu.memory_space<vmem>>, %arg3: memref<1x8x64xf32, #tpu.memory_space<vmem>>, %arg4: memref<1x8x16xf32, #tpu.memory_space<vmem>>, %arg5: memref<1x8x16xf32, #tpu.memory_space<vmem>>, %arg6: memref<16x64xf32, #tpu.memory_space<vmem>>, %arg7: memref<1x64xf32, #tpu.memory_space<vmem>>, %arg8: memref<1x64xf32, #tpu.memory_space<vmem>>, %arg9: memref<1x8x64xf32, #tpu.memory_space<vmem>>, %arg10: memref<8x16x64xf32, #tpu.memory_space<vmem>>, %arg11: memref<8x16x64xf32, #tpu.memory_space<vmem>>) attributes {dimension_semantics = [#tpu.dimension_semantics<parallel>], iteration_bounds = array<i64: 2>, scalar_prefetch = 0 : i64, scratch_operands = 2 : i64, tpu.core_type = #tpu.core_type<tc>, window_params = [{transform_indices = @transform_0, window_bounds = array<i64: 1, 8, 64>}, {transform_indices = @transform_1, window_bounds = array<i64: 1, 8, 64>}, {transform_indices = @transform_2, window_bounds = array<i64: 1, 8, 64>}, {transform_indices = @transform_3, window_bounds = array<i64: 1, 8, 16>}, {transform_indices = @transform_4, window_bounds = array<i64: 1, 8, 16>}, {pipeline_mode = #tpu.pipeline_mode<synchronous>, transform_indices = @transform_5, window_bounds = array<i64: 16, 64>}, {pipeline_mode = #tpu.pipeline_mode<synchronous>, transform_indices = @transform_6, window_bounds = array<i64: 1, 64>}, {pipeline_mode = #tpu.pipeline_mode<synchronous>, transform_indices = @transform_7, window_bounds = array<i64: 1, 64>}, {transform_indices = @transform_8, window_bounds = array<i64: 1, 8, 64>}]} {
    %c0 = arith.constant 0 : index
    %c0_0 = arith.constant 0 : index
    %c0_1 = arith.constant 0 : index
    %0 = vector.load %arg1[%c0, %c0_0, %c0_1] : memref<1x8x64xf32, #tpu.memory_space<vmem>>, vector<1x8x64xf32>
    %1 = vector.shape_cast %0 : vector<1x8x64xf32> to vector<8x64xf32>
    %c0_2 = arith.constant 0 : index
    %c0_3 = arith.constant 0 : index
    %c0_4 = arith.constant 0 : index
    %2 = vector.load %arg2[%c0_2, %c0_3, %c0_4] : memref<1x8x64xf32, #tpu.memory_space<vmem>>, vector<1x8x64xf32>
    %3 = vector.shape_cast %2 : vector<1x8x64xf32> to vector<8x64xf32>
    %c0_5 = arith.constant 0 : index
    %c0_6 = arith.constant 0 : index
    %4 = vector.load %arg8[%c0_5, %c0_6] : memref<1x64xf32, #tpu.memory_space<vmem>>, vector<1x64xf32>
    %5 = vector.broadcast %4 : vector<1x64xf32> to vector<8x64xf32>
    %6 = arith.addf %3, %5 : vector<8x64xf32>
    %cst = arith.constant 2.000000e+01 : f32
    %7 = vector.broadcast %cst : f32 to vector<8x64xf32>
    %8 = arith.cmpf ogt, %6, %7 : vector<8x64xf32>
    %cst_7 = arith.constant 2.000000e+01 : f32
    %9 = vector.broadcast %cst_7 : f32 to vector<8x64xf32>
    %10 = arith.minimumf %6, %9 : vector<8x64xf32>
    %11 = math.exp %10 : vector<8x64xf32>
    %12 = math.log1p %11 : vector<8x64xf32>
    %13 = arith.select %8, %6, %12 : vector<8x64xi1>, vector<8x64xf32>
    %c0_8 = arith.constant 0 : index
    %c0_9 = arith.constant 0 : index
    %14 = vector.load %arg6[%c0_8, %c0_9] : memref<16x64xf32, #tpu.memory_space<vmem>>, vector<16x64xf32>
    %c0_10 = arith.constant 0 : index
    %c0_11 = arith.constant 0 : index
    %c0_12 = arith.constant 0 : index
    %15 = vector.load %arg4[%c0_10, %c0_11, %c0_12] : memref<1x8x16xf32, #tpu.memory_space<vmem>>, vector<1x8x16xf32>
    %16 = vector.shape_cast %15 : vector<1x8x16xf32> to vector<8x16xf32>
    %17 = vector.shape_cast %13 : vector<8x64xf32> to vector<8x1x64xf32>
    %18 = vector.shape_cast %14 : vector<16x64xf32> to vector<1x16x64xf32>
    %19 = vector.broadcast %17 : vector<8x1x64xf32> to vector<8x16x64xf32>
    %20 = vector.broadcast %18 : vector<1x16x64xf32> to vector<8x16x64xf32>
    %21 = arith.mulf %19, %20 : vector<8x16x64xf32>
    %22 = math.exp %21 : vector<8x16x64xf32>
    %c0_13 = arith.constant 0 : index
    %c0_14 = arith.constant 0 : index
    %c0_15 = arith.constant 0 : index
    %23 = vector.load %arg10[%c0_13, %c0_14, %c0_15] : memref<8x16x64xf32, #tpu.memory_space<vmem>>, vector<8x16x64xf32>
    tpu.vector_store %arg10[%c0_13, %c0_14, %c0_15], %22 {strides = array<i32>} : memref<8x16x64xf32, #tpu.memory_space<vmem>>, vector<8x16x64xf32>,
    %24 = arith.mulf %13, %1 : vector<8x64xf32>
    %25 = vector.shape_cast %24 : vector<8x64xf32> to vector<8x1x64xf32>
    %26 = vector.shape_cast %16 : vector<8x16xf32> to vector<8x16x1xf32>
    %27 = vector.broadcast %25 : vector<8x1x64xf32> to vector<8x16x64xf32>
    %28 = vector.broadcast %26 : vector<8x16x1xf32> to vector<8x16x64xf32>
    %29 = arith.mulf %27, %28 : vector<8x16x64xf32>
    %c0_16 = arith.constant 0 : index
    %c0_17 = arith.constant 0 : index
    %c0_18 = arith.constant 0 : index
    %30 = vector.load %arg11[%c0_16, %c0_17, %c0_18] : memref<8x16x64xf32, #tpu.memory_space<vmem>>, vector<8x16x64xf32>
    tpu.vector_store %arg11[%c0_16, %c0_17, %c0_18], %29 {strides = array<i32>} : memref<8x16x64xf32, #tpu.memory_space<vmem>>, vector<8x16x64xf32>,
    %cst_19 = arith.constant 0.000000e+00 : f32
    %31 = vector.broadcast %cst_19 : f32 to vector<16x64xf32>
    %c0_i32 = arith.constant 0 : i32
    %32 = arith.index_cast %c0_i32 : i32 to index
    %c0_20 = arith.constant 0 : index
    %c0_21 = arith.constant 0 : index
    %33 = vector.load %arg10[%32, %c0_20, %c0_21] : memref<8x16x64xf32, #tpu.memory_space<vmem>>, vector<1x16x64xf32>
    %34 = vector.shape_cast %33 : vector<1x16x64xf32> to vector<16x64xf32>
    %35 = arith.mulf %34, %31 : vector<16x64xf32>
    %36 = arith.index_cast %c0_i32 : i32 to index
    %c0_22 = arith.constant 0 : index
    %c0_23 = arith.constant 0 : index
    %37 = vector.load %arg11[%36, %c0_22, %c0_23] : memref<8x16x64xf32, #tpu.memory_space<vmem>>, vector<1x16x64xf32>
    %38 = vector.shape_cast %37 : vector<1x16x64xf32> to vector<16x64xf32>
    %39 = arith.addf %35, %38 : vector<16x64xf32>
    %40 = arith.index_cast %c0_i32 : i32 to index
    %c0_24 = arith.constant 0 : index
    %c0_25 = arith.constant 0 : index
    %41 = vector.load %arg11[%40, %c0_24, %c0_25] : memref<8x16x64xf32, #tpu.memory_space<vmem>>, vector<1x16x64xf32>
    %42 = vector.shape_cast %41 : vector<1x16x64xf32> to vector<16x64xf32>
    %43 = vector.shape_cast %39 : vector<16x64xf32> to vector<1x16x64xf32>
    tpu.vector_store %arg11[%40, %c0_24, %c0_25], %43 {strides = array<i32>} : memref<8x16x64xf32, #tpu.memory_space<vmem>>, vector<1x16x64xf32>,
    %c1_i32 = arith.constant 1 : i32
    %44 = arith.index_cast %c1_i32 : i32 to index
    %c0_26 = arith.constant 0 : index
    %c0_27 = arith.constant 0 : index
    %45 = vector.load %arg10[%44, %c0_26, %c0_27] : memref<8x16x64xf32, #tpu.memory_space<vmem>>, vector<1x16x64xf32>
    %46 = vector.shape_cast %45 : vector<1x16x64xf32> to vector<16x64xf32>
    %47 = arith.mulf %46, %39 : vector<16x64xf32>
    %48 = arith.index_cast %c1_i32 : i32 to index
    %c0_28 = arith.constant 0 : index
    %c0_29 = arith.constant 0 : index
    %49 = vector.load %arg11[%48, %c0_28, %c0_29] : memref<8x16x64xf32, #tpu.memory_space<vmem>>, vector<1x16x64xf32>
    %50 = vector.shape_cast %49 : vector<1x16x64xf32> to vector<16x64xf32>
    %51 = arith.addf %47, %50 : vector<16x64xf32>
    %52 = arith.index_cast %c1_i32 : i32 to index
    %c0_30 = arith.constant 0 : index
    %c0_31 = arith.constant 0 : index
    %53 = vector.load %arg11[%52, %c0_30, %c0_31] : memref<8x16x64xf32, #tpu.memory_space<vmem>>, vector<1x16x64xf32>
    %54 = vector.shape_cast %53 : vector<1x16x64xf32> to vector<16x64xf32>
    %55 = vector.shape_cast %51 : vector<16x64xf32> to vector<1x16x64xf32>
    tpu.vector_store %arg11[%52, %c0_30, %c0_31], %55 {strides = array<i32>} : memref<8x16x64xf32, #tpu.memory_space<vmem>>, vector<1x16x64xf32>,
    %c2_i32 = arith.constant 2 : i32
    %56 = arith.index_cast %c2_i32 : i32 to index
    %c0_32 = arith.constant 0 : index
    %c0_33 = arith.constant 0 : index
    %57 = vector.load %arg10[%56, %c0_32, %c0_33] : memref<8x16x64xf32, #tpu.memory_space<vmem>>, vector<1x16x64xf32>
    %58 = vector.shape_cast %57 : vector<1x16x64xf32> to vector<16x64xf32>
    %59 = arith.mulf %58, %51 : vector<16x64xf32>
    %60 = arith.index_cast %c2_i32 : i32 to index
    %c0_34 = arith.constant 0 : index
    %c0_35 = arith.constant 0 : index
    %61 = vector.load %arg11[%60, %c0_34, %c0_35] : memref<8x16x64xf32, #tpu.memory_space<vmem>>, vector<1x16x64xf32>
    %62 = vector.shape_cast %61 : vector<1x16x64xf32> to vector<16x64xf32>
    %63 = arith.addf %59, %62 : vector<16x64xf32>
    %64 = arith.index_cast %c2_i32 : i32 to index
    %c0_36 = arith.constant 0 : index
    %c0_37 = arith.constant 0 : index
    %65 = vector.load %arg11[%64, %c0_36, %c0_37] : memref<8x16x64xf32, #tpu.memory_space<vmem>>, vector<1x16x64xf32>
    %66 = vector.shape_cast %65 : vector<1x16x64xf32> to vector<16x64xf32>
    %67 = vector.shape_cast %63 : vector<16x64xf32> to vector<1x16x64xf32>
    tpu.vector_store %arg11[%64, %c0_36, %c0_37], %67 {strides = array<i32>} : memref<8x16x64xf32, #tpu.memory_space<vmem>>, vector<1x16x64xf32>,
    %c3_i32 = arith.constant 3 : i32
    %68 = arith.index_cast %c3_i32 : i32 to index
    %c0_38 = arith.constant 0 : index
    %c0_39 = arith.constant 0 : index
    %69 = vector.load %arg10[%68, %c0_38, %c0_39] : memref<8x16x64xf32, #tpu.memory_space<vmem>>, vector<1x16x64xf32>
    %70 = vector.shape_cast %69 : vector<1x16x64xf32> to vector<16x64xf32>
    %71 = arith.mulf %70, %63 : vector<16x64xf32>
    %72 = arith.index_cast %c3_i32 : i32 to index
    %c0_40 = arith.constant 0 : index
    %c0_41 = arith.constant 0 : index
    %73 = vector.load %arg11[%72, %c0_40, %c0_41] : memref<8x16x64xf32, #tpu.memory_space<vmem>>, vector<1x16x64xf32>
    %74 = vector.shape_cast %73 : vector<1x16x64xf32> to vector<16x64xf32>
    %75 = arith.addf %71, %74 : vector<16x64xf32>
    %76 = arith.index_cast %c3_i32 : i32 to index
    %c0_42 = arith.constant 0 : index
    %c0_43 = arith.constant 0 : index
    %77 = vector.load %arg11[%76, %c0_42, %c0_43] : memref<8x16x64xf32, #tpu.memory_space<vmem>>, vector<1x16x64xf32>
    %78 = vector.shape_cast %77 : vector<1x16x64xf32> to vector<16x64xf32>
    %79 = vector.shape_cast %75 : vector<16x64xf32> to vector<1x16x64xf32>
    tpu.vector_store %arg11[%76, %c0_42, %c0_43], %79 {strides = array<i32>} : memref<8x16x64xf32, #tpu.memory_space<vmem>>, vector<1x16x64xf32>,
    %c4_i32 = arith.constant 4 : i32
    %80 = arith.index_cast %c4_i32 : i32 to index
    %c0_44 = arith.constant 0 : index
    %c0_45 = arith.constant 0 : index
    %81 = vector.load %arg10[%80, %c0_44, %c0_45] : memref<8x16x64xf32, #tpu.memory_space<vmem>>, vector<1x16x64xf32>
    %82 = vector.shape_cast %81 : vector<1x16x64xf32> to vector<16x64xf32>
    %83 = arith.mulf %82, %75 : vector<16x64xf32>
    %84 = arith.index_cast %c4_i32 : i32 to index
    %c0_46 = arith.constant 0 : index
    %c0_47 = arith.constant 0 : index
    %85 = vector.load %arg11[%84, %c0_46, %c0_47] : memref<8x16x64xf32, #tpu.memory_space<vmem>>, vector<1x16x64xf32>
    %86 = vector.shape_cast %85 : vector<1x16x64xf32> to vector<16x64xf32>
    %87 = arith.addf %83, %86 : vector<16x64xf32>
    %88 = arith.index_cast %c4_i32 : i32 to index
    %c0_48 = arith.constant 0 : index
    %c0_49 = arith.constant 0 : index
    %89 = vector.load %arg11[%88, %c0_48, %c0_49] : memref<8x16x64xf32, #tpu.memory_space<vmem>>, vector<1x16x64xf32>
    %90 = vector.shape_cast %89 : vector<1x16x64xf32> to vector<16x64xf32>
    %91 = vector.shape_cast %87 : vector<16x64xf32> to vector<1x16x64xf32>
    tpu.vector_store %arg11[%88, %c0_48, %c0_49], %91 {strides = array<i32>} : memref<8x16x64xf32, #tpu.memory_space<vmem>>, vector<1x16x64xf32>,
    %c5_i32 = arith.constant 5 : i32
    %92 = arith.index_cast %c5_i32 : i32 to index
    %c0_50 = arith.constant 0 : index
    %c0_51 = arith.constant 0 : index
    %93 = vector.load %arg10[%92, %c0_50, %c0_51] : memref<8x16x64xf32, #tpu.memory_space<vmem>>, vector<1x16x64xf32>
    %94 = vector.shape_cast %93 : vector<1x16x64xf32> to vector<16x64xf32>
    %95 = arith.mulf %94, %87 : vector<16x64xf32>
    %96 = arith.index_cast %c5_i32 : i32 to index
    %c0_52 = arith.constant 0 : index
    %c0_53 = arith.constant 0 : index
    %97 = vector.load %arg11[%96, %c0_52, %c0_53] : memref<8x16x64xf32, #tpu.memory_space<vmem>>, vector<1x16x64xf32>
    %98 = vector.shape_cast %97 : vector<1x16x64xf32> to vector<16x64xf32>
    %99 = arith.addf %95, %98 : vector<16x64xf32>
    %100 = arith.index_cast %c5_i32 : i32 to index
    %c0_54 = arith.constant 0 : index
    %c0_55 = arith.constant 0 : index
    %101 = vector.load %arg11[%100, %c0_54, %c0_55] : memref<8x16x64xf32, #tpu.memory_space<vmem>>, vector<1x16x64xf32>
    %102 = vector.shape_cast %101 : vector<1x16x64xf32> to vector<16x64xf32>
    %103 = vector.shape_cast %99 : vector<16x64xf32> to vector<1x16x64xf32>
    tpu.vector_store %arg11[%100, %c0_54, %c0_55], %103 {strides = array<i32>} : memref<8x16x64xf32, #tpu.memory_space<vmem>>, vector<1x16x64xf32>,
    %c6_i32 = arith.constant 6 : i32
    %104 = arith.index_cast %c6_i32 : i32 to index
    %c0_56 = arith.constant 0 : index
    %c0_57 = arith.constant 0 : index
    %105 = vector.load %arg10[%104, %c0_56, %c0_57] : memref<8x16x64xf32, #tpu.memory_space<vmem>>, vector<1x16x64xf32>
    %106 = vector.shape_cast %105 : vector<1x16x64xf32> to vector<16x64xf32>
    %107 = arith.mulf %106, %99 : vector<16x64xf32>
    %108 = arith.index_cast %c6_i32 : i32 to index
    %c0_58 = arith.constant 0 : index
    %c0_59 = arith.constant 0 : index
    %109 = vector.load %arg11[%108, %c0_58, %c0_59] : memref<8x16x64xf32, #tpu.memory_space<vmem>>, vector<1x16x64xf32>
    %110 = vector.shape_cast %109 : vector<1x16x64xf32> to vector<16x64xf32>
    %111 = arith.addf %107, %110 : vector<16x64xf32>
    %112 = arith.index_cast %c6_i32 : i32 to index
    %c0_60 = arith.constant 0 : index
    %c0_61 = arith.constant 0 : index
    %113 = vector.load %arg11[%112, %c0_60, %c0_61] : memref<8x16x64xf32, #tpu.memory_space<vmem>>, vector<1x16x64xf32>
    %114 = vector.shape_cast %113 : vector<1x16x64xf32> to vector<16x64xf32>
    %115 = vector.shape_cast %111 : vector<16x64xf32> to vector<1x16x64xf32>
    tpu.vector_store %arg11[%112, %c0_60, %c0_61], %115 {strides = array<i32>} : memref<8x16x64xf32, #tpu.memory_space<vmem>>, vector<1x16x64xf32>,
    %c7_i32 = arith.constant 7 : i32
    %116 = arith.index_cast %c7_i32 : i32 to index
    %c0_62 = arith.constant 0 : index
    %c0_63 = arith.constant 0 : index
    %117 = vector.load %arg10[%116, %c0_62, %c0_63] : memref<8x16x64xf32, #tpu.memory_space<vmem>>, vector<1x16x64xf32>
    %118 = vector.shape_cast %117 : vector<1x16x64xf32> to vector<16x64xf32>
    %119 = arith.mulf %118, %111 : vector<16x64xf32>
    %120 = arith.index_cast %c7_i32 : i32 to index
    %c0_64 = arith.constant 0 : index
    %c0_65 = arith.constant 0 : index
    %121 = vector.load %arg11[%120, %c0_64, %c0_65] : memref<8x16x64xf32, #tpu.memory_space<vmem>>, vector<1x16x64xf32>
    %122 = vector.shape_cast %121 : vector<1x16x64xf32> to vector<16x64xf32>
    %123 = arith.addf %119, %122 : vector<16x64xf32>
    %124 = arith.index_cast %c7_i32 : i32 to index
    %c0_66 = arith.constant 0 : index
    %c0_67 = arith.constant 0 : index
    %125 = vector.load %arg11[%124, %c0_66, %c0_67] : memref<8x16x64xf32, #tpu.memory_space<vmem>>, vector<1x16x64xf32>
    %126 = vector.shape_cast %125 : vector<1x16x64xf32> to vector<16x64xf32>
    %127 = vector.shape_cast %123 : vector<16x64xf32> to vector<1x16x64xf32>
    tpu.vector_store %arg11[%124, %c0_66, %c0_67], %127 {strides = array<i32>} : memref<8x16x64xf32, #tpu.memory_space<vmem>>, vector<1x16x64xf32>,
    %c8_i32 = arith.constant 8 : i32
    %c0_68 = arith.constant 0 : index
    %c0_69 = arith.constant 0 : index
    %c0_70 = arith.constant 0 : index
    %128 = vector.load %arg5[%c0_68, %c0_69, %c0_70] : memref<1x8x16xf32, #tpu.memory_space<vmem>>, vector<1x8x16xf32>
    %129 = vector.shape_cast %128 : vector<1x8x16xf32> to vector<8x16xf32>
    %c0_71 = arith.constant 0 : index
    %c0_72 = arith.constant 0 : index
    %c0_73 = arith.constant 0 : index
    %130 = vector.load %arg11[%c0_71, %c0_72, %c0_73] : memref<8x16x64xf32, #tpu.memory_space<vmem>>, vector<8x16x64xf32>
    %131 = vector.shape_cast %129 : vector<8x16xf32> to vector<8x16x1xf32>
    %132 = vector.broadcast %131 : vector<8x16x1xf32> to vector<8x16x64xf32>
    %133 = arith.mulf %130, %132 : vector<8x16x64xf32>
    %cst_74 = arith.constant dense<0.000000e+00> : vector<8x64xf32>
    %134 = vector.multi_reduction <add>, %133, %cst_74 [1] : vector<8x16x64xf32> to vector<8x64xf32>
    %c0_75 = arith.constant 0 : index
    %c0_76 = arith.constant 0 : index
    %135 = vector.load %arg7[%c0_75, %c0_76] : memref<1x64xf32, #tpu.memory_space<vmem>>, vector<1x64xf32>
    %136 = vector.broadcast %135 : vector<1x64xf32> to vector<8x64xf32>
    %137 = arith.mulf %1, %136 : vector<8x64xf32>
    %138 = arith.addf %134, %137 : vector<8x64xf32>
    %c0_77 = arith.constant 0 : index
    %c0_78 = arith.constant 0 : index
    %c0_79 = arith.constant 0 : index
    %139 = vector.load %arg3[%c0_77, %c0_78, %c0_79] : memref<1x8x64xf32, #tpu.memory_space<vmem>>, vector<1x8x64xf32>
    %140 = vector.shape_cast %139 : vector<1x8x64xf32> to vector<8x64xf32>
    %141 = arith.negf %140 : vector<8x64xf32>
    %142 = math.exp %141 : vector<8x64xf32>
    %cst_80 = arith.constant 1.000000e+00 : f32
    %143 = vector.broadcast %cst_80 : f32 to vector<8x64xf32>
    %144 = arith.addf %143, %142 : vector<8x64xf32>
    %145 = arith.divf %143, %144 : vector<8x64xf32>
    %146 = arith.mulf %140, %145 : vector<8x64xf32>
    %147 = arith.mulf %138, %146 : vector<8x64xf32>
    %c0_81 = arith.constant 0 : index
    %c0_82 = arith.constant 0 : index
    %c0_83 = arith.constant 0 : index
    %148 = vector.load %arg9[%c0_81, %c0_82, %c0_83] : memref<1x8x64xf32, #tpu.memory_space<vmem>>, vector<1x8x64xf32>
    %149 = vector.shape_cast %148 : vector<1x8x64xf32> to vector<8x64xf32>
    %150 = vector.shape_cast %147 : vector<8x64xf32> to vector<1x8x64xf32>
    tpu.vector_store %arg9[%c0_81, %c0_82, %c0_83], %150 {strides = array<i32>} : memref<1x8x64xf32, #tpu.memory_space<vmem>>, vector<1x8x64xf32>,
    return
  }
  func.func @transform_0(%arg0: i32) -> (i32, i32, i32) {
    %c0_i32 = arith.constant 0 : i32
    %c0_i32_0 = arith.constant 0 : i32
    %c0_i32_1 = arith.constant 0 : i32
    return %arg0, %c0_i32, %c0_i32_0 : i32, i32, i32
  }
  func.func @transform_1(%arg0: i32) -> (i32, i32, i32) {
    %c0_i32 = arith.constant 0 : i32
    %c0_i32_0 = arith.constant 0 : i32
    %c0_i32_1 = arith.constant 0 : i32
    return %arg0, %c0_i32, %c0_i32_0 : i32, i32, i32
  }
  func.func @transform_2(%arg0: i32) -> (i32, i32, i32) {
    %c0_i32 = arith.constant 0 : i32
    %c0_i32_0 = arith.constant 0 : i32
    %c0_i32_1 = arith.constant 0 : i32
    return %arg0, %c0_i32, %c0_i32_0 : i32, i32, i32
  }
  func.func @transform_3(%arg0: i32) -> (i32, i32, i32) {
    %c0_i32 = arith.constant 0 : i32
    %c0_i32_0 = arith.constant 0 : i32
    %c0_i32_1 = arith.constant 0 : i32
    return %arg0, %c0_i32, %c0_i32_0 : i32, i32, i32
  }
  func.func @transform_4(%arg0: i32) -> (i32, i32, i32) {
    %c0_i32 = arith.constant 0 : i32
    %c0_i32_0 = arith.constant 0 : i32
    %c0_i32_1 = arith.constant 0 : i32
    return %arg0, %c0_i32, %c0_i32_0 : i32, i32, i32
  }
  func.func @transform_5(%arg0: i32) -> (i32, i32) {
    %c0_i32 = arith.constant 0 : i32
    %c0_i32_0 = arith.constant 0 : i32
    %c0_i32_1 = arith.constant 0 : i32
    return %c0_i32, %c0_i32_0 : i32, i32
  }
  func.func @transform_6(%arg0: i32) -> (i32, i32) {
    %c0_i32 = arith.constant 0 : i32
    %c0_i32_0 = arith.constant 0 : i32
    %c0_i32_1 = arith.constant 0 : i32
    return %c0_i32, %c0_i32_0 : i32, i32
  }
  func.func @transform_7(%arg0: i32) -> (i32, i32) {
    %c0_i32 = arith.constant 0 : i32
    %c0_i32_0 = arith.constant 0 : i32
    %c0_i32_1 = arith.constant 0 : i32
    return %c0_i32, %c0_i32_0 : i32, i32
  }
  func.func @transform_8(%arg0: i32) -> (i32, i32, i32) {
    %c0_i32 = arith.constant 0 : i32
    %c0_i32_0 = arith.constant 0 : i32
    %c0_i32_1 = arith.constant 0 : i32
    return %arg0, %c0_i32, %c0_i32_0 : i32, i32, i32
  }
}

module attributes {stable_mosaic.version = 11 : i64} {
  func.func @_mm_kernel(%arg0: i32, %arg1: i32, %arg2: i32, %arg3: memref<16x128xf32, #tpu.memory_space<vmem>>, %arg4: memref<128x128xbf16, #tpu.memory_space<vmem>>, %arg5: memref<1x128xf32, #tpu.memory_space<vmem>>, %arg6: memref<16x128xbf16, #tpu.memory_space<vmem>>, %arg7: memref<16x128xf32, #tpu.memory_space<vmem>>) attributes {dimension_semantics = [#tpu.dimension_semantics<parallel>, #tpu.dimension_semantics<parallel>, #tpu.dimension_semantics<arbitrary>], iteration_bounds = array<i64: 1, 1, 1>, scalar_prefetch = 0 : i64, scratch_operands = 1 : i64, tpu.core_type = #tpu.core_type<tc>, window_params = [{transform_indices = @transform_0, window_bounds = array<i64: 16, 128>}, {transform_indices = @transform_1, window_bounds = array<i64: 128, 128>}, {transform_indices = @transform_2, window_bounds = array<i64: 1, 128>}, {transform_indices = @transform_3, window_bounds = array<i64: 16, 128>}]} {
    %c0_i32 = arith.constant 0 : i32
    %0 = arith.cmpi eq, %arg2, %c0_i32 : i32
    %1 = arith.extui %0 : i1 to i32
    %c0_i32_0 = arith.constant 0 : i32
    %2 = arith.cmpi ne, %1, %c0_i32_0 : i32
    scf.if %2 {
      %cst_10 = arith.constant 0.000000e+00 : f32
      %13 = vector.broadcast %cst_10 : f32 to vector<16x128xf32>
      %c0_11 = arith.constant 0 : index
      %c0_12 = arith.constant 0 : index
      %14 = vector.load %arg7[%c0_11, %c0_12] : memref<16x128xf32, #tpu.memory_space<vmem>>, vector<16x128xf32>
      tpu.vector_store %arg7[%c0_11, %c0_12], %13 {strides = array<i32>} : memref<16x128xf32, #tpu.memory_space<vmem>>, vector<16x128xf32>,
    } else {
    }
    %c0 = arith.constant 0 : index
    %c0_1 = arith.constant 0 : index
    %3 = vector.load %arg3[%c0, %c0_1] : memref<16x128xf32, #tpu.memory_space<vmem>>, vector<16x128xf32>
    %4 = arith.truncf %3 : vector<16x128xf32> to vector<16x128xbf16>
    %c0_2 = arith.constant 0 : index
    %c0_3 = arith.constant 0 : index
    %5 = vector.load %arg7[%c0_2, %c0_3] : memref<16x128xf32, #tpu.memory_space<vmem>>, vector<16x128xf32>
    %c0_4 = arith.constant 0 : index
    %c0_5 = arith.constant 0 : index
    %6 = vector.load %arg4[%c0_4, %c0_5] : memref<128x128xbf16, #tpu.memory_space<vmem>>, vector<128x128xbf16>
    %cst = arith.constant dense<0.000000e+00> : vector<16x128xf32>
    %7 = tpu.matmul %4, %6, %cst {dimension_numbers = #tpu.dot_dimension_numbers<[1], [0], [0], [1], [0, 0, 1, 1], [], []>} : vector<16x128xbf16>, vector<128x128xbf16>, vector<16x128xf32> -> vector<16x128xf32>
    %8 = arith.addf %5, %7 : vector<16x128xf32>
    %c0_6 = arith.constant 0 : index
    %c0_7 = arith.constant 0 : index
    %9 = vector.load %arg7[%c0_6, %c0_7] : memref<16x128xf32, #tpu.memory_space<vmem>>, vector<16x128xf32>
    tpu.vector_store %arg7[%c0_6, %c0_7], %8 {strides = array<i32>} : memref<16x128xf32, #tpu.memory_space<vmem>>, vector<16x128xf32>,
    %c0_i32_8 = arith.constant 0 : i32
    %10 = arith.cmpi eq, %arg2, %c0_i32_8 : i32
    %11 = arith.extui %10 : i1 to i32
    %c0_i32_9 = arith.constant 0 : i32
    %12 = arith.cmpi ne, %11, %c0_i32_9 : i32
    scf.if %12 {
      %c0_10 = arith.constant 0 : index
      %c0_11 = arith.constant 0 : index
      %13 = vector.load %arg7[%c0_10, %c0_11] : memref<16x128xf32, #tpu.memory_space<vmem>>, vector<16x128xf32>
      %c0_12 = arith.constant 0 : index
      %c0_13 = arith.constant 0 : index
      %14 = vector.load %arg5[%c0_12, %c0_13] : memref<1x128xf32, #tpu.memory_space<vmem>>, vector<1x128xf32>
      %15 = vector.broadcast %14 : vector<1x128xf32> to vector<16x128xf32>
      %16 = arith.addf %13, %15 : vector<16x128xf32>
      %cst_14 = arith.constant 5.000000e-01 : f32
      %17 = vector.broadcast %cst_14 : f32 to vector<16x128xf32>
      %18 = arith.mulf %17, %16 : vector<16x128xf32>
      %cst_15 = arith.constant 4.471500e-02 : f32
      %19 = vector.broadcast %cst_15 : f32 to vector<16x128xf32>
      %20 = arith.mulf %19, %16 : vector<16x128xf32>
      %21 = arith.mulf %20, %16 : vector<16x128xf32>
      %22 = arith.mulf %21, %16 : vector<16x128xf32>
      %23 = arith.addf %16, %22 : vector<16x128xf32>
      %cst_16 = arith.constant 0.797884583 : f32
      %24 = vector.broadcast %cst_16 : f32 to vector<16x128xf32>
      %25 = arith.mulf %24, %23 : vector<16x128xf32>
      %26 = math.tanh %25 : vector<16x128xf32>
      %cst_17 = arith.constant 1.000000e+00 : f32
      %27 = vector.broadcast %cst_17 : f32 to vector<16x128xf32>
      %28 = arith.addf %27, %26 : vector<16x128xf32>
      %29 = arith.mulf %18, %28 : vector<16x128xf32>
      %30 = arith.truncf %29 : vector<16x128xf32> to vector<16x128xbf16>
      %c0_18 = arith.constant 0 : index
      %c0_19 = arith.constant 0 : index
      %31 = vector.load %arg6[%c0_18, %c0_19] : memref<16x128xbf16, #tpu.memory_space<vmem>>, vector<16x128xbf16>
      tpu.vector_store %arg6[%c0_18, %c0_19], %30 {strides = array<i32>} : memref<16x128xbf16, #tpu.memory_space<vmem>>, vector<16x128xbf16>,
    } else {
    }
    return
  }
  func.func @transform_0(%arg0: i32, %arg1: i32, %arg2: i32) -> (i32, i32) {
    %c0_i32 = arith.constant 0 : i32
    return %arg0, %arg2 : i32, i32
  }
  func.func @transform_1(%arg0: i32, %arg1: i32, %arg2: i32) -> (i32, i32) {
    %c0_i32 = arith.constant 0 : i32
    return %arg2, %arg1 : i32, i32
  }
  func.func @transform_2(%arg0: i32, %arg1: i32, %arg2: i32) -> (i32, i32) {
    %c0_i32 = arith.constant 0 : i32
    %c0_i32_0 = arith.constant 0 : i32
    return %c0_i32, %arg1 : i32, i32
  }
  func.func @transform_3(%arg0: i32, %arg1: i32, %arg2: i32) -> (i32, i32) {
    %c0_i32 = arith.constant 0 : i32
    return %arg0, %arg1 : i32, i32
  }
}

module attributes {stable_mosaic.version = 11 : i64} {
  func.func @_ln_kernel(%arg0: i32, %arg1: memref<16x64xf32, #tpu.memory_space<vmem>>, %arg2: memref<1x64xf32, #tpu.memory_space<vmem>>, %arg3: memref<1x64xf32, #tpu.memory_space<vmem>>, %arg4: memref<16x64xf32, #tpu.memory_space<vmem>>) attributes {dimension_semantics = [#tpu.dimension_semantics<parallel>], iteration_bounds = array<i64: 1>, scalar_prefetch = 0 : i64, scratch_operands = 0 : i64, tpu.core_type = #tpu.core_type<tc>, window_params = [{transform_indices = @transform_0, window_bounds = array<i64: 16, 64>}, {pipeline_mode = #tpu.pipeline_mode<synchronous>, transform_indices = @transform_1, window_bounds = array<i64: 1, 64>}, {pipeline_mode = #tpu.pipeline_mode<synchronous>, transform_indices = @transform_2, window_bounds = array<i64: 1, 64>}, {transform_indices = @transform_3, window_bounds = array<i64: 16, 64>}]} {
    %c0 = arith.constant 0 : index
    %c0_0 = arith.constant 0 : index
    %0 = vector.load %arg1[%c0, %c0_0] : memref<16x64xf32, #tpu.memory_space<vmem>>, vector<16x64xf32>
    %cst = arith.constant dense<0.000000e+00> : vector<16xf32>
    %1 = vector.multi_reduction <add>, %0, %cst [1] : vector<16x64xf32> to vector<16xf32>
    %2 = vector.shape_cast %1 : vector<16xf32> to vector<16x1xf32>
    %cst_1 = arith.constant 6.400000e+01 : f32
    %3 = vector.broadcast %cst_1 : f32 to vector<16x1xf32>
    %4 = arith.divf %2, %3 : vector<16x1xf32>
    %5 = arith.mulf %0, %0 : vector<16x64xf32>
    %cst_2 = arith.constant dense<0.000000e+00> : vector<16xf32>
    %6 = vector.multi_reduction <add>, %5, %cst_2 [1] : vector<16x64xf32> to vector<16xf32>
    %7 = vector.shape_cast %6 : vector<16xf32> to vector<16x1xf32>
    %cst_3 = arith.constant 6.400000e+01 : f32
    %8 = vector.broadcast %cst_3 : f32 to vector<16x1xf32>
    %9 = arith.divf %7, %8 : vector<16x1xf32>
    %10 = vector.broadcast %4 : vector<16x1xf32> to vector<16x64xf32>
    %11 = arith.subf %0, %10 : vector<16x64xf32>
    %12 = arith.mulf %4, %4 : vector<16x1xf32>
    %13 = arith.subf %9, %12 : vector<16x1xf32>
    %cst_4 = arith.constant 9.99999974E-6 : f32
    %14 = vector.broadcast %cst_4 : f32 to vector<16x1xf32>
    %15 = arith.addf %13, %14 : vector<16x1xf32>
    %16 = math.rsqrt %15 : vector<16x1xf32>
    %17 = vector.broadcast %16 : vector<16x1xf32> to vector<16x64xf32>
    %18 = arith.mulf %11, %17 : vector<16x64xf32>
    %c0_5 = arith.constant 0 : index
    %c0_6 = arith.constant 0 : index
    %19 = vector.load %arg2[%c0_5, %c0_6] : memref<1x64xf32, #tpu.memory_space<vmem>>, vector<1x64xf32>
    %20 = vector.broadcast %19 : vector<1x64xf32> to vector<16x64xf32>
    %21 = arith.mulf %18, %20 : vector<16x64xf32>
    %c0_7 = arith.constant 0 : index
    %c0_8 = arith.constant 0 : index
    %22 = vector.load %arg3[%c0_7, %c0_8] : memref<1x64xf32, #tpu.memory_space<vmem>>, vector<1x64xf32>
    %23 = vector.broadcast %22 : vector<1x64xf32> to vector<16x64xf32>
    %24 = arith.addf %21, %23 : vector<16x64xf32>
    %c0_9 = arith.constant 0 : index
    %c0_10 = arith.constant 0 : index
    %25 = vector.load %arg4[%c0_9, %c0_10] : memref<16x64xf32, #tpu.memory_space<vmem>>, vector<16x64xf32>
    tpu.vector_store %arg4[%c0_9, %c0_10], %24 {strides = array<i32>} : memref<16x64xf32, #tpu.memory_space<vmem>>, vector<16x64xf32>,
    return
  }
  func.func @transform_0(%arg0: i32) -> (i32, i32) {
    %c0_i32 = arith.constant 0 : i32
    %c0_i32_0 = arith.constant 0 : i32
    return %arg0, %c0_i32 : i32, i32
  }
  func.func @transform_1(%arg0: i32) -> (i32, i32) {
    %c0_i32 = arith.constant 0 : i32
    %c0_i32_0 = arith.constant 0 : i32
    %c0_i32_1 = arith.constant 0 : i32
    return %c0_i32, %c0_i32_0 : i32, i32
  }
  func.func @transform_2(%arg0: i32) -> (i32, i32) {
    %c0_i32 = arith.constant 0 : i32
    %c0_i32_0 = arith.constant 0 : i32
    %c0_i32_1 = arith.constant 0 : i32
    return %c0_i32, %c0_i32_0 : i32, i32
  }
  func.func @transform_3(%arg0: i32) -> (i32, i32) {
    %c0_i32 = arith.constant 0 : i32
    %c0_i32_0 = arith.constant 0 : i32
    return %arg0, %c0_i32 : i32, i32
  }
}

</mosaic_0001>

<llo_original>
// kernel: morf_prediction_branch2.35
$region0: #{morf_prediction_branch2.35}
  #allocation0 [shape = 'u32[]', space=smem, size = 0x4, offset = 0x4, fixed_abs, tag = 'smem constant byte address 0x4 - core index']
  #allocation1 [shape = 'u32[144,128]{1,0:T(1,128)}', space=vmem, size = 0x12000, scoped, tag = 'internal scratch']
  #allocation2 [shape = 'f32[16,128]{1,0:T(8,128)}', space=vmem, size = 0x2000, scoped, tag = 'scratch operand']
  %s0 = inlined_call_operand.vmem [shape: f32[16,128], index: 0, kind: input, shape index: {}]
  %s1 = inlined_call_operand.vmem [shape: bf16[128,384], index: 1, kind: input, shape index: {}]
  %s2 = inlined_call_operand.vmem [shape: f32[1,384], index: 2, kind: input, shape index: {}]
  %s3 = inlined_call_operand.vmem [shape: bf16[16,384], index: 3, kind: output, shape index: {}]
  %s4 = sld [smem:[#allocation0]]
  $region131: #{morf_prediction_branch2.35} parent=0
    _
  %s6 = ssub.s32 1, %s4
  %s7 = scalar_select 0, %s6, %s4
  $region1: #{morf_prediction_branch2.35} parent=0
    #allocation3 [shape = 'u8[65536]{0}', space=vmem, size = 0x10000, scoped, tag = 'input window, operand 1']
    #allocation4 [shape = 'u8[8192]{0}', space=vmem, size = 0x2000, scoped, tag = 'output window, operand 0']
    loop: start=0, step=1, limit=5
    $region2: #{morf_prediction_branch2.35} parent=1 // loop_pre_header
      _
    $region3: #{morf_prediction_branch2.35} parent=1 // loop_header
      %s9 = sphi 0, %s13
      %p10 = scmp.ge.s32.totalorder %s9, 5
      %s16 = sphi 0, %s35
      %s17 = sphi 0, %s31
      %s18 = sphi 0, %s27
      %s19 = sphi 0, %s16
      %s20 = sphi 0, %s17
      %s21 = sphi 0, %s18
      %s22 = sphi 0, %s19
      %s23 = sphi 0, %s20
      %s24 = sphi 0, %s21
      %s40 = sphi 0, %s42
      %s43 = sphi 0, %s40
      %s44 = sphi 0, %s43
      %s60 = sphi 0, %s44
      %s68 = sphi 0, %s70
      %s71 = sphi 0, %s68
      %s72 = sphi 0, %s71
      %s88 = sphi 0, %s72
      %s94 = sphi 0, %s96
      %s97 = sphi 0, %s94
      %s98 = sphi 0, %s97
      %s114 = sphi 0, %s98
      %s122 = sphi 0, %s124
      %s125 = sphi 0, %s122
      %s126 = sphi 0, %s125
      %s142 = sphi 0, %s126
    $region4: #{morf_prediction_branch2.35} parent=1 // loop_header_branch
      %12 = sbr.rel (%p10) target = $region8
    $region5: #{morf_prediction_branch2.35} parent=1 // loop_body
      %s14 = ssub.s32 %s9, 1
      %s15 = ssub.s32 %s9, 2
      %s25 = sadd.s32 1, %s18
      %p26 = scmp.ge.s32.totalorder %s25, 1
      %s27 = scalar_select %p26, 0, %s25
      %s28 = sadd.s32 1, %s17
      %s29 = scalar_select %p26, %s28, %s17
      %p30 = scmp.ge.s32.totalorder %s29, 3
      %s31 = scalar_select %p30, 0, %s29
      %s32 = sadd.s32 1, %s16
      %s33 = scalar_select %p30, %s32, %s16
      %p34 = scmp.ge.s32.totalorder %s33, 1
      %s35 = scalar_select %p34, 0, %s33
      %s36 = ssub.s32 %s16, %s35
      %s37 = ssub.s32 %s18, %s27
      %s38 = sor.u32 %s36, %s37
      %p39 = scmp.eq.s32.totalorder %s38, 0
      %s41 = sadd.s32 %s40, 1
      %s42 = scalar_select %p39, %s40, %s41
      %p45 = pneg %p39
      %p46 = scmp.eq.s32.totalorder %s9, 2
      %p47 = por %p45, %p46
      %p48 = scmp.ne.s32.totalorder %s40, %s43
      %p49 = scmp.eq.s32.totalorder %s9, 0
      %p50 = por %p48, %p49
      %p51 = scmp.ne.s32.totalorder %s40, %s43
      %p52 = scmp.eq.s32.totalorder %s14, 2
      %p53 = por %p51, %p52
      %p54 = scmp.ne.s32.totalorder %s43, %s44
      %p55 = scmp.eq.s32.totalorder %s14, 0
      %p56 = por %p54, %p55
      %p57 = scmp.ne.s32.totalorder %s43, %s44
      %p58 = scmp.eq.s32.totalorder %s15, 2
      %p59 = por %p57, %p58
      %p61 = scmp.ne.s32.totalorder %s44, %s60
      %p62 = scmp.eq.s32.totalorder %s15, 0
      %p63 = por %p61, %p62
      %s64 = ssub.s32 %s18, %s27
      %s65 = ssub.s32 %s17, %s31
      %s66 = sor.u32 %s64, %s65
      %p67 = scmp.eq.s32.totalorder %s66, 0
      %s69 = sadd.s32 %s68, 1
      %s70 = scalar_select %p67, %s68, %s69
      %p73 = pneg %p67
      %p74 = scmp.eq.s32.totalorder %s9, 2
      %p75 = por %p73, %p74
      %p76 = scmp.ne.s32.totalorder %s68, %s71
      %p77 = scmp.eq.s32.totalorder %s9, 0
      %p78 = por %p76, %p77
      %p79 = scmp.ne.s32.totalorder %s68, %s71
      %p80 = scmp.eq.s32.totalorder %s14, 2
      %p81 = por %p79, %p80
      %p82 = scmp.ne.s32.totalorder %s71, %s72
      %p83 = scmp.eq.s32.totalorder %s14, 0
      %p84 = por %p82, %p83
      %p85 = scmp.ne.s32.totalorder %s71, %s72
      %p86 = scmp.eq.s32.totalorder %s15, 2
      %p87 = por %p85, %p86
      %p89 = scmp.ne.s32.totalorder %s72, %s88
      %p90 = scmp.eq.s32.totalorder %s15, 0
      %p91 = por %p89, %p90
      %s92 = ssub.s32 %s17, %s31
      %p93 = scmp.eq.s32.totalorder %s92, 0
      %s95 = sadd.s32 %s94, 1
      %s96 = scalar_select %p93, %s94, %s95
      %p99 = pneg %p93
      %p100 = scmp.eq.s32.totalorder %s9, 2
      %p101 = por %p99, %p100
      %p102 = scmp.ne.s32.totalorder %s94, %s97
      %p103 = scmp.eq.s32.totalorder %s9, 0
      %p104 = por %p102, %p103
      %p105 = scmp.ne.s32.totalorder %s94, %s97
      %p106 = scmp.eq.s32.totalorder %s14, 2
      %p107 = por %p105, %p106
      %p108 = scmp.ne.s32.totalorder %s97, %s98
      %p109 = scmp.eq.s32.totalorder %s14, 0
      %p110 = por %p108, %p109
      %p111 = scmp.ne.s32.totalorder %s97, %s98
      %p112 = scmp.eq.s32.totalorder %s15, 2
      %p113 = por %p111, %p112
      %p115 = scmp.ne.s32.totalorder %s98, %s114
      %p116 = scmp.eq.s32.totalorder %s15, 0
      %p117 = por %p115, %p116
      %s118 = ssub.s32 %s16, %s35
      %s119 = ssub.s32 %s17, %s31
      %s120 = sor.u32 %s118, %s119
      %p121 = scmp.eq.s32.totalorder %s120, 0
      %s123 = sadd.s32 %s122, 1
      %s124 = scalar_select %p121, %s122, %s123
      %p127 = pneg %p121
      %p128 = scmp.eq.s32.totalorder %s9, 2
      %p129 = por %p127, %p128
      %p130 = scmp.ne.s32.totalorder %s122, %s125
      %p131 = scmp.eq.s32.totalorder %s9, 0
      %p132 = por %p130, %p131
      %p133 = scmp.ne.s32.totalorder %s122, %s125
      %p134 = scmp.eq.s32.totalorder %s14, 2
      %p135 = por %p133, %p134
      %p136 = scmp.ne.s32.totalorder %s125, %s126
      %p137 = scmp.eq.s32.totalorder %s14, 0
      %p138 = por %p136, %p137
      %p139 = scmp.ne.s32.totalorder %s125, %s126
      %p140 = scmp.eq.s32.totalorder %s15, 2
      %p141 = por %p139, %p140
      %p143 = scmp.ne.s32.totalorder %s126, %s142
      %p144 = scmp.eq.s32.totalorder %s15, 0
      %p145 = por %p143, %p144
      %p146 = scmp.le.s32.totalorder 1, %s9
      %p147 = scmp.lt.s32.totalorder %s9, 4
      %p148 = pnand %p146, %p147
      %p149 = pneg %p148
      // Predicated region
      $region9: #{morf_prediction_branch2.35} parent=5 // pred_check
        _
      $region10: #{morf_prediction_branch2.35} parent=5 // pred_check_branch
        %151 = sbr.rel (%p148) target = $region12
      $region11: #{morf_prediction_branch2.35} parent=5 // pred_region
        %s152 = ssub.s32 %s9, 1
        // Predicated region
        $region13: #{morf_prediction_branch2.35} parent=11 // pred_check
          %p153 = pneg %p56
        $region14: #{morf_prediction_branch2.35} parent=11 // pred_check_branch
          %155 = sbr.rel (%p153) target = $region16
        $region15: #{morf_prediction_branch2.35} parent=11 // pred_region
          %s156 = smul.u32 2, %s19
          %p157 = scmp.lt.s32.totalorder %s156, 1
          %s158 = scalar_select %p157, %s156, 1
          %p159 = scmp.lt.s32.totalorder %s21, 0
          %s160 = scalar_select %p159, %s21, 0
          %s161 = sadd.s32 %s160, %s158
          %s162 = smul.addr %s161, 8
          %s163 = scalar_lea.vmem %s0, %s162
          %s164 = smul.u32 2, %s19
        $region16: #{morf_prediction_branch2.35} parent=11 // pred_fallthru
          _
      $region12: #{morf_prediction_branch2.35} parent=5 // pred_fallthru
        _
      %p165 = scmp.lt.s32.totalorder %s9, 3
      // Predicated region
      $region17: #{morf_prediction_branch2.35} parent=5 // pred_check
        %p166 = pneg %p165
      $region18: #{morf_prediction_branch2.35} parent=5 // pred_check_branch
        %168 = sbr.rel (%p166) target = $region20
      $region19: #{morf_prediction_branch2.35} parent=5 // pred_region
        // Predicated region
        $region21: #{morf_prediction_branch2.35} parent=19 // pred_check
          %p169 = pneg %p78
        $region22: #{morf_prediction_branch2.35} parent=19 // pred_check_branch
          %171 = sbr.rel (%p169) target = $region24
        $region23: #{morf_prediction_branch2.35} parent=19 // pred_region
          %s172 = sand.u32 %s68, 1
          %s173 = sand.u32 %s68, 1
          %s174 = smul.addr %s173, 64
          %s175 = scalar_lea.vmem [#allocation3], %s174
          %s176 = smul.u32 16, %s18
          %s177 = smul.addr %s176, 3
          %s178 = sadd.s32 %s17, %s177
          %s179 = smul.addr %s178, 4
          %s180 = scalar_lea.vmem %s1, %s179
          // Predicated region
          $region25: #{morf_prediction_branch2.35} parent=23 // pred_check
            _
          $region26: #{morf_prediction_branch2.35} parent=23 // pred_check_branch
            %182 = sbr.rel (0) target = $region28
          $region27: #{morf_prediction_branch2.35} parent=23 // pred_region
            // Predicated region
            $region29: #{morf_prediction_branch2.35} parent=27 // pred_check
              _
            $region30: #{morf_prediction_branch2.35} parent=27 // pred_check_branch
              %184 = sbr.rel target = $region32
            $region31: #{morf_prediction_branch2.35} parent=27 // pred_region
              // Predicated region
              $region44: #{morf_prediction_branch2.35} parent=31 // pred_check
                _
              $region45: #{morf_prediction_branch2.35} parent=31 // pred_check_branch
                %229 = sbr.rel (0) target = $region47
              $region46: #{morf_prediction_branch2.35} parent=31 // pred_region
                loop: start=0, step=1, limit=1
                $region48: #{morf_prediction_branch2.35} parent=46 // loop_pre_header
                  _
                $region49: #{morf_prediction_branch2.35} parent=46 // loop_header
                  %s231 = sphi 0, %s235
                  %p232 = scmp.ge.s32.totalorder %s231, 1
                  %s236 = sphi %s180, %s180
                  %s237 = sphi %s175, %s175
                $region50: #{morf_prediction_branch2.35} parent=46 // loop_header_branch
                  %234 = sbr.rel (%p232) target = $region54
                $region51: #{morf_prediction_branch2.35} parent=46 // loop_body
                  _
                $region52: #{morf_prediction_branch2.35} parent=46 // loop_footer
                  %s235 = sadd.s32 1, %s231
                $region53: #{morf_prediction_branch2.35} parent=46 // loop_footer_branch
                  %230 = sbr.rel target = $region49
                $region54: #{morf_prediction_branch2.35} parent=46 // loop_exit
                  _
                loop: start=0, step=1, limit=1
                $region55: #{morf_prediction_branch2.35} parent=46 // loop_pre_header
                  _
                $region56: #{morf_prediction_branch2.35} parent=46 // loop_header
                  %s240 = sphi 0, %s244
                  %p241 = scmp.ge.s32.totalorder %s240, 1
                  %s245 = sphi %s180, %s180
                  %s246 = sphi %s175, %s175
                $region57: #{morf_prediction_branch2.35} parent=46 // loop_header_branch
                  %243 = sbr.rel (%p241) target = $region61
                $region58: #{morf_prediction_branch2.35} parent=46 // loop_body
                  %v247 = vld [vmem:[%s245] sm:$0xf]
                  %248 = vst [vmem:[%s246] sm:$0xf] %v247
                  %v249 = vld [vmem:[%s245 + $0xc] sm:$0xf]
                  %250 = vst [vmem:[%s246 + $0x4] sm:$0xf] %v249
                  %v251 = vld [vmem:[%s245 + $0x18] sm:$0xf]
                  %252 = vst [vmem:[%s246 + $0x8] sm:$0xf] %v251
                  %v253 = vld [vmem:[%s245 + $0x24] sm:$0xf]
                  %254 = vst [vmem:[%s246 + $0xc] sm:$0xf] %v253
                  %v255 = vld [vmem:[%s245 + $0x30] sm:$0xf]
                  %256 = vst [vmem:[%s246 + $0x10] sm:$0xf] %v255
                  %v257 = vld [vmem:[%s245 + $0x3c] sm:$0xf]
                  %258 = vst [vmem:[%s246 + $0x14] sm:$0xf] %v257
                  %v259 = vld [vmem:[%s245 + $0x48] sm:$0xf]
                  %260 = vst [vmem:[%s246 + $0x18] sm:$0xf] %v259
                  %v261 = vld [vmem:[%s245 + $0x54] sm:$0xf]
                  %262 = vst [vmem:[%s246 + $0x1c] sm:$0xf] %v261
                  %v263 = vld [vmem:[%s245 + $0x60] sm:$0xf]
                  %264 = vst [vmem:[%s246 + $0x20] sm:$0xf] %v263
                  %v265 = vld [vmem:[%s245 + $0x6c] sm:$0xf]
                  %266 = vst [vmem:[%s246 + $0x24] sm:$0xf] %v265
                  %v267 = vld [vmem:[%s245 + $0x78] sm:$0xf]
                  %268 = vst [vmem:[%s246 + $0x28] sm:$0xf] %v267
                  %v269 = vld [vmem:[%s245 + $0x84] sm:$0xf]
                  %270 = vst [vmem:[%s246 + $0x2c] sm:$0xf] %v269
                  %v271 = vld [vmem:[%s245 + $0x90] sm:$0xf]
                  %272 = vst [vmem:[%s246 + $0x30] sm:$0xf] %v271
                  %v273 = vld [vmem:[%s245 + $0x9c] sm:$0xf]
                  %274 = vst [vmem:[%s246 + $0x34] sm:$0xf] %v273
                  %v275 = vld [vmem:[%s245 + $0xa8] sm:$0xf]
                  %276 = vst [vmem:[%s246 + $0x38] sm:$0xf] %v275
                  %v277 = vld [vmem:[%s245 + $0xb4] sm:$0xf]
                  %278 = vst [vmem:[%s246 + $0x3c] sm:$0xf] %v277
                $region59: #{morf_prediction_branch2.35} parent=46 // loop_footer
                  %s244 = sadd.s32 1, %s240
                $region60: #{morf_prediction_branch2.35} parent=46 // loop_footer_branch
                  %239 = sbr.rel target = $region56
                $region61: #{morf_prediction_branch2.35} parent=46 // loop_exit
                  _
              $region47: #{morf_prediction_branch2.35} parent=31 // pred_fallthru
                _
            $region32: #{morf_prediction_branch2.35} parent=27 // pred_fallthru
              _
            // Predicated region
            $region33: #{morf_prediction_branch2.35} parent=27 // pred_check
              _
            $region34: #{morf_prediction_branch2.35} parent=27 // pred_check_branch
              %186 = sbr.rel (0) target = $region36
            $region35: #{morf_prediction_branch2.35} parent=27 // pred_region
              loop: start=0, step=1, limit=1
              $region37: #{morf_prediction_branch2.35} parent=35 // loop_pre_header
                _
              $region38: #{morf_prediction_branch2.35} parent=35 // loop_header
                %s189 = sphi 0, %s193
                %p190 = scmp.ge.s32.totalorder %s189, 1
                %s194 = sphi %s180, %s180
                %s195 = sphi %s175, %s175
              $region39: #{morf_prediction_branch2.35} parent=35 // loop_header_branch
                %192 = sbr.rel (%p190) target = $region43
              $region40: #{morf_prediction_branch2.35} parent=35 // loop_body
                %v196 = vld [vmem:[%s194] sm:$0xf]
                %197 = vst [vmem:[%s195] sm:$0xf] %v196
                %v198 = vld [vmem:[%s194 + $0xc] sm:$0xf]
                %199 = vst [vmem:[%s195 + $0x4] sm:$0xf] %v198
                %v200 = vld [vmem:[%s194 + $0x18] sm:$0xf]
                %201 = vst [vmem:[%s195 + $0x8] sm:$0xf] %v200
                %v202 = vld [vmem:[%s194 + $0x24] sm:$0xf]
                %203 = vst [vmem:[%s195 + $0xc] sm:$0xf] %v202
                %v204 = vld [vmem:[%s194 + $0x30] sm:$0xf]
                %205 = vst [vmem:[%s195 + $0x10] sm:$0xf] %v204
                %v206 = vld [vmem:[%s194 + $0x3c] sm:$0xf]
                %207 = vst [vmem:[%s195 + $0x14] sm:$0xf] %v206
                %v208 = vld [vmem:[%s194 + $0x48] sm:$0xf]
                %209 = vst [vmem:[%s195 + $0x18] sm:$0xf] %v208
                %v210 = vld [vmem:[%s194 + $0x54] sm:$0xf]
                %211 = vst [vmem:[%s195 + $0x1c] sm:$0xf] %v210
                %v212 = vld [vmem:[%s194 + $0x60] sm:$0xf]
                %213 = vst [vmem:[%s195 + $0x20] sm:$0xf] %v212
                %v214 = vld [vmem:[%s194 + $0x6c] sm:$0xf]
                %215 = vst [vmem:[%s195 + $0x24] sm:$0xf] %v214
                %v216 = vld [vmem:[%s194 + $0x78] sm:$0xf]
                %217 = vst [vmem:[%s195 + $0x28] sm:$0xf] %v216
                %v218 = vld [vmem:[%s194 + $0x84] sm:$0xf]
                %219 = vst [vmem:[%s195 + $0x2c] sm:$0xf] %v218
                %v220 = vld [vmem:[%s194 + $0x90] sm:$0xf]
                %221 = vst [vmem:[%s195 + $0x30] sm:$0xf] %v220
                %v222 = vld [vmem:[%s194 + $0x9c] sm:$0xf]
                %223 = vst [vmem:[%s195 + $0x34] sm:$0xf] %v222
                %v224 = vld [vmem:[%s194 + $0xa8] sm:$0xf]
                %225 = vst [vmem:[%s195 + $0x38] sm:$0xf] %v224
                %v226 = vld [vmem:[%s194 + $0xb4] sm:$0xf]
                %227 = vst [vmem:[%s195 + $0x3c] sm:$0xf] %v226
              $region41: #{morf_prediction_branch2.35} parent=35 // loop_footer
                %s193 = sadd.s32 1, %s189
              $region42: #{morf_prediction_branch2.35} parent=35 // loop_footer_branch
                %188 = sbr.rel target = $region38
              $region43: #{morf_prediction_branch2.35} parent=35 // loop_exit
                _
            $region36: #{morf_prediction_branch2.35} parent=27 // pred_fallthru
              _
          $region28: #{morf_prediction_branch2.35} parent=23 // pred_fallthru
            _
          %279 = vnop
        $region24: #{morf_prediction_branch2.35} parent=19 // pred_fallthru
          _
        // Predicated region
        $region62: #{morf_prediction_branch2.35} parent=19 // pred_check
          %p280 = pneg %p104
        $region63: #{morf_prediction_branch2.35} parent=19 // pred_check_branch
          %282 = sbr.rel (%p280) target = $region65
        $region64: #{morf_prediction_branch2.35} parent=19 // pred_region
          %p283 = scmp.lt.s32.totalorder %s17, 2
          %s284 = scalar_select %p283, %s17, 2
          %s285 = scalar_lea.vmem %s2, %s284
        $region65: #{morf_prediction_branch2.35} parent=19 // pred_fallthru
          _
      $region20: #{morf_prediction_branch2.35} parent=5 // pred_fallthru
        _
      %p286 = scmp.le.s32.totalorder 1, %s9
      %p287 = scmp.lt.s32.totalorder %s9, 4
      %p288 = pnand %p286, %p287
      %p289 = pneg %p288
      // Predicated region
      $region66: #{morf_prediction_branch2.35} parent=5 // pred_check
        _
      $region67: #{morf_prediction_branch2.35} parent=5 // pred_check_branch
        %291 = sbr.rel (%p288) target = $region69
      $region68: #{morf_prediction_branch2.35} parent=5 // pred_region
        %s292 = ssub.s32 %s9, 1
        %s293 = sand.u32 %s71, 1
        %s294 = sand.u32 %s71, 1
        %s295 = smul.addr %s294, 64
        %s296 = scalar_lea.vmem [#allocation3], %s295
        // Predicated region
        $region70: #{morf_prediction_branch2.35} parent=68 // pred_check
          %p297 = pneg %p84
        $region71: #{morf_prediction_branch2.35} parent=68 // pred_check_branch
          %299 = sbr.rel (%p297) target = $region73
        $region72: #{morf_prediction_branch2.35} parent=68 // pred_region
          _
        $region73: #{morf_prediction_branch2.35} parent=68 // pred_fallthru
          _
        %s300 = smul.u32 2, %s19
        %p301 = scmp.lt.s32.totalorder %s300, 1
        %s302 = scalar_select %p301, %s300, 1
        %p303 = scmp.lt.s32.totalorder %s21, 0
        %s304 = scalar_select %p303, %s21, 0
        %s305 = sadd.s32 %s304, %s302
        %s306 = smul.addr %s305, 8
        %s307 = scalar_lea.vmem %s0, %s306
        %p308 = pneg %p56
        %p309 = pneg %p53
        %s310 = sand.u32 %s71, 1
        %s311 = sand.u32 %s71, 1
        %s312 = smul.addr %s311, 64
        %s313 = scalar_lea.vmem [#allocation3], %s312
        %p314 = pneg %p84
        %p315 = pneg %p81
        %p316 = scmp.lt.s32.totalorder %s20, 2
        %s317 = scalar_select %p316, %s20, 2
        %s318 = scalar_lea.vmem %s2, %s317
        %p319 = pneg %p110
        %p320 = pneg %p107
        %p321 = pneg %p138
        %p322 = pneg %p135
        %s323 = sand.u32 %s125, 1
        %s324 = sand.u32 %s125, 1
        %s325 = smul.addr %s324, 8
        %s326 = scalar_lea.vmem [#allocation4], %s325
        %s327 = smul.u32 2, %s19
        %p328 = scmp.lt.s32.totalorder %s327, 1
        %s329 = scalar_select %p328, %s327, 1
        %p330 = scmp.lt.s32.totalorder %s21, 0
        %s331 = scalar_select %p330, %s21, 0
        %s332 = sadd.s32 %s331, %s329
        %s333 = smul.addr %s332, 8
        %s334 = scalar_lea.vmem %s0, %s333
        %s335 = smul.u32 2, %s19
        %s336 = smul.u32 16, %s21
        %p337 = scmp.lt.s32.totalorder %s20, 2
        %s338 = scalar_select %p337, %s20, 2
        %s339 = scalar_lea.vmem %s2, %s338
        %s340 = smul.u32 2, %s19
        %p342 = scmp.eq.s32.totalorder %s21, 0
        // Predicated region
        $region74: #{morf_prediction_branch2.35} parent=68 // pred_check
          %p343 = pneg %p342
        $region75: #{morf_prediction_branch2.35} parent=68 // pred_check_branch
          %345 = sbr.rel (%p343) target = $region77
        $region76: #{morf_prediction_branch2.35} parent=68 // pred_region
          %346 = vst [vmem:[#allocation2] sm:$0xff] 0.0
          %347 = vst [vmem:[#allocation2 + $0x8] sm:$0xff] 0.0
        $region77: #{morf_prediction_branch2.35} parent=68 // pred_fallthru
          _
        %v348 = vld [vmem:[%s334] sm:$0xff]
        %v349 = vld [vmem:[%s334 + $0x8] sm:$0xff]
        %v350 = vpack.c.bf16 %v349, %v348
        %v351 = vld [vmem:[#allocation2] sm:$0xff]
        %v352 = vld [vmem:[#allocation2 + $0x8] sm:$0xff]
        %v353 = vld [vmem:[%s296] sm:$0xf]
        %v354 = vld [vmem:[%s296 + $0x4] sm:$0xf]
        %v355 = vld [vmem:[%s296 + $0x8] sm:$0xf]
        %v356 = vld [vmem:[%s296 + $0xc] sm:$0xf]
        %v357 = vld [vmem:[%s296 + $0x10] sm:$0xf]
        %v358 = vld [vmem:[%s296 + $0x14] sm:$0xf]
        %v359 = vld [vmem:[%s296 + $0x18] sm:$0xf]
        %v360 = vld [vmem:[%s296 + $0x1c] sm:$0xf]
        %v361 = vld [vmem:[%s296 + $0x20] sm:$0xf]
        %v362 = vld [vmem:[%s296 + $0x24] sm:$0xf]
        %v363 = vld [vmem:[%s296 + $0x28] sm:$0xf]
        %v364 = vld [vmem:[%s296 + $0x2c] sm:$0xf]
        %v365 = vld [vmem:[%s296 + $0x30] sm:$0xf]
        %v366 = vld [vmem:[%s296 + $0x34] sm:$0xf]
        %v367 = vld [vmem:[%s296 + $0x38] sm:$0xf]
        %v368 = vld [vmem:[%s296 + $0x3c] sm:$0xf]
        %v385 = vunpack.c.l.b16 %v353
        %v386 = vunpack.c.l.b16 %v354
        %v387 = vunpack.c.l.b16 %v355
        %v388 = vunpack.c.l.b16 %v356
        %v389 = vunpack.c.l.b16 %v357
        %v390 = vunpack.c.l.b16 %v358
        %v391 = vunpack.c.l.b16 %v359
        %v392 = vunpack.c.l.b16 %v360
        %v393 = vunpack.c.l.b16 %v361
        %v394 = vunpack.c.l.b16 %v362
        %v395 = vunpack.c.l.b16 %v363
        %v396 = vunpack.c.l.b16 %v364
        %v397 = vunpack.c.l.b16 %v365
        %v398 = vunpack.c.l.b16 %v366
        %v399 = vunpack.c.l.b16 %v367
        %v400 = vunpack.c.l.b16 %v368
        %v401 = vpack.c.b16 %v386, %v385
        %v402 = vpack.c.b16 %v388, %v387
        %v403 = vpack.c.b16 %v390, %v389
        %v404 = vpack.c.b16 %v392, %v391
        %v405 = vpack.c.b16 %v394, %v393
        %v406 = vpack.c.b16 %v396, %v395
        %v407 = vpack.c.b16 %v398, %v397
        %v408 = vpack.c.b16 %v400, %v399
        %417 = vmatprep.subr.bf16.mxu0 0
        %418 = vmatpush1.bf16.msra.mxu0 %v401
        %419 = vmatprep.subr.bf16.mxu0 0
        %420 = vmatpush1.bf16.msra.mxu0 %v402
        %421 = vmatprep.subr.bf16.mxu0 0
        %422 = vmatpush1.bf16.msra.mxu0 %v403
        %423 = vmatprep.subr.bf16.mxu0 0
        %424 = vmatpush1.bf16.msra.mxu0 %v404
        %425 = vmatprep.subr.bf16.mxu0 0
        %426 = vmatpush1.bf16.msra.mxu0 %v405
        %427 = vmatprep.subr.bf16.mxu0 0
        %428 = vmatpush1.bf16.msra.mxu0 %v406
        %429 = vmatprep.subr.bf16.mxu0 0
        %430 = vmatpush1.bf16.msra.mxu0 %v407
        %431 = vmatprep.subr.bf16.mxu0 0
        %432 = vmatpush1.bf16.msra.mxu0 %v408
        %433 = vmatprep.subr.bf16.mxu0 0
        %434 = vmatpush1.bf16.msra.mxu0 0
        %435 = vmatprep.subr.bf16.mxu0 0
        %436 = vmatpush1.bf16.msra.mxu0 0
        %437 = vmatprep.subr.bf16.mxu0 0
        %438 = vmatpush1.bf16.msra.mxu0 0
        %439 = vmatprep.subr.bf16.mxu0 0
        %440 = vmatpush1.bf16.msra.mxu0 0
        %441 = vmatprep.subr.bf16.mxu0 0
        %442 = vmatpush1.bf16.msra.mxu0 0
        %443 = vmatprep.subr.bf16.mxu0 0
        %444 = vmatpush1.bf16.msra.mxu0 0
        %445 = vmatprep.subr.bf16.mxu0 0
        %446 = vmatpush1.bf16.msra.mxu0 0
        %447 = vmatprep.subr.bf16.mxu0 0
        %448 = vmatpush1.bf16.msra.mxu0 0
        %449 = vmatprep.mubr.bf16.mxu0 0
        %450 = vmatmul.mubr.bf16.gmra.mrb[0].mxu0 %v350
        %v451 = vpop.f32.mrb[0].mxu0
        %v452 = vadd.f32 0.0, %v451
        %v453 = vpop.f32.mrb[0].mxu0
        %v454 = vpop.f32.mrb[0].mxu0
        %v455 = vadd.f32 0.0, %v454
        %v456 = vpop.f32.mrb[0].mxu0
        %457 = vdwg.mxu0
        %v458 = vadd.f32 %v351, %v452
        %v459 = vadd.f32 %v352, %v455
        %460 = vst [vmem:[#allocation2] sm:$0xff] %v458
        %461 = vst [vmem:[#allocation2 + $0x8] sm:$0xff] %v459
        // Predicated region
        $region78: #{morf_prediction_branch2.35} parent=68 // pred_check
          %p462 = pneg %p342
        $region79: #{morf_prediction_branch2.35} parent=68 // pred_check_branch
          %464 = sbr.rel (%p462) target = $region81
        $region80: #{morf_prediction_branch2.35} parent=68 // pred_region
          %v465 = vld [vmem:[#allocation2] sm:$0xff]
          %v466 = vld [vmem:[#allocation2 + $0x8] sm:$0xff]
          %v467 = vld [vmem:[%s339] sm:$0x1]
          %v469 = vlaneseq
          %v470 = vshrl.u32 %v469, 7
          %v471 = vsub.s32 0, %v470
          %v472 = vrot.slane %v467, %v471
          %v474 = vadd.f32 %v465, %v472
          %v475 = vadd.f32 %v466, %v472
          %v476 = vpack.c.bf16 %v475, %v474
          %v478 = vunpack.c.l.b16 %v476
          %v479 = vunpack.c.h.b16 %v476
          %v480 = vpack.c.b16 %v478, %v478
          %v481 = vpack.c.b16 %v479, %v479
          %484 = vst [vmem:[%s326] sm:$0xf] %v480
          %485 = vst [vmem:[%s326 + $0x4] sm:$0xf] %v481
        $region81: #{morf_prediction_branch2.35} parent=68 // pred_fallthru
          _
        %s486 = sand.u32 %s125, 1
        %s487 = sand.u32 %s125, 1
        %s488 = smul.addr %s487, 8
        %s489 = scalar_lea.vmem [#allocation4], %s488
        // Predicated region
        $region82: #{morf_prediction_branch2.35} parent=68 // pred_check
          %p490 = pneg %p135
        $region83: #{morf_prediction_branch2.35} parent=68 // pred_check_branch
          %492 = sbr.rel (%p490) target = $region85
        $region84: #{morf_prediction_branch2.35} parent=68 // pred_region
          %s493 = smul.u32 2, %s19
          %s494 = smul.addr %s493, 3
          %s495 = sadd.s32 %s20, %s494
          %s496 = smul.addr %s495, 4
          %s497 = scalar_lea.vmem %s3, %s496
          // Predicated region
          $region86: #{morf_prediction_branch2.35} parent=84 // pred_check
            _
          $region87: #{morf_prediction_branch2.35} parent=84 // pred_check_branch
            %499 = sbr.rel (0) target = $region89
          $region88: #{morf_prediction_branch2.35} parent=84 // pred_region
            // Predicated region
            $region90: #{morf_prediction_branch2.35} parent=88 // pred_check
              _
            $region91: #{morf_prediction_branch2.35} parent=88 // pred_check_branch
              %501 = sbr.rel target = $region93
            $region92: #{morf_prediction_branch2.35} parent=88 // pred_region
              // Predicated region
              $region105: #{morf_prediction_branch2.35} parent=92 // pred_check
                _
              $region106: #{morf_prediction_branch2.35} parent=92 // pred_check_branch
                %518 = sbr.rel (0) target = $region108
              $region107: #{morf_prediction_branch2.35} parent=92 // pred_region
                loop: start=0, step=1, limit=1
                $region109: #{morf_prediction_branch2.35} parent=107 // loop_pre_header
                  _
                $region110: #{morf_prediction_branch2.35} parent=107 // loop_header
                  %s520 = sphi 0, %s524
                  %p521 = scmp.ge.s32.totalorder %s520, 1
                  %s525 = sphi %s489, %s489
                  %s526 = sphi %s497, %s497
                $region111: #{morf_prediction_branch2.35} parent=107 // loop_header_branch
                  %523 = sbr.rel (%p521) target = $region115
                $region112: #{morf_prediction_branch2.35} parent=107 // loop_body
                  _
                $region113: #{morf_prediction_branch2.35} parent=107 // loop_footer
                  %s524 = sadd.s32 1, %s520
                $region114: #{morf_prediction_branch2.35} parent=107 // loop_footer_branch
                  %519 = sbr.rel target = $region110
                $region115: #{morf_prediction_branch2.35} parent=107 // loop_exit
                  _
                loop: start=0, step=1, limit=1
                $region116: #{morf_prediction_branch2.35} parent=107 // loop_pre_header
                  _
                $region117: #{morf_prediction_branch2.35} parent=107 // loop_header
                  %s529 = sphi 0, %s533
                  %p530 = scmp.ge.s32.totalorder %s529, 1
                  %s534 = sphi %s489, %s489
                  %s535 = sphi %s497, %s497
                $region118: #{morf_prediction_branch2.35} parent=107 // loop_header_branch
                  %532 = sbr.rel (%p530) target = $region122
                $region119: #{morf_prediction_branch2.35} parent=107 // loop_body
                  %v536 = vld [vmem:[%s534] sm:$0xf]
                  %537 = vst [vmem:[%s535] sm:$0xf] %v536
                  %v538 = vld [vmem:[%s534 + $0x4] sm:$0xf]
                  %539 = vst [vmem:[%s535 + $0xc] sm:$0xf] %v538
                $region120: #{morf_prediction_branch2.35} parent=107 // loop_footer
                  %s533 = sadd.s32 1, %s529
                $region121: #{morf_prediction_branch2.35} parent=107 // loop_footer_branch
                  %528 = sbr.rel target = $region117
                $region122: #{morf_prediction_branch2.35} parent=107 // loop_exit
                  _
              $region108: #{morf_prediction_branch2.35} parent=92 // pred_fallthru
                _
            $region93: #{morf_prediction_branch2.35} parent=88 // pred_fallthru
              _
            // Predicated region
            $region94: #{morf_prediction_branch2.35} parent=88 // pred_check
              _
            $region95: #{morf_prediction_branch2.35} parent=88 // pred_check_branch
              %503 = sbr.rel (0) target = $region97
            $region96: #{morf_prediction_branch2.35} parent=88 // pred_region
              loop: start=0, step=1, limit=1
              $region98: #{morf_prediction_branch2.35} parent=96 // loop_pre_header
                _
              $region99: #{morf_prediction_branch2.35} parent=96 // loop_header
                %s506 = sphi 0, %s510
                %p507 = scmp.ge.s32.totalorder %s506, 1
                %s511 = sphi %s489, %s489
                %s512 = sphi %s497, %s497
              $region100: #{morf_prediction_branch2.35} parent=96 // loop_header_branch
                %509 = sbr.rel (%p507) target = $region104
              $region101: #{morf_prediction_branch2.35} parent=96 // loop_body
                %v513 = vld [vmem:[%s511] sm:$0xf]
                %514 = vst [vmem:[%s512] sm:$0xf] %v513
                %v515 = vld [vmem:[%s511 + $0x4] sm:$0xf]
                %516 = vst [vmem:[%s512 + $0xc] sm:$0xf] %v515
              $region102: #{morf_prediction_branch2.35} parent=96 // loop_footer
                %s510 = sadd.s32 1, %s506
              $region103: #{morf_prediction_branch2.35} parent=96 // loop_footer_branch
                %505 = sbr.rel target = $region99
              $region104: #{morf_prediction_branch2.35} parent=96 // loop_exit
                _
            $region97: #{morf_prediction_branch2.35} parent=88 // pred_fallthru
              _
          $region89: #{morf_prediction_branch2.35} parent=84 // pred_fallthru
            _
          %540 = vnop
        $region85: #{morf_prediction_branch2.35} parent=68 // pred_fallthru
          _
      $region69: #{morf_prediction_branch2.35} parent=5 // pred_fallthru
        _
      %p541 = scmp.le.s32.totalorder 2, %s9
      // Predicated region
      $region123: #{morf_prediction_branch2.35} parent=5 // pred_check
        %p542 = pneg %p541
      $region124: #{morf_prediction_branch2.35} parent=5 // pred_check_branch
        %544 = sbr.rel (%p542) target = $region126
      $region125: #{morf_prediction_branch2.35} parent=5 // pred_region
        %s545 = ssub.s32 %s9, 2
        // Predicated region
        $region127: #{morf_prediction_branch2.35} parent=125 // pred_check
          %p546 = pneg %p141
        $region128: #{morf_prediction_branch2.35} parent=125 // pred_check_branch
          %548 = sbr.rel (%p546) target = $region130
        $region129: #{morf_prediction_branch2.35} parent=125 // pred_region
          %s549 = sand.u32 %s126, 1
          %s550 = sand.u32 %s126, 1
          %s551 = smul.addr %s550, 8
          %s552 = scalar_lea.vmem [#allocation4], %s551
        $region130: #{morf_prediction_branch2.35} parent=125 // pred_fallthru
          _
      $region126: #{morf_prediction_branch2.35} parent=5 // pred_fallthru
        _
    $region6: #{morf_prediction_branch2.35} parent=1 // loop_footer
      %s13 = sadd.s32 1, %s9
    $region7: #{morf_prediction_branch2.35} parent=1 // loop_footer_branch
      %8 = sbr.rel target = $region3
    $region8: #{morf_prediction_branch2.35} parent=1 // loop_exit
      _

// kernel: morf_prediction_branch2.37
$region0: #{morf_prediction_branch2.37}
  #allocation0 [shape = 'u32[]', space=smem, size = 0x4, offset = 0x4, fixed_abs, tag = 'smem constant byte address 0x4 - core index']
  #allocation1 [shape = 'u32[144,128]{1,0:T(1,128)}', space=vmem, size = 0x12000, scoped, tag = 'internal scratch']
  #allocation2 [shape = 'f32[10,128]{1,0:T(8,128)}', space=vmem, size = 0x2000, scoped, tag = 'scratch operand']
  %s0 = inlined_call_operand.vmem [shape: bf16[2,8,128], index: 0, kind: input, shape index: {}]
  %s1 = inlined_call_operand.vmem [shape: bf16[384,128], index: 1, kind: input, shape index: {}]
  %s2 = inlined_call_operand.vmem [shape: f32[1,128], index: 2, kind: input, shape index: {}]
  %s3 = inlined_call_operand.vmem [shape: bf16[2,8,128], index: 3, kind: output, shape index: {}]
  %s4 = sld [smem:[#allocation0]]
  $region45: #{morf_prediction_branch2.37} parent=0
    _
  %s6 = ssub.s32 1, %s4
  %s7 = scalar_select 0, %s6, %s4
  loop: start=0, step=1, limit=4
  $region2: #{morf_prediction_branch2.37} parent=0 // loop_pre_header
    _
  $region3: #{morf_prediction_branch2.37} parent=0 // loop_header
    %s9 = sphi 0, %s13
    %p10 = scmp.ge.s32.totalorder %s9, 4
    %s19 = sphi 0, %s21
    %s22 = sphi 0, %s19
    %s23 = sphi 0, %s22
    %s39 = sphi 0, %s23
    %s43 = sphi 0, %s43
    %s45 = sphi 0, %s43
    %s46 = sphi 0, %s45
    %s60 = sphi 0, %s46
    %s64 = sphi 0, %s64
    %s66 = sphi 0, %s64
    %s67 = sphi 0, %s66
    %s81 = sphi 0, %s67
    %s87 = sphi 0, %s89
    %s90 = sphi 0, %s87
    %s91 = sphi 0, %s90
    %s107 = sphi 0, %s91
  $region4: #{morf_prediction_branch2.37} parent=0 // loop_header_branch
    %12 = sbr.rel (%p10) target = $region8
  $region5: #{morf_prediction_branch2.37} parent=0 // loop_body
    %s14 = ssub.s32 %s9, 1
    %s15 = ssub.s32 %s9, 2
    %s16 = sadd.s32 %s9, 1
    %s17 = ssub.s32 %s9, %s16
    %p18 = scmp.eq.s32.totalorder %s17, 0
    %s20 = sadd.s32 %s19, 1
    %s21 = scalar_select %p18, %s19, %s20
    %p24 = pneg %p18
    %p25 = scmp.eq.s32.totalorder %s9, 1
    %p26 = por %p24, %p25
    %p27 = scmp.ne.s32.totalorder %s19, %s22
    %p28 = scmp.eq.s32.totalorder %s9, 0
    %p29 = por %p27, %p28
    %p30 = scmp.ne.s32.totalorder %s19, %s22
    %p31 = scmp.eq.s32.totalorder %s14, 1
    %p32 = por %p30, %p31
    %p33 = scmp.ne.s32.totalorder %s22, %s23
    %p34 = scmp.eq.s32.totalorder %s14, 0
    %p35 = por %p33, %p34
    %p36 = scmp.ne.s32.totalorder %s22, %s23
    %p37 = scmp.eq.s32.totalorder %s15, 1
    %p38 = por %p36, %p37
    %p40 = scmp.ne.s32.totalorder %s23, %s39
    %p41 = scmp.eq.s32.totalorder %s15, 0
    %p42 = por %p40, %p41
    %s44 = sadd.s32 %s43, 1
    %p47 = scmp.eq.s32.totalorder %s9, 1
    %p48 = scmp.ne.s32.totalorder %s43, %s45
    %p49 = scmp.eq.s32.totalorder %s9, 0
    %p50 = por %p48, %p49
    %p51 = scmp.ne.s32.totalorder %s43, %s45
    %p52 = scmp.eq.s32.totalorder %s14, 1
    %p53 = por %p51, %p52
    %p54 = scmp.ne.s32.totalorder %s45, %s46
    %p55 = scmp.eq.s32.totalorder %s14, 0
    %p56 = por %p54, %p55
    %p57 = scmp.ne.s32.totalorder %s45, %s46
    %p58 = scmp.eq.s32.totalorder %s15, 1
    %p59 = por %p57, %p58
    %p61 = scmp.ne.s32.totalorder %s46, %s60
    %p62 = scmp.eq.s32.totalorder %s15, 0
    %p63 = por %p61, %p62
    %s65 = sadd.s32 %s64, 1
    %p68 = scmp.eq.s32.totalorder %s9, 1
    %p69 = scmp.ne.s32.totalorder %s64, %s66
    %p70 = scmp.eq.s32.totalorder %s9, 0
    %p71 = por %p69, %p70
    %p72 = scmp.ne.s32.totalorder %s64, %s66
    %p73 = scmp.eq.s32.totalorder %s14, 1
    %p74 = por %p72, %p73
    %p75 = scmp.ne.s32.totalorder %s66, %s67
    %p76 = scmp.eq.s32.totalorder %s14, 0
    %p77 = por %p75, %p76
    %p78 = scmp.ne.s32.totalorder %s66, %s67
    %p79 = scmp.eq.s32.totalorder %s15, 1
    %p80 = por %p78, %p79
    %p82 = scmp.ne.s32.totalorder %s67, %s81
    %p83 = scmp.eq.s32.totalorder %s15, 0
    %p84 = por %p82, %p83
    %s85 = ssub.s32 %s9, %s16
    %p86 = scmp.eq.s32.totalorder %s85, 0
    %s88 = sadd.s32 %s87, 1
    %s89 = scalar_select %p86, %s87, %s88
    %p92 = pneg %p86
    %p93 = scmp.eq.s32.totalorder %s9, 1
    %p94 = por %p92, %p93
    %p95 = scmp.ne.s32.totalorder %s87, %s90
    %p96 = scmp.eq.s32.totalorder %s9, 0
    %p97 = por %p95, %p96
    %p98 = scmp.ne.s32.totalorder %s87, %s90
    %p99 = scmp.eq.s32.totalorder %s14, 1
    %p100 = por %p98, %p99
    %p101 = scmp.ne.s32.totalorder %s90, %s91
    %p102 = scmp.eq.s32.totalorder %s14, 0
    %p103 = por %p101, %p102
    %p104 = scmp.ne.s32.totalorder %s90, %s91
    %p105 = scmp.eq.s32.totalorder %s15, 1
    %p106 = por %p104, %p105
    %p108 = scmp.ne.s32.totalorder %s91, %s107
    %p109 = scmp.eq.s32.totalorder %s15, 0
    %p110 = por %p108, %p109
    %p111 = scmp.le.s32.totalorder 1, %s9
    %p112 = scmp.lt.s32.totalorder %s9, 3
    %p113 = pnand %p111, %p112
    %p114 = pneg %p113
    // Predicated region
    $region9: #{morf_prediction_branch2.37} parent=5 // pred_check
      _
    $region10: #{morf_prediction_branch2.37} parent=5 // pred_check_branch
      %116 = sbr.rel (%p113) target = $region12
    $region11: #{morf_prediction_branch2.37} parent=5 // pred_region
      %s117 = ssub.s32 %s9, 1
      // Predicated region
      $region13: #{morf_prediction_branch2.37} parent=11 // pred_check
        %p118 = pneg %p56
      $region14: #{morf_prediction_branch2.37} parent=11 // pred_check_branch
        %120 = sbr.rel (%p118) target = $region16
      $region15: #{morf_prediction_branch2.37} parent=11 // pred_region
        _
      $region16: #{morf_prediction_branch2.37} parent=11 // pred_fallthru
        _
      // Predicated region
      $region17: #{morf_prediction_branch2.37} parent=11 // pred_check
        %p121 = pneg %p77
      $region18: #{morf_prediction_branch2.37} parent=11 // pred_check_branch
        %123 = sbr.rel (%p121) target = $region20
      $region19: #{morf_prediction_branch2.37} parent=11 // pred_region
        _
      $region20: #{morf_prediction_branch2.37} parent=11 // pred_fallthru
        _
    $region12: #{morf_prediction_branch2.37} parent=5 // pred_fallthru
      _
    %p124 = scmp.lt.s32.totalorder %s9, 2
    // Predicated region
    $region21: #{morf_prediction_branch2.37} parent=5 // pred_check
      %p125 = pneg %p124
    $region22: #{morf_prediction_branch2.37} parent=5 // pred_check_branch
      %127 = sbr.rel (%p125) target = $region24
    $region23: #{morf_prediction_branch2.37} parent=5 // pred_region
      // Predicated region
      $region25: #{morf_prediction_branch2.37} parent=23 // pred_check
        %p128 = pneg %p29
      $region26: #{morf_prediction_branch2.37} parent=23 // pred_check_branch
        %130 = sbr.rel (%p128) target = $region28
      $region27: #{morf_prediction_branch2.37} parent=23 // pred_region
        %p131 = scmp.lt.s32.totalorder %s9, 1
        %s132 = scalar_select %p131, %s9, 1
        %s133 = smul.addr %s132, 4
        %s134 = scalar_lea.vmem %s0, %s133
      $region28: #{morf_prediction_branch2.37} parent=23 // pred_fallthru
        _
    $region24: #{morf_prediction_branch2.37} parent=5 // pred_fallthru
      _
    %p135 = scmp.le.s32.totalorder 1, %s9
    %p136 = scmp.lt.s32.totalorder %s9, 3
    %p137 = pnand %p135, %p136
    %p138 = pneg %p137
    // Predicated region
    $region29: #{morf_prediction_branch2.37} parent=5 // pred_check
      _
    $region30: #{morf_prediction_branch2.37} parent=5 // pred_check_branch
      %140 = sbr.rel (%p137) target = $region32
    $region31: #{morf_prediction_branch2.37} parent=5 // pred_region
      %s141 = ssub.s32 %s9, 1
      %p142 = scmp.lt.s32.totalorder %s14, 1
      %s143 = scalar_select %p142, %s14, 1
      %s144 = smul.addr %s143, 4
      %s145 = scalar_lea.vmem %s0, %s144
      %p146 = pneg %p35
      %p147 = pneg %p32
      %p148 = pneg %p56
      %p149 = pneg %p53
      %p150 = pneg %p77
      %p151 = pneg %p74
      %p152 = pneg %p103
      %p153 = pneg %p100
      %p154 = scmp.lt.s32.totalorder %s14, 1
      %s155 = scalar_select %p154, %s14, 1
      %s156 = smul.addr %s155, 4
      %s157 = scalar_lea.vmem %s3, %s156
      %p158 = scmp.lt.s32.totalorder %s14, 1
      %s159 = scalar_select %p158, %s14, 1
      %s160 = smul.addr %s159, 4
      %s161 = scalar_lea.vmem %s0, %s160
      %p162 = scmp.lt.s32.totalorder %s14, 1
      %s163 = scalar_select %p162, %s14, 1
      %s164 = smul.addr %s163, 4
      %s165 = scalar_lea.vmem %s3, %s164
      %167 = vst [vmem:[#allocation2] sm:$0xff] 0.0
      %168 = vst [vmem:[#allocation2 + $0x8] sm:$0x3] 0.0
      %v169 = vld [vmem:[%s161] sm:$0xf]
      %v170 = vunpack.c.l.bf16 %v169
      %171 = vst [vmem:[#allocation2 + $0x1] sm:$0xff] %v170
      %v172 = vld [vmem:[#allocation2] sm:$0xff]
      %v173 = vpack.c.bf16 %v172, %v172
      %v174 = vld [vmem:[%s1] sm:$0xf]
      %v175 = vld [vmem:[%s1 + $0x4] sm:$0xf]
      %v176 = vld [vmem:[%s1 + $0x8] sm:$0xf]
      %v177 = vld [vmem:[%s1 + $0xc] sm:$0xf]
      %v178 = vld [vmem:[%s1 + $0x10] sm:$0xf]
      %v179 = vld [vmem:[%s1 + $0x14] sm:$0xf]
      %v180 = vld [vmem:[%s1 + $0x18] sm:$0xf]
      %v181 = vld [vmem:[%s1 + $0x1c] sm:$0xf]
      %v182 = vld [vmem:[%s1 + $0x20] sm:$0xf]
      %v183 = vld [vmem:[%s1 + $0x24] sm:$0xf]
      %v184 = vld [vmem:[%s1 + $0x28] sm:$0xf]
      %v185 = vld [vmem:[%s1 + $0x2c] sm:$0xf]
      %v186 = vld [vmem:[%s1 + $0x30] sm:$0xf]
      %v187 = vld [vmem:[%s1 + $0x34] sm:$0xf]
      %v188 = vld [vmem:[%s1 + $0x38] sm:$0xf]
      %v189 = vld [vmem:[%s1 + $0x3c] sm:$0xf]
      %v190 = vld [vmem:[#allocation2 + $0x1] sm:$0xff]
      %v191 = vpack.c.bf16 %v190, %v190
      %v192 = vld [vmem:[%s1 + $0x40] sm:$0xf]
      %v193 = vld [vmem:[%s1 + $0x44] sm:$0xf]
      %v194 = vld [vmem:[%s1 + $0x48] sm:$0xf]
      %v195 = vld [vmem:[%s1 + $0x4c] sm:$0xf]
      %v196 = vld [vmem:[%s1 + $0x50] sm:$0xf]
      %v197 = vld [vmem:[%s1 + $0x54] sm:$0xf]
      %v198 = vld [vmem:[%s1 + $0x58] sm:$0xf]
      %v199 = vld [vmem:[%s1 + $0x5c] sm:$0xf]
      %v200 = vld [vmem:[%s1 + $0x60] sm:$0xf]
      %v201 = vld [vmem:[%s1 + $0x64] sm:$0xf]
      %v202 = vld [vmem:[%s1 + $0x68] sm:$0xf]
      %v203 = vld [vmem:[%s1 + $0x6c] sm:$0xf]
      %v204 = vld [vmem:[%s1 + $0x70] sm:$0xf]
      %v205 = vld [vmem:[%s1 + $0x74] sm:$0xf]
      %v206 = vld [vmem:[%s1 + $0x78] sm:$0xf]
      %v207 = vld [vmem:[%s1 + $0x7c] sm:$0xf]
      %v224 = vunpack.c.l.b16 %v192
      %v225 = vunpack.c.l.b16 %v193
      %v226 = vunpack.c.l.b16 %v194
      %v227 = vunpack.c.l.b16 %v195
      %v228 = vunpack.c.l.b16 %v196
      %v229 = vunpack.c.l.b16 %v197
      %v230 = vunpack.c.l.b16 %v198
      %v231 = vunpack.c.l.b16 %v199
      %v232 = vunpack.c.l.b16 %v200
      %v233 = vunpack.c.l.b16 %v201
      %v234 = vunpack.c.l.b16 %v202
      %v235 = vunpack.c.l.b16 %v203
      %v236 = vunpack.c.l.b16 %v204
      %v237 = vunpack.c.l.b16 %v205
      %v238 = vunpack.c.l.b16 %v206
      %v239 = vunpack.c.l.b16 %v207
      %v240 = vpack.c.b16 %v225, %v224
      %v241 = vpack.c.b16 %v227, %v226
      %v242 = vpack.c.b16 %v229, %v228
      %v243 = vpack.c.b16 %v231, %v230
      %v244 = vpack.c.b16 %v233, %v232
      %v245 = vpack.c.b16 %v235, %v234
      %v246 = vpack.c.b16 %v237, %v236
      %v247 = vpack.c.b16 %v239, %v238
      %256 = vmatprep.subr.bf16.mxu0 0
      %257 = vmatpush1.bf16.msra.mxu0 %v240
      %258 = vmatprep.subr.bf16.mxu0 0
      %259 = vmatpush1.bf16.msra.mxu0 %v241
      %260 = vmatprep.subr.bf16.mxu0 0
      %261 = vmatpush1.bf16.msra.mxu0 %v242
      %262 = vmatprep.subr.bf16.mxu0 0
      %263 = vmatpush1.bf16.msra.mxu0 %v243
      %264 = vmatprep.subr.bf16.mxu0 0
      %265 = vmatpush1.bf16.msra.mxu0 %v244
      %266 = vmatprep.subr.bf16.mxu0 0
      %267 = vmatpush1.bf16.msra.mxu0 %v245
      %268 = vmatprep.subr.bf16.mxu0 0
      %269 = vmatpush1.bf16.msra.mxu0 %v246
      %270 = vmatprep.subr.bf16.mxu0 0
      %271 = vmatpush1.bf16.msra.mxu0 %v247
      %272 = vmatprep.subr.bf16.mxu0 0
      %273 = vmatpush1.bf16.msra.mxu0 0
      %274 = vmatprep.subr.bf16.mxu0 0
      %275 = vmatpush1.bf16.msra.mxu0 0
      %276 = vmatprep.subr.bf16.mxu0 0
      %277 = vmatpush1.bf16.msra.mxu0 0
      %278 = vmatprep.subr.bf16.mxu0 0
      %279 = vmatpush1.bf16.msra.mxu0 0
      %280 = vmatprep.subr.bf16.mxu0 0
      %281 = vmatpush1.bf16.msra.mxu0 0
      %282 = vmatprep.subr.bf16.mxu0 0
      %283 = vmatpush1.bf16.msra.mxu0 0
      %284 = vmatprep.subr.bf16.mxu0 0
      %285 = vmatpush1.bf16.msra.mxu0 0
      %286 = vmatprep.subr.bf16.mxu0 0
      %287 = vmatpush1.bf16.msra.mxu0 0
      %288 = vmatprep.mubr.bf16.mxu0 0
      %289 = vmatmul.mubr.bf16.gmra.mrb[0].mxu0 %v191
      %v290 = vpop.f32.mrb[0].mxu0
      %v291 = vadd.f32 0.0, %v290
      %v292 = vpop.f32.mrb[0].mxu0
      %v293 = vpop.f32.mrb[0].mxu0
      %v294 = vpop.f32.mrb[0].mxu0
      %295 = vdwg.mxu0
      %v312 = vunpack.c.l.b16 %v174
      %v313 = vunpack.c.l.b16 %v175
      %v314 = vunpack.c.l.b16 %v176
      %v315 = vunpack.c.l.b16 %v177
      %v316 = vunpack.c.l.b16 %v178
      %v317 = vunpack.c.l.b16 %v179
      %v318 = vunpack.c.l.b16 %v180
      %v319 = vunpack.c.l.b16 %v181
      %v320 = vunpack.c.l.b16 %v182
      %v321 = vunpack.c.l.b16 %v183
      %v322 = vunpack.c.l.b16 %v184
      %v323 = vunpack.c.l.b16 %v185
      %v324 = vunpack.c.l.b16 %v186
      %v325 = vunpack.c.l.b16 %v187
      %v326 = vunpack.c.l.b16 %v188
      %v327 = vunpack.c.l.b16 %v189
      %v328 = vpack.c.b16 %v313, %v312
      %v329 = vpack.c.b16 %v315, %v314
      %v330 = vpack.c.b16 %v317, %v316
      %v331 = vpack.c.b16 %v319, %v318
      %v332 = vpack.c.b16 %v321, %v320
      %v333 = vpack.c.b16 %v323, %v322
      %v334 = vpack.c.b16 %v325, %v324
      %v335 = vpack.c.b16 %v327, %v326
      %344 = vmatprep.subr.bf16.mxu0 0
      %345 = vmatpush1.bf16.msra.mxu0 %v328
      %346 = vmatprep.subr.bf16.mxu0 0
      %347 = vmatpush1.bf16.msra.mxu0 %v329
      %348 = vmatprep.subr.bf16.mxu0 0
      %349 = vmatpush1.bf16.msra.mxu0 %v330
      %350 = vmatprep.subr.bf16.mxu0 0
      %351 = vmatpush1.bf16.msra.mxu0 %v331
      %352 = vmatprep.subr.bf16.mxu0 0
      %353 = vmatpush1.bf16.msra.mxu0 %v332
      %354 = vmatprep.subr.bf16.mxu0 0
      %355 = vmatpush1.bf16.msra.mxu0 %v333
      %356 = vmatprep.subr.bf16.mxu0 0
      %357 = vmatpush1.bf16.msra.mxu0 %v334
      %358 = vmatprep.subr.bf16.mxu0 0
      %359 = vmatpush1.bf16.msra.mxu0 %v335
      %360 = vmatprep.subr.bf16.mxu0 0
      %361 = vmatpush1.bf16.msra.mxu0 0
      %362 = vmatprep.subr.bf16.mxu0 0
      %363 = vmatpush1.bf16.msra.mxu0 0
      %364 = vmatprep.subr.bf16.mxu0 0
      %365 = vmatpush1.bf16.msra.mxu0 0
      %366 = vmatprep.subr.bf16.mxu0 0
      %367 = vmatpush1.bf16.msra.mxu0 0
      %368 = vmatprep.subr.bf16.mxu0 0
      %369 = vmatpush1.bf16.msra.mxu0 0
      %370 = vmatprep.subr.bf16.mxu0 0
      %371 = vmatpush1.bf16.msra.mxu0 0
      %372 = vmatprep.subr.bf16.mxu0 0
      %373 = vmatpush1.bf16.msra.mxu0 0
      %374 = vmatprep.subr.bf16.mxu0 0
      %375 = vmatpush1.bf16.msra.mxu0 0
      %376 = vmatprep.mubr.bf16.mxu0 0
      %377 = vmatmul.mubr.bf16.gmra.mrb[0].mxu0 %v173
      %v378 = vpop.f32.mrb[0].mxu0
      %v379 = vadd.f32 %v291, %v378
      %v380 = vpop.f32.mrb[0].mxu0
      %v381 = vpop.f32.mrb[0].mxu0
      %v382 = vpop.f32.mrb[0].mxu0
      %383 = vdwg.mxu0
      %v384 = vld [vmem:[#allocation2 + $0x2] sm:$0xff]
      %v385 = vpack.c.bf16 %v384, %v384
      %v386 = vld [vmem:[%s1 + $0x80] sm:$0xf]
      %v387 = vld [vmem:[%s1 + $0x84] sm:$0xf]
      %v388 = vld [vmem:[%s1 + $0x88] sm:$0xf]
      %v389 = vld [vmem:[%s1 + $0x8c] sm:$0xf]
      %v390 = vld [vmem:[%s1 + $0x90] sm:$0xf]
      %v391 = vld [vmem:[%s1 + $0x94] sm:$0xf]
      %v392 = vld [vmem:[%s1 + $0x98] sm:$0xf]
      %v393 = vld [vmem:[%s1 + $0x9c] sm:$0xf]
      %v394 = vld [vmem:[%s1 + $0xa0] sm:$0xf]
      %v395 = vld [vmem:[%s1 + $0xa4] sm:$0xf]
      %v396 = vld [vmem:[%s1 + $0xa8] sm:$0xf]
      %v397 = vld [vmem:[%s1 + $0xac] sm:$0xf]
      %v398 = vld [vmem:[%s1 + $0xb0] sm:$0xf]
      %v399 = vld [vmem:[%s1 + $0xb4] sm:$0xf]
      %v400 = vld [vmem:[%s1 + $0xb8] sm:$0xf]
      %v401 = vld [vmem:[%s1 + $0xbc] sm:$0xf]
      %v418 = vunpack.c.l.b16 %v386
      %v419 = vunpack.c.l.b16 %v387
      %v420 = vunpack.c.l.b16 %v388
      %v421 = vunpack.c.l.b16 %v389
      %v422 = vunpack.c.l.b16 %v390
      %v423 = vunpack.c.l.b16 %v391
      %v424 = vunpack.c.l.b16 %v392
      %v425 = vunpack.c.l.b16 %v393
      %v426 = vunpack.c.l.b16 %v394
      %v427 = vunpack.c.l.b16 %v395
      %v428 = vunpack.c.l.b16 %v396
      %v429 = vunpack.c.l.b16 %v397
      %v430 = vunpack.c.l.b16 %v398
      %v431 = vunpack.c.l.b16 %v399
      %v432 = vunpack.c.l.b16 %v400
      %v433 = vunpack.c.l.b16 %v401
      %v434 = vpack.c.b16 %v419, %v418
      %v435 = vpack.c.b16 %v421, %v420
      %v436 = vpack.c.b16 %v423, %v422
      %v437 = vpack.c.b16 %v425, %v424
      %v438 = vpack.c.b16 %v427, %v426
      %v439 = vpack.c.b16 %v429, %v428
      %v440 = vpack.c.b16 %v431, %v430
      %v441 = vpack.c.b16 %v433, %v432
      %450 = vmatprep.subr.bf16.mxu0 0
      %451 = vmatpush1.bf16.msra.mxu0 %v434
      %452 = vmatprep.subr.bf16.mxu0 0
      %453 = vmatpush1.bf16.msra.mxu0 %v435
      %454 = vmatprep.subr.bf16.mxu0 0
      %455 = vmatpush1.bf16.msra.mxu0 %v436
      %456 = vmatprep.subr.bf16.mxu0 0
      %457 = vmatpush1.bf16.msra.mxu0 %v437
      %458 = vmatprep.subr.bf16.mxu0 0
      %459 = vmatpush1.bf16.msra.mxu0 %v438
      %460 = vmatprep.subr.bf16.mxu0 0
      %461 = vmatpush1.bf16.msra.mxu0 %v439
      %462 = vmatprep.subr.bf16.mxu0 0
      %463 = vmatpush1.bf16.msra.mxu0 %v440
      %464 = vmatprep.subr.bf16.mxu0 0
      %465 = vmatpush1.bf16.msra.mxu0 %v441
      %466 = vmatprep.subr.bf16.mxu0 0
      %467 = vmatpush1.bf16.msra.mxu0 0
      %468 = vmatprep.subr.bf16.mxu0 0
      %469 = vmatpush1.bf16.msra.mxu0 0
      %470 = vmatprep.subr.bf16.mxu0 0
      %471 = vmatpush1.bf16.msra.mxu0 0
      %472 = vmatprep.subr.bf16.mxu0 0
      %473 = vmatpush1.bf16.msra.mxu0 0
      %474 = vmatprep.subr.bf16.mxu0 0
      %475 = vmatpush1.bf16.msra.mxu0 0
      %476 = vmatprep.subr.bf16.mxu0 0
      %477 = vmatpush1.bf16.msra.mxu0 0
      %478 = vmatprep.subr.bf16.mxu0 0
      %479 = vmatpush1.bf16.msra.mxu0 0
      %480 = vmatprep.subr.bf16.mxu0 0
      %481 = vmatpush1.bf16.msra.mxu0 0
      %482 = vmatprep.mubr.bf16.mxu0 0
      %483 = vmatmul.mubr.bf16.gmra.mrb[0].mxu0 %v385
      %v484 = vpop.f32.mrb[0].mxu0
      %v485 = vadd.f32 0.0, %v484
      %v486 = vpop.f32.mrb[0].mxu0
      %v487 = vpop.f32.mrb[0].mxu0
      %v488 = vpop.f32.mrb[0].mxu0
      %489 = vdwg.mxu0
      %v490 = vadd.f32 %v379, %v485
      %v491 = vld [vmem:[%s2] sm:$0x1]
      %v493 = vlaneseq
      %v494 = vshrl.u32 %v493, 7
      %v495 = vsub.s32 0, %v494
      %v496 = vrot.slane %v491, %v495
      %v498 = vadd.f32 %v490, %v496
      %v499 = vpack.c.bf16 %v498, %v498
      %500 = vst [vmem:[%s165] sm:$0xf] %v499
      %p501 = scmp.lt.s32.totalorder %s14, 1
      %s502 = scalar_select %p501, %s14, 1
      %s503 = smul.addr %s502, 4
      %s504 = scalar_lea.vmem %s3, %s503
      // Predicated region
      $region33: #{morf_prediction_branch2.37} parent=31 // pred_check
        %p505 = pneg %p100
      $region34: #{morf_prediction_branch2.37} parent=31 // pred_check_branch
        %507 = sbr.rel (%p505) target = $region36
      $region35: #{morf_prediction_branch2.37} parent=31 // pred_region
        _
      $region36: #{morf_prediction_branch2.37} parent=31 // pred_fallthru
        _
    $region32: #{morf_prediction_branch2.37} parent=5 // pred_fallthru
      _
    %p508 = scmp.le.s32.totalorder 2, %s9
    // Predicated region
    $region37: #{morf_prediction_branch2.37} parent=5 // pred_check
      %p509 = pneg %p508
    $region38: #{morf_prediction_branch2.37} parent=5 // pred_check_branch
      %511 = sbr.rel (%p509) target = $region40
    $region39: #{morf_prediction_branch2.37} parent=5 // pred_region
      %s512 = ssub.s32 %s9, 2
      // Predicated region
      $region41: #{morf_prediction_branch2.37} parent=39 // pred_check
        %p513 = pneg %p106
      $region42: #{morf_prediction_branch2.37} parent=39 // pred_check_branch
        %515 = sbr.rel (%p513) target = $region44
      $region43: #{morf_prediction_branch2.37} parent=39 // pred_region
        %p516 = scmp.lt.s32.totalorder %s15, 1
        %s517 = scalar_select %p516, %s15, 1
        %s518 = smul.addr %s517, 4
        %s519 = scalar_lea.vmem %s3, %s518
      $region44: #{morf_prediction_branch2.37} parent=39 // pred_fallthru
        _
    $region40: #{morf_prediction_branch2.37} parent=5 // pred_fallthru
      _
  $region6: #{morf_prediction_branch2.37} parent=0 // loop_footer
    %s13 = sadd.s32 1, %s9
  $region7: #{morf_prediction_branch2.37} parent=0 // loop_footer_branch
    %8 = sbr.rel target = $region3
  $region8: #{morf_prediction_branch2.37} parent=0 // loop_exit
    _

// kernel: morf_prediction_branch2.39
$region0: #{morf_prediction_branch2.39}
  #allocation0 [shape = 'u32[]', space=smem, size = 0x4, offset = 0x4, fixed_abs, tag = 'smem constant byte address 0x4 - core index']
  #allocation1 [shape = 'u32[144,128]{1,0:T(1,128)}', space=vmem, size = 0x12000, scoped, tag = 'internal scratch']
  #allocation2 [shape = 'f32[16,128]{1,0:T(8,128)}', space=vmem, size = 0x2000, scoped, tag = 'scratch operand']
  %s0 = inlined_call_operand.vmem [shape: bf16[16,128], index: 0, kind: input, shape index: {}]
  %s1 = inlined_call_operand.vmem [shape: bf16[128,128], index: 1, kind: input, shape index: {}]
  %s2 = inlined_call_operand.vmem [shape: bf16[16,128], index: 2, kind: input, shape index: {}]
  %s3 = inlined_call_operand.vmem [shape: bf16[128,128], index: 3, kind: input, shape index: {}]
  %s4 = inlined_call_operand.vmem [shape: f32[1,128], index: 4, kind: input, shape index: {}]
  %s5 = inlined_call_operand.vmem [shape: bf16[16,128], index: 5, kind: output, shape index: {}]
  %s6 = sld [smem:[#allocation0]]
  $region38: #{morf_prediction_branch2.39} parent=0
    _
  %s8 = ssub.s32 1, %s6
  %s9 = scalar_select 0, %s8, %s6
  // Predicated region
  $region2: #{morf_prediction_branch2.39} parent=0 // pred_check
    _
  $region3: #{morf_prediction_branch2.39} parent=0 // pred_check_branch
    %11 = sbr.rel (0) target = $region5
  $region4: #{morf_prediction_branch2.39} parent=0 // pred_region
    _
  $region5: #{morf_prediction_branch2.39} parent=0 // pred_fallthru
    _
  // Predicated region
  $region6: #{morf_prediction_branch2.39} parent=0 // pred_check
    _
  $region7: #{morf_prediction_branch2.39} parent=0 // pred_check_branch
    %13 = sbr.rel (0) target = $region9
  $region8: #{morf_prediction_branch2.39} parent=0 // pred_region
    _
  $region9: #{morf_prediction_branch2.39} parent=0 // pred_fallthru
    _
  // Predicated region
  $region10: #{morf_prediction_branch2.39} parent=0 // pred_check
    _
  $region11: #{morf_prediction_branch2.39} parent=0 // pred_check_branch
    %15 = sbr.rel (0) target = $region13
  $region12: #{morf_prediction_branch2.39} parent=0 // pred_region
    _
  $region13: #{morf_prediction_branch2.39} parent=0 // pred_fallthru
    _
  // Predicated region
  $region14: #{morf_prediction_branch2.39} parent=0 // pred_check
    _
  $region15: #{morf_prediction_branch2.39} parent=0 // pred_check_branch
    %17 = sbr.rel (0) target = $region17
  $region16: #{morf_prediction_branch2.39} parent=0 // pred_region
    _
  $region17: #{morf_prediction_branch2.39} parent=0 // pred_fallthru
    _
  // Predicated region
  $region18: #{morf_prediction_branch2.39} parent=0 // pred_check
    _
  $region19: #{morf_prediction_branch2.39} parent=0 // pred_check_branch
    %19 = sbr.rel (0) target = $region21
  $region20: #{morf_prediction_branch2.39} parent=0 // pred_region
    _
  $region21: #{morf_prediction_branch2.39} parent=0 // pred_fallthru
    _
  %p21 = scmp.eq.s32.totalorder 0, 0
  // Predicated region
  $region22: #{morf_prediction_branch2.39} parent=0 // pred_check
    %p22 = pneg %p21
  $region23: #{morf_prediction_branch2.39} parent=0 // pred_check_branch
    %24 = sbr.rel (%p22) target = $region25
  $region24: #{morf_prediction_branch2.39} parent=0 // pred_region
    %25 = vst [vmem:[#allocation2] sm:$0xff] 0.0
    %26 = vst [vmem:[#allocation2 + $0x8] sm:$0xff] 0.0
  $region25: #{morf_prediction_branch2.39} parent=0 // pred_fallthru
    _
  %v27 = vld [vmem:[%s0] sm:$0xf]
  %v28 = vld [vmem:[%s0 + $0x4] sm:$0xf]
  %v29 = vld [vmem:[%s2] sm:$0xf]
  %v30 = vld [vmem:[%s2 + $0x4] sm:$0xf]
  %v31 = vld [vmem:[#allocation2] sm:$0xff]
  %v32 = vld [vmem:[#allocation2 + $0x8] sm:$0xff]
  %v33 = vld [vmem:[%s1] sm:$0xf]
  %v34 = vld [vmem:[%s1 + $0x4] sm:$0xf]
  %v35 = vld [vmem:[%s1 + $0x8] sm:$0xf]
  %v36 = vld [vmem:[%s1 + $0xc] sm:$0xf]
  %v37 = vld [vmem:[%s1 + $0x10] sm:$0xf]
  %v38 = vld [vmem:[%s1 + $0x14] sm:$0xf]
  %v39 = vld [vmem:[%s1 + $0x18] sm:$0xf]
  %v40 = vld [vmem:[%s1 + $0x1c] sm:$0xf]
  %v41 = vld [vmem:[%s1 + $0x20] sm:$0xf]
  %v42 = vld [vmem:[%s1 + $0x24] sm:$0xf]
  %v43 = vld [vmem:[%s1 + $0x28] sm:$0xf]
  %v44 = vld [vmem:[%s1 + $0x2c] sm:$0xf]
  %v45 = vld [vmem:[%s1 + $0x30] sm:$0xf]
  %v46 = vld [vmem:[%s1 + $0x34] sm:$0xf]
  %v47 = vld [vmem:[%s1 + $0x38] sm:$0xf]
  %v48 = vld [vmem:[%s1 + $0x3c] sm:$0xf]
  %v49 = vld [vmem:[%s3] sm:$0xf]
  %v50 = vld [vmem:[%s3 + $0x4] sm:$0xf]
  %v51 = vld [vmem:[%s3 + $0x8] sm:$0xf]
  %v52 = vld [vmem:[%s3 + $0xc] sm:$0xf]
  %v53 = vld [vmem:[%s3 + $0x10] sm:$0xf]
  %v54 = vld [vmem:[%s3 + $0x14] sm:$0xf]
  %v55 = vld [vmem:[%s3 + $0x18] sm:$0xf]
  %v56 = vld [vmem:[%s3 + $0x1c] sm:$0xf]
  %v57 = vld [vmem:[%s3 + $0x20] sm:$0xf]
  %v58 = vld [vmem:[%s3 + $0x24] sm:$0xf]
  %v59 = vld [vmem:[%s3 + $0x28] sm:$0xf]
  %v60 = vld [vmem:[%s3 + $0x2c] sm:$0xf]
  %v61 = vld [vmem:[%s3 + $0x30] sm:$0xf]
  %v62 = vld [vmem:[%s3 + $0x34] sm:$0xf]
  %v63 = vld [vmem:[%s3 + $0x38] sm:$0xf]
  %v64 = vld [vmem:[%s3 + $0x3c] sm:$0xf]
  %v67 = vunpack.c.l.b16 %v29
  %v68 = vunpack.c.l.b16 %v30
  %v69 = vpack.c.b16 %v68, %v67
  %v87 = vunpack.c.l.b16 %v49
  %v88 = vunpack.c.l.b16 %v50
  %v89 = vunpack.c.l.b16 %v51
  %v90 = vunpack.c.l.b16 %v52
  %v91 = vunpack.c.l.b16 %v53
  %v92 = vunpack.c.l.b16 %v54
  %v93 = vunpack.c.l.b16 %v55
  %v94 = vunpack.c.l.b16 %v56
  %v95 = vunpack.c.l.b16 %v57
  %v96 = vunpack.c.l.b16 %v58
  %v97 = vunpack.c.l.b16 %v59
  %v98 = vunpack.c.l.b16 %v60
  %v99 = vunpack.c.l.b16 %v61
  %v100 = vunpack.c.l.b16 %v62
  %v101 = vunpack.c.l.b16 %v63
  %v102 = vunpack.c.l.b16 %v64
  %v103 = vpack.c.b16 %v88, %v87
  %v104 = vpack.c.b16 %v90, %v89
  %v105 = vpack.c.b16 %v92, %v91
  %v106 = vpack.c.b16 %v94, %v93
  %v107 = vpack.c.b16 %v96, %v95
  %v108 = vpack.c.b16 %v98, %v97
  %v109 = vpack.c.b16 %v100, %v99
  %v110 = vpack.c.b16 %v102, %v101
  %119 = vmatprep.subr.bf16.mxu0 0
  %120 = vmatpush1.bf16.msra.mxu0 %v103
  %121 = vmatprep.subr.bf16.mxu0 0
  %122 = vmatpush1.bf16.msra.mxu0 %v104
  %123 = vmatprep.subr.bf16.mxu0 0
  %124 = vmatpush1.bf16.msra.mxu0 %v105
  %125 = vmatprep.subr.bf16.mxu0 0
  %126 = vmatpush1.bf16.msra.mxu0 %v106
  %127 = vmatprep.subr.bf16.mxu0 0
  %128 = vmatpush1.bf16.msra.mxu0 %v107
  %129 = vmatprep.subr.bf16.mxu0 0
  %130 = vmatpush1.bf16.msra.mxu0 %v108
  %131 = vmatprep.subr.bf16.mxu0 0
  %132 = vmatpush1.bf16.msra.mxu0 %v109
  %133 = vmatprep.subr.bf16.mxu0 0
  %134 = vmatpush1.bf16.msra.mxu0 %v110
  %135 = vmatprep.subr.bf16.mxu0 0
  %136 = vmatpush1.bf16.msra.mxu0 0
  %137 = vmatprep.subr.bf16.mxu0 0
  %138 = vmatpush1.bf16.msra.mxu0 0
  %139 = vmatprep.subr.bf16.mxu0 0
  %140 = vmatpush1.bf16.msra.mxu0 0
  %141 = vmatprep.subr.bf16.mxu0 0
  %142 = vmatpush1.bf16.msra.mxu0 0
  %143 = vmatprep.subr.bf16.mxu0 0
  %144 = vmatpush1.bf16.msra.mxu0 0
  %145 = vmatprep.subr.bf16.mxu0 0
  %146 = vmatpush1.bf16.msra.mxu0 0
  %147 = vmatprep.subr.bf16.mxu0 0
  %148 = vmatpush1.bf16.msra.mxu0 0
  %149 = vmatprep.subr.bf16.mxu0 0
  %150 = vmatpush1.bf16.msra.mxu0 0
  %151 = vmatprep.mubr.bf16.mxu0 0
  %152 = vmatmul.mubr.bf16.gmra.mrb[0].mxu0 %v69
  %v153 = vpop.f32.mrb[0].mxu0
  %v154 = vadd.f32 0.0, %v153
  %v155 = vpop.f32.mrb[0].mxu0
  %v156 = vpop.f32.mrb[0].mxu0
  %v157 = vadd.f32 0.0, %v156
  %v158 = vpop.f32.mrb[0].mxu0
  %159 = vdwg.mxu0
  %v162 = vunpack.c.l.b16 %v27
  %v163 = vunpack.c.l.b16 %v28
  %v164 = vpack.c.b16 %v163, %v162
  %v182 = vunpack.c.l.b16 %v33
  %v183 = vunpack.c.l.b16 %v34
  %v184 = vunpack.c.l.b16 %v35
  %v185 = vunpack.c.l.b16 %v36
  %v186 = vunpack.c.l.b16 %v37
  %v187 = vunpack.c.l.b16 %v38
  %v188 = vunpack.c.l.b16 %v39
  %v189 = vunpack.c.l.b16 %v40
  %v190 = vunpack.c.l.b16 %v41
  %v191 = vunpack.c.l.b16 %v42
  %v192 = vunpack.c.l.b16 %v43
  %v193 = vunpack.c.l.b16 %v44
  %v194 = vunpack.c.l.b16 %v45
  %v195 = vunpack.c.l.b16 %v46
  %v196 = vunpack.c.l.b16 %v47
  %v197 = vunpack.c.l.b16 %v48
  %v198 = vpack.c.b16 %v183, %v182
  %v199 = vpack.c.b16 %v185, %v184
  %v200 = vpack.c.b16 %v187, %v186
  %v201 = vpack.c.b16 %v189, %v188
  %v202 = vpack.c.b16 %v191, %v190
  %v203 = vpack.c.b16 %v193, %v192
  %v204 = vpack.c.b16 %v195, %v194
  %v205 = vpack.c.b16 %v197, %v196
  %214 = vmatprep.subr.bf16.mxu0 0
  %215 = vmatpush1.bf16.msra.mxu0 %v198
  %216 = vmatprep.subr.bf16.mxu0 0
  %217 = vmatpush1.bf16.msra.mxu0 %v199
  %218 = vmatprep.subr.bf16.mxu0 0
  %219 = vmatpush1.bf16.msra.mxu0 %v200
  %220 = vmatprep.subr.bf16.mxu0 0
  %221 = vmatpush1.bf16.msra.mxu0 %v201
  %222 = vmatprep.subr.bf16.mxu0 0
  %223 = vmatpush1.bf16.msra.mxu0 %v202
  %224 = vmatprep.subr.bf16.mxu0 0
  %225 = vmatpush1.bf16.msra.mxu0 %v203
  %226 = vmatprep.subr.bf16.mxu0 0
  %227 = vmatpush1.bf16.msra.mxu0 %v204
  %228 = vmatprep.subr.bf16.mxu0 0
  %229 = vmatpush1.bf16.msra.mxu0 %v205
  %230 = vmatprep.subr.bf16.mxu0 0
  %231 = vmatpush1.bf16.msra.mxu0 0
  %232 = vmatprep.subr.bf16.mxu0 0
  %233 = vmatpush1.bf16.msra.mxu0 0
  %234 = vmatprep.subr.bf16.mxu0 0
  %235 = vmatpush1.bf16.msra.mxu0 0
  %236 = vmatprep.subr.bf16.mxu0 0
  %237 = vmatpush1.bf16.msra.mxu0 0
  %238 = vmatprep.subr.bf16.mxu0 0
  %239 = vmatpush1.bf16.msra.mxu0 0
  %240 = vmatprep.subr.bf16.mxu0 0
  %241 = vmatpush1.bf16.msra.mxu0 0
  %242 = vmatprep.subr.bf16.mxu0 0
  %243 = vmatpush1.bf16.msra.mxu0 0
  %244 = vmatprep.subr.bf16.mxu0 0
  %245 = vmatpush1.bf16.msra.mxu0 0
  %246 = vmatprep.mubr.bf16.mxu0 0
  %247 = vmatmul.mubr.bf16.gmra.mrb[0].mxu0 %v164
  %v248 = vpop.f32.mrb[0].mxu0
  %v249 = vadd.f32 %v154, %v248
  %v250 = vpop.f32.mrb[0].mxu0
  %v251 = vpop.f32.mrb[0].mxu0
  %v252 = vadd.f32 %v157, %v251
  %v253 = vpop.f32.mrb[0].mxu0
  %254 = vdwg.mxu0
  %v255 = vadd.f32 %v31, %v249
  %v256 = vadd.f32 %v32, %v252
  %257 = vst [vmem:[#allocation2] sm:$0xff] %v255
  %258 = vst [vmem:[#allocation2 + $0x8] sm:$0xff] %v256
  // Predicated region
  $region26: #{morf_prediction_branch2.39} parent=0 // pred_check
    %p259 = pneg %p21
  $region27: #{morf_prediction_branch2.39} parent=0 // pred_check_branch
    %261 = sbr.rel (%p259) target = $region29
  $region28: #{morf_prediction_branch2.39} parent=0 // pred_region
    %v262 = vld [vmem:[#allocation2] sm:$0xff]
    %v263 = vld [vmem:[#allocation2 + $0x8] sm:$0xff]
    %v264 = vld [vmem:[%s4] sm:$0x1]
    %v266 = vlaneseq
    %v267 = vshrl.u32 %v266, 7
    %v268 = vsub.s32 0, %v267
    %v269 = vrot.slane %v264, %v268
    %v271 = vadd.f32 %v262, %v269
    %v272 = vadd.f32 %v263, %v269
    %v273 = vpack.c.bf16 %v272, %v271
    %v275 = vunpack.c.l.b16 %v273
    %v276 = vunpack.c.h.b16 %v273
    %v277 = vpack.c.b16 %v275, %v275
    %v278 = vpack.c.b16 %v276, %v276
    %281 = vst [vmem:[%s5] sm:$0xf] %v277
    %282 = vst [vmem:[%s5 + $0x4] sm:$0xf] %v278
  $region29: #{morf_prediction_branch2.39} parent=0 // pred_fallthru
    _
  // Predicated region
  $region30: #{morf_prediction_branch2.39} parent=0 // pred_check
    _
  $region31: #{morf_prediction_branch2.39} parent=0 // pred_check_branch
    %284 = sbr.rel (0) target = $region33
  $region32: #{morf_prediction_branch2.39} parent=0 // pred_region
    _
  $region33: #{morf_prediction_branch2.39} parent=0 // pred_fallthru
    _
  // Predicated region
  $region34: #{morf_prediction_branch2.39} parent=0 // pred_check
    _
  $region35: #{morf_prediction_branch2.39} parent=0 // pred_check_branch
    %286 = sbr.rel (0) target = $region37
  $region36: #{morf_prediction_branch2.39} parent=0 // pred_region
    _
  $region37: #{morf_prediction_branch2.39} parent=0 // pred_fallthru
    _

// kernel: morf_prediction_branch2.40
$region0: #{morf_prediction_branch2.40}
  #allocation0 [shape = 'u32[]', space=smem, size = 0x4, offset = 0x4, fixed_abs, tag = 'smem constant byte address 0x4 - core index']
  #allocation1 [shape = 'u32[144,128]{1,0:T(1,128)}', space=vmem, size = 0x12000, scoped, tag = 'internal scratch']
  #allocation2 [shape = 'f32[10,128]{1,0:T(8,128)}', space=vmem, size = 0x2000, scoped, tag = 'scratch operand']
  %s0 = inlined_call_operand.vmem [shape: f32[2,8,128], index: 0, kind: input, shape index: {}]
  %s1 = inlined_call_operand.vmem [shape: f32[12,128], index: 1, kind: input, shape index: {}]
  %s2 = inlined_call_operand.vmem [shape: f32[4,128], index: 2, kind: input, shape index: {}]
  %s3 = inlined_call_operand.vmem [shape: bf16[2,8,512], index: 3, kind: output, shape index: {}]
  %s4 = sld [smem:[#allocation0]]
  $region45: #{morf_prediction_branch2.40} parent=0
    _
  %s6 = ssub.s32 1, %s4
  %s7 = scalar_select 0, %s6, %s4
  loop: start=0, step=1, limit=4
  $region2: #{morf_prediction_branch2.40} parent=0 // loop_pre_header
    _
  $region3: #{morf_prediction_branch2.40} parent=0 // loop_header
    %s9 = sphi 0, %s13
    %p10 = scmp.ge.s32.totalorder %s9, 4
    %s19 = sphi 0, %s21
    %s22 = sphi 0, %s19
    %s23 = sphi 0, %s22
    %s39 = sphi 0, %s23
    %s43 = sphi 0, %s43
    %s45 = sphi 0, %s43
    %s46 = sphi 0, %s45
    %s60 = sphi 0, %s46
    %s64 = sphi 0, %s64
    %s66 = sphi 0, %s64
    %s67 = sphi 0, %s66
    %s81 = sphi 0, %s67
    %s87 = sphi 0, %s89
    %s90 = sphi 0, %s87
    %s91 = sphi 0, %s90
    %s107 = sphi 0, %s91
  $region4: #{morf_prediction_branch2.40} parent=0 // loop_header_branch
    %12 = sbr.rel (%p10) target = $region8
  $region5: #{morf_prediction_branch2.40} parent=0 // loop_body
    %s14 = ssub.s32 %s9, 1
    %s15 = ssub.s32 %s9, 2
    %s16 = sadd.s32 %s9, 1
    %s17 = ssub.s32 %s9, %s16
    %p18 = scmp.eq.s32.totalorder %s17, 0
    %s20 = sadd.s32 %s19, 1
    %s21 = scalar_select %p18, %s19, %s20
    %p24 = pneg %p18
    %p25 = scmp.eq.s32.totalorder %s9, 1
    %p26 = por %p24, %p25
    %p27 = scmp.ne.s32.totalorder %s19, %s22
    %p28 = scmp.eq.s32.totalorder %s9, 0
    %p29 = por %p27, %p28
    %p30 = scmp.ne.s32.totalorder %s19, %s22
    %p31 = scmp.eq.s32.totalorder %s14, 1
    %p32 = por %p30, %p31
    %p33 = scmp.ne.s32.totalorder %s22, %s23
    %p34 = scmp.eq.s32.totalorder %s14, 0
    %p35 = por %p33, %p34
    %p36 = scmp.ne.s32.totalorder %s22, %s23
    %p37 = scmp.eq.s32.totalorder %s15, 1
    %p38 = por %p36, %p37
    %p40 = scmp.ne.s32.totalorder %s23, %s39
    %p41 = scmp.eq.s32.totalorder %s15, 0
    %p42 = por %p40, %p41
    %s44 = sadd.s32 %s43, 1
    %p47 = scmp.eq.s32.totalorder %s9, 1
    %p48 = scmp.ne.s32.totalorder %s43, %s45
    %p49 = scmp.eq.s32.totalorder %s9, 0
    %p50 = por %p48, %p49
    %p51 = scmp.ne.s32.totalorder %s43, %s45
    %p52 = scmp.eq.s32.totalorder %s14, 1
    %p53 = por %p51, %p52
    %p54 = scmp.ne.s32.totalorder %s45, %s46
    %p55 = scmp.eq.s32.totalorder %s14, 0
    %p56 = por %p54, %p55
    %p57 = scmp.ne.s32.totalorder %s45, %s46
    %p58 = scmp.eq.s32.totalorder %s15, 1
    %p59 = por %p57, %p58
    %p61 = scmp.ne.s32.totalorder %s46, %s60
    %p62 = scmp.eq.s32.totalorder %s15, 0
    %p63 = por %p61, %p62
    %s65 = sadd.s32 %s64, 1
    %p68 = scmp.eq.s32.totalorder %s9, 1
    %p69 = scmp.ne.s32.totalorder %s64, %s66
    %p70 = scmp.eq.s32.totalorder %s9, 0
    %p71 = por %p69, %p70
    %p72 = scmp.ne.s32.totalorder %s64, %s66
    %p73 = scmp.eq.s32.totalorder %s14, 1
    %p74 = por %p72, %p73
    %p75 = scmp.ne.s32.totalorder %s66, %s67
    %p76 = scmp.eq.s32.totalorder %s14, 0
    %p77 = por %p75, %p76
    %p78 = scmp.ne.s32.totalorder %s66, %s67
    %p79 = scmp.eq.s32.totalorder %s15, 1
    %p80 = por %p78, %p79
    %p82 = scmp.ne.s32.totalorder %s67, %s81
    %p83 = scmp.eq.s32.totalorder %s15, 0
    %p84 = por %p82, %p83
    %s85 = ssub.s32 %s9, %s16
    %p86 = scmp.eq.s32.totalorder %s85, 0
    %s88 = sadd.s32 %s87, 1
    %s89 = scalar_select %p86, %s87, %s88
    %p92 = pneg %p86
    %p93 = scmp.eq.s32.totalorder %s9, 1
    %p94 = por %p92, %p93
    %p95 = scmp.ne.s32.totalorder %s87, %s90
    %p96 = scmp.eq.s32.totalorder %s9, 0
    %p97 = por %p95, %p96
    %p98 = scmp.ne.s32.totalorder %s87, %s90
    %p99 = scmp.eq.s32.totalorder %s14, 1
    %p100 = por %p98, %p99
    %p101 = scmp.ne.s32.totalorder %s90, %s91
    %p102 = scmp.eq.s32.totalorder %s14, 0
    %p103 = por %p101, %p102
    %p104 = scmp.ne.s32.totalorder %s90, %s91
    %p105 = scmp.eq.s32.totalorder %s15, 1
    %p106 = por %p104, %p105
    %p108 = scmp.ne.s32.totalorder %s91, %s107
    %p109 = scmp.eq.s32.totalorder %s15, 0
    %p110 = por %p108, %p109
    %p111 = scmp.le.s32.totalorder 1, %s9
    %p112 = scmp.lt.s32.totalorder %s9, 3
    %p113 = pnand %p111, %p112
    %p114 = pneg %p113
    // Predicated region
    $region9: #{morf_prediction_branch2.40} parent=5 // pred_check
      _
    $region10: #{morf_prediction_branch2.40} parent=5 // pred_check_branch
      %116 = sbr.rel (%p113) target = $region12
    $region11: #{morf_prediction_branch2.40} parent=5 // pred_region
      %s117 = ssub.s32 %s9, 1
      // Predicated region
      $region13: #{morf_prediction_branch2.40} parent=11 // pred_check
        %p118 = pneg %p56
      $region14: #{morf_prediction_branch2.40} parent=11 // pred_check_branch
        %120 = sbr.rel (%p118) target = $region16
      $region15: #{morf_prediction_branch2.40} parent=11 // pred_region
        _
      $region16: #{morf_prediction_branch2.40} parent=11 // pred_fallthru
        _
      // Predicated region
      $region17: #{morf_prediction_branch2.40} parent=11 // pred_check
        %p121 = pneg %p77
      $region18: #{morf_prediction_branch2.40} parent=11 // pred_check_branch
        %123 = sbr.rel (%p121) target = $region20
      $region19: #{morf_prediction_branch2.40} parent=11 // pred_region
        _
      $region20: #{morf_prediction_branch2.40} parent=11 // pred_fallthru
        _
    $region12: #{morf_prediction_branch2.40} parent=5 // pred_fallthru
      _
    %p124 = scmp.lt.s32.totalorder %s9, 2
    // Predicated region
    $region21: #{morf_prediction_branch2.40} parent=5 // pred_check
      %p125 = pneg %p124
    $region22: #{morf_prediction_branch2.40} parent=5 // pred_check_branch
      %127 = sbr.rel (%p125) target = $region24
    $region23: #{morf_prediction_branch2.40} parent=5 // pred_region
      // Predicated region
      $region25: #{morf_prediction_branch2.40} parent=23 // pred_check
        %p128 = pneg %p29
      $region26: #{morf_prediction_branch2.40} parent=23 // pred_check_branch
        %130 = sbr.rel (%p128) target = $region28
      $region27: #{morf_prediction_branch2.40} parent=23 // pred_region
        %p131 = scmp.lt.s32.totalorder %s9, 1
        %s132 = scalar_select %p131, %s9, 1
        %s133 = smul.addr %s132, 8
        %s134 = scalar_lea.vmem %s0, %s133
      $region28: #{morf_prediction_branch2.40} parent=23 // pred_fallthru
        _
    $region24: #{morf_prediction_branch2.40} parent=5 // pred_fallthru
      _
    %p135 = scmp.le.s32.totalorder 1, %s9
    %p136 = scmp.lt.s32.totalorder %s9, 3
    %p137 = pnand %p135, %p136
    %p138 = pneg %p137
    // Predicated region
    $region29: #{morf_prediction_branch2.40} parent=5 // pred_check
      _
    $region30: #{morf_prediction_branch2.40} parent=5 // pred_check_branch
      %140 = sbr.rel (%p137) target = $region32
    $region31: #{morf_prediction_branch2.40} parent=5 // pred_region
      %s141 = ssub.s32 %s9, 1
      %p142 = scmp.lt.s32.totalorder %s14, 1
      %s143 = scalar_select %p142, %s14, 1
      %s144 = smul.addr %s143, 8
      %s145 = scalar_lea.vmem %s0, %s144
      %p146 = pneg %p35
      %p147 = pneg %p32
      %p148 = pneg %p56
      %p149 = pneg %p53
      %p150 = pneg %p77
      %p151 = pneg %p74
      %p152 = pneg %p103
      %p153 = pneg %p100
      %p154 = scmp.lt.s32.totalorder %s14, 1
      %s155 = scalar_select %p154, %s14, 1
      %s156 = smul.addr %s155, 4
      %s157 = smul.addr %s156, 4
      %s158 = scalar_lea.vmem %s3, %s157
      %p159 = scmp.lt.s32.totalorder %s14, 1
      %s160 = scalar_select %p159, %s14, 1
      %s161 = smul.addr %s160, 8
      %s162 = scalar_lea.vmem %s0, %s161
      %p163 = scmp.lt.s32.totalorder %s14, 1
      %s164 = scalar_select %p163, %s14, 1
      %s165 = smul.addr %s164, 4
      %s166 = smul.addr %s165, 4
      %s167 = scalar_lea.vmem %s3, %s166
      %168 = vst [vmem:[#allocation2] sm:$0xff] 0.0
      %169 = vst [vmem:[#allocation2 + $0x8] sm:$0x3] 0.0
      %v170 = vld [vmem:[%s162] sm:$0xff]
      %171 = vst [vmem:[#allocation2 + $0x1] sm:$0xff] %v170
      %v172 = vld [vmem:[#allocation2] sm:$0xff]
      %v173 = vld [vmem:[%s1] sm:$0x1]
      %v174 = vlaneseq
      %v175 = vshrl.u32 %v174, 7
      %v176 = vsub.s32 0, %v175
      %v177 = vrot.slane %v173, %v176
      %v178 = vmul.f32 %v172, %v177
      %v179 = vadd.f32 %v178, 0.0
      %v180 = vld [vmem:[#allocation2 + $0x1] sm:$0xff]
      %v181 = vld [vmem:[%s1 + $0x1] sm:$0x1]
      %v182 = vlaneseq
      %v183 = vshrl.u32 %v182, 7
      %v184 = vsub.s32 0, %v183
      %v185 = vrot.slane %v181, %v184
      %v186 = vmul.f32 %v180, %v185
      %v187 = vadd.f32 %v179, %v186
      %v188 = vld [vmem:[#allocation2 + $0x2] sm:$0xff]
      %v189 = vld [vmem:[%s1 + $0x2] sm:$0x1]
      %v190 = vlaneseq
      %v191 = vshrl.u32 %v190, 7
      %v192 = vsub.s32 0, %v191
      %v193 = vrot.slane %v189, %v192
      %v194 = vmul.f32 %v188, %v193
      %v195 = vadd.f32 %v187, %v194
      %v196 = vld [vmem:[%s2] sm:$0x1]
      %v197 = vlaneseq
      %v198 = vshrl.u32 %v197, 7
      %v199 = vsub.s32 0, %v198
      %v200 = vrot.slane %v196, %v199
      %v201 = vadd.f32 %v195, %v200
      %v202 = vmul.f32 %v201, 0.5
      %v203 = vmul.f32 %v201, 0.044715
      %v204 = vmul.f32 %v203, %v201
      %v205 = vmul.f32 %v204, %v201
      %v206 = vadd.f32 %v201, %v205
      %v207 = vmul.f32 %v206, 0.7978846
      %v208 = vtanh.pop %v207
      %v209 = vadd.f32 %v208, 1.0
      %v210 = vmul.f32 %v202, %v209
      %v211 = vpack.c.bf16 %v210, %v210
      %212 = vst [vmem:[%s167] sm:$0xf] %v211
      %v213 = vld [vmem:[#allocation2] sm:$0xff]
      %v214 = vld [vmem:[%s1 + $0x3] sm:$0x1]
      %v215 = vlaneseq
      %v216 = vshrl.u32 %v215, 7
      %v217 = vsub.s32 0, %v216
      %v218 = vrot.slane %v214, %v217
      %v219 = vmul.f32 %v213, %v218
      %v220 = vadd.f32 %v219, 0.0
      %v221 = vld [vmem:[#allocation2 + $0x1] sm:$0xff]
      %v222 = vld [vmem:[%s1 + $0x4] sm:$0x1]
      %v223 = vlaneseq
      %v224 = vshrl.u32 %v223, 7
      %v225 = vsub.s32 0, %v224
      %v226 = vrot.slane %v222, %v225
      %v227 = vmul.f32 %v221, %v226
      %v228 = vadd.f32 %v220, %v227
      %v229 = vld [vmem:[#allocation2 + $0x2] sm:$0xff]
      %v230 = vld [vmem:[%s1 + $0x5] sm:$0x1]
      %v231 = vlaneseq
      %v232 = vshrl.u32 %v231, 7
      %v233 = vsub.s32 0, %v232
      %v234 = vrot.slane %v230, %v233
      %v235 = vmul.f32 %v229, %v234
      %v236 = vadd.f32 %v228, %v235
      %v237 = vld [vmem:[%s2 + $0x1] sm:$0x1]
      %v238 = vlaneseq
      %v239 = vshrl.u32 %v238, 7
      %v240 = vsub.s32 0, %v239
      %v241 = vrot.slane %v237, %v240
      %v242 = vadd.f32 %v236, %v241
      %v243 = vmul.f32 %v242, 0.5
      %v244 = vmul.f32 %v242, 0.044715
      %v245 = vmul.f32 %v244, %v242
      %v246 = vmul.f32 %v245, %v242
      %v247 = vadd.f32 %v242, %v246
      %v248 = vmul.f32 %v247, 0.7978846
      %v249 = vtanh.pop %v248
      %v250 = vadd.f32 %v249, 1.0
      %v251 = vmul.f32 %v243, %v250
      %v252 = vpack.c.bf16 %v251, %v251
      %253 = vst [vmem:[%s167 + $0x4] sm:$0xf] %v252
      %v254 = vld [vmem:[#allocation2] sm:$0xff]
      %v255 = vld [vmem:[%s1 + $0x6] sm:$0x1]
      %v256 = vlaneseq
      %v257 = vshrl.u32 %v256, 7
      %v258 = vsub.s32 0, %v257
      %v259 = vrot.slane %v255, %v258
      %v260 = vmul.f32 %v254, %v259
      %v261 = vadd.f32 %v260, 0.0
      %v262 = vld [vmem:[#allocation2 + $0x1] sm:$0xff]
      %v263 = vld [vmem:[%s1 + $0x7] sm:$0x1]
      %v264 = vlaneseq
      %v265 = vshrl.u32 %v264, 7
      %v266 = vsub.s32 0, %v265
      %v267 = vrot.slane %v263, %v266
      %v268 = vmul.f32 %v262, %v267
      %v269 = vadd.f32 %v261, %v268
      %v270 = vld [vmem:[#allocation2 + $0x2] sm:$0xff]
      %v271 = vld [vmem:[%s1 + $0x8] sm:$0x1]
      %v272 = vlaneseq
      %v273 = vshrl.u32 %v272, 7
      %v274 = vsub.s32 0, %v273
      %v275 = vrot.slane %v271, %v274
      %v276 = vmul.f32 %v270, %v275
      %v277 = vadd.f32 %v269, %v276
      %v278 = vld [vmem:[%s2 + $0x2] sm:$0x1]
      %v279 = vlaneseq
      %v280 = vshrl.u32 %v279, 7
      %v281 = vsub.s32 0, %v280
      %v282 = vrot.slane %v278, %v281
      %v283 = vadd.f32 %v277, %v282
      %v284 = vmul.f32 %v283, 0.5
      %v285 = vmul.f32 %v283, 0.044715
      %v286 = vmul.f32 %v285, %v283
      %v287 = vmul.f32 %v286, %v283
      %v288 = vadd.f32 %v283, %v287
      %v289 = vmul.f32 %v288, 0.7978846
      %v290 = vtanh.pop %v289
      %v291 = vadd.f32 %v290, 1.0
      %v292 = vmul.f32 %v284, %v291
      %v293 = vpack.c.bf16 %v292, %v292
      %294 = vst [vmem:[%s167 + $0x8] sm:$0xf] %v293
      %v295 = vld [vmem:[#allocation2] sm:$0xff]
      %v296 = vld [vmem:[%s1 + $0x9] sm:$0x1]
      %v297 = vlaneseq
      %v298 = vshrl.u32 %v297, 7
      %v299 = vsub.s32 0, %v298
      %v300 = vrot.slane %v296, %v299
      %v301 = vmul.f32 %v295, %v300
      %v302 = vadd.f32 %v301, 0.0
      %v303 = vld [vmem:[#allocation2 + $0x1] sm:$0xff]
      %v304 = vld [vmem:[%s1 + $0xa] sm:$0x1]
      %v305 = vlaneseq
      %v306 = vshrl.u32 %v305, 7
      %v307 = vsub.s32 0, %v306
      %v308 = vrot.slane %v304, %v307
      %v309 = vmul.f32 %v303, %v308
      %v310 = vadd.f32 %v302, %v309
      %v311 = vld [vmem:[#allocation2 + $0x2] sm:$0xff]
      %v312 = vld [vmem:[%s1 + $0xb] sm:$0x1]
      %v313 = vlaneseq
      %v314 = vshrl.u32 %v313, 7
      %v315 = vsub.s32 0, %v314
      %v316 = vrot.slane %v312, %v315
      %v317 = vmul.f32 %v311, %v316
      %v318 = vadd.f32 %v310, %v317
      %v319 = vld [vmem:[%s2 + $0x3] sm:$0x1]
      %v320 = vlaneseq
      %v321 = vshrl.u32 %v320, 7
      %v322 = vsub.s32 0, %v321
      %v323 = vrot.slane %v319, %v322
      %v324 = vadd.f32 %v318, %v323
      %v325 = vmul.f32 %v324, 0.5
      %v326 = vmul.f32 %v324, 0.044715
      %v327 = vmul.f32 %v326, %v324
      %v328 = vmul.f32 %v327, %v324
      %v329 = vadd.f32 %v324, %v328
      %v330 = vmul.f32 %v329, 0.7978846
      %v331 = vtanh.pop %v330
      %v332 = vadd.f32 %v331, 1.0
      %v333 = vmul.f32 %v325, %v332
      %v334 = vpack.c.bf16 %v333, %v333
      %335 = vst [vmem:[%s167 + $0xc] sm:$0xf] %v334
      %p336 = scmp.lt.s32.totalorder %s14, 1
      %s337 = scalar_select %p336, %s14, 1
      %s338 = smul.addr %s337, 4
      %s339 = smul.addr %s338, 4
      %s340 = scalar_lea.vmem %s3, %s339
      // Predicated region
      $region33: #{morf_prediction_branch2.40} parent=31 // pred_check
        %p341 = pneg %p100
      $region34: #{morf_prediction_branch2.40} parent=31 // pred_check_branch
        %343 = sbr.rel (%p341) target = $region36
      $region35: #{morf_prediction_branch2.40} parent=31 // pred_region
        _
      $region36: #{morf_prediction_branch2.40} parent=31 // pred_fallthru
        _
    $region32: #{morf_prediction_branch2.40} parent=5 // pred_fallthru
      _
    %p344 = scmp.le.s32.totalorder 2, %s9
    // Predicated region
    $region37: #{morf_prediction_branch2.40} parent=5 // pred_check
      %p345 = pneg %p344
    $region38: #{morf_prediction_branch2.40} parent=5 // pred_check_branch
      %347 = sbr.rel (%p345) target = $region40
    $region39: #{morf_prediction_branch2.40} parent=5 // pred_region
      %s348 = ssub.s32 %s9, 2
      // Predicated region
      $region41: #{morf_prediction_branch2.40} parent=39 // pred_check
        %p349 = pneg %p106
      $region42: #{morf_prediction_branch2.40} parent=39 // pred_check_branch
        %351 = sbr.rel (%p349) target = $region44
      $region43: #{morf_prediction_branch2.40} parent=39 // pred_region
        %p352 = scmp.lt.s32.totalorder %s15, 1
        %s353 = scalar_select %p352, %s15, 1
        %s354 = smul.addr %s353, 4
        %s355 = smul.addr %s354, 4
        %s356 = scalar_lea.vmem %s3, %s355
      $region44: #{morf_prediction_branch2.40} parent=39 // pred_fallthru
        _
    $region40: #{morf_prediction_branch2.40} parent=5 // pred_fallthru
      _
  $region6: #{morf_prediction_branch2.40} parent=0 // loop_footer
    %s13 = sadd.s32 1, %s9
  $region7: #{morf_prediction_branch2.40} parent=0 // loop_footer_branch
    %8 = sbr.rel target = $region3
  $region8: #{morf_prediction_branch2.40} parent=0 // loop_exit
    _

// kernel: morf_prediction_branch2.41
$region0: #{morf_prediction_branch2.41}
  #allocation0 [shape = 'u32[]', space=smem, size = 0x4, offset = 0x4, fixed_abs, tag = 'smem constant byte address 0x4 - core index']
  #allocation1 [shape = 'u32[144,128]{1,0:T(1,128)}', space=vmem, size = 0x12000, scoped, tag = 'internal scratch']
  #allocation2 [shape = 'f32[16,128]{1,0:T(8,128)}', space=vmem, size = 0x2000, scoped, tag = 'scratch operand']
  %s0 = inlined_call_operand.vmem [shape: bf16[16,512], index: 0, kind: input, shape index: {}]
  %s1 = inlined_call_operand.vmem [shape: bf16[512,128], index: 1, kind: input, shape index: {}]
  %s2 = inlined_call_operand.vmem [shape: f32[1,128], index: 2, kind: input, shape index: {}]
  %s3 = inlined_call_operand.vmem [shape: f32[16,128], index: 3, kind: output, shape index: {}]
  %s4 = sld [smem:[#allocation0]]
  $region30: #{morf_prediction_branch2.41} parent=0
    _
  %s6 = ssub.s32 1, %s4
  %s7 = scalar_select 0, %s6, %s4
  // Predicated region
  $region2: #{morf_prediction_branch2.41} parent=0 // pred_check
    _
  $region3: #{morf_prediction_branch2.41} parent=0 // pred_check_branch
    %9 = sbr.rel (0) target = $region5
  $region4: #{morf_prediction_branch2.41} parent=0 // pred_region
    _
  $region5: #{morf_prediction_branch2.41} parent=0 // pred_fallthru
    _
  // Predicated region
  $region6: #{morf_prediction_branch2.41} parent=0 // pred_check
    _
  $region7: #{morf_prediction_branch2.41} parent=0 // pred_check_branch
    %11 = sbr.rel (0) target = $region9
  $region8: #{morf_prediction_branch2.41} parent=0 // pred_region
    _
  $region9: #{morf_prediction_branch2.41} parent=0 // pred_fallthru
    _
  // Predicated region
  $region10: #{morf_prediction_branch2.41} parent=0 // pred_check
    _
  $region11: #{morf_prediction_branch2.41} parent=0 // pred_check_branch
    %13 = sbr.rel (0) target = $region13
  $region12: #{morf_prediction_branch2.41} parent=0 // pred_region
    _
  $region13: #{morf_prediction_branch2.41} parent=0 // pred_fallthru
    _
  %p15 = scmp.eq.s32.totalorder 0, 0
  // Predicated region
  $region14: #{morf_prediction_branch2.41} parent=0 // pred_check
    %p16 = pneg %p15
  $region15: #{morf_prediction_branch2.41} parent=0 // pred_check_branch
    %18 = sbr.rel (%p16) target = $region17
  $region16: #{morf_prediction_branch2.41} parent=0 // pred_region
    %19 = vst [vmem:[#allocation2] sm:$0xff] 0.0
    %20 = vst [vmem:[#allocation2 + $0x8] sm:$0xff] 0.0
  $region17: #{morf_prediction_branch2.41} parent=0 // pred_fallthru
    _
  %v21 = vld [vmem:[%s0] sm:$0xff]
  %v22 = vld [vmem:[%s0 + $0x8] sm:$0xff]
  %v23 = vld [vmem:[%s0 + $0x10] sm:$0xff]
  %v24 = vld [vmem:[%s0 + $0x18] sm:$0xff]
  %v25 = vld [vmem:[#allocation2] sm:$0xff]
  %v26 = vld [vmem:[#allocation2 + $0x8] sm:$0xff]
  %v27 = vld [vmem:[%s1] sm:$0xf]
  %v28 = vld [vmem:[%s1 + $0x4] sm:$0xf]
  %v29 = vld [vmem:[%s1 + $0x8] sm:$0xf]
  %v30 = vld [vmem:[%s1 + $0xc] sm:$0xf]
  %v31 = vld [vmem:[%s1 + $0x10] sm:$0xf]
  %v32 = vld [vmem:[%s1 + $0x14] sm:$0xf]
  %v33 = vld [vmem:[%s1 + $0x18] sm:$0xf]
  %v34 = vld [vmem:[%s1 + $0x1c] sm:$0xf]
  %v35 = vld [vmem:[%s1 + $0x20] sm:$0xf]
  %v36 = vld [vmem:[%s1 + $0x24] sm:$0xf]
  %v37 = vld [vmem:[%s1 + $0x28] sm:$0xf]
  %v38 = vld [vmem:[%s1 + $0x2c] sm:$0xf]
  %v39 = vld [vmem:[%s1 + $0x30] sm:$0xf]
  %v40 = vld [vmem:[%s1 + $0x34] sm:$0xf]
  %v41 = vld [vmem:[%s1 + $0x38] sm:$0xf]
  %v42 = vld [vmem:[%s1 + $0x3c] sm:$0xf]
  %v43 = vld [vmem:[%s1 + $0x40] sm:$0xf]
  %v44 = vld [vmem:[%s1 + $0x44] sm:$0xf]
  %v45 = vld [vmem:[%s1 + $0x48] sm:$0xf]
  %v46 = vld [vmem:[%s1 + $0x4c] sm:$0xf]
  %v47 = vld [vmem:[%s1 + $0x50] sm:$0xf]
  %v48 = vld [vmem:[%s1 + $0x54] sm:$0xf]
  %v49 = vld [vmem:[%s1 + $0x58] sm:$0xf]
  %v50 = vld [vmem:[%s1 + $0x5c] sm:$0xf]
  %v51 = vld [vmem:[%s1 + $0x60] sm:$0xf]
  %v52 = vld [vmem:[%s1 + $0x64] sm:$0xf]
  %v53 = vld [vmem:[%s1 + $0x68] sm:$0xf]
  %v54 = vld [vmem:[%s1 + $0x6c] sm:$0xf]
  %v55 = vld [vmem:[%s1 + $0x70] sm:$0xf]
  %v56 = vld [vmem:[%s1 + $0x74] sm:$0xf]
  %v57 = vld [vmem:[%s1 + $0x78] sm:$0xf]
  %v58 = vld [vmem:[%s1 + $0x7c] sm:$0xf]
  %v59 = vld [vmem:[%s1 + $0x80] sm:$0xf]
  %v60 = vld [vmem:[%s1 + $0x84] sm:$0xf]
  %v61 = vld [vmem:[%s1 + $0x88] sm:$0xf]
  %v62 = vld [vmem:[%s1 + $0x8c] sm:$0xf]
  %v63 = vld [vmem:[%s1 + $0x90] sm:$0xf]
  %v64 = vld [vmem:[%s1 + $0x94] sm:$0xf]
  %v65 = vld [vmem:[%s1 + $0x98] sm:$0xf]
  %v66 = vld [vmem:[%s1 + $0x9c] sm:$0xf]
  %v67 = vld [vmem:[%s1 + $0xa0] sm:$0xf]
  %v68 = vld [vmem:[%s1 + $0xa4] sm:$0xf]
  %v69 = vld [vmem:[%s1 + $0xa8] sm:$0xf]
  %v70 = vld [vmem:[%s1 + $0xac] sm:$0xf]
  %v71 = vld [vmem:[%s1 + $0xb0] sm:$0xf]
  %v72 = vld [vmem:[%s1 + $0xb4] sm:$0xf]
  %v73 = vld [vmem:[%s1 + $0xb8] sm:$0xf]
  %v74 = vld [vmem:[%s1 + $0xbc] sm:$0xf]
  %v75 = vld [vmem:[%s1 + $0xc0] sm:$0xf]
  %v76 = vld [vmem:[%s1 + $0xc4] sm:$0xf]
  %v77 = vld [vmem:[%s1 + $0xc8] sm:$0xf]
  %v78 = vld [vmem:[%s1 + $0xcc] sm:$0xf]
  %v79 = vld [vmem:[%s1 + $0xd0] sm:$0xf]
  %v80 = vld [vmem:[%s1 + $0xd4] sm:$0xf]
  %v81 = vld [vmem:[%s1 + $0xd8] sm:$0xf]
  %v82 = vld [vmem:[%s1 + $0xdc] sm:$0xf]
  %v83 = vld [vmem:[%s1 + $0xe0] sm:$0xf]
  %v84 = vld [vmem:[%s1 + $0xe4] sm:$0xf]
  %v85 = vld [vmem:[%s1 + $0xe8] sm:$0xf]
  %v86 = vld [vmem:[%s1 + $0xec] sm:$0xf]
  %v87 = vld [vmem:[%s1 + $0xf0] sm:$0xf]
  %v88 = vld [vmem:[%s1 + $0xf4] sm:$0xf]
  %v89 = vld [vmem:[%s1 + $0xf8] sm:$0xf]
  %v90 = vld [vmem:[%s1 + $0xfc] sm:$0xf]
  %v95 = vunpack.c.l.b16 %v21
  %v96 = vunpack.c.h.b16 %v21
  %v97 = vunpack.c.l.b16 %v22
  %v98 = vunpack.c.h.b16 %v22
  %v99 = vunpack.c.l.b16 %v23
  %v100 = vunpack.c.h.b16 %v23
  %v101 = vunpack.c.l.b16 %v24
  %v102 = vunpack.c.h.b16 %v24
  %v103 = vpack.c.b16 %v99, %v95
  %v104 = vpack.c.b16 %v100, %v96
  %v105 = vpack.c.b16 %v101, %v97
  %v106 = vpack.c.b16 %v102, %v98
  %v175 = vunpack.c.l.b16 %v27
  %v176 = vunpack.c.l.b16 %v28
  %v177 = vunpack.c.l.b16 %v29
  %v178 = vunpack.c.l.b16 %v30
  %v179 = vunpack.c.l.b16 %v31
  %v180 = vunpack.c.l.b16 %v32
  %v181 = vunpack.c.l.b16 %v33
  %v182 = vunpack.c.l.b16 %v34
  %v183 = vunpack.c.l.b16 %v35
  %v184 = vunpack.c.l.b16 %v36
  %v185 = vunpack.c.l.b16 %v37
  %v186 = vunpack.c.l.b16 %v38
  %v187 = vunpack.c.l.b16 %v39
  %v188 = vunpack.c.l.b16 %v40
  %v189 = vunpack.c.l.b16 %v41
  %v190 = vunpack.c.l.b16 %v42
  %v191 = vunpack.c.l.b16 %v43
  %v192 = vunpack.c.l.b16 %v44
  %v193 = vunpack.c.l.b16 %v45
  %v194 = vunpack.c.l.b16 %v46
  %v195 = vunpack.c.l.b16 %v47
  %v196 = vunpack.c.l.b16 %v48
  %v197 = vunpack.c.l.b16 %v49
  %v198 = vunpack.c.l.b16 %v50
  %v199 = vunpack.c.l.b16 %v51
  %v200 = vunpack.c.l.b16 %v52
  %v201 = vunpack.c.l.b16 %v53
  %v202 = vunpack.c.l.b16 %v54
  %v203 = vunpack.c.l.b16 %v55
  %v204 = vunpack.c.l.b16 %v56
  %v205 = vunpack.c.l.b16 %v57
  %v206 = vunpack.c.l.b16 %v58
  %v207 = vunpack.c.l.b16 %v59
  %v208 = vunpack.c.l.b16 %v60
  %v209 = vunpack.c.l.b16 %v61
  %v210 = vunpack.c.l.b16 %v62
  %v211 = vunpack.c.l.b16 %v63
  %v212 = vunpack.c.l.b16 %v64
  %v213 = vunpack.c.l.b16 %v65
  %v214 = vunpack.c.l.b16 %v66
  %v215 = vunpack.c.l.b16 %v67
  %v216 = vunpack.c.l.b16 %v68
  %v217 = vunpack.c.l.b16 %v69
  %v218 = vunpack.c.l.b16 %v70
  %v219 = vunpack.c.l.b16 %v71
  %v220 = vunpack.c.l.b16 %v72
  %v221 = vunpack.c.l.b16 %v73
  %v222 = vunpack.c.l.b16 %v74
  %v223 = vunpack.c.l.b16 %v75
  %v224 = vunpack.c.l.b16 %v76
  %v225 = vunpack.c.l.b16 %v77
  %v226 = vunpack.c.l.b16 %v78
  %v227 = vunpack.c.l.b16 %v79
  %v228 = vunpack.c.l.b16 %v80
  %v229 = vunpack.c.l.b16 %v81
  %v230 = vunpack.c.l.b16 %v82
  %v231 = vunpack.c.l.b16 %v83
  %v232 = vunpack.c.l.b16 %v84
  %v233 = vunpack.c.l.b16 %v85
  %v234 = vunpack.c.l.b16 %v86
  %v235 = vunpack.c.l.b16 %v87
  %v236 = vunpack.c.l.b16 %v88
  %v237 = vunpack.c.l.b16 %v89
  %v238 = vunpack.c.l.b16 %v90
  %v239 = vpack.c.b16 %v176, %v175
  %v240 = vpack.c.b16 %v178, %v177
  %v241 = vpack.c.b16 %v180, %v179
  %v242 = vpack.c.b16 %v182, %v181
  %v243 = vpack.c.b16 %v184, %v183
  %v244 = vpack.c.b16 %v186, %v185
  %v245 = vpack.c.b16 %v188, %v187
  %v246 = vpack.c.b16 %v190, %v189
  %v247 = vpack.c.b16 %v192, %v191
  %v248 = vpack.c.b16 %v194, %v193
  %v249 = vpack.c.b16 %v196, %v195
  %v250 = vpack.c.b16 %v198, %v197
  %v251 = vpack.c.b16 %v200, %v199
  %v252 = vpack.c.b16 %v202, %v201
  %v253 = vpack.c.b16 %v204, %v203
  %v254 = vpack.c.b16 %v206, %v205
  %v255 = vpack.c.b16 %v208, %v207
  %v256 = vpack.c.b16 %v210, %v209
  %v257 = vpack.c.b16 %v212, %v211
  %v258 = vpack.c.b16 %v214, %v213
  %v259 = vpack.c.b16 %v216, %v215
  %v260 = vpack.c.b16 %v218, %v217
  %v261 = vpack.c.b16 %v220, %v219
  %v262 = vpack.c.b16 %v222, %v221
  %v263 = vpack.c.b16 %v224, %v223
  %v264 = vpack.c.b16 %v226, %v225
  %v265 = vpack.c.b16 %v228, %v227
  %v266 = vpack.c.b16 %v230, %v229
  %v267 = vpack.c.b16 %v232, %v231
  %v268 = vpack.c.b16 %v234, %v233
  %v269 = vpack.c.b16 %v236, %v235
  %v270 = vpack.c.b16 %v238, %v237
  %303 = vmatprep.subr.bf16.mxu0 0
  %304 = vmatpush1.bf16.msra.mxu0 %v239
  %305 = vmatprep.subr.bf16.mxu0 0
  %306 = vmatpush1.bf16.msra.mxu0 %v240
  %307 = vmatprep.subr.bf16.mxu0 0
  %308 = vmatpush1.bf16.msra.mxu0 %v241
  %309 = vmatprep.subr.bf16.mxu0 0
  %310 = vmatpush1.bf16.msra.mxu0 %v242
  %311 = vmatprep.subr.bf16.mxu0 0
  %312 = vmatpush1.bf16.msra.mxu0 %v243
  %313 = vmatprep.subr.bf16.mxu0 0
  %314 = vmatpush1.bf16.msra.mxu0 %v244
  %315 = vmatprep.subr.bf16.mxu0 0
  %316 = vmatpush1.bf16.msra.mxu0 %v245
  %317 = vmatprep.subr.bf16.mxu0 0
  %318 = vmatpush1.bf16.msra.mxu0 %v246
  %319 = vmatprep.subr.bf16.mxu0 0
  %320 = vmatpush1.bf16.msra.mxu0 %v247
  %321 = vmatprep.subr.bf16.mxu0 0
  %322 = vmatpush1.bf16.msra.mxu0 %v248
  %323 = vmatprep.subr.bf16.mxu0 0
  %324 = vmatpush1.bf16.msra.mxu0 %v249
  %325 = vmatprep.subr.bf16.mxu0 0
  %326 = vmatpush1.bf16.msra.mxu0 %v250
  %327 = vmatprep.subr.bf16.mxu0 0
  %328 = vmatpush1.bf16.msra.mxu0 %v251
  %329 = vmatprep.subr.bf16.mxu0 0
  %330 = vmatpush1.bf16.msra.mxu0 %v252
  %331 = vmatprep.subr.bf16.mxu0 0
  %332 = vmatpush1.bf16.msra.mxu0 %v253
  %333 = vmatprep.subr.bf16.mxu0 0
  %334 = vmatpush1.bf16.msra.mxu0 %v254
  %335 = vmatprep.mubr.bf16.mxu0 %v104
  %336 = vmatmul.mubr.bf16.gmra.mrb[0].mxu0 %v103
  %v337 = vpop.f32.mrb[0].mxu0
  %v338 = vadd.f32 0.0, %v337
  %v339 = vpop.f32.mrb[0].mxu0
  %v340 = vpop.f32.mrb[0].mxu0
  %v341 = vadd.f32 0.0, %v340
  %v342 = vpop.f32.mrb[0].mxu0
  %343 = vdwg.mxu0
  %344 = vmatprep.subr.bf16.mxu0 0
  %345 = vmatpush1.bf16.msra.mxu0 %v255
  %346 = vmatprep.subr.bf16.mxu0 0
  %347 = vmatpush1.bf16.msra.mxu0 %v256
  %348 = vmatprep.subr.bf16.mxu0 0
  %349 = vmatpush1.bf16.msra.mxu0 %v257
  %350 = vmatprep.subr.bf16.mxu0 0
  %351 = vmatpush1.bf16.msra.mxu0 %v258
  %352 = vmatprep.subr.bf16.mxu0 0
  %353 = vmatpush1.bf16.msra.mxu0 %v259
  %354 = vmatprep.subr.bf16.mxu0 0
  %355 = vmatpush1.bf16.msra.mxu0 %v260
  %356 = vmatprep.subr.bf16.mxu0 0
  %357 = vmatpush1.bf16.msra.mxu0 %v261
  %358 = vmatprep.subr.bf16.mxu0 0
  %359 = vmatpush1.bf16.msra.mxu0 %v262
  %360 = vmatprep.subr.bf16.mxu0 0
  %361 = vmatpush1.bf16.msra.mxu0 %v263
  %362 = vmatprep.subr.bf16.mxu0 0
  %363 = vmatpush1.bf16.msra.mxu0 %v264
  %364 = vmatprep.subr.bf16.mxu0 0
  %365 = vmatpush1.bf16.msra.mxu0 %v265
  %366 = vmatprep.subr.bf16.mxu0 0
  %367 = vmatpush1.bf16.msra.mxu0 %v266
  %368 = vmatprep.subr.bf16.mxu0 0
  %369 = vmatpush1.bf16.msra.mxu0 %v267
  %370 = vmatprep.subr.bf16.mxu0 0
  %371 = vmatpush1.bf16.msra.mxu0 %v268
  %372 = vmatprep.subr.bf16.mxu0 0
  %373 = vmatpush1.bf16.msra.mxu0 %v269
  %374 = vmatprep.subr.bf16.mxu0 0
  %375 = vmatpush1.bf16.msra.mxu0 %v270
  %376 = vmatprep.mubr.bf16.mxu0 %v106
  %377 = vmatmul.mubr.bf16.gmra.mrb[0].mxu0 %v105
  %v378 = vpop.f32.mrb[0].mxu0
  %v379 = vadd.f32 %v338, %v378
  %v380 = vpop.f32.mrb[0].mxu0
  %v381 = vpop.f32.mrb[0].mxu0
  %v382 = vadd.f32 %v341, %v381
  %v383 = vpop.f32.mrb[0].mxu0
  %384 = vdwg.mxu0
  %v385 = vadd.f32 %v25, %v379
  %v386 = vadd.f32 %v26, %v382
  %387 = vst [vmem:[#allocation2] sm:$0xff] %v385
  %388 = vst [vmem:[#allocation2 + $0x8] sm:$0xff] %v386
  // Predicated region
  $region18: #{morf_prediction_branch2.41} parent=0 // pred_check
    %p389 = pneg %p15
  $region19: #{morf_prediction_branch2.41} parent=0 // pred_check_branch
    %391 = sbr.rel (%p389) target = $region21
  $region20: #{morf_prediction_branch2.41} parent=0 // pred_region
    %v392 = vld [vmem:[#allocation2] sm:$0xff]
    %v393 = vld [vmem:[#allocation2 + $0x8] sm:$0xff]
    %v394 = vld [vmem:[%s2] sm:$0x1]
    %v396 = vlaneseq
    %v397 = vshrl.u32 %v396, 7
    %v398 = vsub.s32 0, %v397
    %v399 = vrot.slane %v394, %v398
    %v401 = vadd.f32 %v392, %v399
    %v402 = vadd.f32 %v393, %v399
    %v403 = vxor.u32 %v401, 2147483648
    %v404 = vxor.u32 %v402, 2147483648
    %v405 = vmul.f32 %v403, 1.442695
    %v406 = vpow.pop %v405
    %v407 = vmul.f32 %v404, 1.442695
    %v408 = vpow.pop %v407
    %v409 = vadd.f32 %v406, 1.0
    %v410 = vadd.f32 %v408, 1.0
    %v411 = vrcp.pop %v409
    %v412 = vmul.f32 1.0, %v411
    %v413 = vrcp.pop %v410
    %v414 = vmul.f32 1.0, %v413
    %415 = vst [vmem:[%s3] sm:$0xff] %v412
    %416 = vst [vmem:[%s3 + $0x8] sm:$0xff] %v414
  $region21: #{morf_prediction_branch2.41} parent=0 // pred_fallthru
    _
  // Predicated region
  $region22: #{morf_prediction_branch2.41} parent=0 // pred_check
    _
  $region23: #{morf_prediction_branch2.41} parent=0 // pred_check_branch
    %418 = sbr.rel (0) target = $region25
  $region24: #{morf_prediction_branch2.41} parent=0 // pred_region
    _
  $region25: #{morf_prediction_branch2.41} parent=0 // pred_fallthru
    _
  // Predicated region
  $region26: #{morf_prediction_branch2.41} parent=0 // pred_check
    _
  $region27: #{morf_prediction_branch2.41} parent=0 // pred_check_branch
    %420 = sbr.rel (0) target = $region29
  $region28: #{morf_prediction_branch2.41} parent=0 // pred_region
    _
  $region29: #{morf_prediction_branch2.41} parent=0 // pred_fallthru
    _

// kernel: morf_prediction_branch2.43
$region0: #{morf_prediction_branch2.43}
  #allocation0 [shape = 'u32[]', space=smem, size = 0x4, offset = 0x4, fixed_abs, tag = 'smem constant byte address 0x4 - core index']
  #allocation1 [shape = 'u32[144,128]{1,0:T(1,128)}', space=vmem, size = 0x12000, scoped, tag = 'internal scratch']
  #allocation2 [shape = 'f32[16,128]{1,0:T(8,128)}', space=vmem, size = 0x2000, scoped, tag = 'scratch operand']
  %s0 = inlined_call_operand.vmem [shape: bf16[16,128], index: 0, kind: input, shape index: {}]
  %s1 = inlined_call_operand.vmem [shape: bf16[128,128], index: 1, kind: input, shape index: {}]
  %s2 = inlined_call_operand.vmem [shape: f32[1,128], index: 2, kind: input, shape index: {}]
  %s3 = inlined_call_operand.vmem [shape: f32[16,128], index: 3, kind: output, shape index: {}]
  %s4 = sld [smem:[#allocation0]]
  $region30: #{morf_prediction_branch2.43} parent=0
    _
  %s6 = ssub.s32 1, %s4
  %s7 = scalar_select 0, %s6, %s4
  // Predicated region
  $region2: #{morf_prediction_branch2.43} parent=0 // pred_check
    _
  $region3: #{morf_prediction_branch2.43} parent=0 // pred_check_branch
    %9 = sbr.rel (0) target = $region5
  $region4: #{morf_prediction_branch2.43} parent=0 // pred_region
    _
  $region5: #{morf_prediction_branch2.43} parent=0 // pred_fallthru
    _
  // Predicated region
  $region6: #{morf_prediction_branch2.43} parent=0 // pred_check
    _
  $region7: #{morf_prediction_branch2.43} parent=0 // pred_check_branch
    %11 = sbr.rel (0) target = $region9
  $region8: #{morf_prediction_branch2.43} parent=0 // pred_region
    _
  $region9: #{morf_prediction_branch2.43} parent=0 // pred_fallthru
    _
  // Predicated region
  $region10: #{morf_prediction_branch2.43} parent=0 // pred_check
    _
  $region11: #{morf_prediction_branch2.43} parent=0 // pred_check_branch
    %13 = sbr.rel (0) target = $region13
  $region12: #{morf_prediction_branch2.43} parent=0 // pred_region
    _
  $region13: #{morf_prediction_branch2.43} parent=0 // pred_fallthru
    _
  %p15 = scmp.eq.s32.totalorder 0, 0
  // Predicated region
  $region14: #{morf_prediction_branch2.43} parent=0 // pred_check
    %p16 = pneg %p15
  $region15: #{morf_prediction_branch2.43} parent=0 // pred_check_branch
    %18 = sbr.rel (%p16) target = $region17
  $region16: #{morf_prediction_branch2.43} parent=0 // pred_region
    %19 = vst [vmem:[#allocation2] sm:$0xff] 0.0
    %20 = vst [vmem:[#allocation2 + $0x8] sm:$0xff] 0.0
  $region17: #{morf_prediction_branch2.43} parent=0 // pred_fallthru
    _
  %v21 = vld [vmem:[%s0] sm:$0xf]
  %v22 = vld [vmem:[%s0 + $0x4] sm:$0xf]
  %v23 = vld [vmem:[#allocation2] sm:$0xff]
  %v24 = vld [vmem:[#allocation2 + $0x8] sm:$0xff]
  %v25 = vld [vmem:[%s1] sm:$0xf]
  %v26 = vld [vmem:[%s1 + $0x4] sm:$0xf]
  %v27 = vld [vmem:[%s1 + $0x8] sm:$0xf]
  %v28 = vld [vmem:[%s1 + $0xc] sm:$0xf]
  %v29 = vld [vmem:[%s1 + $0x10] sm:$0xf]
  %v30 = vld [vmem:[%s1 + $0x14] sm:$0xf]
  %v31 = vld [vmem:[%s1 + $0x18] sm:$0xf]
  %v32 = vld [vmem:[%s1 + $0x1c] sm:$0xf]
  %v33 = vld [vmem:[%s1 + $0x20] sm:$0xf]
  %v34 = vld [vmem:[%s1 + $0x24] sm:$0xf]
  %v35 = vld [vmem:[%s1 + $0x28] sm:$0xf]
  %v36 = vld [vmem:[%s1 + $0x2c] sm:$0xf]
  %v37 = vld [vmem:[%s1 + $0x30] sm:$0xf]
  %v38 = vld [vmem:[%s1 + $0x34] sm:$0xf]
  %v39 = vld [vmem:[%s1 + $0x38] sm:$0xf]
  %v40 = vld [vmem:[%s1 + $0x3c] sm:$0xf]
  %v43 = vunpack.c.l.b16 %v21
  %v44 = vunpack.c.l.b16 %v22
  %v45 = vpack.c.b16 %v44, %v43
  %v63 = vunpack.c.l.b16 %v25
  %v64 = vunpack.c.l.b16 %v26
  %v65 = vunpack.c.l.b16 %v27
  %v66 = vunpack.c.l.b16 %v28
  %v67 = vunpack.c.l.b16 %v29
  %v68 = vunpack.c.l.b16 %v30
  %v69 = vunpack.c.l.b16 %v31
  %v70 = vunpack.c.l.b16 %v32
  %v71 = vunpack.c.l.b16 %v33
  %v72 = vunpack.c.l.b16 %v34
  %v73 = vunpack.c.l.b16 %v35
  %v74 = vunpack.c.l.b16 %v36
  %v75 = vunpack.c.l.b16 %v37
  %v76 = vunpack.c.l.b16 %v38
  %v77 = vunpack.c.l.b16 %v39
  %v78 = vunpack.c.l.b16 %v40
  %v79 = vpack.c.b16 %v64, %v63
  %v80 = vpack.c.b16 %v66, %v65
  %v81 = vpack.c.b16 %v68, %v67
  %v82 = vpack.c.b16 %v70, %v69
  %v83 = vpack.c.b16 %v72, %v71
  %v84 = vpack.c.b16 %v74, %v73
  %v85 = vpack.c.b16 %v76, %v75
  %v86 = vpack.c.b16 %v78, %v77
  %95 = vmatprep.subr.bf16.mxu0 0
  %96 = vmatpush1.bf16.msra.mxu0 %v79
  %97 = vmatprep.subr.bf16.mxu0 0
  %98 = vmatpush1.bf16.msra.mxu0 %v80
  %99 = vmatprep.subr.bf16.mxu0 0
  %100 = vmatpush1.bf16.msra.mxu0 %v81
  %101 = vmatprep.subr.bf16.mxu0 0
  %102 = vmatpush1.bf16.msra.mxu0 %v82
  %103 = vmatprep.subr.bf16.mxu0 0
  %104 = vmatpush1.bf16.msra.mxu0 %v83
  %105 = vmatprep.subr.bf16.mxu0 0
  %106 = vmatpush1.bf16.msra.mxu0 %v84
  %107 = vmatprep.subr.bf16.mxu0 0
  %108 = vmatpush1.bf16.msra.mxu0 %v85
  %109 = vmatprep.subr.bf16.mxu0 0
  %110 = vmatpush1.bf16.msra.mxu0 %v86
  %111 = vmatprep.subr.bf16.mxu0 0
  %112 = vmatpush1.bf16.msra.mxu0 0
  %113 = vmatprep.subr.bf16.mxu0 0
  %114 = vmatpush1.bf16.msra.mxu0 0
  %115 = vmatprep.subr.bf16.mxu0 0
  %116 = vmatpush1.bf16.msra.mxu0 0
  %117 = vmatprep.subr.bf16.mxu0 0
  %118 = vmatpush1.bf16.msra.mxu0 0
  %119 = vmatprep.subr.bf16.mxu0 0
  %120 = vmatpush1.bf16.msra.mxu0 0
  %121 = vmatprep.subr.bf16.mxu0 0
  %122 = vmatpush1.bf16.msra.mxu0 0
  %123 = vmatprep.subr.bf16.mxu0 0
  %124 = vmatpush1.bf16.msra.mxu0 0
  %125 = vmatprep.subr.bf16.mxu0 0
  %126 = vmatpush1.bf16.msra.mxu0 0
  %127 = vmatprep.mubr.bf16.mxu0 0
  %128 = vmatmul.mubr.bf16.gmra.mrb[0].mxu0 %v45
  %v129 = vpop.f32.mrb[0].mxu0
  %v130 = vadd.f32 0.0, %v129
  %v131 = vpop.f32.mrb[0].mxu0
  %v132 = vpop.f32.mrb[0].mxu0
  %v133 = vadd.f32 0.0, %v132
  %v134 = vpop.f32.mrb[0].mxu0
  %135 = vdwg.mxu0
  %v136 = vadd.f32 %v23, %v130
  %v137 = vadd.f32 %v24, %v133
  %138 = vst [vmem:[#allocation2] sm:$0xff] %v136
  %139 = vst [vmem:[#allocation2 + $0x8] sm:$0xff] %v137
  // Predicated region
  $region18: #{morf_prediction_branch2.43} parent=0 // pred_check
    %p140 = pneg %p15
  $region19: #{morf_prediction_branch2.43} parent=0 // pred_check_branch
    %142 = sbr.rel (%p140) target = $region21
  $region20: #{morf_prediction_branch2.43} parent=0 // pred_region
    %v143 = vld [vmem:[#allocation2] sm:$0xff]
    %v144 = vld [vmem:[#allocation2 + $0x8] sm:$0xff]
    %v145 = vld [vmem:[%s2] sm:$0x1]
    %v147 = vlaneseq
    %v148 = vshrl.u32 %v147, 7
    %v149 = vsub.s32 0, %v148
    %v150 = vrot.slane %v145, %v149
    %v152 = vadd.f32 %v143, %v150
    %v153 = vadd.f32 %v144, %v150
    %154 = vst [vmem:[%s3] sm:$0xff] %v152
    %155 = vst [vmem:[%s3 + $0x8] sm:$0xff] %v153
  $region21: #{morf_prediction_branch2.43} parent=0 // pred_fallthru
    _
  // Predicated region
  $region22: #{morf_prediction_branch2.43} parent=0 // pred_check
    _
  $region23: #{morf_prediction_branch2.43} parent=0 // pred_check_branch
    %157 = sbr.rel (0) target = $region25
  $region24: #{morf_prediction_branch2.43} parent=0 // pred_region
    _
  $region25: #{morf_prediction_branch2.43} parent=0 // pred_fallthru
    _
  // Predicated region
  $region26: #{morf_prediction_branch2.43} parent=0 // pred_check
    _
  $region27: #{morf_prediction_branch2.43} parent=0 // pred_check_branch
    %159 = sbr.rel (0) target = $region29
  $region28: #{morf_prediction_branch2.43} parent=0 // pred_region
    _
  $region29: #{morf_prediction_branch2.43} parent=0 // pred_fallthru
    _

// kernel: morf_prediction_branch2.44
$region0: #{morf_prediction_branch2.44}
  #allocation0 [shape = 'u32[]', space=smem, size = 0x4, offset = 0x4, fixed_abs, tag = 'smem constant byte address 0x4 - core index']
  #allocation1 [shape = 'u32[144,128]{1,0:T(1,128)}', space=vmem, size = 0x12000, scoped, tag = 'internal scratch']
  %s0 = inlined_call_operand.vmem [shape: f32[16,128], index: 0, kind: input, shape index: {}]
  %s1 = inlined_call_operand.vmem [shape: f32[16,128], index: 1, kind: input, shape index: {}]
  %s2 = inlined_call_operand.vmem [shape: f32[1,128], index: 2, kind: input, shape index: {}]
  %s3 = inlined_call_operand.vmem [shape: f32[1,128], index: 3, kind: input, shape index: {}]
  %s4 = inlined_call_operand.vmem [shape: f32[16,128], index: 4, kind: output, shape index: {}]
  %s5 = sld [smem:[#allocation0]]
  $region26: #{morf_prediction_branch2.44} parent=0
    _
  %s7 = ssub.s32 1, %s5
  %s8 = scalar_select 0, %s7, %s5
  // Predicated region
  $region2: #{morf_prediction_branch2.44} parent=0 // pred_check
    _
  $region3: #{morf_prediction_branch2.44} parent=0 // pred_check_branch
    %10 = sbr.rel (0) target = $region5
  $region4: #{morf_prediction_branch2.44} parent=0 // pred_region
    _
  $region5: #{morf_prediction_branch2.44} parent=0 // pred_fallthru
    _
  // Predicated region
  $region6: #{morf_prediction_branch2.44} parent=0 // pred_check
    _
  $region7: #{morf_prediction_branch2.44} parent=0 // pred_check_branch
    %12 = sbr.rel (0) target = $region9
  $region8: #{morf_prediction_branch2.44} parent=0 // pred_region
    _
  $region9: #{morf_prediction_branch2.44} parent=0 // pred_fallthru
    _
  // Predicated region
  $region10: #{morf_prediction_branch2.44} parent=0 // pred_check
    _
  $region11: #{morf_prediction_branch2.44} parent=0 // pred_check_branch
    %14 = sbr.rel (0) target = $region13
  $region12: #{morf_prediction_branch2.44} parent=0 // pred_region
    _
  $region13: #{morf_prediction_branch2.44} parent=0 // pred_fallthru
    _
  // Predicated region
  $region14: #{morf_prediction_branch2.44} parent=0 // pred_check
    _
  $region15: #{morf_prediction_branch2.44} parent=0 // pred_check_branch
    %16 = sbr.rel (0) target = $region17
  $region16: #{morf_prediction_branch2.44} parent=0 // pred_region
    _
  $region17: #{morf_prediction_branch2.44} parent=0 // pred_fallthru
    _
  %v17 = vld [vmem:[%s0] sm:$0xff]
  %v18 = vld [vmem:[%s0 + $0x8] sm:$0xff]
  %v19 = vld [vmem:[%s1] sm:$0xff]
  %v20 = vld [vmem:[%s1 + $0x8] sm:$0xff]
  %v21 = vadd.f32 %v17, %v19
  %v22 = vadd.f32 %v18, %v20
  %23 = vadd.xlane.f32.xlu0 %v21
  %v24 = vpop.xlane.xlu0 %23
  %25 = vadd.xlane.f32.xlu0 %v22
  %v26 = vpop.xlane.xlu0 %25
  %v27 = vrcp.pop 128.0
  %v28 = vmul.f32 %v24, %v27
  %v29 = vmul.f32 %v26, %v27
  %v30 = vmul.f32 %v21, %v21
  %v31 = vmul.f32 %v22, %v22
  %32 = vadd.xlane.f32.xlu0 %v30
  %v33 = vpop.xlane.xlu0 %32
  %34 = vadd.xlane.f32.xlu0 %v31
  %v35 = vpop.xlane.xlu0 %34
  %v36 = vmul.f32 %v33, %v27
  %v37 = vmul.f32 %v35, %v27
  %v38 = vsub.f32 %v21, %v28
  %v39 = vsub.f32 %v22, %v29
  %v40 = vmul.f32 %v28, %v28
  %v41 = vmul.f32 %v29, %v29
  %v42 = vsub.f32 %v36, %v40
  %v43 = vsub.f32 %v37, %v41
  %v44 = vadd.f32 %v42, 1e-05
  %v45 = vadd.f32 %v43, 1e-05
  %v46 = vrsqrt.pop %v44
  %v47 = vrsqrt.pop %v45
  %v48 = vmul.f32 %v38, %v46
  %v49 = vmul.f32 %v39, %v47
  %v50 = vld [vmem:[%s2] sm:$0x1]
  %v52 = vlaneseq
  %v53 = vshrl.u32 %v52, 7
  %v54 = vsub.s32 0, %v53
  %v55 = vrot.slane %v50, %v54
  %v57 = vmul.f32 %v48, %v55
  %v58 = vmul.f32 %v49, %v55
  %v59 = vld [vmem:[%s3] sm:$0x1]
  %v61 = vlaneseq
  %v62 = vshrl.u32 %v61, 7
  %v63 = vsub.s32 0, %v62
  %v64 = vrot.slane %v59, %v63
  %v66 = vadd.f32 %v57, %v64
  %v67 = vadd.f32 %v58, %v64
  %68 = vst [vmem:[%s4] sm:$0xff] %v66
  %69 = vst [vmem:[%s4 + $0x8] sm:$0xff] %v67
  // Predicated region
  $region18: #{morf_prediction_branch2.44} parent=0 // pred_check
    _
  $region19: #{morf_prediction_branch2.44} parent=0 // pred_check_branch
    %71 = sbr.rel (0) target = $region21
  $region20: #{morf_prediction_branch2.44} parent=0 // pred_region
    _
  $region21: #{morf_prediction_branch2.44} parent=0 // pred_fallthru
    _
  // Predicated region
  $region22: #{morf_prediction_branch2.44} parent=0 // pred_check
    _
  $region23: #{morf_prediction_branch2.44} parent=0 // pred_check_branch
    %73 = sbr.rel (0) target = $region25
  $region24: #{morf_prediction_branch2.44} parent=0 // pred_region
    _
  $region25: #{morf_prediction_branch2.44} parent=0 // pred_fallthru
    _

// kernel: morf_prediction_branch2.42
$region0: #{morf_prediction_branch2.42}
  #allocation0 [shape = 'u32[]', space=smem, size = 0x4, offset = 0x4, fixed_abs, tag = 'smem constant byte address 0x4 - core index']
  #allocation1 [shape = 'u32[144,128]{1,0:T(1,128)}', space=vmem, size = 0x12000, scoped, tag = 'internal scratch']
  %s0 = inlined_call_operand.vmem [shape: bf16[2,8,128], index: 0, kind: input, shape index: {}]
  %s1 = inlined_call_operand.vmem [shape: bf16[2,8,128], index: 1, kind: input, shape index: {}]
  %s2 = inlined_call_operand.vmem [shape: bf16[2,8,128], index: 2, kind: input, shape index: {}]
  %s3 = inlined_call_operand.vmem [shape: f32[2,8,4], index: 3, kind: input, shape index: {}]
  %s4 = inlined_call_operand.vmem [shape: f32[2,4,8], index: 4, kind: input, shape index: {}]
  %s5 = inlined_call_operand.vmem [shape: bf16[2,8,128], index: 5, kind: output, shape index: {}]
  %s6 = sld [smem:[#allocation0]]
  $region53: #{morf_prediction_branch2.42} parent=0
    _
  %s8 = ssub.s32 1, %s6
  %s9 = scalar_select 0, %s8, %s6
  loop: start=0, step=1, limit=4
  $region2: #{morf_prediction_branch2.42} parent=0 // loop_pre_header
    _
  $region3: #{morf_prediction_branch2.42} parent=0 // loop_header
    %s11 = sphi 0, %s15
    %p12 = scmp.ge.s32.totalorder %s11, 4
    %s21 = sphi 0, %s23
    %s24 = sphi 0, %s21
    %s25 = sphi 0, %s24
    %s41 = sphi 0, %s25
    %s47 = sphi 0, %s49
    %s50 = sphi 0, %s47
    %s51 = sphi 0, %s50
    %s67 = sphi 0, %s51
    %s73 = sphi 0, %s75
    %s76 = sphi 0, %s73
    %s77 = sphi 0, %s76
    %s93 = sphi 0, %s77
    %s99 = sphi 0, %s101
    %s102 = sphi 0, %s99
    %s103 = sphi 0, %s102
    %s119 = sphi 0, %s103
    %s125 = sphi 0, %s127
    %s128 = sphi 0, %s125
    %s129 = sphi 0, %s128
    %s145 = sphi 0, %s129
    %s151 = sphi 0, %s153
    %s154 = sphi 0, %s151
    %s155 = sphi 0, %s154
    %s171 = sphi 0, %s155
  $region4: #{morf_prediction_branch2.42} parent=0 // loop_header_branch
    %14 = sbr.rel (%p12) target = $region8
  $region5: #{morf_prediction_branch2.42} parent=0 // loop_body
    %s16 = ssub.s32 %s11, 1
    %s17 = ssub.s32 %s11, 2
    %s18 = sadd.s32 %s11, 1
    %s19 = ssub.s32 %s11, %s18
    %p20 = scmp.eq.s32.totalorder %s19, 0
    %s22 = sadd.s32 %s21, 1
    %s23 = scalar_select %p20, %s21, %s22
    %p26 = pneg %p20
    %p27 = scmp.eq.s32.totalorder %s11, 1
    %p28 = por %p26, %p27
    %p29 = scmp.ne.s32.totalorder %s21, %s24
    %p30 = scmp.eq.s32.totalorder %s11, 0
    %p31 = por %p29, %p30
    %p32 = scmp.ne.s32.totalorder %s21, %s24
    %p33 = scmp.eq.s32.totalorder %s16, 1
    %p34 = por %p32, %p33
    %p35 = scmp.ne.s32.totalorder %s24, %s25
    %p36 = scmp.eq.s32.totalorder %s16, 0
    %p37 = por %p35, %p36
    %p38 = scmp.ne.s32.totalorder %s24, %s25
    %p39 = scmp.eq.s32.totalorder %s17, 1
    %p40 = por %p38, %p39
    %p42 = scmp.ne.s32.totalorder %s25, %s41
    %p43 = scmp.eq.s32.totalorder %s17, 0
    %p44 = por %p42, %p43
    %s45 = ssub.s32 %s11, %s18
    %p46 = scmp.eq.s32.totalorder %s45, 0
    %s48 = sadd.s32 %s47, 1
    %s49 = scalar_select %p46, %s47, %s48
    %p52 = pneg %p46
    %p53 = scmp.eq.s32.totalorder %s11, 1
    %p54 = por %p52, %p53
    %p55 = scmp.ne.s32.totalorder %s47, %s50
    %p56 = scmp.eq.s32.totalorder %s11, 0
    %p57 = por %p55, %p56
    %p58 = scmp.ne.s32.totalorder %s47, %s50
    %p59 = scmp.eq.s32.totalorder %s16, 1
    %p60 = por %p58, %p59
    %p61 = scmp.ne.s32.totalorder %s50, %s51
    %p62 = scmp.eq.s32.totalorder %s16, 0
    %p63 = por %p61, %p62
    %p64 = scmp.ne.s32.totalorder %s50, %s51
    %p65 = scmp.eq.s32.totalorder %s17, 1
    %p66 = por %p64, %p65
    %p68 = scmp.ne.s32.totalorder %s51, %s67
    %p69 = scmp.eq.s32.totalorder %s17, 0
    %p70 = por %p68, %p69
    %s71 = ssub.s32 %s11, %s18
    %p72 = scmp.eq.s32.totalorder %s71, 0
    %s74 = sadd.s32 %s73, 1
    %s75 = scalar_select %p72, %s73, %s74
    %p78 = pneg %p72
    %p79 = scmp.eq.s32.totalorder %s11, 1
    %p80 = por %p78, %p79
    %p81 = scmp.ne.s32.totalorder %s73, %s76
    %p82 = scmp.eq.s32.totalorder %s11, 0
    %p83 = por %p81, %p82
    %p84 = scmp.ne.s32.totalorder %s73, %s76
    %p85 = scmp.eq.s32.totalorder %s16, 1
    %p86 = por %p84, %p85
    %p87 = scmp.ne.s32.totalorder %s76, %s77
    %p88 = scmp.eq.s32.totalorder %s16, 0
    %p89 = por %p87, %p88
    %p90 = scmp.ne.s32.totalorder %s76, %s77
    %p91 = scmp.eq.s32.totalorder %s17, 1
    %p92 = por %p90, %p91
    %p94 = scmp.ne.s32.totalorder %s77, %s93
    %p95 = scmp.eq.s32.totalorder %s17, 0
    %p96 = por %p94, %p95
    %s97 = ssub.s32 %s11, %s18
    %p98 = scmp.eq.s32.totalorder %s97, 0
    %s100 = sadd.s32 %s99, 1
    %s101 = scalar_select %p98, %s99, %s100
    %p104 = pneg %p98
    %p105 = scmp.eq.s32.totalorder %s11, 1
    %p106 = por %p104, %p105
    %p107 = scmp.ne.s32.totalorder %s99, %s102
    %p108 = scmp.eq.s32.totalorder %s11, 0
    %p109 = por %p107, %p108
    %p110 = scmp.ne.s32.totalorder %s99, %s102
    %p111 = scmp.eq.s32.totalorder %s16, 1
    %p112 = por %p110, %p111
    %p113 = scmp.ne.s32.totalorder %s102, %s103
    %p114 = scmp.eq.s32.totalorder %s16, 0
    %p115 = por %p113, %p114
    %p116 = scmp.ne.s32.totalorder %s102, %s103
    %p117 = scmp.eq.s32.totalorder %s17, 1
    %p118 = por %p116, %p117
    %p120 = scmp.ne.s32.totalorder %s103, %s119
    %p121 = scmp.eq.s32.totalorder %s17, 0
    %p122 = por %p120, %p121
    %s123 = ssub.s32 %s11, %s18
    %p124 = scmp.eq.s32.totalorder %s123, 0
    %s126 = sadd.s32 %s125, 1
    %s127 = scalar_select %p124, %s125, %s126
    %p130 = pneg %p124
    %p131 = scmp.eq.s32.totalorder %s11, 1
    %p132 = por %p130, %p131
    %p133 = scmp.ne.s32.totalorder %s125, %s128
    %p134 = scmp.eq.s32.totalorder %s11, 0
    %p135 = por %p133, %p134
    %p136 = scmp.ne.s32.totalorder %s125, %s128
    %p137 = scmp.eq.s32.totalorder %s16, 1
    %p138 = por %p136, %p137
    %p139 = scmp.ne.s32.totalorder %s128, %s129
    %p140 = scmp.eq.s32.totalorder %s16, 0
    %p141 = por %p139, %p140
    %p142 = scmp.ne.s32.totalorder %s128, %s129
    %p143 = scmp.eq.s32.totalorder %s17, 1
    %p144 = por %p142, %p143
    %p146 = scmp.ne.s32.totalorder %s129, %s145
    %p147 = scmp.eq.s32.totalorder %s17, 0
    %p148 = por %p146, %p147
    %s149 = ssub.s32 %s11, %s18
    %p150 = scmp.eq.s32.totalorder %s149, 0
    %s152 = sadd.s32 %s151, 1
    %s153 = scalar_select %p150, %s151, %s152
    %p156 = pneg %p150
    %p157 = scmp.eq.s32.totalorder %s11, 1
    %p158 = por %p156, %p157
    %p159 = scmp.ne.s32.totalorder %s151, %s154
    %p160 = scmp.eq.s32.totalorder %s11, 0
    %p161 = por %p159, %p160
    %p162 = scmp.ne.s32.totalorder %s151, %s154
    %p163 = scmp.eq.s32.totalorder %s16, 1
    %p164 = por %p162, %p163
    %p165 = scmp.ne.s32.totalorder %s154, %s155
    %p166 = scmp.eq.s32.totalorder %s16, 0
    %p167 = por %p165, %p166
    %p168 = scmp.ne.s32.totalorder %s154, %s155
    %p169 = scmp.eq.s32.totalorder %s17, 1
    %p170 = por %p168, %p169
    %p172 = scmp.ne.s32.totalorder %s155, %s171
    %p173 = scmp.eq.s32.totalorder %s17, 0
    %p174 = por %p172, %p173
    %p175 = scmp.le.s32.totalorder 1, %s11
    %p176 = scmp.lt.s32.totalorder %s11, 3
    %p177 = pnand %p175, %p176
    %p178 = pneg %p177
    // Predicated region
    $region9: #{morf_prediction_branch2.42} parent=5 // pred_check
      _
    $region10: #{morf_prediction_branch2.42} parent=5 // pred_check_branch
      %180 = sbr.rel (%p177) target = $region12
    $region11: #{morf_prediction_branch2.42} parent=5 // pred_region
      %s181 = ssub.s32 %s11, 1
    $region12: #{morf_prediction_branch2.42} parent=5 // pred_fallthru
      _
    %p182 = scmp.lt.s32.totalorder %s11, 2
    // Predicated region
    $region13: #{morf_prediction_branch2.42} parent=5 // pred_check
      %p183 = pneg %p182
    $region14: #{morf_prediction_branch2.42} parent=5 // pred_check_branch
      %185 = sbr.rel (%p183) target = $region16
    $region15: #{morf_prediction_branch2.42} parent=5 // pred_region
      // Predicated region
      $region17: #{morf_prediction_branch2.42} parent=15 // pred_check
        %p186 = pneg %p31
      $region18: #{morf_prediction_branch2.42} parent=15 // pred_check_branch
        %188 = sbr.rel (%p186) target = $region20
      $region19: #{morf_prediction_branch2.42} parent=15 // pred_region
        %p189 = scmp.lt.s32.totalorder %s11, 1
        %s190 = scalar_select %p189, %s11, 1
        %s191 = smul.addr %s190, 4
        %s192 = scalar_lea.vmem %s0, %s191
      $region20: #{morf_prediction_branch2.42} parent=15 // pred_fallthru
        _
      // Predicated region
      $region21: #{morf_prediction_branch2.42} parent=15 // pred_check
        %p193 = pneg %p57
      $region22: #{morf_prediction_branch2.42} parent=15 // pred_check_branch
        %195 = sbr.rel (%p193) target = $region24
      $region23: #{morf_prediction_branch2.42} parent=15 // pred_region
        %p196 = scmp.lt.s32.totalorder %s11, 1
        %s197 = scalar_select %p196, %s11, 1
        %s198 = smul.addr %s197, 4
        %s199 = scalar_lea.vmem %s1, %s198
      $region24: #{morf_prediction_branch2.42} parent=15 // pred_fallthru
        _
      // Predicated region
      $region25: #{morf_prediction_branch2.42} parent=15 // pred_check
        %p200 = pneg %p83
      $region26: #{morf_prediction_branch2.42} parent=15 // pred_check_branch
        %202 = sbr.rel (%p200) target = $region28
      $region27: #{morf_prediction_branch2.42} parent=15 // pred_region
        %p203 = scmp.lt.s32.totalorder %s11, 1
        %s204 = scalar_select %p203, %s11, 1
        %s205 = smul.addr %s204, 4
        %s206 = scalar_lea.vmem %s2, %s205
      $region28: #{morf_prediction_branch2.42} parent=15 // pred_fallthru
        _
      // Predicated region
      $region29: #{morf_prediction_branch2.42} parent=15 // pred_check
        %p207 = pneg %p109
      $region30: #{morf_prediction_branch2.42} parent=15 // pred_check_branch
        %209 = sbr.rel (%p207) target = $region32
      $region31: #{morf_prediction_branch2.42} parent=15 // pred_region
        %p210 = scmp.lt.s32.totalorder %s11, 1
        %s211 = scalar_select %p210, %s11, 1
        %s212 = smul.addr %s211, 8
        %s213 = scalar_lea.vmem %s3, %s212
      $region32: #{morf_prediction_branch2.42} parent=15 // pred_fallthru
        _
      // Predicated region
      $region33: #{morf_prediction_branch2.42} parent=15 // pred_check
        %p214 = pneg %p135
      $region34: #{morf_prediction_branch2.42} parent=15 // pred_check_branch
        %216 = sbr.rel (%p214) target = $region36
      $region35: #{morf_prediction_branch2.42} parent=15 // pred_region
        %p217 = scmp.lt.s32.totalorder %s11, 1
        %s218 = scalar_select %p217, %s11, 1
        %s219 = smul.addr %s218, 4
        %s220 = scalar_lea.vmem %s4, %s219
      $region36: #{morf_prediction_branch2.42} parent=15 // pred_fallthru
        _
    $region16: #{morf_prediction_branch2.42} parent=5 // pred_fallthru
      _
    %p221 = scmp.le.s32.totalorder 1, %s11
    %p222 = scmp.lt.s32.totalorder %s11, 3
    %p223 = pnand %p221, %p222
    %p224 = pneg %p223
    // Predicated region
    $region37: #{morf_prediction_branch2.42} parent=5 // pred_check
      _
    $region38: #{morf_prediction_branch2.42} parent=5 // pred_check_branch
      %226 = sbr.rel (%p223) target = $region40
    $region39: #{morf_prediction_branch2.42} parent=5 // pred_region
      %s227 = ssub.s32 %s11, 1
      %p228 = scmp.lt.s32.totalorder %s16, 1
      %s229 = scalar_select %p228, %s16, 1
      %s230 = smul.addr %s229, 4
      %s231 = scalar_lea.vmem %s0, %s230
      %p232 = pneg %p37
      %p233 = pneg %p34
      %p234 = scmp.lt.s32.totalorder %s16, 1
      %s235 = scalar_select %p234, %s16, 1
      %s236 = smul.addr %s235, 4
      %s237 = scalar_lea.vmem %s1, %s236
      %p238 = pneg %p63
      %p239 = pneg %p60
      %p240 = scmp.lt.s32.totalorder %s16, 1
      %s241 = scalar_select %p240, %s16, 1
      %s242 = smul.addr %s241, 4
      %s243 = scalar_lea.vmem %s2, %s242
      %p244 = pneg %p89
      %p245 = pneg %p86
      %p246 = scmp.lt.s32.totalorder %s16, 1
      %s247 = scalar_select %p246, %s16, 1
      %s248 = smul.addr %s247, 8
      %s249 = scalar_lea.vmem %s3, %s248
      %p250 = pneg %p115
      %p251 = pneg %p112
      %p252 = scmp.lt.s32.totalorder %s16, 1
      %s253 = scalar_select %p252, %s16, 1
      %s254 = smul.addr %s253, 4
      %s255 = scalar_lea.vmem %s4, %s254
      %p256 = pneg %p141
      %p257 = pneg %p138
      %p258 = pneg %p167
      %p259 = pneg %p164
      %p260 = scmp.lt.s32.totalorder %s16, 1
      %s261 = scalar_select %p260, %s16, 1
      %s262 = smul.addr %s261, 4
      %s263 = scalar_lea.vmem %s5, %s262
      %p264 = scmp.lt.s32.totalorder %s16, 1
      %s265 = scalar_select %p264, %s16, 1
      %s266 = smul.addr %s265, 4
      %s267 = scalar_lea.vmem %s0, %s266
      %p268 = scmp.lt.s32.totalorder %s16, 1
      %s269 = scalar_select %p268, %s16, 1
      %s270 = smul.addr %s269, 4
      %s271 = scalar_lea.vmem %s1, %s270
      %p272 = scmp.lt.s32.totalorder %s16, 1
      %s273 = scalar_select %p272, %s16, 1
      %s274 = smul.addr %s273, 4
      %s275 = scalar_lea.vmem %s2, %s274
      %p276 = scmp.lt.s32.totalorder %s16, 1
      %s277 = scalar_select %p276, %s16, 1
      %s278 = smul.addr %s277, 8
      %s279 = scalar_lea.vmem %s3, %s278
      %p280 = scmp.lt.s32.totalorder %s16, 1
      %s281 = scalar_select %p280, %s16, 1
      %s282 = smul.addr %s281, 4
      %s283 = scalar_lea.vmem %s4, %s282
      %p284 = scmp.lt.s32.totalorder %s16, 1
      %s285 = scalar_select %p284, %s16, 1
      %s286 = smul.addr %s285, 4
      %s287 = scalar_lea.vmem %s5, %s286
      %v289 = vld [vmem:[%s267] sm:$0xf]
      %v290 = vld [vmem:[%s271] sm:$0xf]
      %v291 = vld [vmem:[%s275] sm:$0xf]
      %v292 = vld [vmem:[%s279] sm:$0xff]
      %v293 = vld [vmem:[%s283] sm:$0xf]
      %vm294 = vcmask 261120
      %v296 = vsel %vm294, %v289, 0
      %v299 = vsel %vm294, %v290, 0
      %301 = vmatprep.subr.bf16.mxu0 0
      %302 = vmatpush1.bf16.xpose.msra.mxu0 %v299
      %303 = vmatprep.subr.bf16.mxu0 0
      %304 = vmatpush1.bf16.xpose.msra.mxu0 0
      %305 = vmatprep.subr.bf16.mxu0 0
      %306 = vmatpush1.bf16.xpose.msra.mxu0 0
      %307 = vmatprep.subr.bf16.mxu0 0
      %308 = vmatpush1.bf16.xpose.msra.mxu0 0
      %309 = vmatprep.subr.bf16.mxu0 0
      %310 = vmatpush1.bf16.xpose.msra.mxu0 0
      %311 = vmatprep.subr.bf16.mxu0 0
      %312 = vmatpush1.bf16.xpose.msra.mxu0 0
      %313 = vmatprep.subr.bf16.mxu0 0
      %314 = vmatpush1.bf16.xpose.msra.mxu0 0
      %315 = vmatprep.subr.bf16.mxu0 0
      %316 = vmatpush1.bf16.xpose.msra.mxu0 0
      %317 = vmatprep.subr.bf16.mxu0 0
      %318 = vmatpush1.bf16.xpose.msra.mxu0 0
      %319 = vmatprep.subr.bf16.mxu0 0
      %320 = vmatpush1.bf16.xpose.msra.mxu0 0
      %321 = vmatprep.subr.bf16.mxu0 0
      %322 = vmatpush1.bf16.xpose.msra.mxu0 0
      %323 = vmatprep.subr.bf16.mxu0 0
      %324 = vmatpush1.bf16.xpose.msra.mxu0 0
      %325 = vmatprep.subr.bf16.mxu0 0
      %326 = vmatpush1.bf16.xpose.msra.mxu0 0
      %327 = vmatprep.subr.bf16.mxu0 0
      %328 = vmatpush1.bf16.xpose.msra.mxu0 0
      %329 = vmatprep.subr.bf16.mxu0 0
      %330 = vmatpush1.bf16.xpose.msra.mxu0 0
      %331 = vmatprep.subr.bf16.mxu0 0
      %332 = vmatpush1.bf16.xpose.msra.mxu0 0
      %333 = vmatprep.mubr.bf16.mxu0 0
      %334 = vmatmul.mubr.bf16.gmra.mrb[0].mxu0 %v296
      %v335 = vpop.f32.mrb[0].mxu0
      %v336 = vadd.f32 0.0, %v335
      %v337 = vpop.f32.mrb[0].mxu0
      %v338 = vpop.f32.mrb[0].mxu0
      %v339 = vpop.f32.mrb[0].mxu0
      %340 = vdwg.mxu0
      %v341 = vmul.f32 %v292, 0.17677669
      %343 = vset.pattern.permute.xlu0 0
      %344 = vperm.xlu0 %343, %v341
      %v345 = vpop.permute.xlu0 %344
      %v347 = vmul.f32 %v336, %v345
      %v348 = vlaneseq
      %v349 = vshrl.u32 %v348, 7
      %v350 = vsub.s32 0, %v349
      %v351 = vrot.slane %v293, %v350
      %v352 = vadd.f32 %v347, %v351
      %vm353 = vcmask 64512
      %v354 = vsel %vm353, %v352, -inf
      %355 = vmax.xlane.f32.xlu0 %v354
      %v356 = vpop.xlane.xlu0 %355
      %v357 = vsub.f32 %v352, %v356
      %v358 = vmul.f32 %v357, 1.442695
      %v359 = vpow.pop %v358
      %v360 = vsel %vm353, %v359, 0.0
      %361 = vadd.xlane.f32.xlu0 %v360
      %v362 = vpop.xlane.xlu0 %361
      %v363 = vrcp.pop %v362
      %v364 = vmul.f32 %v359, %v363
      %v365 = vpack.c.bf16 %v364, %v364
      %v367 = vsel %vm353, %v365, 0
      %vm369 = vcmask 1043456
      %v371 = vsel %vm369, %v291, 0
      %373 = vmatprep.subr.bf16.mxu0 0
      %374 = vmatpush1.bf16.msra.mxu0 %v371
      %375 = vmatprep.subr.bf16.mxu0 0
      %376 = vmatpush1.bf16.msra.mxu0 0
      %377 = vmatprep.subr.bf16.mxu0 0
      %378 = vmatpush1.bf16.msra.mxu0 0
      %379 = vmatprep.subr.bf16.mxu0 0
      %380 = vmatpush1.bf16.msra.mxu0 0
      %381 = vmatprep.subr.bf16.mxu0 0
      %382 = vmatpush1.bf16.msra.mxu0 0
      %383 = vmatprep.subr.bf16.mxu0 0
      %384 = vmatpush1.bf16.msra.mxu0 0
      %385 = vmatprep.subr.bf16.mxu0 0
      %386 = vmatpush1.bf16.msra.mxu0 0
      %387 = vmatprep.subr.bf16.mxu0 0
      %388 = vmatpush1.bf16.msra.mxu0 0
      %389 = vmatprep.subr.bf16.mxu0 0
      %390 = vmatpush1.bf16.msra.mxu0 0
      %391 = vmatprep.subr.bf16.mxu0 0
      %392 = vmatpush1.bf16.msra.mxu0 0
      %393 = vmatprep.subr.bf16.mxu0 0
      %394 = vmatpush1.bf16.msra.mxu0 0
      %395 = vmatprep.subr.bf16.mxu0 0
      %396 = vmatpush1.bf16.msra.mxu0 0
      %397 = vmatprep.subr.bf16.mxu0 0
      %398 = vmatpush1.bf16.msra.mxu0 0
      %399 = vmatprep.subr.bf16.mxu0 0
      %400 = vmatpush1.bf16.msra.mxu0 0
      %401 = vmatprep.subr.bf16.mxu0 0
      %402 = vmatpush1.bf16.msra.mxu0 0
      %403 = vmatprep.subr.bf16.mxu0 0
      %404 = vmatpush1.bf16.msra.mxu0 0
      %405 = vmatprep.mubr.bf16.mxu0 0
      %406 = vmatmul.mubr.bf16.gmra.mrb[0].mxu0 %v367
      %v407 = vpop.f32.mrb[0].mxu0
      %v408 = vadd.f32 0.0, %v407
      %v409 = vpop.f32.mrb[0].mxu0
      %v410 = vpop.f32.mrb[0].mxu0
      %v411 = vpop.f32.mrb[0].mxu0
      %412 = vdwg.mxu0
      %v414 = vunpack.c.l.b16 %v289
      %v415 = vpack.c.b16 %v414, %v414
      %416 = vrot.lane.b32.xlu0 %v415, 96
      %v417 = vpop.permute.xlu0 %416
      %v419 = vunpack.c.l.b16 %v290
      %v420 = vpack.c.b16 %v419, %v419
      %421 = vrot.lane.b32.xlu0 %v420, 96
      %v422 = vpop.permute.xlu0 %421
      %v424 = vsel %vm294, %v417, 0
      %v427 = vsel %vm294, %v422, 0
      %429 = vmatprep.subr.bf16.mxu0 0
      %430 = vmatpush1.bf16.xpose.msra.mxu0 %v427
      %431 = vmatprep.subr.bf16.mxu0 0
      %432 = vmatpush1.bf16.xpose.msra.mxu0 0
      %433 = vmatprep.subr.bf16.mxu0 0
      %434 = vmatpush1.bf16.xpose.msra.mxu0 0
      %435 = vmatprep.subr.bf16.mxu0 0
      %436 = vmatpush1.bf16.xpose.msra.mxu0 0
      %437 = vmatprep.subr.bf16.mxu0 0
      %438 = vmatpush1.bf16.xpose.msra.mxu0 0
      %439 = vmatprep.subr.bf16.mxu0 0
      %440 = vmatpush1.bf16.xpose.msra.mxu0 0
      %441 = vmatprep.subr.bf16.mxu0 0
      %442 = vmatpush1.bf16.xpose.msra.mxu0 0
      %443 = vmatprep.subr.bf16.mxu0 0
      %444 = vmatpush1.bf16.xpose.msra.mxu0 0
      %445 = vmatprep.subr.bf16.mxu0 0
      %446 = vmatpush1.bf16.xpose.msra.mxu0 0
      %447 = vmatprep.subr.bf16.mxu0 0
      %448 = vmatpush1.bf16.xpose.msra.mxu0 0
      %449 = vmatprep.subr.bf16.mxu0 0
      %450 = vmatpush1.bf16.xpose.msra.mxu0 0
      %451 = vmatprep.subr.bf16.mxu0 0
      %452 = vmatpush1.bf16.xpose.msra.mxu0 0
      %453 = vmatprep.subr.bf16.mxu0 0
      %454 = vmatpush1.bf16.xpose.msra.mxu0 0
      %455 = vmatprep.subr.bf16.mxu0 0
      %456 = vmatpush1.bf16.xpose.msra.mxu0 0
      %457 = vmatprep.subr.bf16.mxu0 0
      %458 = vmatpush1.bf16.xpose.msra.mxu0 0
      %459 = vmatprep.subr.bf16.mxu0 0
      %460 = vmatpush1.bf16.xpose.msra.mxu0 0
      %461 = vmatprep.mubr.bf16.mxu0 0
      %462 = vmatmul.mubr.bf16.gmra.mrb[0].mxu0 %v424
      %v463 = vpop.f32.mrb[0].mxu0
      %v464 = vadd.f32 0.0, %v463
      %v465 = vpop.f32.mrb[0].mxu0
      %v466 = vpop.f32.mrb[0].mxu0
      %v467 = vpop.f32.mrb[0].mxu0
      %468 = vdwg.mxu0
      %469 = vset.pattern.permute.xlu0 1
      %470 = vperm.xlu0 %469, %v341
      %v471 = vpop.permute.xlu0 %470
      %v473 = vmul.f32 %v464, %v471
      %v474 = vlaneseq
      %v475 = vshrl.u32 %v474, 7
      %v476 = vsub.s32 1, %v475
      %v477 = vrot.slane %v293, %v476
      %v478 = vadd.f32 %v473, %v477
      %v479 = vsel %vm353, %v478, -inf
      %480 = vmax.xlane.f32.xlu0 %v479
      %v481 = vpop.xlane.xlu0 %480
      %v482 = vsub.f32 %v478, %v481
      %v483 = vmul.f32 %v482, 1.442695
      %v484 = vpow.pop %v483
      %v485 = vsel %vm353, %v484, 0.0
      %486 = vadd.xlane.f32.xlu0 %v485
      %v487 = vpop.xlane.xlu0 %486
      %v488 = vrcp.pop %v487
      %v489 = vmul.f32 %v484, %v488
      %v490 = vpack.c.bf16 %v489, %v489
      %v492 = vunpack.c.l.b16 %v291
      %v493 = vpack.c.b16 %v492, %v492
      %494 = vrot.lane.b32.xlu0 %v493, 96
      %v495 = vpop.permute.xlu0 %494
      %v497 = vsel %vm353, %v490, 0
      %v500 = vsel %vm369, %v495, 0
      %502 = vmatprep.subr.bf16.mxu0 0
      %503 = vmatpush1.bf16.msra.mxu0 %v500
      %504 = vmatprep.subr.bf16.mxu0 0
      %505 = vmatpush1.bf16.msra.mxu0 0
      %506 = vmatprep.subr.bf16.mxu0 0
      %507 = vmatpush1.bf16.msra.mxu0 0
      %508 = vmatprep.subr.bf16.mxu0 0
      %509 = vmatpush1.bf16.msra.mxu0 0
      %510 = vmatprep.subr.bf16.mxu0 0
      %511 = vmatpush1.bf16.msra.mxu0 0
      %512 = vmatprep.subr.bf16.mxu0 0
      %513 = vmatpush1.bf16.msra.mxu0 0
      %514 = vmatprep.subr.bf16.mxu0 0
      %515 = vmatpush1.bf16.msra.mxu0 0
      %516 = vmatprep.subr.bf16.mxu0 0
      %517 = vmatpush1.bf16.msra.mxu0 0
      %518 = vmatprep.subr.bf16.mxu0 0
      %519 = vmatpush1.bf16.msra.mxu0 0
      %520 = vmatprep.subr.bf16.mxu0 0
      %521 = vmatpush1.bf16.msra.mxu0 0
      %522 = vmatprep.subr.bf16.mxu0 0
      %523 = vmatpush1.bf16.msra.mxu0 0
      %524 = vmatprep.subr.bf16.mxu0 0
      %525 = vmatpush1.bf16.msra.mxu0 0
      %526 = vmatprep.subr.bf16.mxu0 0
      %527 = vmatpush1.bf16.msra.mxu0 0
      %528 = vmatprep.subr.bf16.mxu0 0
      %529 = vmatpush1.bf16.msra.mxu0 0
      %530 = vmatprep.subr.bf16.mxu0 0
      %531 = vmatpush1.bf16.msra.mxu0 0
      %532 = vmatprep.subr.bf16.mxu0 0
      %533 = vmatpush1.bf16.msra.mxu0 0
      %534 = vmatprep.mubr.bf16.mxu0 0
      %535 = vmatmul.mubr.bf16.gmra.mrb[0].mxu0 %v497
      %v536 = vpop.f32.mrb[0].mxu0
      %v537 = vadd.f32 0.0, %v536
      %v538 = vpop.f32.mrb[0].mxu0
      %v539 = vpop.f32.mrb[0].mxu0
      %v540 = vpop.f32.mrb[0].mxu0
      %541 = vdwg.mxu0
      %542 = vrot.lane.b32.xlu0 %v415, 64
      %v543 = vpop.permute.xlu0 %542
      %544 = vrot.lane.b32.xlu0 %v420, 64
      %v545 = vpop.permute.xlu0 %544
      %v547 = vsel %vm294, %v543, 0
      %v550 = vsel %vm294, %v545, 0
      %552 = vmatprep.subr.bf16.mxu0 0
      %553 = vmatpush1.bf16.xpose.msra.mxu0 %v550
      %554 = vmatprep.subr.bf16.mxu0 0
      %555 = vmatpush1.bf16.xpose.msra.mxu0 0
      %556 = vmatprep.subr.bf16.mxu0 0
      %557 = vmatpush1.bf16.xpose.msra.mxu0 0
      %558 = vmatprep.subr.bf16.mxu0 0
      %559 = vmatpush1.bf16.xpose.msra.mxu0 0
      %560 = vmatprep.subr.bf16.mxu0 0
      %561 = vmatpush1.bf16.xpose.msra.mxu0 0
      %562 = vmatprep.subr.bf16.mxu0 0
      %563 = vmatpush1.bf16.xpose.msra.mxu0 0
      %564 = vmatprep.subr.bf16.mxu0 0
      %565 = vmatpush1.bf16.xpose.msra.mxu0 0
      %566 = vmatprep.subr.bf16.mxu0 0
      %567 = vmatpush1.bf16.xpose.msra.mxu0 0
      %568 = vmatprep.subr.bf16.mxu0 0
      %569 = vmatpush1.bf16.xpose.msra.mxu0 0
      %570 = vmatprep.subr.bf16.mxu0 0
      %571 = vmatpush1.bf16.xpose.msra.mxu0 0
      %572 = vmatprep.subr.bf16.mxu0 0
      %573 = vmatpush1.bf16.xpose.msra.mxu0 0
      %574 = vmatprep.subr.bf16.mxu0 0
      %575 = vmatpush1.bf16.xpose.msra.mxu0 0
      %576 = vmatprep.subr.bf16.mxu0 0
      %577 = vmatpush1.bf16.xpose.msra.mxu0 0
      %578 = vmatprep.subr.bf16.mxu0 0
      %579 = vmatpush1.bf16.xpose.msra.mxu0 0
      %580 = vmatprep.subr.bf16.mxu0 0
      %581 = vmatpush1.bf16.xpose.msra.mxu0 0
      %582 = vmatprep.subr.bf16.mxu0 0
      %583 = vmatpush1.bf16.xpose.msra.mxu0 0
      %584 = vmatprep.mubr.bf16.mxu0 0
      %585 = vmatmul.mubr.bf16.gmra.mrb[0].mxu0 %v547
      %v586 = vpop.f32.mrb[0].mxu0
      %v587 = vadd.f32 0.0, %v586
      %v588 = vpop.f32.mrb[0].mxu0
      %v589 = vpop.f32.mrb[0].mxu0
      %v590 = vpop.f32.mrb[0].mxu0
      %591 = vdwg.mxu0
      %592 = vset.pattern.permute.xlu0 2
      %593 = vperm.xlu0 %592, %v341
      %v594 = vpop.permute.xlu0 %593
      %v596 = vmul.f32 %v587, %v594
      %v597 = vlaneseq
      %v598 = vshrl.u32 %v597, 7
      %v599 = vsub.s32 2, %v598
      %v600 = vrot.slane %v293, %v599
      %v601 = vadd.f32 %v596, %v600
      %v602 = vsel %vm353, %v601, -inf
      %603 = vmax.xlane.f32.xlu0 %v602
      %v604 = vpop.xlane.xlu0 %603
      %v605 = vsub.f32 %v601, %v604
      %v606 = vmul.f32 %v605, 1.442695
      %v607 = vpow.pop %v606
      %v608 = vsel %vm353, %v607, 0.0
      %609 = vadd.xlane.f32.xlu0 %v608
      %v610 = vpop.xlane.xlu0 %609
      %v611 = vrcp.pop %v610
      %v612 = vmul.f32 %v607, %v611
      %v613 = vpack.c.bf16 %v612, %v612
      %614 = vrot.lane.b32.xlu0 %v493, 64
      %v615 = vpop.permute.xlu0 %614
      %v617 = vsel %vm353, %v613, 0
      %v620 = vsel %vm369, %v615, 0
      %622 = vmatprep.subr.bf16.mxu0 0
      %623 = vmatpush1.bf16.msra.mxu0 %v620
      %624 = vmatprep.subr.bf16.mxu0 0
      %625 = vmatpush1.bf16.msra.mxu0 0
      %626 = vmatprep.subr.bf16.mxu0 0
      %627 = vmatpush1.bf16.msra.mxu0 0
      %628 = vmatprep.subr.bf16.mxu0 0
      %629 = vmatpush1.bf16.msra.mxu0 0
      %630 = vmatprep.subr.bf16.mxu0 0
      %631 = vmatpush1.bf16.msra.mxu0 0
      %632 = vmatprep.subr.bf16.mxu0 0
      %633 = vmatpush1.bf16.msra.mxu0 0
      %634 = vmatprep.subr.bf16.mxu0 0
      %635 = vmatpush1.bf16.msra.mxu0 0
      %636 = vmatprep.subr.bf16.mxu0 0
      %637 = vmatpush1.bf16.msra.mxu0 0
      %638 = vmatprep.subr.bf16.mxu0 0
      %639 = vmatpush1.bf16.msra.mxu0 0
      %640 = vmatprep.subr.bf16.mxu0 0
      %641 = vmatpush1.bf16.msra.mxu0 0
      %642 = vmatprep.subr.bf16.mxu0 0
      %643 = vmatpush1.bf16.msra.mxu0 0
      %644 = vmatprep.subr.bf16.mxu0 0
      %645 = vmatpush1.bf16.msra.mxu0 0
      %646 = vmatprep.subr.bf16.mxu0 0
      %647 = vmatpush1.bf16.msra.mxu0 0
      %648 = vmatprep.subr.bf16.mxu0 0
      %649 = vmatpush1.bf16.msra.mxu0 0
      %650 = vmatprep.subr.bf16.mxu0 0
      %651 = vmatpush1.bf16.msra.mxu0 0
      %652 = vmatprep.subr.bf16.mxu0 0
      %653 = vmatpush1.bf16.msra.mxu0 0
      %654 = vmatprep.mubr.bf16.mxu0 0
      %655 = vmatmul.mubr.bf16.gmra.mrb[0].mxu0 %v617
      %v656 = vpop.f32.mrb[0].mxu0
      %v657 = vadd.f32 0.0, %v656
      %v658 = vpop.f32.mrb[0].mxu0
      %v659 = vpop.f32.mrb[0].mxu0
      %v660 = vpop.f32.mrb[0].mxu0
      %661 = vdwg.mxu0
      %662 = vrot.lane.b32.xlu0 %v415, 32
      %v663 = vpop.permute.xlu0 %662
      %664 = vrot.lane.b32.xlu0 %v420, 32
      %v665 = vpop.permute.xlu0 %664
      %v667 = vsel %vm294, %v663, 0
      %v670 = vsel %vm294, %v665, 0
      %672 = vmatprep.subr.bf16.mxu0 0
      %673 = vmatpush1.bf16.xpose.msra.mxu0 %v670
      %674 = vmatprep.subr.bf16.mxu0 0
      %675 = vmatpush1.bf16.xpose.msra.mxu0 0
      %676 = vmatprep.subr.bf16.mxu0 0
      %677 = vmatpush1.bf16.xpose.msra.mxu0 0
      %678 = vmatprep.subr.bf16.mxu0 0
      %679 = vmatpush1.bf16.xpose.msra.mxu0 0
      %680 = vmatprep.subr.bf16.mxu0 0
      %681 = vmatpush1.bf16.xpose.msra.mxu0 0
      %682 = vmatprep.subr.bf16.mxu0 0
      %683 = vmatpush1.bf16.xpose.msra.mxu0 0
      %684 = vmatprep.subr.bf16.mxu0 0
      %685 = vmatpush1.bf16.xpose.msra.mxu0 0
      %686 = vmatprep.subr.bf16.mxu0 0
      %687 = vmatpush1.bf16.xpose.msra.mxu0 0
      %688 = vmatprep.subr.bf16.mxu0 0
      %689 = vmatpush1.bf16.xpose.msra.mxu0 0
      %690 = vmatprep.subr.bf16.mxu0 0
      %691 = vmatpush1.bf16.xpose.msra.mxu0 0
      %692 = vmatprep.subr.bf16.mxu0 0
      %693 = vmatpush1.bf16.xpose.msra.mxu0 0
      %694 = vmatprep.subr.bf16.mxu0 0
      %695 = vmatpush1.bf16.xpose.msra.mxu0 0
      %696 = vmatprep.subr.bf16.mxu0 0
      %697 = vmatpush1.bf16.xpose.msra.mxu0 0
      %698 = vmatprep.subr.bf16.mxu0 0
      %699 = vmatpush1.bf16.xpose.msra.mxu0 0
      %700 = vmatprep.subr.bf16.mxu0 0
      %701 = vmatpush1.bf16.xpose.msra.mxu0 0
      %702 = vmatprep.subr.bf16.mxu0 0
      %703 = vmatpush1.bf16.xpose.msra.mxu0 0
      %704 = vmatprep.mubr.bf16.mxu0 0
      %705 = vmatmul.mubr.bf16.gmra.mrb[0].mxu0 %v667
      %v706 = vpop.f32.mrb[0].mxu0
      %v707 = vadd.f32 0.0, %v706
      %v708 = vpop.f32.mrb[0].mxu0
      %v709 = vpop.f32.mrb[0].mxu0
      %v710 = vpop.f32.mrb[0].mxu0
      %711 = vdwg.mxu0
      %712 = vset.pattern.permute.xlu0 3
      %713 = vperm.xlu0 %712, %v341
      %v714 = vpop.permute.xlu0 %713
      %v716 = vmul.f32 %v707, %v714
      %v717 = vlaneseq
      %v718 = vshrl.u32 %v717, 7
      %v719 = vsub.s32 3, %v718
      %v720 = vrot.slane %v293, %v719
      %v721 = vadd.f32 %v716, %v720
      %v722 = vsel %vm353, %v721, -inf
      %723 = vmax.xlane.f32.xlu0 %v722
      %v724 = vpop.xlane.xlu0 %723
      %v725 = vsub.f32 %v721, %v724
      %v726 = vmul.f32 %v725, 1.442695
      %v727 = vpow.pop %v726
      %v728 = vsel %vm353, %v727, 0.0
      %729 = vadd.xlane.f32.xlu0 %v728
      %v730 = vpop.xlane.xlu0 %729
      %v731 = vrcp.pop %v730
      %v732 = vmul.f32 %v727, %v731
      %v733 = vpack.c.bf16 %v732, %v732
      %734 = vrot.lane.b32.xlu0 %v493, 32
      %v735 = vpop.permute.xlu0 %734
      %v737 = vsel %vm353, %v733, 0
      %v740 = vsel %vm369, %v735, 0
      %742 = vmatprep.subr.bf16.mxu0 0
      %743 = vmatpush1.bf16.msra.mxu0 %v740
      %744 = vmatprep.subr.bf16.mxu0 0
      %745 = vmatpush1.bf16.msra.mxu0 0
      %746 = vmatprep.subr.bf16.mxu0 0
      %747 = vmatpush1.bf16.msra.mxu0 0
      %748 = vmatprep.subr.bf16.mxu0 0
      %749 = vmatpush1.bf16.msra.mxu0 0
      %750 = vmatprep.subr.bf16.mxu0 0
      %751 = vmatpush1.bf16.msra.mxu0 0
      %752 = vmatprep.subr.bf16.mxu0 0
      %753 = vmatpush1.bf16.msra.mxu0 0
      %754 = vmatprep.subr.bf16.mxu0 0
      %755 = vmatpush1.bf16.msra.mxu0 0
      %756 = vmatprep.subr.bf16.mxu0 0
      %757 = vmatpush1.bf16.msra.mxu0 0
      %758 = vmatprep.subr.bf16.mxu0 0
      %759 = vmatpush1.bf16.msra.mxu0 0
      %760 = vmatprep.subr.bf16.mxu0 0
      %761 = vmatpush1.bf16.msra.mxu0 0
      %762 = vmatprep.subr.bf16.mxu0 0
      %763 = vmatpush1.bf16.msra.mxu0 0
      %764 = vmatprep.subr.bf16.mxu0 0
      %765 = vmatpush1.bf16.msra.mxu0 0
      %766 = vmatprep.subr.bf16.mxu0 0
      %767 = vmatpush1.bf16.msra.mxu0 0
      %768 = vmatprep.subr.bf16.mxu0 0
      %769 = vmatpush1.bf16.msra.mxu0 0
      %770 = vmatprep.subr.bf16.mxu0 0
      %771 = vmatpush1.bf16.msra.mxu0 0
      %772 = vmatprep.subr.bf16.mxu0 0
      %773 = vmatpush1.bf16.msra.mxu0 0
      %774 = vmatprep.mubr.bf16.mxu0 0
      %775 = vmatmul.mubr.bf16.gmra.mrb[0].mxu0 %v737
      %v776 = vpop.f32.mrb[0].mxu0
      %v777 = vadd.f32 0.0, %v776
      %v778 = vpop.f32.mrb[0].mxu0
      %v779 = vpop.f32.mrb[0].mxu0
      %v780 = vpop.f32.mrb[0].mxu0
      %781 = vdwg.mxu0
      %783 = vrot.lane.b32.xlu0 %v537, 32
      %v784 = vpop.permute.xlu0 %783
      %787 = vrot.lane.b32.xlu0 %v657, 64
      %v788 = vpop.permute.xlu0 %787
      %791 = vrot.lane.b32.xlu0 %v777, 96
      %v792 = vpop.permute.xlu0 %791
      %v794 = vsel %vm294, %v408, %v784
      %vm795 = vcmask 523264
      %v796 = vsel %vm795, %v794, %v788
      %vm797 = vcmask 785408
      %v798 = vsel %vm797, %v796, %v792
      %v799 = vpack.c.bf16 %v798, %v798
      %800 = vst [vmem:[%s287] sm:$0xf] %v799
      %p801 = scmp.lt.s32.totalorder %s16, 1
      %s802 = scalar_select %p801, %s16, 1
      %s803 = smul.addr %s802, 4
      %s804 = scalar_lea.vmem %s5, %s803
      // Predicated region
      $region41: #{morf_prediction_branch2.42} parent=39 // pred_check
        %p805 = pneg %p164
      $region42: #{morf_prediction_branch2.42} parent=39 // pred_check_branch
        %807 = sbr.rel (%p805) target = $region44
      $region43: #{morf_prediction_branch2.42} parent=39 // pred_region
        _
      $region44: #{morf_prediction_branch2.42} parent=39 // pred_fallthru
        _
    $region40: #{morf_prediction_branch2.42} parent=5 // pred_fallthru
      _
    %p808 = scmp.le.s32.totalorder 2, %s11
    // Predicated region
    $region45: #{morf_prediction_branch2.42} parent=5 // pred_check
      %p809 = pneg %p808
    $region46: #{morf_prediction_branch2.42} parent=5 // pred_check_branch
      %811 = sbr.rel (%p809) target = $region48
    $region47: #{morf_prediction_branch2.42} parent=5 // pred_region
      %s812 = ssub.s32 %s11, 2
      // Predicated region
      $region49: #{morf_prediction_branch2.42} parent=47 // pred_check
        %p813 = pneg %p170
      $region50: #{morf_prediction_branch2.42} parent=47 // pred_check_branch
        %815 = sbr.rel (%p813) target = $region52
      $region51: #{morf_prediction_branch2.42} parent=47 // pred_region
        %p816 = scmp.lt.s32.totalorder %s17, 1
        %s817 = scalar_select %p816, %s17, 1
        %s818 = smul.addr %s817, 4
        %s819 = scalar_lea.vmem %s5, %s818
      $region52: #{morf_prediction_branch2.42} parent=47 // pred_fallthru
        _
    $region48: #{morf_prediction_branch2.42} parent=5 // pred_fallthru
      _
  $region6: #{morf_prediction_branch2.42} parent=0 // loop_footer
    %s15 = sadd.s32 1, %s11
  $region7: #{morf_prediction_branch2.42} parent=0 // loop_footer_branch
    %10 = sbr.rel target = $region3
  $region8: #{morf_prediction_branch2.42} parent=0 // loop_exit
    _

// kernel: morf_prediction_branch2.45
$region0: #{morf_prediction_branch2.45}
  #allocation0 [shape = 'u32[]', space=smem, size = 0x4, offset = 0x4, fixed_abs, tag = 'smem constant byte address 0x4 - core index']
  #allocation1 [shape = 'u32[144,128]{1,0:T(1,128)}', space=vmem, size = 0x12000, scoped, tag = 'internal scratch']
  #allocation2 [shape = 'f32[16,256]{1,0:T(8,128)}', space=vmem, size = 0x4000, scoped, tag = 'scratch operand']
  %s0 = inlined_call_operand.vmem [shape: f32[16,128], index: 0, kind: input, shape index: {}]
  %s1 = inlined_call_operand.vmem [shape: bf16[128,256], index: 1, kind: input, shape index: {}]
  %s2 = inlined_call_operand.vmem [shape: f32[1,256], index: 2, kind: input, shape index: {}]
  %s3 = inlined_call_operand.vmem [shape: bf16[16,256], index: 3, kind: output, shape index: {}]
  %s4 = sld [smem:[#allocation0]]
  $region30: #{morf_prediction_branch2.45} parent=0
    _
  %s6 = ssub.s32 1, %s4
  %s7 = scalar_select 0, %s6, %s4
  // Predicated region
  $region2: #{morf_prediction_branch2.45} parent=0 // pred_check
    _
  $region3: #{morf_prediction_branch2.45} parent=0 // pred_check_branch
    %9 = sbr.rel (0) target = $region5
  $region4: #{morf_prediction_branch2.45} parent=0 // pred_region
    _
  $region5: #{morf_prediction_branch2.45} parent=0 // pred_fallthru
    _
  // Predicated region
  $region6: #{morf_prediction_branch2.45} parent=0 // pred_check
    _
  $region7: #{morf_prediction_branch2.45} parent=0 // pred_check_branch
    %11 = sbr.rel (0) target = $region9
  $region8: #{morf_prediction_branch2.45} parent=0 // pred_region
    _
  $region9: #{morf_prediction_branch2.45} parent=0 // pred_fallthru
    _
  // Predicated region
  $region10: #{morf_prediction_branch2.45} parent=0 // pred_check
    _
  $region11: #{morf_prediction_branch2.45} parent=0 // pred_check_branch
    %13 = sbr.rel (0) target = $region13
  $region12: #{morf_prediction_branch2.45} parent=0 // pred_region
    _
  $region13: #{morf_prediction_branch2.45} parent=0 // pred_fallthru
    _
  %p15 = scmp.eq.s32.totalorder 0, 0
  // Predicated region
  $region14: #{morf_prediction_branch2.45} parent=0 // pred_check
    %p16 = pneg %p15
  $region15: #{morf_prediction_branch2.45} parent=0 // pred_check_branch
    %18 = sbr.rel (%p16) target = $region17
  $region16: #{morf_prediction_branch2.45} parent=0 // pred_region
    %19 = vst [vmem:[#allocation2] sm:$0xff] 0.0
    %20 = vst [vmem:[#allocation2 + $0x8] sm:$0xff] 0.0
    %21 = vst [vmem:[#allocation2 + $0x10] sm:$0xff] 0.0
    %22 = vst [vmem:[#allocation2 + $0x18] sm:$0xff] 0.0
  $region17: #{morf_prediction_branch2.45} parent=0 // pred_fallthru
    _
  %v23 = vld [vmem:[%s0] sm:$0xff]
  %v24 = vld [vmem:[%s0 + $0x8] sm:$0xff]
  %v25 = vpack.c.bf16 %v24, %v23
  %v26 = vld [vmem:[#allocation2] sm:$0xff]
  %v27 = vld [vmem:[#allocation2 + $0x8] sm:$0xff]
  %v28 = vld [vmem:[#allocation2 + $0x10] sm:$0xff]
  %v29 = vld [vmem:[#allocation2 + $0x18] sm:$0xff]
  %v30 = vld [vmem:[%s1] sm:$0xff]
  %v31 = vld [vmem:[%s1 + $0x8] sm:$0xff]
  %v32 = vld [vmem:[%s1 + $0x10] sm:$0xff]
  %v33 = vld [vmem:[%s1 + $0x18] sm:$0xff]
  %v34 = vld [vmem:[%s1 + $0x20] sm:$0xff]
  %v35 = vld [vmem:[%s1 + $0x28] sm:$0xff]
  %v36 = vld [vmem:[%s1 + $0x30] sm:$0xff]
  %v37 = vld [vmem:[%s1 + $0x38] sm:$0xff]
  %v38 = vld [vmem:[%s1 + $0x40] sm:$0xff]
  %v39 = vld [vmem:[%s1 + $0x48] sm:$0xff]
  %v40 = vld [vmem:[%s1 + $0x50] sm:$0xff]
  %v41 = vld [vmem:[%s1 + $0x58] sm:$0xff]
  %v42 = vld [vmem:[%s1 + $0x60] sm:$0xff]
  %v43 = vld [vmem:[%s1 + $0x68] sm:$0xff]
  %v44 = vld [vmem:[%s1 + $0x70] sm:$0xff]
  %v45 = vld [vmem:[%s1 + $0x78] sm:$0xff]
  %v62 = vunpack.c.l.b16 %v30
  %v63 = vunpack.c.h.b16 %v30
  %v64 = vunpack.c.l.b16 %v31
  %v65 = vunpack.c.h.b16 %v31
  %v66 = vunpack.c.l.b16 %v32
  %v67 = vunpack.c.h.b16 %v32
  %v68 = vunpack.c.l.b16 %v33
  %v69 = vunpack.c.h.b16 %v33
  %v70 = vunpack.c.l.b16 %v34
  %v71 = vunpack.c.h.b16 %v34
  %v72 = vunpack.c.l.b16 %v35
  %v73 = vunpack.c.h.b16 %v35
  %v74 = vunpack.c.l.b16 %v36
  %v75 = vunpack.c.h.b16 %v36
  %v76 = vunpack.c.l.b16 %v37
  %v77 = vunpack.c.h.b16 %v37
  %v78 = vunpack.c.l.b16 %v38
  %v79 = vunpack.c.h.b16 %v38
  %v80 = vunpack.c.l.b16 %v39
  %v81 = vunpack.c.h.b16 %v39
  %v82 = vunpack.c.l.b16 %v40
  %v83 = vunpack.c.h.b16 %v40
  %v84 = vunpack.c.l.b16 %v41
  %v85 = vunpack.c.h.b16 %v41
  %v86 = vunpack.c.l.b16 %v42
  %v87 = vunpack.c.h.b16 %v42
  %v88 = vunpack.c.l.b16 %v43
  %v89 = vunpack.c.h.b16 %v43
  %v90 = vunpack.c.l.b16 %v44
  %v91 = vunpack.c.h.b16 %v44
  %v92 = vunpack.c.l.b16 %v45
  %v93 = vunpack.c.h.b16 %v45
  %v94 = vpack.c.b16 %v64, %v62
  %v95 = vpack.c.b16 %v65, %v63
  %v96 = vpack.c.b16 %v68, %v66
  %v97 = vpack.c.b16 %v69, %v67
  %v98 = vpack.c.b16 %v72, %v70
  %v99 = vpack.c.b16 %v73, %v71
  %v100 = vpack.c.b16 %v76, %v74
  %v101 = vpack.c.b16 %v77, %v75
  %v102 = vpack.c.b16 %v80, %v78
  %v103 = vpack.c.b16 %v81, %v79
  %v104 = vpack.c.b16 %v84, %v82
  %v105 = vpack.c.b16 %v85, %v83
  %v106 = vpack.c.b16 %v88, %v86
  %v107 = vpack.c.b16 %v89, %v87
  %v108 = vpack.c.b16 %v92, %v90
  %v109 = vpack.c.b16 %v93, %v91
  %126 = vmatprep.subr.bf16.mxu0 %v95
  %127 = vmatpush1.bf16.msra.mxu0 %v94
  %128 = vmatprep.subr.bf16.mxu0 %v97
  %129 = vmatpush1.bf16.msra.mxu0 %v96
  %130 = vmatprep.subr.bf16.mxu0 %v99
  %131 = vmatpush1.bf16.msra.mxu0 %v98
  %132 = vmatprep.subr.bf16.mxu0 %v101
  %133 = vmatpush1.bf16.msra.mxu0 %v100
  %134 = vmatprep.subr.bf16.mxu0 %v103
  %135 = vmatpush1.bf16.msra.mxu0 %v102
  %136 = vmatprep.subr.bf16.mxu0 %v105
  %137 = vmatpush1.bf16.msra.mxu0 %v104
  %138 = vmatprep.subr.bf16.mxu0 %v107
  %139 = vmatpush1.bf16.msra.mxu0 %v106
  %140 = vmatprep.subr.bf16.mxu0 %v109
  %141 = vmatpush1.bf16.msra.mxu0 %v108
  %142 = vmatprep.subr.bf16.mxu0 0
  %143 = vmatpush1.bf16.msra.mxu0 0
  %144 = vmatprep.subr.bf16.mxu0 0
  %145 = vmatpush1.bf16.msra.mxu0 0
  %146 = vmatprep.subr.bf16.mxu0 0
  %147 = vmatpush1.bf16.msra.mxu0 0
  %148 = vmatprep.subr.bf16.mxu0 0
  %149 = vmatpush1.bf16.msra.mxu0 0
  %150 = vmatprep.subr.bf16.mxu0 0
  %151 = vmatpush1.bf16.msra.mxu0 0
  %152 = vmatprep.subr.bf16.mxu0 0
  %153 = vmatpush1.bf16.msra.mxu0 0
  %154 = vmatprep.subr.bf16.mxu0 0
  %155 = vmatpush1.bf16.msra.mxu0 0
  %156 = vmatprep.subr.bf16.mxu0 0
  %157 = vmatpush1.bf16.msra.mxu0 0
  %158 = vmatprep.mubr.bf16.mxu0 0
  %159 = vmatmul.mubr.bf16.gmra.mrb[0].mxu0 %v25
  %v160 = vpop.f32.mrb[0].mxu0
  %v161 = vadd.f32 0.0, %v160
  %v162 = vpop.f32.mrb[0].mxu0
  %v163 = vadd.f32 0.0, %v162
  %v164 = vpop.f32.mrb[0].mxu0
  %v165 = vadd.f32 0.0, %v164
  %v166 = vpop.f32.mrb[0].mxu0
  %v167 = vadd.f32 0.0, %v166
  %168 = vdwg.mxu0
  %v169 = vadd.f32 %v26, %v161
  %v170 = vadd.f32 %v27, %v163
  %v171 = vadd.f32 %v28, %v165
  %v172 = vadd.f32 %v29, %v167
  %173 = vst [vmem:[#allocation2] sm:$0xff] %v169
  %174 = vst [vmem:[#allocation2 + $0x8] sm:$0xff] %v170
  %175 = vst [vmem:[#allocation2 + $0x10] sm:$0xff] %v171
  %176 = vst [vmem:[#allocation2 + $0x18] sm:$0xff] %v172
  // Predicated region
  $region18: #{morf_prediction_branch2.45} parent=0 // pred_check
    %p177 = pneg %p15
  $region19: #{morf_prediction_branch2.45} parent=0 // pred_check_branch
    %179 = sbr.rel (%p177) target = $region21
  $region20: #{morf_prediction_branch2.45} parent=0 // pred_region
    %v180 = vld [vmem:[#allocation2] sm:$0xff]
    %v181 = vld [vmem:[#allocation2 + $0x8] sm:$0xff]
    %v182 = vld [vmem:[#allocation2 + $0x10] sm:$0xff]
    %v183 = vld [vmem:[#allocation2 + $0x18] sm:$0xff]
    %v184 = vld [vmem:[%s2] sm:$0x3]
    %v186 = vlaneseq
    %v187 = vshrl.u32 %v186, 7
    %v188 = vsub.s32 0, %v187
    %v189 = vrot.slane %v184, %v188
    %v190 = vlaneseq
    %v191 = vshrl.u32 %v190, 7
    %v192 = vsub.s32 1, %v191
    %v193 = vrot.slane %v184, %v192
    %v196 = vadd.f32 %v180, %v189
    %v197 = vadd.f32 %v181, %v193
    %v198 = vadd.f32 %v182, %v189
    %v199 = vadd.f32 %v183, %v193
    %v200 = vmul.f32 %v196, 0.5
    %v201 = vmul.f32 %v197, 0.5
    %v202 = vmul.f32 %v198, 0.5
    %v203 = vmul.f32 %v199, 0.5
    %v204 = vmul.f32 %v196, 0.044715
    %v205 = vmul.f32 %v197, 0.044715
    %v206 = vmul.f32 %v198, 0.044715
    %v207 = vmul.f32 %v199, 0.044715
    %v208 = vmul.f32 %v204, %v196
    %v209 = vmul.f32 %v205, %v197
    %v210 = vmul.f32 %v206, %v198
    %v211 = vmul.f32 %v207, %v199
    %v212 = vmul.f32 %v208, %v196
    %v213 = vmul.f32 %v209, %v197
    %v214 = vmul.f32 %v210, %v198
    %v215 = vmul.f32 %v211, %v199
    %v216 = vadd.f32 %v196, %v212
    %v217 = vadd.f32 %v197, %v213
    %v218 = vadd.f32 %v198, %v214
    %v219 = vadd.f32 %v199, %v215
    %v220 = vmul.f32 %v216, 0.7978846
    %v221 = vmul.f32 %v217, 0.7978846
    %v222 = vmul.f32 %v218, 0.7978846
    %v223 = vmul.f32 %v219, 0.7978846
    %v224 = vtanh.pop %v220
    %v225 = vtanh.pop %v221
    %v226 = vtanh.pop %v222
    %v227 = vtanh.pop %v223
    %v228 = vadd.f32 %v224, 1.0
    %v229 = vadd.f32 %v225, 1.0
    %v230 = vadd.f32 %v226, 1.0
    %v231 = vadd.f32 %v227, 1.0
    %v232 = vmul.f32 %v200, %v228
    %v233 = vmul.f32 %v201, %v229
    %v234 = vmul.f32 %v202, %v230
    %v235 = vmul.f32 %v203, %v231
    %v236 = vpack.c.bf16 %v234, %v232
    %v237 = vpack.c.bf16 %v235, %v233
    %v240 = vunpack.c.l.b16 %v236
    %v241 = vunpack.c.l.b16 %v237
    %v242 = vunpack.c.h.b16 %v236
    %v243 = vunpack.c.h.b16 %v237
    %v244 = vpack.c.b16 %v241, %v240
    %v245 = vpack.c.b16 %v243, %v242
    %248 = vst [vmem:[%s3] sm:$0xff] %v244
    %249 = vst [vmem:[%s3 + $0x8] sm:$0xff] %v245
  $region21: #{morf_prediction_branch2.45} parent=0 // pred_fallthru
    _
  // Predicated region
  $region22: #{morf_prediction_branch2.45} parent=0 // pred_check
    _
  $region23: #{morf_prediction_branch2.45} parent=0 // pred_check_branch
    %251 = sbr.rel (0) target = $region25
  $region24: #{morf_prediction_branch2.45} parent=0 // pred_region
    _
  $region25: #{morf_prediction_branch2.45} parent=0 // pred_fallthru
    _
  // Predicated region
  $region26: #{morf_prediction_branch2.45} parent=0 // pred_check
    _
  $region27: #{morf_prediction_branch2.45} parent=0 // pred_check_branch
    %253 = sbr.rel (0) target = $region29
  $region28: #{morf_prediction_branch2.45} parent=0 // pred_region
    _
  $region29: #{morf_prediction_branch2.45} parent=0 // pred_fallthru
    _

// kernel: morf_prediction_branch2.46
$region0: #{morf_prediction_branch2.46}
  #allocation0 [shape = 'u32[]', space=smem, size = 0x4, offset = 0x4, fixed_abs, tag = 'smem constant byte address 0x4 - core index']
  #allocation1 [shape = 'u32[144,128]{1,0:T(1,128)}', space=vmem, size = 0x12000, scoped, tag = 'internal scratch']
  #allocation2 [shape = 'f32[16,128]{1,0:T(8,128)}', space=vmem, size = 0x2000, scoped, tag = 'scratch operand']
  %s0 = inlined_call_operand.vmem [shape: bf16[16,256], index: 0, kind: input, shape index: {}]
  %s1 = inlined_call_operand.vmem [shape: bf16[256,128], index: 1, kind: input, shape index: {}]
  %s2 = inlined_call_operand.vmem [shape: f32[1,128], index: 2, kind: input, shape index: {}]
  %s3 = inlined_call_operand.vmem [shape: f32[16,128], index: 3, kind: output, shape index: {}]
  %s4 = sld [smem:[#allocation0]]
  $region30: #{morf_prediction_branch2.46} parent=0
    _
  %s6 = ssub.s32 1, %s4
  %s7 = scalar_select 0, %s6, %s4
  // Predicated region
  $region2: #{morf_prediction_branch2.46} parent=0 // pred_check
    _
  $region3: #{morf_prediction_branch2.46} parent=0 // pred_check_branch
    %9 = sbr.rel (0) target = $region5
  $region4: #{morf_prediction_branch2.46} parent=0 // pred_region
    _
  $region5: #{morf_prediction_branch2.46} parent=0 // pred_fallthru
    _
  // Predicated region
  $region6: #{morf_prediction_branch2.46} parent=0 // pred_check
    _
  $region7: #{morf_prediction_branch2.46} parent=0 // pred_check_branch
    %11 = sbr.rel (0) target = $region9
  $region8: #{morf_prediction_branch2.46} parent=0 // pred_region
    _
  $region9: #{morf_prediction_branch2.46} parent=0 // pred_fallthru
    _
  // Predicated region
  $region10: #{morf_prediction_branch2.46} parent=0 // pred_check
    _
  $region11: #{morf_prediction_branch2.46} parent=0 // pred_check_branch
    %13 = sbr.rel (0) target = $region13
  $region12: #{morf_prediction_branch2.46} parent=0 // pred_region
    _
  $region13: #{morf_prediction_branch2.46} parent=0 // pred_fallthru
    _
  %p15 = scmp.eq.s32.totalorder 0, 0
  // Predicated region
  $region14: #{morf_prediction_branch2.46} parent=0 // pred_check
    %p16 = pneg %p15
  $region15: #{morf_prediction_branch2.46} parent=0 // pred_check_branch
    %18 = sbr.rel (%p16) target = $region17
  $region16: #{morf_prediction_branch2.46} parent=0 // pred_region
    %19 = vst [vmem:[#allocation2] sm:$0xff] 0.0
    %20 = vst [vmem:[#allocation2 + $0x8] sm:$0xff] 0.0
  $region17: #{morf_prediction_branch2.46} parent=0 // pred_fallthru
    _
  %v21 = vld [vmem:[%s0] sm:$0xff]
  %v22 = vld [vmem:[%s0 + $0x8] sm:$0xff]
  %v23 = vld [vmem:[#allocation2] sm:$0xff]
  %v24 = vld [vmem:[#allocation2 + $0x8] sm:$0xff]
  %v25 = vld [vmem:[%s1] sm:$0xf]
  %v26 = vld [vmem:[%s1 + $0x4] sm:$0xf]
  %v27 = vld [vmem:[%s1 + $0x8] sm:$0xf]
  %v28 = vld [vmem:[%s1 + $0xc] sm:$0xf]
  %v29 = vld [vmem:[%s1 + $0x10] sm:$0xf]
  %v30 = vld [vmem:[%s1 + $0x14] sm:$0xf]
  %v31 = vld [vmem:[%s1 + $0x18] sm:$0xf]
  %v32 = vld [vmem:[%s1 + $0x1c] sm:$0xf]
  %v33 = vld [vmem:[%s1 + $0x20] sm:$0xf]
  %v34 = vld [vmem:[%s1 + $0x24] sm:$0xf]
  %v35 = vld [vmem:[%s1 + $0x28] sm:$0xf]
  %v36 = vld [vmem:[%s1 + $0x2c] sm:$0xf]
  %v37 = vld [vmem:[%s1 + $0x30] sm:$0xf]
  %v38 = vld [vmem:[%s1 + $0x34] sm:$0xf]
  %v39 = vld [vmem:[%s1 + $0x38] sm:$0xf]
  %v40 = vld [vmem:[%s1 + $0x3c] sm:$0xf]
  %v41 = vld [vmem:[%s1 + $0x40] sm:$0xf]
  %v42 = vld [vmem:[%s1 + $0x44] sm:$0xf]
  %v43 = vld [vmem:[%s1 + $0x48] sm:$0xf]
  %v44 = vld [vmem:[%s1 + $0x4c] sm:$0xf]
  %v45 = vld [vmem:[%s1 + $0x50] sm:$0xf]
  %v46 = vld [vmem:[%s1 + $0x54] sm:$0xf]
  %v47 = vld [vmem:[%s1 + $0x58] sm:$0xf]
  %v48 = vld [vmem:[%s1 + $0x5c] sm:$0xf]
  %v49 = vld [vmem:[%s1 + $0x60] sm:$0xf]
  %v50 = vld [vmem:[%s1 + $0x64] sm:$0xf]
  %v51 = vld [vmem:[%s1 + $0x68] sm:$0xf]
  %v52 = vld [vmem:[%s1 + $0x6c] sm:$0xf]
  %v53 = vld [vmem:[%s1 + $0x70] sm:$0xf]
  %v54 = vld [vmem:[%s1 + $0x74] sm:$0xf]
  %v55 = vld [vmem:[%s1 + $0x78] sm:$0xf]
  %v56 = vld [vmem:[%s1 + $0x7c] sm:$0xf]
  %v59 = vunpack.c.l.b16 %v21
  %v60 = vunpack.c.h.b16 %v21
  %v61 = vunpack.c.l.b16 %v22
  %v62 = vunpack.c.h.b16 %v22
  %v63 = vpack.c.b16 %v61, %v59
  %v64 = vpack.c.b16 %v62, %v60
  %v99 = vunpack.c.l.b16 %v25
  %v100 = vunpack.c.l.b16 %v26
  %v101 = vunpack.c.l.b16 %v27
  %v102 = vunpack.c.l.b16 %v28
  %v103 = vunpack.c.l.b16 %v29
  %v104 = vunpack.c.l.b16 %v30
  %v105 = vunpack.c.l.b16 %v31
  %v106 = vunpack.c.l.b16 %v32
  %v107 = vunpack.c.l.b16 %v33
  %v108 = vunpack.c.l.b16 %v34
  %v109 = vunpack.c.l.b16 %v35
  %v110 = vunpack.c.l.b16 %v36
  %v111 = vunpack.c.l.b16 %v37
  %v112 = vunpack.c.l.b16 %v38
  %v113 = vunpack.c.l.b16 %v39
  %v114 = vunpack.c.l.b16 %v40
  %v115 = vunpack.c.l.b16 %v41
  %v116 = vunpack.c.l.b16 %v42
  %v117 = vunpack.c.l.b16 %v43
  %v118 = vunpack.c.l.b16 %v44
  %v119 = vunpack.c.l.b16 %v45
  %v120 = vunpack.c.l.b16 %v46
  %v121 = vunpack.c.l.b16 %v47
  %v122 = vunpack.c.l.b16 %v48
  %v123 = vunpack.c.l.b16 %v49
  %v124 = vunpack.c.l.b16 %v50
  %v125 = vunpack.c.l.b16 %v51
  %v126 = vunpack.c.l.b16 %v52
  %v127 = vunpack.c.l.b16 %v53
  %v128 = vunpack.c.l.b16 %v54
  %v129 = vunpack.c.l.b16 %v55
  %v130 = vunpack.c.l.b16 %v56
  %v131 = vpack.c.b16 %v100, %v99
  %v132 = vpack.c.b16 %v102, %v101
  %v133 = vpack.c.b16 %v104, %v103
  %v134 = vpack.c.b16 %v106, %v105
  %v135 = vpack.c.b16 %v108, %v107
  %v136 = vpack.c.b16 %v110, %v109
  %v137 = vpack.c.b16 %v112, %v111
  %v138 = vpack.c.b16 %v114, %v113
  %v139 = vpack.c.b16 %v116, %v115
  %v140 = vpack.c.b16 %v118, %v117
  %v141 = vpack.c.b16 %v120, %v119
  %v142 = vpack.c.b16 %v122, %v121
  %v143 = vpack.c.b16 %v124, %v123
  %v144 = vpack.c.b16 %v126, %v125
  %v145 = vpack.c.b16 %v128, %v127
  %v146 = vpack.c.b16 %v130, %v129
  %163 = vmatprep.subr.bf16.mxu0 0
  %164 = vmatpush1.bf16.msra.mxu0 %v131
  %165 = vmatprep.subr.bf16.mxu0 0
  %166 = vmatpush1.bf16.msra.mxu0 %v132
  %167 = vmatprep.subr.bf16.mxu0 0
  %168 = vmatpush1.bf16.msra.mxu0 %v133
  %169 = vmatprep.subr.bf16.mxu0 0
  %170 = vmatpush1.bf16.msra.mxu0 %v134
  %171 = vmatprep.subr.bf16.mxu0 0
  %172 = vmatpush1.bf16.msra.mxu0 %v135
  %173 = vmatprep.subr.bf16.mxu0 0
  %174 = vmatpush1.bf16.msra.mxu0 %v136
  %175 = vmatprep.subr.bf16.mxu0 0
  %176 = vmatpush1.bf16.msra.mxu0 %v137
  %177 = vmatprep.subr.bf16.mxu0 0
  %178 = vmatpush1.bf16.msra.mxu0 %v138
  %179 = vmatprep.subr.bf16.mxu0 0
  %180 = vmatpush1.bf16.msra.mxu0 %v139
  %181 = vmatprep.subr.bf16.mxu0 0
  %182 = vmatpush1.bf16.msra.mxu0 %v140
  %183 = vmatprep.subr.bf16.mxu0 0
  %184 = vmatpush1.bf16.msra.mxu0 %v141
  %185 = vmatprep.subr.bf16.mxu0 0
  %186 = vmatpush1.bf16.msra.mxu0 %v142
  %187 = vmatprep.subr.bf16.mxu0 0
  %188 = vmatpush1.bf16.msra.mxu0 %v143
  %189 = vmatprep.subr.bf16.mxu0 0
  %190 = vmatpush1.bf16.msra.mxu0 %v144
  %191 = vmatprep.subr.bf16.mxu0 0
  %192 = vmatpush1.bf16.msra.mxu0 %v145
  %193 = vmatprep.subr.bf16.mxu0 0
  %194 = vmatpush1.bf16.msra.mxu0 %v146
  %195 = vmatprep.mubr.bf16.mxu0 %v64
  %196 = vmatmul.mubr.bf16.gmra.mrb[0].mxu0 %v63
  %v197 = vpop.f32.mrb[0].mxu0
  %v198 = vadd.f32 0.0, %v197
  %v199 = vpop.f32.mrb[0].mxu0
  %v200 = vpop.f32.mrb[0].mxu0
  %v201 = vadd.f32 0.0, %v200
  %v202 = vpop.f32.mrb[0].mxu0
  %203 = vdwg.mxu0
  %v204 = vadd.f32 %v23, %v198
  %v205 = vadd.f32 %v24, %v201
  %206 = vst [vmem:[#allocation2] sm:$0xff] %v204
  %207 = vst [vmem:[#allocation2 + $0x8] sm:$0xff] %v205
  // Predicated region
  $region18: #{morf_prediction_branch2.46} parent=0 // pred_check
    %p208 = pneg %p15
  $region19: #{morf_prediction_branch2.46} parent=0 // pred_check_branch
    %210 = sbr.rel (%p208) target = $region21
  $region20: #{morf_prediction_branch2.46} parent=0 // pred_region
    %v211 = vld [vmem:[#allocation2] sm:$0xff]
    %v212 = vld [vmem:[#allocation2 + $0x8] sm:$0xff]
    %v213 = vld [vmem:[%s2] sm:$0x1]
    %v215 = vlaneseq
    %v216 = vshrl.u32 %v215, 7
    %v217 = vsub.s32 0, %v216
    %v218 = vrot.slane %v213, %v217
    %v220 = vadd.f32 %v211, %v218
    %v221 = vadd.f32 %v212, %v218
    %222 = vst [vmem:[%s3] sm:$0xff] %v220
    %223 = vst [vmem:[%s3 + $0x8] sm:$0xff] %v221
  $region21: #{morf_prediction_branch2.46} parent=0 // pred_fallthru
    _
  // Predicated region
  $region22: #{morf_prediction_branch2.46} parent=0 // pred_check
    _
  $region23: #{morf_prediction_branch2.46} parent=0 // pred_check_branch
    %225 = sbr.rel (0) target = $region25
  $region24: #{morf_prediction_branch2.46} parent=0 // pred_region
    _
  $region25: #{morf_prediction_branch2.46} parent=0 // pred_fallthru
    _
  // Predicated region
  $region26: #{morf_prediction_branch2.46} parent=0 // pred_check
    _
  $region27: #{morf_prediction_branch2.46} parent=0 // pred_check_branch
    %227 = sbr.rel (0) target = $region29
  $region28: #{morf_prediction_branch2.46} parent=0 // pred_region
    _
  $region29: #{morf_prediction_branch2.46} parent=0 // pred_fallthru
    _

// kernel: morf_prediction_branch2.61
$region0: #{morf_prediction_branch2.61}
  #allocation0 [shape = 'u32[]', space=smem, size = 0x4, offset = 0x4, fixed_abs, tag = 'smem constant byte address 0x4 - core index']
  #allocation1 [shape = 'u32[144,128]{1,0:T(1,128)}', space=vmem, size = 0x12000, scoped, tag = 'internal scratch']
  #allocation2 [shape = 'f32[16,128]{1,0:T(8,128)}', space=vmem, size = 0x2000, scoped, tag = 'scratch operand']
  %s0 = inlined_call_operand.vmem [shape: f32[16,128], index: 0, kind: input, shape index: {}]
  %s1 = inlined_call_operand.vmem [shape: bf16[128,128], index: 1, kind: input, shape index: {}]
  %s2 = inlined_call_operand.vmem [shape: f32[1,128], index: 2, kind: input, shape index: {}]
  %s3 = inlined_call_operand.vmem [shape: bf16[16,128], index: 3, kind: output, shape index: {}]
  %s4 = sld [smem:[#allocation0]]
  $region30: #{morf_prediction_branch2.61} parent=0
    _
  %s6 = ssub.s32 1, %s4
  %s7 = scalar_select 0, %s6, %s4
  // Predicated region
  $region2: #{morf_prediction_branch2.61} parent=0 // pred_check
    _
  $region3: #{morf_prediction_branch2.61} parent=0 // pred_check_branch
    %9 = sbr.rel (0) target = $region5
  $region4: #{morf_prediction_branch2.61} parent=0 // pred_region
    _
  $region5: #{morf_prediction_branch2.61} parent=0 // pred_fallthru
    _
  // Predicated region
  $region6: #{morf_prediction_branch2.61} parent=0 // pred_check
    _
  $region7: #{morf_prediction_branch2.61} parent=0 // pred_check_branch
    %11 = sbr.rel (0) target = $region9
  $region8: #{morf_prediction_branch2.61} parent=0 // pred_region
    _
  $region9: #{morf_prediction_branch2.61} parent=0 // pred_fallthru
    _
  // Predicated region
  $region10: #{morf_prediction_branch2.61} parent=0 // pred_check
    _
  $region11: #{morf_prediction_branch2.61} parent=0 // pred_check_branch
    %13 = sbr.rel (0) target = $region13
  $region12: #{morf_prediction_branch2.61} parent=0 // pred_region
    _
  $region13: #{morf_prediction_branch2.61} parent=0 // pred_fallthru
    _
  %p15 = scmp.eq.s32.totalorder 0, 0
  // Predicated region
  $region14: #{morf_prediction_branch2.61} parent=0 // pred_check
    %p16 = pneg %p15
  $region15: #{morf_prediction_branch2.61} parent=0 // pred_check_branch
    %18 = sbr.rel (%p16) target = $region17
  $region16: #{morf_prediction_branch2.61} parent=0 // pred_region
    %19 = vst [vmem:[#allocation2] sm:$0xff] 0.0
    %20 = vst [vmem:[#allocation2 + $0x8] sm:$0xff] 0.0
  $region17: #{morf_prediction_branch2.61} parent=0 // pred_fallthru
    _
  %v21 = vld [vmem:[%s0] sm:$0xff]
  %v22 = vld [vmem:[%s0 + $0x8] sm:$0xff]
  %v23 = vpack.c.bf16 %v22, %v21
  %v24 = vld [vmem:[#allocation2] sm:$0xff]
  %v25 = vld [vmem:[#allocation2 + $0x8] sm:$0xff]
  %v26 = vld [vmem:[%s1] sm:$0xf]
  %v27 = vld [vmem:[%s1 + $0x4] sm:$0xf]
  %v28 = vld [vmem:[%s1 + $0x8] sm:$0xf]
  %v29 = vld [vmem:[%s1 + $0xc] sm:$0xf]
  %v30 = vld [vmem:[%s1 + $0x10] sm:$0xf]
  %v31 = vld [vmem:[%s1 + $0x14] sm:$0xf]
  %v32 = vld [vmem:[%s1 + $0x18] sm:$0xf]
  %v33 = vld [vmem:[%s1 + $0x1c] sm:$0xf]
  %v34 = vld [vmem:[%s1 + $0x20] sm:$0xf]
  %v35 = vld [vmem:[%s1 + $0x24] sm:$0xf]
  %v36 = vld [vmem:[%s1 + $0x28] sm:$0xf]
  %v37 = vld [vmem:[%s1 + $0x2c] sm:$0xf]
  %v38 = vld [vmem:[%s1 + $0x30] sm:$0xf]
  %v39 = vld [vmem:[%s1 + $0x34] sm:$0xf]
  %v40 = vld [vmem:[%s1 + $0x38] sm:$0xf]
  %v41 = vld [vmem:[%s1 + $0x3c] sm:$0xf]
  %v58 = vunpack.c.l.b16 %v26
  %v59 = vunpack.c.l.b16 %v27
  %v60 = vunpack.c.l.b16 %v28
  %v61 = vunpack.c.l.b16 %v29
  %v62 = vunpack.c.l.b16 %v30
  %v63 = vunpack.c.l.b16 %v31
  %v64 = vunpack.c.l.b16 %v32
  %v65 = vunpack.c.l.b16 %v33
  %v66 = vunpack.c.l.b16 %v34
  %v67 = vunpack.c.l.b16 %v35
  %v68 = vunpack.c.l.b16 %v36
  %v69 = vunpack.c.l.b16 %v37
  %v70 = vunpack.c.l.b16 %v38
  %v71 = vunpack.c.l.b16 %v39
  %v72 = vunpack.c.l.b16 %v40
  %v73 = vunpack.c.l.b16 %v41
  %v74 = vpack.c.b16 %v59, %v58
  %v75 = vpack.c.b16 %v61, %v60
  %v76 = vpack.c.b16 %v63, %v62
  %v77 = vpack.c.b16 %v65, %v64
  %v78 = vpack.c.b16 %v67, %v66
  %v79 = vpack.c.b16 %v69, %v68
  %v80 = vpack.c.b16 %v71, %v70
  %v81 = vpack.c.b16 %v73, %v72
  %90 = vmatprep.subr.bf16.mxu0 0
  %91 = vmatpush1.bf16.msra.mxu0 %v74
  %92 = vmatprep.subr.bf16.mxu0 0
  %93 = vmatpush1.bf16.msra.mxu0 %v75
  %94 = vmatprep.subr.bf16.mxu0 0
  %95 = vmatpush1.bf16.msra.mxu0 %v76
  %96 = vmatprep.subr.bf16.mxu0 0
  %97 = vmatpush1.bf16.msra.mxu0 %v77
  %98 = vmatprep.subr.bf16.mxu0 0
  %99 = vmatpush1.bf16.msra.mxu0 %v78
  %100 = vmatprep.subr.bf16.mxu0 0
  %101 = vmatpush1.bf16.msra.mxu0 %v79
  %102 = vmatprep.subr.bf16.mxu0 0
  %103 = vmatpush1.bf16.msra.mxu0 %v80
  %104 = vmatprep.subr.bf16.mxu0 0
  %105 = vmatpush1.bf16.msra.mxu0 %v81
  %106 = vmatprep.subr.bf16.mxu0 0
  %107 = vmatpush1.bf16.msra.mxu0 0
  %108 = vmatprep.subr.bf16.mxu0 0
  %109 = vmatpush1.bf16.msra.mxu0 0
  %110 = vmatprep.subr.bf16.mxu0 0
  %111 = vmatpush1.bf16.msra.mxu0 0
  %112 = vmatprep.subr.bf16.mxu0 0
  %113 = vmatpush1.bf16.msra.mxu0 0
  %114 = vmatprep.subr.bf16.mxu0 0
  %115 = vmatpush1.bf16.msra.mxu0 0
  %116 = vmatprep.subr.bf16.mxu0 0
  %117 = vmatpush1.bf16.msra.mxu0 0
  %118 = vmatprep.subr.bf16.mxu0 0
  %119 = vmatpush1.bf16.msra.mxu0 0
  %120 = vmatprep.subr.bf16.mxu0 0
  %121 = vmatpush1.bf16.msra.mxu0 0
  %122 = vmatprep.mubr.bf16.mxu0 0
  %123 = vmatmul.mubr.bf16.gmra.mrb[0].mxu0 %v23
  %v124 = vpop.f32.mrb[0].mxu0
  %v125 = vadd.f32 0.0, %v124
  %v126 = vpop.f32.mrb[0].mxu0
  %v127 = vpop.f32.mrb[0].mxu0
  %v128 = vadd.f32 0.0, %v127
  %v129 = vpop.f32.mrb[0].mxu0
  %130 = vdwg.mxu0
  %v131 = vadd.f32 %v24, %v125
  %v132 = vadd.f32 %v25, %v128
  %133 = vst [vmem:[#allocation2] sm:$0xff] %v131
  %134 = vst [vmem:[#allocation2 + $0x8] sm:$0xff] %v132
  // Predicated region
  $region18: #{morf_prediction_branch2.61} parent=0 // pred_check
    %p135 = pneg %p15
  $region19: #{morf_prediction_branch2.61} parent=0 // pred_check_branch
    %137 = sbr.rel (%p135) target = $region21
  $region20: #{morf_prediction_branch2.61} parent=0 // pred_region
    %v138 = vld [vmem:[#allocation2] sm:$0xff]
    %v139 = vld [vmem:[#allocation2 + $0x8] sm:$0xff]
    %v140 = vld [vmem:[%s2] sm:$0x1]
    %v142 = vlaneseq
    %v143 = vshrl.u32 %v142, 7
    %v144 = vsub.s32 0, %v143
    %v145 = vrot.slane %v140, %v144
    %v147 = vadd.f32 %v138, %v145
    %v148 = vadd.f32 %v139, %v145
    %v149 = vpack.c.bf16 %v148, %v147
    %v151 = vunpack.c.l.b16 %v149
    %v152 = vunpack.c.h.b16 %v149
    %v153 = vpack.c.b16 %v151, %v151
    %v154 = vpack.c.b16 %v152, %v152
    %157 = vst [vmem:[%s3] sm:$0xf] %v153
    %158 = vst [vmem:[%s3 + $0x4] sm:$0xf] %v154
  $region21: #{morf_prediction_branch2.61} parent=0 // pred_fallthru
    _
  // Predicated region
  $region22: #{morf_prediction_branch2.61} parent=0 // pred_check
    _
  $region23: #{morf_prediction_branch2.61} parent=0 // pred_check_branch
    %160 = sbr.rel (0) target = $region25
  $region24: #{morf_prediction_branch2.61} parent=0 // pred_region
    _
  $region25: #{morf_prediction_branch2.61} parent=0 // pred_fallthru
    _
  // Predicated region
  $region26: #{morf_prediction_branch2.61} parent=0 // pred_check
    _
  $region27: #{morf_prediction_branch2.61} parent=0 // pred_check_branch
    %162 = sbr.rel (0) target = $region29
  $region28: #{morf_prediction_branch2.61} parent=0 // pred_region
    _
  $region29: #{morf_prediction_branch2.61} parent=0 // pred_fallthru
    _

// kernel: morf_prediction_branch2.62
$region0: #{morf_prediction_branch2.62}
  #allocation0 [shape = 'u32[]', space=smem, size = 0x4, offset = 0x4, fixed_abs, tag = 'smem constant byte address 0x4 - core index']
  #allocation1 [shape = 'u32[144,128]{1,0:T(1,128)}', space=vmem, size = 0x12000, scoped, tag = 'internal scratch']
  #allocation2 [shape = 'f32[12,128]{1,0:T(8,128)}', space=vmem, size = 0x2000, scoped, tag = 'scratch operand']
  %s0 = inlined_call_operand.vmem [shape: bf16[2,8,128], index: 0, kind: input, shape index: {}]
  %s1 = inlined_call_operand.vmem [shape: f32[5,128], index: 1, kind: input, shape index: {}]
  %s2 = inlined_call_operand.vmem [shape: f32[1,128], index: 2, kind: input, shape index: {}]
  %s3 = inlined_call_operand.vmem [shape: f32[2,8,128], index: 3, kind: output, shape index: {}]
  %s4 = sld [smem:[#allocation0]]
  $region45: #{morf_prediction_branch2.62} parent=0
    _
  %s6 = ssub.s32 1, %s4
  %s7 = scalar_select 0, %s6, %s4
  loop: start=0, step=1, limit=4
  $region2: #{morf_prediction_branch2.62} parent=0 // loop_pre_header
    _
  $region3: #{morf_prediction_branch2.62} parent=0 // loop_header
    %s9 = sphi 0, %s13
    %p10 = scmp.ge.s32.totalorder %s9, 4
    %s19 = sphi 0, %s21
    %s22 = sphi 0, %s19
    %s23 = sphi 0, %s22
    %s39 = sphi 0, %s23
    %s43 = sphi 0, %s43
    %s45 = sphi 0, %s43
    %s46 = sphi 0, %s45
    %s60 = sphi 0, %s46
    %s64 = sphi 0, %s64
    %s66 = sphi 0, %s64
    %s67 = sphi 0, %s66
    %s81 = sphi 0, %s67
    %s87 = sphi 0, %s89
    %s90 = sphi 0, %s87
    %s91 = sphi 0, %s90
    %s107 = sphi 0, %s91
  $region4: #{morf_prediction_branch2.62} parent=0 // loop_header_branch
    %12 = sbr.rel (%p10) target = $region8
  $region5: #{morf_prediction_branch2.62} parent=0 // loop_body
    %s14 = ssub.s32 %s9, 1
    %s15 = ssub.s32 %s9, 2
    %s16 = sadd.s32 %s9, 1
    %s17 = ssub.s32 %s9, %s16
    %p18 = scmp.eq.s32.totalorder %s17, 0
    %s20 = sadd.s32 %s19, 1
    %s21 = scalar_select %p18, %s19, %s20
    %p24 = pneg %p18
    %p25 = scmp.eq.s32.totalorder %s9, 1
    %p26 = por %p24, %p25
    %p27 = scmp.ne.s32.totalorder %s19, %s22
    %p28 = scmp.eq.s32.totalorder %s9, 0
    %p29 = por %p27, %p28
    %p30 = scmp.ne.s32.totalorder %s19, %s22
    %p31 = scmp.eq.s32.totalorder %s14, 1
    %p32 = por %p30, %p31
    %p33 = scmp.ne.s32.totalorder %s22, %s23
    %p34 = scmp.eq.s32.totalorder %s14, 0
    %p35 = por %p33, %p34
    %p36 = scmp.ne.s32.totalorder %s22, %s23
    %p37 = scmp.eq.s32.totalorder %s15, 1
    %p38 = por %p36, %p37
    %p40 = scmp.ne.s32.totalorder %s23, %s39
    %p41 = scmp.eq.s32.totalorder %s15, 0
    %p42 = por %p40, %p41
    %s44 = sadd.s32 %s43, 1
    %p47 = scmp.eq.s32.totalorder %s9, 1
    %p48 = scmp.ne.s32.totalorder %s43, %s45
    %p49 = scmp.eq.s32.totalorder %s9, 0
    %p50 = por %p48, %p49
    %p51 = scmp.ne.s32.totalorder %s43, %s45
    %p52 = scmp.eq.s32.totalorder %s14, 1
    %p53 = por %p51, %p52
    %p54 = scmp.ne.s32.totalorder %s45, %s46
    %p55 = scmp.eq.s32.totalorder %s14, 0
    %p56 = por %p54, %p55
    %p57 = scmp.ne.s32.totalorder %s45, %s46
    %p58 = scmp.eq.s32.totalorder %s15, 1
    %p59 = por %p57, %p58
    %p61 = scmp.ne.s32.totalorder %s46, %s60
    %p62 = scmp.eq.s32.totalorder %s15, 0
    %p63 = por %p61, %p62
    %s65 = sadd.s32 %s64, 1
    %p68 = scmp.eq.s32.totalorder %s9, 1
    %p69 = scmp.ne.s32.totalorder %s64, %s66
    %p70 = scmp.eq.s32.totalorder %s9, 0
    %p71 = por %p69, %p70
    %p72 = scmp.ne.s32.totalorder %s64, %s66
    %p73 = scmp.eq.s32.totalorder %s14, 1
    %p74 = por %p72, %p73
    %p75 = scmp.ne.s32.totalorder %s66, %s67
    %p76 = scmp.eq.s32.totalorder %s14, 0
    %p77 = por %p75, %p76
    %p78 = scmp.ne.s32.totalorder %s66, %s67
    %p79 = scmp.eq.s32.totalorder %s15, 1
    %p80 = por %p78, %p79
    %p82 = scmp.ne.s32.totalorder %s67, %s81
    %p83 = scmp.eq.s32.totalorder %s15, 0
    %p84 = por %p82, %p83
    %s85 = ssub.s32 %s9, %s16
    %p86 = scmp.eq.s32.totalorder %s85, 0
    %s88 = sadd.s32 %s87, 1
    %s89 = scalar_select %p86, %s87, %s88
    %p92 = pneg %p86
    %p93 = scmp.eq.s32.totalorder %s9, 1
    %p94 = por %p92, %p93
    %p95 = scmp.ne.s32.totalorder %s87, %s90
    %p96 = scmp.eq.s32.totalorder %s9, 0
    %p97 = por %p95, %p96
    %p98 = scmp.ne.s32.totalorder %s87, %s90
    %p99 = scmp.eq.s32.totalorder %s14, 1
    %p100 = por %p98, %p99
    %p101 = scmp.ne.s32.totalorder %s90, %s91
    %p102 = scmp.eq.s32.totalorder %s14, 0
    %p103 = por %p101, %p102
    %p104 = scmp.ne.s32.totalorder %s90, %s91
    %p105 = scmp.eq.s32.totalorder %s15, 1
    %p106 = por %p104, %p105
    %p108 = scmp.ne.s32.totalorder %s91, %s107
    %p109 = scmp.eq.s32.totalorder %s15, 0
    %p110 = por %p108, %p109
    %p111 = scmp.le.s32.totalorder 1, %s9
    %p112 = scmp.lt.s32.totalorder %s9, 3
    %p113 = pnand %p111, %p112
    %p114 = pneg %p113
    // Predicated region
    $region9: #{morf_prediction_branch2.62} parent=5 // pred_check
      _
    $region10: #{morf_prediction_branch2.62} parent=5 // pred_check_branch
      %116 = sbr.rel (%p113) target = $region12
    $region11: #{morf_prediction_branch2.62} parent=5 // pred_region
      %s117 = ssub.s32 %s9, 1
      // Predicated region
      $region13: #{morf_prediction_branch2.62} parent=11 // pred_check
        %p118 = pneg %p56
      $region14: #{morf_prediction_branch2.62} parent=11 // pred_check_branch
        %120 = sbr.rel (%p118) target = $region16
      $region15: #{morf_prediction_branch2.62} parent=11 // pred_region
        _
      $region16: #{morf_prediction_branch2.62} parent=11 // pred_fallthru
        _
      // Predicated region
      $region17: #{morf_prediction_branch2.62} parent=11 // pred_check
        %p121 = pneg %p77
      $region18: #{morf_prediction_branch2.62} parent=11 // pred_check_branch
        %123 = sbr.rel (%p121) target = $region20
      $region19: #{morf_prediction_branch2.62} parent=11 // pred_region
        _
      $region20: #{morf_prediction_branch2.62} parent=11 // pred_fallthru
        _
    $region12: #{morf_prediction_branch2.62} parent=5 // pred_fallthru
      _
    %p124 = scmp.lt.s32.totalorder %s9, 2
    // Predicated region
    $region21: #{morf_prediction_branch2.62} parent=5 // pred_check
      %p125 = pneg %p124
    $region22: #{morf_prediction_branch2.62} parent=5 // pred_check_branch
      %127 = sbr.rel (%p125) target = $region24
    $region23: #{morf_prediction_branch2.62} parent=5 // pred_region
      // Predicated region
      $region25: #{morf_prediction_branch2.62} parent=23 // pred_check
        %p128 = pneg %p29
      $region26: #{morf_prediction_branch2.62} parent=23 // pred_check_branch
        %130 = sbr.rel (%p128) target = $region28
      $region27: #{morf_prediction_branch2.62} parent=23 // pred_region
        %p131 = scmp.lt.s32.totalorder %s9, 1
        %s132 = scalar_select %p131, %s9, 1
        %s133 = smul.addr %s132, 4
        %s134 = scalar_lea.vmem %s0, %s133
      $region28: #{morf_prediction_branch2.62} parent=23 // pred_fallthru
        _
    $region24: #{morf_prediction_branch2.62} parent=5 // pred_fallthru
      _
    %p135 = scmp.le.s32.totalorder 1, %s9
    %p136 = scmp.lt.s32.totalorder %s9, 3
    %p137 = pnand %p135, %p136
    %p138 = pneg %p137
    // Predicated region
    $region29: #{morf_prediction_branch2.62} parent=5 // pred_check
      _
    $region30: #{morf_prediction_branch2.62} parent=5 // pred_check_branch
      %140 = sbr.rel (%p137) target = $region32
    $region31: #{morf_prediction_branch2.62} parent=5 // pred_region
      %s141 = ssub.s32 %s9, 1
      %p142 = scmp.lt.s32.totalorder %s14, 1
      %s143 = scalar_select %p142, %s14, 1
      %s144 = smul.addr %s143, 4
      %s145 = scalar_lea.vmem %s0, %s144
      %p146 = pneg %p35
      %p147 = pneg %p32
      %p148 = pneg %p56
      %p149 = pneg %p53
      %p150 = pneg %p77
      %p151 = pneg %p74
      %p152 = pneg %p103
      %p153 = pneg %p100
      %p154 = scmp.lt.s32.totalorder %s14, 1
      %s155 = scalar_select %p154, %s14, 1
      %s156 = smul.addr %s155, 8
      %s157 = scalar_lea.vmem %s3, %s156
      %p158 = scmp.lt.s32.totalorder %s14, 1
      %s159 = scalar_select %p158, %s14, 1
      %s160 = smul.addr %s159, 4
      %s161 = scalar_lea.vmem %s0, %s160
      %p162 = scmp.lt.s32.totalorder %s14, 1
      %s163 = scalar_select %p162, %s14, 1
      %s164 = smul.addr %s163, 8
      %s165 = scalar_lea.vmem %s3, %s164
      %166 = vst [vmem:[#allocation2] sm:$0xff] 0.0
      %167 = vst [vmem:[#allocation2 + $0x8] sm:$0xf] 0.0
      %v168 = vld [vmem:[%s161] sm:$0xf]
      %v169 = vunpack.c.l.bf16 %v168
      %170 = vst [vmem:[#allocation2 + $0x2] sm:$0xff] %v169
      %v171 = vld [vmem:[#allocation2] sm:$0xff]
      %v172 = vld [vmem:[%s1] sm:$0x1]
      %v173 = vlaneseq
      %v174 = vshrl.u32 %v173, 7
      %v175 = vsub.s32 0, %v174
      %v176 = vrot.slane %v172, %v175
      %v177 = vmul.f32 %v171, %v176
      %v178 = vadd.f32 %v177, 0.0
      %v179 = vld [vmem:[#allocation2 + $0x1] sm:$0xff]
      %v180 = vld [vmem:[%s1 + $0x1] sm:$0x1]
      %v181 = vlaneseq
      %v182 = vshrl.u32 %v181, 7
      %v183 = vsub.s32 0, %v182
      %v184 = vrot.slane %v180, %v183
      %v185 = vmul.f32 %v179, %v184
      %v186 = vadd.f32 %v178, %v185
      %v187 = vld [vmem:[#allocation2 + $0x2] sm:$0xff]
      %v188 = vld [vmem:[%s1 + $0x2] sm:$0x1]
      %v189 = vlaneseq
      %v190 = vshrl.u32 %v189, 7
      %v191 = vsub.s32 0, %v190
      %v192 = vrot.slane %v188, %v191
      %v193 = vmul.f32 %v187, %v192
      %v194 = vadd.f32 %v186, %v193
      %v195 = vld [vmem:[#allocation2 + $0x3] sm:$0xff]
      %v196 = vld [vmem:[%s1 + $0x3] sm:$0x1]
      %v197 = vlaneseq
      %v198 = vshrl.u32 %v197, 7
      %v199 = vsub.s32 0, %v198
      %v200 = vrot.slane %v196, %v199
      %v201 = vmul.f32 %v195, %v200
      %v202 = vadd.f32 %v194, %v201
      %v203 = vld [vmem:[#allocation2 + $0x4] sm:$0xff]
      %v204 = vld [vmem:[%s1 + $0x4] sm:$0x1]
      %v205 = vlaneseq
      %v206 = vshrl.u32 %v205, 7
      %v207 = vsub.s32 0, %v206
      %v208 = vrot.slane %v204, %v207
      %v209 = vmul.f32 %v203, %v208
      %v210 = vadd.f32 %v202, %v209
      %v211 = vld [vmem:[%s2] sm:$0x1]
      %v213 = vlaneseq
      %v214 = vshrl.u32 %v213, 7
      %v215 = vsub.s32 0, %v214
      %v216 = vrot.slane %v211, %v215
      %v218 = vadd.f32 %v210, %v216
      %219 = vst [vmem:[%s165] sm:$0xff] %v218
      %p220 = scmp.lt.s32.totalorder %s14, 1
      %s221 = scalar_select %p220, %s14, 1
      %s222 = smul.addr %s221, 8
      %s223 = scalar_lea.vmem %s3, %s222
      // Predicated region
      $region33: #{morf_prediction_branch2.62} parent=31 // pred_check
        %p224 = pneg %p100
      $region34: #{morf_prediction_branch2.62} parent=31 // pred_check_branch
        %226 = sbr.rel (%p224) target = $region36
      $region35: #{morf_prediction_branch2.62} parent=31 // pred_region
        _
      $region36: #{morf_prediction_branch2.62} parent=31 // pred_fallthru
        _
    $region32: #{morf_prediction_branch2.62} parent=5 // pred_fallthru
      _
    %p227 = scmp.le.s32.totalorder 2, %s9
    // Predicated region
    $region37: #{morf_prediction_branch2.62} parent=5 // pred_check
      %p228 = pneg %p227
    $region38: #{morf_prediction_branch2.62} parent=5 // pred_check_branch
      %230 = sbr.rel (%p228) target = $region40
    $region39: #{morf_prediction_branch2.62} parent=5 // pred_region
      %s231 = ssub.s32 %s9, 2
      // Predicated region
      $region41: #{morf_prediction_branch2.62} parent=39 // pred_check
        %p232 = pneg %p106
      $region42: #{morf_prediction_branch2.62} parent=39 // pred_check_branch
        %234 = sbr.rel (%p232) target = $region44
      $region43: #{morf_prediction_branch2.62} parent=39 // pred_region
        %p235 = scmp.lt.s32.totalorder %s15, 1
        %s236 = scalar_select %p235, %s15, 1
        %s237 = smul.addr %s236, 8
        %s238 = scalar_lea.vmem %s3, %s237
      $region44: #{morf_prediction_branch2.62} parent=39 // pred_fallthru
        _
    $region40: #{morf_prediction_branch2.62} parent=5 // pred_fallthru
      _
  $region6: #{morf_prediction_branch2.62} parent=0 // loop_footer
    %s13 = sadd.s32 1, %s9
  $region7: #{morf_prediction_branch2.62} parent=0 // loop_footer_branch
    %8 = sbr.rel target = $region3
  $region8: #{morf_prediction_branch2.62} parent=0 // loop_exit
    _

// kernel: morf_prediction_branch2.63
$region0: #{morf_prediction_branch2.63}
  #allocation0 [shape = 'u32[]', space=smem, size = 0x4, offset = 0x4, fixed_abs, tag = 'smem constant byte address 0x4 - core index']
  #allocation1 [shape = 'u32[144,128]{1,0:T(1,128)}', space=vmem, size = 0x12000, scoped, tag = 'internal scratch']
  #allocation2 [shape = 'f32[10,64]{1,0:T(8,128)}', space=vmem, size = 0x2000, scoped, tag = 'scratch operand']
  %s0 = inlined_call_operand.vmem [shape: f32[2,8,128], index: 0, kind: input, shape index: {}]
  %s1 = inlined_call_operand.vmem [shape: bf16[64,4], index: 1, kind: input, shape index: {}]
  %s2 = inlined_call_operand.vmem [shape: bf16[4,64], index: 2, kind: input, shape index: {}]
  %s3 = inlined_call_operand.vmem [shape: f32[2,8,8], index: 3, kind: input, shape index: {}]
  %s4 = inlined_call_operand.vmem [shape: f32[3,64], index: 4, kind: input, shape index: {}]
  %s5 = inlined_call_operand.vmem [shape: f32[1,64], index: 5, kind: input, shape index: {}]
  %s6 = inlined_call_operand.vmem [shape: f32[2,8,64], index: 6, kind: output, shape index: {0}]
  %s7 = inlined_call_operand.vmem [shape: f32[2,8,64], index: 7, kind: output, shape index: {1}]
  %8 = xla_tuple %s6, %s7
  %s9 = sld [smem:[#allocation0]]
  $region65: #{morf_prediction_branch2.63} parent=0
    _
  %s11 = ssub.s32 1, %s9
  %s12 = scalar_select 0, %s11, %s9
  loop: start=0, step=1, limit=4
  $region2: #{morf_prediction_branch2.63} parent=0 // loop_pre_header
    _
  $region3: #{morf_prediction_branch2.63} parent=0 // loop_header
    %s14 = sphi 0, %s18
    %p15 = scmp.ge.s32.totalorder %s14, 4
    %s24 = sphi 0, %s26
    %s27 = sphi 0, %s24
    %s28 = sphi 0, %s27
    %s44 = sphi 0, %s28
    %s48 = sphi 0, %s48
    %s50 = sphi 0, %s48
    %s51 = sphi 0, %s50
    %s65 = sphi 0, %s51
    %s69 = sphi 0, %s69
    %s71 = sphi 0, %s69
    %s72 = sphi 0, %s71
    %s86 = sphi 0, %s72
    %s90 = sphi 0, %s90
    %s92 = sphi 0, %s90
    %s93 = sphi 0, %s92
    %s107 = sphi 0, %s93
    %s111 = sphi 0, %s111
    %s113 = sphi 0, %s111
    %s114 = sphi 0, %s113
    %s128 = sphi 0, %s114
    %s132 = sphi 0, %s132
    %s134 = sphi 0, %s132
    %s135 = sphi 0, %s134
    %s149 = sphi 0, %s135
    %s155 = sphi 0, %s157
    %s158 = sphi 0, %s155
    %s159 = sphi 0, %s158
    %s175 = sphi 0, %s159
    %s181 = sphi 0, %s183
    %s184 = sphi 0, %s181
    %s185 = sphi 0, %s184
    %s201 = sphi 0, %s185
  $region4: #{morf_prediction_branch2.63} parent=0 // loop_header_branch
    %17 = sbr.rel (%p15) target = $region8
  $region5: #{morf_prediction_branch2.63} parent=0 // loop_body
    %s19 = ssub.s32 %s14, 1
    %s20 = ssub.s32 %s14, 2
    %s21 = sadd.s32 %s14, 1
    %s22 = ssub.s32 %s14, %s21
    %p23 = scmp.eq.s32.totalorder %s22, 0
    %s25 = sadd.s32 %s24, 1
    %s26 = scalar_select %p23, %s24, %s25
    %p29 = pneg %p23
    %p30 = scmp.eq.s32.totalorder %s14, 1
    %p31 = por %p29, %p30
    %p32 = scmp.ne.s32.totalorder %s24, %s27
    %p33 = scmp.eq.s32.totalorder %s14, 0
    %p34 = por %p32, %p33
    %p35 = scmp.ne.s32.totalorder %s24, %s27
    %p36 = scmp.eq.s32.totalorder %s19, 1
    %p37 = por %p35, %p36
    %p38 = scmp.ne.s32.totalorder %s27, %s28
    %p39 = scmp.eq.s32.totalorder %s19, 0
    %p40 = por %p38, %p39
    %p41 = scmp.ne.s32.totalorder %s27, %s28
    %p42 = scmp.eq.s32.totalorder %s20, 1
    %p43 = por %p41, %p42
    %p45 = scmp.ne.s32.totalorder %s28, %s44
    %p46 = scmp.eq.s32.totalorder %s20, 0
    %p47 = por %p45, %p46
    %s49 = sadd.s32 %s48, 1
    %p52 = scmp.eq.s32.totalorder %s14, 1
    %p53 = scmp.ne.s32.totalorder %s48, %s50
    %p54 = scmp.eq.s32.totalorder %s14, 0
    %p55 = por %p53, %p54
    %p56 = scmp.ne.s32.totalorder %s48, %s50
    %p57 = scmp.eq.s32.totalorder %s19, 1
    %p58 = por %p56, %p57
    %p59 = scmp.ne.s32.totalorder %s50, %s51
    %p60 = scmp.eq.s32.totalorder %s19, 0
    %p61 = por %p59, %p60
    %p62 = scmp.ne.s32.totalorder %s50, %s51
    %p63 = scmp.eq.s32.totalorder %s20, 1
    %p64 = por %p62, %p63
    %p66 = scmp.ne.s32.totalorder %s51, %s65
    %p67 = scmp.eq.s32.totalorder %s20, 0
    %p68 = por %p66, %p67
    %s70 = sadd.s32 %s69, 1
    %p73 = scmp.eq.s32.totalorder %s14, 1
    %p74 = scmp.ne.s32.totalorder %s69, %s71
    %p75 = scmp.eq.s32.totalorder %s14, 0
    %p76 = por %p74, %p75
    %p77 = scmp.ne.s32.totalorder %s69, %s71
    %p78 = scmp.eq.s32.totalorder %s19, 1
    %p79 = por %p77, %p78
    %p80 = scmp.ne.s32.totalorder %s71, %s72
    %p81 = scmp.eq.s32.totalorder %s19, 0
    %p82 = por %p80, %p81
    %p83 = scmp.ne.s32.totalorder %s71, %s72
    %p84 = scmp.eq.s32.totalorder %s20, 1
    %p85 = por %p83, %p84
    %p87 = scmp.ne.s32.totalorder %s72, %s86
    %p88 = scmp.eq.s32.totalorder %s20, 0
    %p89 = por %p87, %p88
    %s91 = sadd.s32 %s90, 1
    %p94 = scmp.eq.s32.totalorder %s14, 1
    %p95 = scmp.ne.s32.totalorder %s90, %s92
    %p96 = scmp.eq.s32.totalorder %s14, 0
    %p97 = por %p95, %p96
    %p98 = scmp.ne.s32.totalorder %s90, %s92
    %p99 = scmp.eq.s32.totalorder %s19, 1
    %p100 = por %p98, %p99
    %p101 = scmp.ne.s32.totalorder %s92, %s93
    %p102 = scmp.eq.s32.totalorder %s19, 0
    %p103 = por %p101, %p102
    %p104 = scmp.ne.s32.totalorder %s92, %s93
    %p105 = scmp.eq.s32.totalorder %s20, 1
    %p106 = por %p104, %p105
    %p108 = scmp.ne.s32.totalorder %s93, %s107
    %p109 = scmp.eq.s32.totalorder %s20, 0
    %p110 = por %p108, %p109
    %s112 = sadd.s32 %s111, 1
    %p115 = scmp.eq.s32.totalorder %s14, 1
    %p116 = scmp.ne.s32.totalorder %s111, %s113
    %p117 = scmp.eq.s32.totalorder %s14, 0
    %p118 = por %p116, %p117
    %p119 = scmp.ne.s32.totalorder %s111, %s113
    %p120 = scmp.eq.s32.totalorder %s19, 1
    %p121 = por %p119, %p120
    %p122 = scmp.ne.s32.totalorder %s113, %s114
    %p123 = scmp.eq.s32.totalorder %s19, 0
    %p124 = por %p122, %p123
    %p125 = scmp.ne.s32.totalorder %s113, %s114
    %p126 = scmp.eq.s32.totalorder %s20, 1
    %p127 = por %p125, %p126
    %p129 = scmp.ne.s32.totalorder %s114, %s128
    %p130 = scmp.eq.s32.totalorder %s20, 0
    %p131 = por %p129, %p130
    %s133 = sadd.s32 %s132, 1
    %p136 = scmp.eq.s32.totalorder %s14, 1
    %p137 = scmp.ne.s32.totalorder %s132, %s134
    %p138 = scmp.eq.s32.totalorder %s14, 0
    %p139 = por %p137, %p138
    %p140 = scmp.ne.s32.totalorder %s132, %s134
    %p141 = scmp.eq.s32.totalorder %s19, 1
    %p142 = por %p140, %p141
    %p143 = scmp.ne.s32.totalorder %s134, %s135
    %p144 = scmp.eq.s32.totalorder %s19, 0
    %p145 = por %p143, %p144
    %p146 = scmp.ne.s32.totalorder %s134, %s135
    %p147 = scmp.eq.s32.totalorder %s20, 1
    %p148 = por %p146, %p147
    %p150 = scmp.ne.s32.totalorder %s135, %s149
    %p151 = scmp.eq.s32.totalorder %s20, 0
    %p152 = por %p150, %p151
    %s153 = ssub.s32 %s14, %s21
    %p154 = scmp.eq.s32.totalorder %s153, 0
    %s156 = sadd.s32 %s155, 1
    %s157 = scalar_select %p154, %s155, %s156
    %p160 = pneg %p154
    %p161 = scmp.eq.s32.totalorder %s14, 1
    %p162 = por %p160, %p161
    %p163 = scmp.ne.s32.totalorder %s155, %s158
    %p164 = scmp.eq.s32.totalorder %s14, 0
    %p165 = por %p163, %p164
    %p166 = scmp.ne.s32.totalorder %s155, %s158
    %p167 = scmp.eq.s32.totalorder %s19, 1
    %p168 = por %p166, %p167
    %p169 = scmp.ne.s32.totalorder %s158, %s159
    %p170 = scmp.eq.s32.totalorder %s19, 0
    %p171 = por %p169, %p170
    %p172 = scmp.ne.s32.totalorder %s158, %s159
    %p173 = scmp.eq.s32.totalorder %s20, 1
    %p174 = por %p172, %p173
    %p176 = scmp.ne.s32.totalorder %s159, %s175
    %p177 = scmp.eq.s32.totalorder %s20, 0
    %p178 = por %p176, %p177
    %s179 = ssub.s32 %s14, %s21
    %p180 = scmp.eq.s32.totalorder %s179, 0
    %s182 = sadd.s32 %s181, 1
    %s183 = scalar_select %p180, %s181, %s182
    %p186 = pneg %p180
    %p187 = scmp.eq.s32.totalorder %s14, 1
    %p188 = por %p186, %p187
    %p189 = scmp.ne.s32.totalorder %s181, %s184
    %p190 = scmp.eq.s32.totalorder %s14, 0
    %p191 = por %p189, %p190
    %p192 = scmp.ne.s32.totalorder %s181, %s184
    %p193 = scmp.eq.s32.totalorder %s19, 1
    %p194 = por %p192, %p193
    %p195 = scmp.ne.s32.totalorder %s184, %s185
    %p196 = scmp.eq.s32.totalorder %s19, 0
    %p197 = por %p195, %p196
    %p198 = scmp.ne.s32.totalorder %s184, %s185
    %p199 = scmp.eq.s32.totalorder %s20, 1
    %p200 = por %p198, %p199
    %p202 = scmp.ne.s32.totalorder %s185, %s201
    %p203 = scmp.eq.s32.totalorder %s20, 0
    %p204 = por %p202, %p203
    %p205 = scmp.le.s32.totalorder 1, %s14
    %p206 = scmp.lt.s32.totalorder %s14, 3
    %p207 = pnand %p205, %p206
    %p208 = pneg %p207
    // Predicated region
    $region9: #{morf_prediction_branch2.63} parent=5 // pred_check
      _
    $region10: #{morf_prediction_branch2.63} parent=5 // pred_check_branch
      %210 = sbr.rel (%p207) target = $region12
    $region11: #{morf_prediction_branch2.63} parent=5 // pred_region
      %s211 = ssub.s32 %s14, 1
      // Predicated region
      $region13: #{morf_prediction_branch2.63} parent=11 // pred_check
        %p212 = pneg %p61
      $region14: #{morf_prediction_branch2.63} parent=11 // pred_check_branch
        %214 = sbr.rel (%p212) target = $region16
      $region15: #{morf_prediction_branch2.63} parent=11 // pred_region
        _
      $region16: #{morf_prediction_branch2.63} parent=11 // pred_fallthru
        _
      // Predicated region
      $region17: #{morf_prediction_branch2.63} parent=11 // pred_check
        %p215 = pneg %p82
      $region18: #{morf_prediction_branch2.63} parent=11 // pred_check_branch
        %217 = sbr.rel (%p215) target = $region20
      $region19: #{morf_prediction_branch2.63} parent=11 // pred_region
        _
      $region20: #{morf_prediction_branch2.63} parent=11 // pred_fallthru
        _
      // Predicated region
      $region21: #{morf_prediction_branch2.63} parent=11 // pred_check
        %p218 = pneg %p103
      $region22: #{morf_prediction_branch2.63} parent=11 // pred_check_branch
        %220 = sbr.rel (%p218) target = $region24
      $region23: #{morf_prediction_branch2.63} parent=11 // pred_region
        _
      $region24: #{morf_prediction_branch2.63} parent=11 // pred_fallthru
        _
      // Predicated region
      $region25: #{morf_prediction_branch2.63} parent=11 // pred_check
        %p221 = pneg %p124
      $region26: #{morf_prediction_branch2.63} parent=11 // pred_check_branch
        %223 = sbr.rel (%p221) target = $region28
      $region27: #{morf_prediction_branch2.63} parent=11 // pred_region
        _
      $region28: #{morf_prediction_branch2.63} parent=11 // pred_fallthru
        _
      // Predicated region
      $region29: #{morf_prediction_branch2.63} parent=11 // pred_check
        %p224 = pneg %p145
      $region30: #{morf_prediction_branch2.63} parent=11 // pred_check_branch
        %226 = sbr.rel (%p224) target = $region32
      $region31: #{morf_prediction_branch2.63} parent=11 // pred_region
        _
      $region32: #{morf_prediction_branch2.63} parent=11 // pred_fallthru
        _
    $region12: #{morf_prediction_branch2.63} parent=5 // pred_fallthru
      _
    %p227 = scmp.lt.s32.totalorder %s14, 2
    // Predicated region
    $region33: #{morf_prediction_branch2.63} parent=5 // pred_check
      %p228 = pneg %p227
    $region34: #{morf_prediction_branch2.63} parent=5 // pred_check_branch
      %230 = sbr.rel (%p228) target = $region36
    $region35: #{morf_prediction_branch2.63} parent=5 // pred_region
      // Predicated region
      $region37: #{morf_prediction_branch2.63} parent=35 // pred_check
        %p231 = pneg %p34
      $region38: #{morf_prediction_branch2.63} parent=35 // pred_check_branch
        %233 = sbr.rel (%p231) target = $region40
      $region39: #{morf_prediction_branch2.63} parent=35 // pred_region
        %p234 = scmp.lt.s32.totalorder %s14, 1
        %s235 = scalar_select %p234, %s14, 1
        %s236 = smul.addr %s235, 8
        %s237 = scalar_lea.vmem %s0, %s236
      $region40: #{morf_prediction_branch2.63} parent=35 // pred_fallthru
        _
    $region36: #{morf_prediction_branch2.63} parent=5 // pred_fallthru
      _
    %p238 = scmp.le.s32.totalorder 1, %s14
    %p239 = scmp.lt.s32.totalorder %s14, 3
    %p240 = pnand %p238, %p239
    %p241 = pneg %p240
    // Predicated region
    $region41: #{morf_prediction_branch2.63} parent=5 // pred_check
      _
    $region42: #{morf_prediction_branch2.63} parent=5 // pred_check_branch
      %243 = sbr.rel (%p240) target = $region44
    $region43: #{morf_prediction_branch2.63} parent=5 // pred_region
      %s244 = ssub.s32 %s14, 1
      %p245 = scmp.lt.s32.totalorder %s19, 1
      %s246 = scalar_select %p245, %s19, 1
      %s247 = smul.addr %s246, 8
      %s248 = scalar_lea.vmem %s0, %s247
      %p249 = pneg %p40
      %p250 = pneg %p37
      %p251 = pneg %p61
      %p252 = pneg %p58
      %p253 = pneg %p82
      %p254 = pneg %p79
      %p255 = pneg %p103
      %p256 = pneg %p100
      %p257 = pneg %p124
      %p258 = pneg %p121
      %p259 = pneg %p145
      %p260 = pneg %p142
      %p261 = pneg %p171
      %p262 = pneg %p168
      %p263 = scmp.lt.s32.totalorder %s19, 1
      %s264 = scalar_select %p263, %s19, 1
      %s265 = smul.addr %s264, 8
      %s266 = scalar_lea.vmem %s6, %s265
      %p267 = pneg %p197
      %p268 = pneg %p194
      %p269 = scmp.lt.s32.totalorder %s19, 1
      %s270 = scalar_select %p269, %s19, 1
      %s271 = smul.addr %s270, 8
      %s272 = scalar_lea.vmem %s7, %s271
      %p273 = scmp.lt.s32.totalorder %s19, 1
      %s274 = scalar_select %p273, %s19, 1
      %s275 = smul.addr %s274, 8
      %s276 = scalar_lea.vmem %s0, %s275
      %p277 = scmp.lt.s32.totalorder %s19, 1
      %s278 = scalar_select %p277, %s19, 1
      %s279 = smul.addr %s278, 8
      %s280 = scalar_lea.vmem %s6, %s279
      %p281 = scmp.lt.s32.totalorder %s19, 1
      %s282 = scalar_select %p281, %s19, 1
      %s283 = smul.addr %s282, 8
      %s284 = scalar_lea.vmem %s7, %s283
      %v286 = vld [vmem:[%s276] sm:$0xff]
      %vm287 = vcmask 523264
      %v288 = vsel %vm287, %v286, 0.0
      %v289 = vrot.slane %v288, 4
      %v290 = vadd.f32 %v288, %v289
      %v291 = vrot.slane %v290, 2
      %v292 = vadd.f32 %v290, %v291
      %v293 = vrot.slane %v292, 1
      %v294 = vadd.f32 %v292, %v293
      %v295 = vrcp.pop 8.0
      %v296 = vmul.f32 %v294, %v295
      %v297 = vsel %vm287, %v286, -inf
      %v298 = vrot.slane %v297, 4
      %v299 = vmax.f32 %v297, %v298
      %v300 = vrot.slane %v299, 2
      %v301 = vmax.f32 %v299, %v300
      %v302 = vrot.slane %v301, 1
      %v303 = vmax.f32 %v301, %v302
      %v304 = vpack.c.bf16 %v296, %v296
      %v305 = vld [vmem:[%s1] sm:$0xf]
      %v306 = vld [vmem:[%s1 + $0x4] sm:$0xf]
      %v307 = vld [vmem:[%s1 + $0x8] sm:$0xf]
      %v308 = vld [vmem:[%s1 + $0xc] sm:$0xf]
      %v309 = vld [vmem:[%s1 + $0x10] sm:$0xf]
      %v310 = vld [vmem:[%s1 + $0x14] sm:$0xf]
      %v311 = vld [vmem:[%s1 + $0x18] sm:$0xf]
      %v312 = vld [vmem:[%s1 + $0x1c] sm:$0xf]
      %v321 = vunpack.c.l.b16 %v305
      %v322 = vunpack.c.l.b16 %v306
      %v323 = vunpack.c.l.b16 %v307
      %v324 = vunpack.c.l.b16 %v308
      %v325 = vunpack.c.l.b16 %v309
      %v326 = vunpack.c.l.b16 %v310
      %v327 = vunpack.c.l.b16 %v311
      %v328 = vunpack.c.l.b16 %v312
      %v329 = vpack.c.b16 %v322, %v321
      %v330 = vpack.c.b16 %v324, %v323
      %v331 = vpack.c.b16 %v326, %v325
      %v332 = vpack.c.b16 %v328, %v327
      %v338 = vsel %vm287, %v304, 0
      %340 = vmatprep.subr.bf16.mxu0 0
      %341 = vmatpush1.bf16.msra.mxu0 %v329
      %342 = vmatprep.subr.bf16.mxu0 0
      %343 = vmatpush1.bf16.msra.mxu0 %v330
      %344 = vmatprep.subr.bf16.mxu0 0
      %345 = vmatpush1.bf16.msra.mxu0 %v331
      %346 = vmatprep.subr.bf16.mxu0 0
      %347 = vmatpush1.bf16.msra.mxu0 %v332
      %348 = vmatprep.subr.bf16.mxu0 0
      %349 = vmatpush1.bf16.msra.mxu0 0
      %350 = vmatprep.subr.bf16.mxu0 0
      %351 = vmatpush1.bf16.msra.mxu0 0
      %352 = vmatprep.subr.bf16.mxu0 0
      %353 = vmatpush1.bf16.msra.mxu0 0
      %354 = vmatprep.subr.bf16.mxu0 0
      %355 = vmatpush1.bf16.msra.mxu0 0
      %356 = vmatprep.subr.bf16.mxu0 0
      %357 = vmatpush1.bf16.msra.mxu0 0
      %358 = vmatprep.subr.bf16.mxu0 0
      %359 = vmatpush1.bf16.msra.mxu0 0
      %360 = vmatprep.subr.bf16.mxu0 0
      %361 = vmatpush1.bf16.msra.mxu0 0
      %362 = vmatprep.subr.bf16.mxu0 0
      %363 = vmatpush1.bf16.msra.mxu0 0
      %364 = vmatprep.subr.bf16.mxu0 0
      %365 = vmatpush1.bf16.msra.mxu0 0
      %366 = vmatprep.subr.bf16.mxu0 0
      %367 = vmatpush1.bf16.msra.mxu0 0
      %368 = vmatprep.subr.bf16.mxu0 0
      %369 = vmatpush1.bf16.msra.mxu0 0
      %370 = vmatprep.subr.bf16.mxu0 0
      %371 = vmatpush1.bf16.msra.mxu0 0
      %372 = vmatprep.mubr.bf16.mxu0 0
      %373 = vmatmul.mubr.bf16.gmra.mrb[0].mxu0 %v338
      %v374 = vpop.f32.mrb[0].mxu0
      %v375 = vadd.f32 0.0, %v374
      %v376 = vpop.f32.mrb[0].mxu0
      %v377 = vpop.f32.mrb[0].mxu0
      %v378 = vpop.f32.mrb[0].mxu0
      %379 = vdwg.mxu0
      %v380 = vxor.u32 %v375, 2147483648
      %v381 = vmul.f32 %v380, 1.442695
      %v382 = vpow.pop %v381
      %v383 = vadd.f32 %v382, 1.0
      %v384 = vrcp.pop %v383
      %v385 = vmul.f32 1.0, %v384
      %v386 = vmul.f32 %v375, %v385
      %v387 = vpack.c.bf16 %v386, %v386
      %v388 = vld [vmem:[%s2] sm:$0x3]
      %v389 = vpack.c.bf16 %v303, %v303
      %v391 = vsel %vm287, %v389, 0
      %393 = vmatprep.subr.bf16.mxu0 0
      %394 = vmatpush1.bf16.msra.mxu0 %v329
      %395 = vmatprep.subr.bf16.mxu0 0
      %396 = vmatpush1.bf16.msra.mxu0 %v330
      %397 = vmatprep.subr.bf16.mxu0 0
      %398 = vmatpush1.bf16.msra.mxu0 %v331
      %399 = vmatprep.subr.bf16.mxu0 0
      %400 = vmatpush1.bf16.msra.mxu0 %v332
      %401 = vmatprep.subr.bf16.mxu0 0
      %402 = vmatpush1.bf16.msra.mxu0 0
      %403 = vmatprep.subr.bf16.mxu0 0
      %404 = vmatpush1.bf16.msra.mxu0 0
      %405 = vmatprep.subr.bf16.mxu0 0
      %406 = vmatpush1.bf16.msra.mxu0 0
      %407 = vmatprep.subr.bf16.mxu0 0
      %408 = vmatpush1.bf16.msra.mxu0 0
      %409 = vmatprep.subr.bf16.mxu0 0
      %410 = vmatpush1.bf16.msra.mxu0 0
      %411 = vmatprep.subr.bf16.mxu0 0
      %412 = vmatpush1.bf16.msra.mxu0 0
      %413 = vmatprep.subr.bf16.mxu0 0
      %414 = vmatpush1.bf16.msra.mxu0 0
      %415 = vmatprep.subr.bf16.mxu0 0
      %416 = vmatpush1.bf16.msra.mxu0 0
      %417 = vmatprep.subr.bf16.mxu0 0
      %418 = vmatpush1.bf16.msra.mxu0 0
      %419 = vmatprep.subr.bf16.mxu0 0
      %420 = vmatpush1.bf16.msra.mxu0 0
      %421 = vmatprep.subr.bf16.mxu0 0
      %422 = vmatpush1.bf16.msra.mxu0 0
      %423 = vmatprep.subr.bf16.mxu0 0
      %424 = vmatpush1.bf16.msra.mxu0 0
      %425 = vmatprep.mubr.bf16.mxu0 0
      %426 = vmatmul.mubr.bf16.gmra.mrb[0].mxu0 %v391
      %v427 = vpop.f32.mrb[0].mxu0
      %v428 = vadd.f32 0.0, %v427
      %v429 = vpop.f32.mrb[0].mxu0
      %v430 = vpop.f32.mrb[0].mxu0
      %v431 = vpop.f32.mrb[0].mxu0
      %432 = vdwg.mxu0
      %v433 = vxor.u32 %v428, 2147483648
      %v434 = vmul.f32 %v433, 1.442695
      %v435 = vpow.pop %v434
      %v436 = vadd.f32 %v435, 1.0
      %v437 = vrcp.pop %v436
      %v438 = vmul.f32 1.0, %v437
      %v439 = vmul.f32 %v428, %v438
      %v440 = vpack.c.bf16 %v439, %v439
      %vm441 = vcmask 31744
      %v443 = vsel %vm441, %v440, 0
      %vm445 = vcmask 1041408
      %v447 = vsel %vm445, %v388, 0
      %449 = vmatprep.subr.bf16.mxu0 0
      %450 = vmatpush1.bf16.msra.mxu0 %v447
      %451 = vmatprep.subr.bf16.mxu0 0
      %452 = vmatpush1.bf16.msra.mxu0 0
      %453 = vmatprep.subr.bf16.mxu0 0
      %454 = vmatpush1.bf16.msra.mxu0 0
      %455 = vmatprep.subr.bf16.mxu0 0
      %456 = vmatpush1.bf16.msra.mxu0 0
      %457 = vmatprep.subr.bf16.mxu0 0
      %458 = vmatpush1.bf16.msra.mxu0 0
      %459 = vmatprep.subr.bf16.mxu0 0
      %460 = vmatpush1.bf16.msra.mxu0 0
      %461 = vmatprep.subr.bf16.mxu0 0
      %462 = vmatpush1.bf16.msra.mxu0 0
      %463 = vmatprep.subr.bf16.mxu0 0
      %464 = vmatpush1.bf16.msra.mxu0 0
      %465 = vmatprep.subr.bf16.mxu0 0
      %466 = vmatpush1.bf16.msra.mxu0 0
      %467 = vmatprep.subr.bf16.mxu0 0
      %468 = vmatpush1.bf16.msra.mxu0 0
      %469 = vmatprep.subr.bf16.mxu0 0
      %470 = vmatpush1.bf16.msra.mxu0 0
      %471 = vmatprep.subr.bf16.mxu0 0
      %472 = vmatpush1.bf16.msra.mxu0 0
      %473 = vmatprep.subr.bf16.mxu0 0
      %474 = vmatpush1.bf16.msra.mxu0 0
      %475 = vmatprep.subr.bf16.mxu0 0
      %476 = vmatpush1.bf16.msra.mxu0 0
      %477 = vmatprep.subr.bf16.mxu0 0
      %478 = vmatpush1.bf16.msra.mxu0 0
      %479 = vmatprep.subr.bf16.mxu0 0
      %480 = vmatpush1.bf16.msra.mxu0 0
      %481 = vmatprep.mubr.bf16.mxu0 0
      %482 = vmatmul.mubr.bf16.gmra.mrb[0].mxu0 %v443
      %v483 = vpop.f32.mrb[0].mxu0
      %v484 = vadd.f32 0.0, %v483
      %v485 = vpop.f32.mrb[0].mxu0
      %v486 = vpop.f32.mrb[0].mxu0
      %v487 = vpop.f32.mrb[0].mxu0
      %488 = vdwg.mxu0
      %v490 = vsel %vm441, %v387, 0
      %492 = vmatprep.subr.bf16.mxu0 0
      %493 = vmatpush1.bf16.msra.mxu0 %v447
      %494 = vmatprep.subr.bf16.mxu0 0
      %495 = vmatpush1.bf16.msra.mxu0 0
      %496 = vmatprep.subr.bf16.mxu0 0
      %497 = vmatpush1.bf16.msra.mxu0 0
      %498 = vmatprep.subr.bf16.mxu0 0
      %499 = vmatpush1.bf16.msra.mxu0 0
      %500 = vmatprep.subr.bf16.mxu0 0
      %501 = vmatpush1.bf16.msra.mxu0 0
      %502 = vmatprep.subr.bf16.mxu0 0
      %503 = vmatpush1.bf16.msra.mxu0 0
      %504 = vmatprep.subr.bf16.mxu0 0
      %505 = vmatpush1.bf16.msra.mxu0 0
      %506 = vmatprep.subr.bf16.mxu0 0
      %507 = vmatpush1.bf16.msra.mxu0 0
      %508 = vmatprep.subr.bf16.mxu0 0
      %509 = vmatpush1.bf16.msra.mxu0 0
      %510 = vmatprep.subr.bf16.mxu0 0
      %511 = vmatpush1.bf16.msra.mxu0 0
      %512 = vmatprep.subr.bf16.mxu0 0
      %513 = vmatpush1.bf16.msra.mxu0 0
      %514 = vmatprep.subr.bf16.mxu0 0
      %515 = vmatpush1.bf16.msra.mxu0 0
      %516 = vmatprep.subr.bf16.mxu0 0
      %517 = vmatpush1.bf16.msra.mxu0 0
      %518 = vmatprep.subr.bf16.mxu0 0
      %519 = vmatpush1.bf16.msra.mxu0 0
      %520 = vmatprep.subr.bf16.mxu0 0
      %521 = vmatpush1.bf16.msra.mxu0 0
      %522 = vmatprep.subr.bf16.mxu0 0
      %523 = vmatpush1.bf16.msra.mxu0 0
      %524 = vmatprep.mubr.bf16.mxu0 0
      %525 = vmatmul.mubr.bf16.gmra.mrb[0].mxu0 %v490
      %v526 = vpop.f32.mrb[0].mxu0
      %v527 = vadd.f32 %v484, %v526
      %v528 = vpop.f32.mrb[0].mxu0
      %v529 = vpop.f32.mrb[0].mxu0
      %v530 = vpop.f32.mrb[0].mxu0
      %531 = vdwg.mxu0
      %v532 = vxor.u32 %v527, 2147483648
      %v533 = vmul.f32 %v532, 1.442695
      %v534 = vpow.pop %v533
      %v535 = vadd.f32 %v534, 1.0
      %v536 = vrcp.pop %v535
      %v537 = vmul.f32 1.0, %v536
      %v538 = vlaneseq
      %v539 = vshrl.u32 %v538, 7
      %v540 = vsub.s32 0, %v539
      %v541 = vrot.slane %v537, %v540
      %v542 = vmul.f32 %v286, %v541
      %544 = vrot.lane.b32.xlu0 %v286, 64
      %v545 = vpop.permute.xlu0 %544
      %v547 = vsel %vm287, %v545, 0.0
      %548 = vadd.xlane.f32.xlu0 %v547
      %v549 = vpop.xlane.xlu0 %548
      %v550 = vrcp.pop 64.0
      %v551 = vmul.f32 %v549, %v550
      %vm552 = vcmask 1048064
      %v553 = vsel %vm552, %v286, -inf
      %554 = vmax.xlane.f32.xlu0 %v553
      %v555 = vpop.xlane.xlu0 %554
      %v556 = vld [vmem:[%s3] sm:$0xff]
      %s557 = scalar_lea.vmem %s3, 8
      %v558 = vld [vmem:[%s557] sm:$0xff]
      %vm559 = vcmask 64512
      %v561 = vsel %vm559, %v558, 0
      %563 = vmatprep.subr.mxu0 0.0
      %564 = vmatpush1.msra.mxu0 %v555
      %565 = vmatprep.subr.mxu0 0.0
      %566 = vmatpush1.msra.mxu0 0.0
      %567 = vmatprep.subr.mxu0 0.0
      %568 = vmatpush1.msra.mxu0 0.0
      %569 = vmatprep.subr.mxu0 0.0
      %570 = vmatpush1.msra.mxu0 0.0
      %571 = vmatprep.subr.mxu0 0.0
      %572 = vmatpush1.msra.mxu0 0.0
      %573 = vmatprep.subr.mxu0 0.0
      %574 = vmatpush1.msra.mxu0 0.0
      %575 = vmatprep.subr.mxu0 0.0
      %576 = vmatpush1.msra.mxu0 0.0
      %577 = vmatprep.subr.mxu0 0.0
      %578 = vmatpush1.msra.mxu0 0.0
      %579 = vmatprep.subr.mxu0 0.0
      %580 = vmatpush1.msra.mxu0 0.0
      %581 = vmatprep.subr.mxu0 0.0
      %582 = vmatpush1.msra.mxu0 0.0
      %583 = vmatprep.subr.mxu0 0.0
      %584 = vmatpush1.msra.mxu0 0.0
      %585 = vmatprep.subr.mxu0 0.0
      %586 = vmatpush1.msra.mxu0 0.0
      %587 = vmatprep.subr.mxu0 0.0
      %588 = vmatpush1.msra.mxu0 0.0
      %589 = vmatprep.subr.mxu0 0.0
      %590 = vmatpush1.msra.mxu0 0.0
      %591 = vmatprep.subr.mxu0 0.0
      %592 = vmatpush1.msra.mxu0 0.0
      %593 = vmatprep.subr.mxu0 0.0
      %594 = vmatpush1.msra.mxu0 0.0
      %595 = vmatprep.subr.mxu0 0.0
      %596 = vmatpush1.msra.mxu0 0.0
      %597 = vmatprep.subr.mxu0 0.0
      %598 = vmatpush1.msra.mxu0 0.0
      %599 = vmatprep.subr.mxu0 0.0
      %600 = vmatpush1.msra.mxu0 0.0
      %601 = vmatprep.subr.mxu0 0.0
      %602 = vmatpush1.msra.mxu0 0.0
      %603 = vmatprep.subr.mxu0 0.0
      %604 = vmatpush1.msra.mxu0 0.0
      %605 = vmatprep.subr.mxu0 0.0
      %606 = vmatpush1.msra.mxu0 0.0
      %607 = vmatprep.subr.mxu0 0.0
      %608 = vmatpush1.msra.mxu0 0.0
      %609 = vmatprep.subr.mxu0 0.0
      %610 = vmatpush1.msra.mxu0 0.0
      %611 = vmatprep.subr.mxu0 0.0
      %612 = vmatpush1.msra.mxu0 0.0
      %613 = vmatprep.subr.mxu0 0.0
      %614 = vmatpush1.msra.mxu0 0.0
      %615 = vmatprep.subr.mxu0 0.0
      %616 = vmatpush1.msra.mxu0 0.0
      %617 = vmatprep.subr.mxu0 0.0
      %618 = vmatpush1.msra.mxu0 0.0
      %619 = vmatprep.subr.mxu0 0.0
      %620 = vmatpush1.msra.mxu0 0.0
      %621 = vmatprep.subr.mxu0 0.0
      %622 = vmatpush1.msra.mxu0 0.0
      %623 = vmatprep.subr.mxu0 0.0
      %624 = vmatpush1.msra.mxu0 0.0
      %625 = vmatprep.subr.mxu0 0.0
      %626 = vmatpush1.msra.mxu0 0.0
      %627 = vmatprep.mubr.f32.mxu0 0.0
      %628 = vmatmul.mubr.f32.gmra.mrb[0].mxu0 %v561
      %v629 = vpop.f32.mrb[0].mxu0
      %v630 = vadd.f32 0.0, %v629
      %v631 = vpop.f32.mrb[0].mxu0
      %632 = vdwg.mxu0
      %v634 = vsel %vm559, %v556, 0
      %636 = vmatprep.subr.mxu0 0.0
      %637 = vmatpush1.msra.mxu0 %v551
      %638 = vmatprep.subr.mxu0 0.0
      %639 = vmatpush1.msra.mxu0 0.0
      %640 = vmatprep.subr.mxu0 0.0
      %641 = vmatpush1.msra.mxu0 0.0
      %642 = vmatprep.subr.mxu0 0.0
      %643 = vmatpush1.msra.mxu0 0.0
      %644 = vmatprep.subr.mxu0 0.0
      %645 = vmatpush1.msra.mxu0 0.0
      %646 = vmatprep.subr.mxu0 0.0
      %647 = vmatpush1.msra.mxu0 0.0
      %648 = vmatprep.subr.mxu0 0.0
      %649 = vmatpush1.msra.mxu0 0.0
      %650 = vmatprep.subr.mxu0 0.0
      %651 = vmatpush1.msra.mxu0 0.0
      %652 = vmatprep.subr.mxu0 0.0
      %653 = vmatpush1.msra.mxu0 0.0
      %654 = vmatprep.subr.mxu0 0.0
      %655 = vmatpush1.msra.mxu0 0.0
      %656 = vmatprep.subr.mxu0 0.0
      %657 = vmatpush1.msra.mxu0 0.0
      %658 = vmatprep.subr.mxu0 0.0
      %659 = vmatpush1.msra.mxu0 0.0
      %660 = vmatprep.subr.mxu0 0.0
      %661 = vmatpush1.msra.mxu0 0.0
      %662 = vmatprep.subr.mxu0 0.0
      %663 = vmatpush1.msra.mxu0 0.0
      %664 = vmatprep.subr.mxu0 0.0
      %665 = vmatpush1.msra.mxu0 0.0
      %666 = vmatprep.subr.mxu0 0.0
      %667 = vmatpush1.msra.mxu0 0.0
      %668 = vmatprep.subr.mxu0 0.0
      %669 = vmatpush1.msra.mxu0 0.0
      %670 = vmatprep.subr.mxu0 0.0
      %671 = vmatpush1.msra.mxu0 0.0
      %672 = vmatprep.subr.mxu0 0.0
      %673 = vmatpush1.msra.mxu0 0.0
      %674 = vmatprep.subr.mxu0 0.0
      %675 = vmatpush1.msra.mxu0 0.0
      %676 = vmatprep.subr.mxu0 0.0
      %677 = vmatpush1.msra.mxu0 0.0
      %678 = vmatprep.subr.mxu0 0.0
      %679 = vmatpush1.msra.mxu0 0.0
      %680 = vmatprep.subr.mxu0 0.0
      %681 = vmatpush1.msra.mxu0 0.0
      %682 = vmatprep.subr.mxu0 0.0
      %683 = vmatpush1.msra.mxu0 0.0
      %684 = vmatprep.subr.mxu0 0.0
      %685 = vmatpush1.msra.mxu0 0.0
      %686 = vmatprep.subr.mxu0 0.0
      %687 = vmatpush1.msra.mxu0 0.0
      %688 = vmatprep.subr.mxu0 0.0
      %689 = vmatpush1.msra.mxu0 0.0
      %690 = vmatprep.subr.mxu0 0.0
      %691 = vmatpush1.msra.mxu0 0.0
      %692 = vmatprep.subr.mxu0 0.0
      %693 = vmatpush1.msra.mxu0 0.0
      %694 = vmatprep.subr.mxu0 0.0
      %695 = vmatpush1.msra.mxu0 0.0
      %696 = vmatprep.subr.mxu0 0.0
      %697 = vmatpush1.msra.mxu0 0.0
      %698 = vmatprep.subr.mxu0 0.0
      %699 = vmatpush1.msra.mxu0 0.0
      %700 = vmatprep.mubr.f32.mxu0 0.0
      %701 = vmatmul.mubr.f32.gmra.mrb[0].mxu0 %v634
      %v702 = vpop.f32.mrb[0].mxu0
      %v703 = vadd.f32 %v630, %v702
      %v704 = vpop.f32.mrb[0].mxu0
      %705 = vdwg.mxu0
      %v706 = vxor.u32 %v703, 2147483648
      %v707 = vmul.f32 %v706, 1.442695
      %v708 = vpow.pop %v707
      %v709 = vadd.f32 %v708, 1.0
      %v710 = vrcp.pop %v709
      %v711 = vmul.f32 1.0, %v710
      %713 = vset.pattern.permute.xlu0 0
      %714 = vperm.xlu0 %713, %v711
      %v715 = vpop.permute.xlu0 %714
      %v717 = vmul.f32 %v286, %v715
      %719 = vrot.lane.b32.xlu0 %v717, 64
      %v720 = vpop.permute.xlu0 %719
      %722 = vst.msk [vmem:[%s284] sm:$0xff] %vm287, %v720
      %723 = vst.msk [vmem:[#allocation2] sm:$0xff] %vm287, 0.0
      %vm724 = vcmask 517120
      %725 = vst.msk [vmem:[#allocation2 + $0x8] sm:$0x3] %vm724, 0.0
      %726 = vst.msk [vmem:[#allocation2 + $0x2] sm:$0xff] %vm287, %v542
      %v727 = vld [vmem:[#allocation2] sm:$0xff]
      %v728 = vld [vmem:[%s4] sm:$0x1]
      %v729 = vlaneseq
      %v730 = vshrl.u32 %v729, 7
      %v731 = vsub.s32 0, %v730
      %v732 = vrot.slane %v728, %v731
      %v733 = vmul.f32 %v727, %v732
      %v734 = vadd.f32 %v733, 0.0
      %v735 = vld [vmem:[#allocation2 + $0x1] sm:$0xff]
      %v736 = vld [vmem:[%s4 + $0x1] sm:$0x1]
      %v737 = vlaneseq
      %v738 = vshrl.u32 %v737, 7
      %v739 = vsub.s32 0, %v738
      %v740 = vrot.slane %v736, %v739
      %v741 = vmul.f32 %v735, %v740
      %v742 = vadd.f32 %v734, %v741
      %v743 = vld [vmem:[#allocation2 + $0x2] sm:$0xff]
      %v744 = vld [vmem:[%s4 + $0x2] sm:$0x1]
      %v745 = vlaneseq
      %v746 = vshrl.u32 %v745, 7
      %v747 = vsub.s32 0, %v746
      %v748 = vrot.slane %v744, %v747
      %v749 = vmul.f32 %v743, %v748
      %v750 = vadd.f32 %v742, %v749
      %v751 = vld [vmem:[%s5] sm:$0x1]
      %v753 = vlaneseq
      %v754 = vshrl.u32 %v753, 7
      %v755 = vsub.s32 0, %v754
      %v756 = vrot.slane %v751, %v755
      %v758 = vadd.f32 %v750, %v756
      %v759 = vxor.u32 %v758, 2147483648
      %v760 = vmul.f32 %v759, 1.442695
      %v761 = vpow.pop %v760
      %v762 = vadd.f32 %v761, 1.0
      %v763 = vrcp.pop %v762
      %v764 = vmul.f32 1.0, %v763
      %v765 = vmul.f32 %v758, %v764
      %766 = vst.msk [vmem:[%s280] sm:$0xff] %vm287, %v765
      %p767 = scmp.lt.s32.totalorder %s19, 1
      %s768 = scalar_select %p767, %s19, 1
      %s769 = smul.addr %s768, 8
      %s770 = scalar_lea.vmem %s6, %s769
      %p771 = scmp.lt.s32.totalorder %s19, 1
      %s772 = scalar_select %p771, %s19, 1
      %s773 = smul.addr %s772, 8
      %s774 = scalar_lea.vmem %s7, %s773
      // Predicated region
      $region45: #{morf_prediction_branch2.63} parent=43 // pred_check
        %p775 = pneg %p168
      $region46: #{morf_prediction_branch2.63} parent=43 // pred_check_branch
        %777 = sbr.rel (%p775) target = $region48
      $region47: #{morf_prediction_branch2.63} parent=43 // pred_region
        _
      $region48: #{morf_prediction_branch2.63} parent=43 // pred_fallthru
        _
      // Predicated region
      $region49: #{morf_prediction_branch2.63} parent=43 // pred_check
        %p778 = pneg %p194
      $region50: #{morf_prediction_branch2.63} parent=43 // pred_check_branch
        %780 = sbr.rel (%p778) target = $region52
      $region51: #{morf_prediction_branch2.63} parent=43 // pred_region
        _
      $region52: #{morf_prediction_branch2.63} parent=43 // pred_fallthru
        _
    $region44: #{morf_prediction_branch2.63} parent=5 // pred_fallthru
      _
    %p781 = scmp.le.s32.totalorder 2, %s14
    // Predicated region
    $region53: #{morf_prediction_branch2.63} parent=5 // pred_check
      %p782 = pneg %p781
    $region54: #{morf_prediction_branch2.63} parent=5 // pred_check_branch
      %784 = sbr.rel (%p782) target = $region56
    $region55: #{morf_prediction_branch2.63} parent=5 // pred_region
      %s785 = ssub.s32 %s14, 2
      // Predicated region
      $region57: #{morf_prediction_branch2.63} parent=55 // pred_check
        %p786 = pneg %p174
      $region58: #{morf_prediction_branch2.63} parent=55 // pred_check_branch
        %788 = sbr.rel (%p786) target = $region60
      $region59: #{morf_prediction_branch2.63} parent=55 // pred_region
        %p789 = scmp.lt.s32.totalorder %s20, 1
        %s790 = scalar_select %p789, %s20, 1
        %s791 = smul.addr %s790, 8
        %s792 = scalar_lea.vmem %s6, %s791
      $region60: #{morf_prediction_branch2.63} parent=55 // pred_fallthru
        _
      // Predicated region
      $region61: #{morf_prediction_branch2.63} parent=55 // pred_check
        %p793 = pneg %p200
      $region62: #{morf_prediction_branch2.63} parent=55 // pred_check_branch
        %795 = sbr.rel (%p793) target = $region64
      $region63: #{morf_prediction_branch2.63} parent=55 // pred_region
        %p796 = scmp.lt.s32.totalorder %s20, 1
        %s797 = scalar_select %p796, %s20, 1
        %s798 = smul.addr %s797, 8
        %s799 = scalar_lea.vmem %s7, %s798
      $region64: #{morf_prediction_branch2.63} parent=55 // pred_fallthru
        _
    $region56: #{morf_prediction_branch2.63} parent=5 // pred_fallthru
      _
  $region6: #{morf_prediction_branch2.63} parent=0 // loop_footer
    %s18 = sadd.s32 1, %s14
  $region7: #{morf_prediction_branch2.63} parent=0 // loop_footer_branch
    %13 = sbr.rel target = $region3
  $region8: #{morf_prediction_branch2.63} parent=0 // loop_exit
    _

// kernel: morf_prediction_branch2.64
$region0: #{morf_prediction_branch2.64}
  #allocation0 [shape = 'u32[]', space=smem, size = 0x4, offset = 0x4, fixed_abs, tag = 'smem constant byte address 0x4 - core index']
  #allocation1 [shape = 'u32[144,128]{1,0:T(1,128)}', space=vmem, size = 0x12000, scoped, tag = 'internal scratch']
  #allocation2 [shape = 'f32[16,128]{1,0:T(8,128)}', space=vmem, size = 0x2000, scoped, tag = 'scratch operand']
  %s0 = inlined_call_operand.vmem [shape: f32[16,128], index: 0, kind: input, shape index: {}]
  %s1 = inlined_call_operand.vmem [shape: bf16[128,128], index: 1, kind: input, shape index: {}]
  %s2 = inlined_call_operand.vmem [shape: f32[1,128], index: 2, kind: input, shape index: {}]
  %s3 = inlined_call_operand.vmem [shape: f32[16,128], index: 3, kind: output, shape index: {}]
  %s4 = sld [smem:[#allocation0]]
  $region30: #{morf_prediction_branch2.64} parent=0
    _
  %s6 = ssub.s32 1, %s4
  %s7 = scalar_select 0, %s6, %s4
  // Predicated region
  $region2: #{morf_prediction_branch2.64} parent=0 // pred_check
    _
  $region3: #{morf_prediction_branch2.64} parent=0 // pred_check_branch
    %9 = sbr.rel (0) target = $region5
  $region4: #{morf_prediction_branch2.64} parent=0 // pred_region
    _
  $region5: #{morf_prediction_branch2.64} parent=0 // pred_fallthru
    _
  // Predicated region
  $region6: #{morf_prediction_branch2.64} parent=0 // pred_check
    _
  $region7: #{morf_prediction_branch2.64} parent=0 // pred_check_branch
    %11 = sbr.rel (0) target = $region9
  $region8: #{morf_prediction_branch2.64} parent=0 // pred_region
    _
  $region9: #{morf_prediction_branch2.64} parent=0 // pred_fallthru
    _
  // Predicated region
  $region10: #{morf_prediction_branch2.64} parent=0 // pred_check
    _
  $region11: #{morf_prediction_branch2.64} parent=0 // pred_check_branch
    %13 = sbr.rel (0) target = $region13
  $region12: #{morf_prediction_branch2.64} parent=0 // pred_region
    _
  $region13: #{morf_prediction_branch2.64} parent=0 // pred_fallthru
    _
  %p15 = scmp.eq.s32.totalorder 0, 0
  // Predicated region
  $region14: #{morf_prediction_branch2.64} parent=0 // pred_check
    %p16 = pneg %p15
  $region15: #{morf_prediction_branch2.64} parent=0 // pred_check_branch
    %18 = sbr.rel (%p16) target = $region17
  $region16: #{morf_prediction_branch2.64} parent=0 // pred_region
    %19 = vst [vmem:[#allocation2] sm:$0xff] 0.0
    %20 = vst [vmem:[#allocation2 + $0x8] sm:$0xff] 0.0
  $region17: #{morf_prediction_branch2.64} parent=0 // pred_fallthru
    _
  %v21 = vld [vmem:[%s0] sm:$0xff]
  %v22 = vld [vmem:[%s0 + $0x8] sm:$0xff]
  %v23 = vpack.c.bf16 %v22, %v21
  %v24 = vld [vmem:[#allocation2] sm:$0xff]
  %v25 = vld [vmem:[#allocation2 + $0x8] sm:$0xff]
  %v26 = vld [vmem:[%s1] sm:$0xf]
  %v27 = vld [vmem:[%s1 + $0x4] sm:$0xf]
  %v28 = vld [vmem:[%s1 + $0x8] sm:$0xf]
  %v29 = vld [vmem:[%s1 + $0xc] sm:$0xf]
  %v30 = vld [vmem:[%s1 + $0x10] sm:$0xf]
  %v31 = vld [vmem:[%s1 + $0x14] sm:$0xf]
  %v32 = vld [vmem:[%s1 + $0x18] sm:$0xf]
  %v33 = vld [vmem:[%s1 + $0x1c] sm:$0xf]
  %v34 = vld [vmem:[%s1 + $0x20] sm:$0xf]
  %v35 = vld [vmem:[%s1 + $0x24] sm:$0xf]
  %v36 = vld [vmem:[%s1 + $0x28] sm:$0xf]
  %v37 = vld [vmem:[%s1 + $0x2c] sm:$0xf]
  %v38 = vld [vmem:[%s1 + $0x30] sm:$0xf]
  %v39 = vld [vmem:[%s1 + $0x34] sm:$0xf]
  %v40 = vld [vmem:[%s1 + $0x38] sm:$0xf]
  %v41 = vld [vmem:[%s1 + $0x3c] sm:$0xf]
  %v58 = vunpack.c.l.b16 %v26
  %v59 = vunpack.c.l.b16 %v27
  %v60 = vunpack.c.l.b16 %v28
  %v61 = vunpack.c.l.b16 %v29
  %v62 = vunpack.c.l.b16 %v30
  %v63 = vunpack.c.l.b16 %v31
  %v64 = vunpack.c.l.b16 %v32
  %v65 = vunpack.c.l.b16 %v33
  %v66 = vunpack.c.l.b16 %v34
  %v67 = vunpack.c.l.b16 %v35
  %v68 = vunpack.c.l.b16 %v36
  %v69 = vunpack.c.l.b16 %v37
  %v70 = vunpack.c.l.b16 %v38
  %v71 = vunpack.c.l.b16 %v39
  %v72 = vunpack.c.l.b16 %v40
  %v73 = vunpack.c.l.b16 %v41
  %v74 = vpack.c.b16 %v59, %v58
  %v75 = vpack.c.b16 %v61, %v60
  %v76 = vpack.c.b16 %v63, %v62
  %v77 = vpack.c.b16 %v65, %v64
  %v78 = vpack.c.b16 %v67, %v66
  %v79 = vpack.c.b16 %v69, %v68
  %v80 = vpack.c.b16 %v71, %v70
  %v81 = vpack.c.b16 %v73, %v72
  %90 = vmatprep.subr.bf16.mxu0 0
  %91 = vmatpush1.bf16.msra.mxu0 %v74
  %92 = vmatprep.subr.bf16.mxu0 0
  %93 = vmatpush1.bf16.msra.mxu0 %v75
  %94 = vmatprep.subr.bf16.mxu0 0
  %95 = vmatpush1.bf16.msra.mxu0 %v76
  %96 = vmatprep.subr.bf16.mxu0 0
  %97 = vmatpush1.bf16.msra.mxu0 %v77
  %98 = vmatprep.subr.bf16.mxu0 0
  %99 = vmatpush1.bf16.msra.mxu0 %v78
  %100 = vmatprep.subr.bf16.mxu0 0
  %101 = vmatpush1.bf16.msra.mxu0 %v79
  %102 = vmatprep.subr.bf16.mxu0 0
  %103 = vmatpush1.bf16.msra.mxu0 %v80
  %104 = vmatprep.subr.bf16.mxu0 0
  %105 = vmatpush1.bf16.msra.mxu0 %v81
  %106 = vmatprep.subr.bf16.mxu0 0
  %107 = vmatpush1.bf16.msra.mxu0 0
  %108 = vmatprep.subr.bf16.mxu0 0
  %109 = vmatpush1.bf16.msra.mxu0 0
  %110 = vmatprep.subr.bf16.mxu0 0
  %111 = vmatpush1.bf16.msra.mxu0 0
  %112 = vmatprep.subr.bf16.mxu0 0
  %113 = vmatpush1.bf16.msra.mxu0 0
  %114 = vmatprep.subr.bf16.mxu0 0
  %115 = vmatpush1.bf16.msra.mxu0 0
  %116 = vmatprep.subr.bf16.mxu0 0
  %117 = vmatpush1.bf16.msra.mxu0 0
  %118 = vmatprep.subr.bf16.mxu0 0
  %119 = vmatpush1.bf16.msra.mxu0 0
  %120 = vmatprep.subr.bf16.mxu0 0
  %121 = vmatpush1.bf16.msra.mxu0 0
  %122 = vmatprep.mubr.bf16.mxu0 0
  %123 = vmatmul.mubr.bf16.gmra.mrb[0].mxu0 %v23
  %v124 = vpop.f32.mrb[0].mxu0
  %v125 = vadd.f32 0.0, %v124
  %v126 = vpop.f32.mrb[0].mxu0
  %v127 = vpop.f32.mrb[0].mxu0
  %v128 = vadd.f32 0.0, %v127
  %v129 = vpop.f32.mrb[0].mxu0
  %130 = vdwg.mxu0
  %v131 = vadd.f32 %v24, %v125
  %v132 = vadd.f32 %v25, %v128
  %133 = vst [vmem:[#allocation2] sm:$0xff] %v131
  %134 = vst [vmem:[#allocation2 + $0x8] sm:$0xff] %v132
  // Predicated region
  $region18: #{morf_prediction_branch2.64} parent=0 // pred_check
    %p135 = pneg %p15
  $region19: #{morf_prediction_branch2.64} parent=0 // pred_check_branch
    %137 = sbr.rel (%p135) target = $region21
  $region20: #{morf_prediction_branch2.64} parent=0 // pred_region
    %v138 = vld [vmem:[#allocation2] sm:$0xff]
    %v139 = vld [vmem:[#allocation2 + $0x8] sm:$0xff]
    %v140 = vld [vmem:[%s2] sm:$0x1]
    %v142 = vlaneseq
    %v143 = vshrl.u32 %v142, 7
    %v144 = vsub.s32 0, %v143
    %v145 = vrot.slane %v140, %v144
    %v147 = vadd.f32 %v138, %v145
    %v148 = vadd.f32 %v139, %v145
    %149 = vst [vmem:[%s3] sm:$0xff] %v147
    %150 = vst [vmem:[%s3 + $0x8] sm:$0xff] %v148
  $region21: #{morf_prediction_branch2.64} parent=0 // pred_fallthru
    _
  // Predicated region
  $region22: #{morf_prediction_branch2.64} parent=0 // pred_check
    _
  $region23: #{morf_prediction_branch2.64} parent=0 // pred_check_branch
    %152 = sbr.rel (0) target = $region25
  $region24: #{morf_prediction_branch2.64} parent=0 // pred_region
    _
  $region25: #{morf_prediction_branch2.64} parent=0 // pred_fallthru
    _
  // Predicated region
  $region26: #{morf_prediction_branch2.64} parent=0 // pred_check
    _
  $region27: #{morf_prediction_branch2.64} parent=0 // pred_check_branch
    %154 = sbr.rel (0) target = $region29
  $region28: #{morf_prediction_branch2.64} parent=0 // pred_region
    _
  $region29: #{morf_prediction_branch2.64} parent=0 // pred_fallthru
    _

// kernel: morf_prediction_branch2.65
$region0: #{morf_prediction_branch2.65}
  #allocation0 [shape = 'u32[]', space=smem, size = 0x4, offset = 0x4, fixed_abs, tag = 'smem constant byte address 0x4 - core index']
  #allocation1 [shape = 'u32[144,128]{1,0:T(1,128)}', space=vmem, size = 0x12000, scoped, tag = 'internal scratch']
  #allocation2 [shape = 'f32[8,16,64]{2,1,0:T(8,128)}', space=vmem, size = 0x10000, scoped, tag = 'scratch operand']
  #allocation3 [shape = 'f32[8,16,64]{2,1,0:T(8,128)}', space=vmem, size = 0x10000, scoped, tag = 'scratch operand']
  %s0 = inlined_call_operand.vmem [shape: f32[2,8,64], index: 0, kind: input, shape index: {}]
  %s1 = inlined_call_operand.vmem [shape: f32[2,8,64], index: 1, kind: input, shape index: {}]
  %s2 = inlined_call_operand.vmem [shape: f32[2,8,64], index: 2, kind: input, shape index: {}]
  %s3 = inlined_call_operand.vmem [shape: f32[2,8,16], index: 3, kind: input, shape index: {}]
  %s4 = inlined_call_operand.vmem [shape: f32[2,8,16], index: 4, kind: input, shape index: {}]
  %s5 = inlined_call_operand.vmem [shape: f32[16,64], index: 5, kind: input, shape index: {}]
  %s6 = inlined_call_operand.vmem [shape: f32[1,64], index: 6, kind: input, shape index: {}]
  %s7 = inlined_call_operand.vmem [shape: f32[1,64], index: 7, kind: input, shape index: {}]
  %s8 = inlined_call_operand.vmem [shape: f32[2,8,64], index: 8, kind: output, shape index: {}]
  %s9 = sld [smem:[#allocation0]]
  $region65: #{morf_prediction_branch2.65} parent=0
    _
  %s11 = ssub.s32 1, %s9
  %s12 = scalar_select 0, %s11, %s9
  loop: start=0, step=1, limit=4
  $region2: #{morf_prediction_branch2.65} parent=0 // loop_pre_header
    _
  $region3: #{morf_prediction_branch2.65} parent=0 // loop_header
    %s14 = sphi 0, %s18
    %p15 = scmp.ge.s32.totalorder %s14, 4
    %s24 = sphi 0, %s26
    %s27 = sphi 0, %s24
    %s28 = sphi 0, %s27
    %s44 = sphi 0, %s28
    %s50 = sphi 0, %s52
    %s53 = sphi 0, %s50
    %s54 = sphi 0, %s53
    %s70 = sphi 0, %s54
    %s76 = sphi 0, %s78
    %s79 = sphi 0, %s76
    %s80 = sphi 0, %s79
    %s96 = sphi 0, %s80
    %s102 = sphi 0, %s104
    %s105 = sphi 0, %s102
    %s106 = sphi 0, %s105
    %s122 = sphi 0, %s106
    %s128 = sphi 0, %s130
    %s131 = sphi 0, %s128
    %s132 = sphi 0, %s131
    %s148 = sphi 0, %s132
    %s152 = sphi 0, %s152
    %s154 = sphi 0, %s152
    %s155 = sphi 0, %s154
    %s169 = sphi 0, %s155
    %s173 = sphi 0, %s173
    %s175 = sphi 0, %s173
    %s176 = sphi 0, %s175
    %s190 = sphi 0, %s176
    %s194 = sphi 0, %s194
    %s196 = sphi 0, %s194
    %s197 = sphi 0, %s196
    %s211 = sphi 0, %s197
    %s217 = sphi 0, %s219
    %s220 = sphi 0, %s217
    %s221 = sphi 0, %s220
    %s237 = sphi 0, %s221
  $region4: #{morf_prediction_branch2.65} parent=0 // loop_header_branch
    %17 = sbr.rel (%p15) target = $region8
  $region5: #{morf_prediction_branch2.65} parent=0 // loop_body
    %s19 = ssub.s32 %s14, 1
    %s20 = ssub.s32 %s14, 2
    %s21 = sadd.s32 %s14, 1
    %s22 = ssub.s32 %s14, %s21
    %p23 = scmp.eq.s32.totalorder %s22, 0
    %s25 = sadd.s32 %s24, 1
    %s26 = scalar_select %p23, %s24, %s25
    %p29 = pneg %p23
    %p30 = scmp.eq.s32.totalorder %s14, 1
    %p31 = por %p29, %p30
    %p32 = scmp.ne.s32.totalorder %s24, %s27
    %p33 = scmp.eq.s32.totalorder %s14, 0
    %p34 = por %p32, %p33
    %p35 = scmp.ne.s32.totalorder %s24, %s27
    %p36 = scmp.eq.s32.totalorder %s19, 1
    %p37 = por %p35, %p36
    %p38 = scmp.ne.s32.totalorder %s27, %s28
    %p39 = scmp.eq.s32.totalorder %s19, 0
    %p40 = por %p38, %p39
    %p41 = scmp.ne.s32.totalorder %s27, %s28
    %p42 = scmp.eq.s32.totalorder %s20, 1
    %p43 = por %p41, %p42
    %p45 = scmp.ne.s32.totalorder %s28, %s44
    %p46 = scmp.eq.s32.totalorder %s20, 0
    %p47 = por %p45, %p46
    %s48 = ssub.s32 %s14, %s21
    %p49 = scmp.eq.s32.totalorder %s48, 0
    %s51 = sadd.s32 %s50, 1
    %s52 = scalar_select %p49, %s50, %s51
    %p55 = pneg %p49
    %p56 = scmp.eq.s32.totalorder %s14, 1
    %p57 = por %p55, %p56
    %p58 = scmp.ne.s32.totalorder %s50, %s53
    %p59 = scmp.eq.s32.totalorder %s14, 0
    %p60 = por %p58, %p59
    %p61 = scmp.ne.s32.totalorder %s50, %s53
    %p62 = scmp.eq.s32.totalorder %s19, 1
    %p63 = por %p61, %p62
    %p64 = scmp.ne.s32.totalorder %s53, %s54
    %p65 = scmp.eq.s32.totalorder %s19, 0
    %p66 = por %p64, %p65
    %p67 = scmp.ne.s32.totalorder %s53, %s54
    %p68 = scmp.eq.s32.totalorder %s20, 1
    %p69 = por %p67, %p68
    %p71 = scmp.ne.s32.totalorder %s54, %s70
    %p72 = scmp.eq.s32.totalorder %s20, 0
    %p73 = por %p71, %p72
    %s74 = ssub.s32 %s14, %s21
    %p75 = scmp.eq.s32.totalorder %s74, 0
    %s77 = sadd.s32 %s76, 1
    %s78 = scalar_select %p75, %s76, %s77
    %p81 = pneg %p75
    %p82 = scmp.eq.s32.totalorder %s14, 1
    %p83 = por %p81, %p82
    %p84 = scmp.ne.s32.totalorder %s76, %s79
    %p85 = scmp.eq.s32.totalorder %s14, 0
    %p86 = por %p84, %p85
    %p87 = scmp.ne.s32.totalorder %s76, %s79
    %p88 = scmp.eq.s32.totalorder %s19, 1
    %p89 = por %p87, %p88
    %p90 = scmp.ne.s32.totalorder %s79, %s80
    %p91 = scmp.eq.s32.totalorder %s19, 0
    %p92 = por %p90, %p91
    %p93 = scmp.ne.s32.totalorder %s79, %s80
    %p94 = scmp.eq.s32.totalorder %s20, 1
    %p95 = por %p93, %p94
    %p97 = scmp.ne.s32.totalorder %s80, %s96
    %p98 = scmp.eq.s32.totalorder %s20, 0
    %p99 = por %p97, %p98
    %s100 = ssub.s32 %s14, %s21
    %p101 = scmp.eq.s32.totalorder %s100, 0
    %s103 = sadd.s32 %s102, 1
    %s104 = scalar_select %p101, %s102, %s103
    %p107 = pneg %p101
    %p108 = scmp.eq.s32.totalorder %s14, 1
    %p109 = por %p107, %p108
    %p110 = scmp.ne.s32.totalorder %s102, %s105
    %p111 = scmp.eq.s32.totalorder %s14, 0
    %p112 = por %p110, %p111
    %p113 = scmp.ne.s32.totalorder %s102, %s105
    %p114 = scmp.eq.s32.totalorder %s19, 1
    %p115 = por %p113, %p114
    %p116 = scmp.ne.s32.totalorder %s105, %s106
    %p117 = scmp.eq.s32.totalorder %s19, 0
    %p118 = por %p116, %p117
    %p119 = scmp.ne.s32.totalorder %s105, %s106
    %p120 = scmp.eq.s32.totalorder %s20, 1
    %p121 = por %p119, %p120
    %p123 = scmp.ne.s32.totalorder %s106, %s122
    %p124 = scmp.eq.s32.totalorder %s20, 0
    %p125 = por %p123, %p124
    %s126 = ssub.s32 %s14, %s21
    %p127 = scmp.eq.s32.totalorder %s126, 0
    %s129 = sadd.s32 %s128, 1
    %s130 = scalar_select %p127, %s128, %s129
    %p133 = pneg %p127
    %p134 = scmp.eq.s32.totalorder %s14, 1
    %p135 = por %p133, %p134
    %p136 = scmp.ne.s32.totalorder %s128, %s131
    %p137 = scmp.eq.s32.totalorder %s14, 0
    %p138 = por %p136, %p137
    %p139 = scmp.ne.s32.totalorder %s128, %s131
    %p140 = scmp.eq.s32.totalorder %s19, 1
    %p141 = por %p139, %p140
    %p142 = scmp.ne.s32.totalorder %s131, %s132
    %p143 = scmp.eq.s32.totalorder %s19, 0
    %p144 = por %p142, %p143
    %p145 = scmp.ne.s32.totalorder %s131, %s132
    %p146 = scmp.eq.s32.totalorder %s20, 1
    %p147 = por %p145, %p146
    %p149 = scmp.ne.s32.totalorder %s132, %s148
    %p150 = scmp.eq.s32.totalorder %s20, 0
    %p151 = por %p149, %p150
    %s153 = sadd.s32 %s152, 1
    %p156 = scmp.eq.s32.totalorder %s14, 1
    %p157 = scmp.ne.s32.totalorder %s152, %s154
    %p158 = scmp.eq.s32.totalorder %s14, 0
    %p159 = por %p157, %p158
    %p160 = scmp.ne.s32.totalorder %s152, %s154
    %p161 = scmp.eq.s32.totalorder %s19, 1
    %p162 = por %p160, %p161
    %p163 = scmp.ne.s32.totalorder %s154, %s155
    %p164 = scmp.eq.s32.totalorder %s19, 0
    %p165 = por %p163, %p164
    %p166 = scmp.ne.s32.totalorder %s154, %s155
    %p167 = scmp.eq.s32.totalorder %s20, 1
    %p168 = por %p166, %p167
    %p170 = scmp.ne.s32.totalorder %s155, %s169
    %p171 = scmp.eq.s32.totalorder %s20, 0
    %p172 = por %p170, %p171
    %s174 = sadd.s32 %s173, 1
    %p177 = scmp.eq.s32.totalorder %s14, 1
    %p178 = scmp.ne.s32.totalorder %s173, %s175
    %p179 = scmp.eq.s32.totalorder %s14, 0
    %p180 = por %p178, %p179
    %p181 = scmp.ne.s32.totalorder %s173, %s175
    %p182 = scmp.eq.s32.totalorder %s19, 1
    %p183 = por %p181, %p182
    %p184 = scmp.ne.s32.totalorder %s175, %s176
    %p185 = scmp.eq.s32.totalorder %s19, 0
    %p186 = por %p184, %p185
    %p187 = scmp.ne.s32.totalorder %s175, %s176
    %p188 = scmp.eq.s32.totalorder %s20, 1
    %p189 = por %p187, %p188
    %p191 = scmp.ne.s32.totalorder %s176, %s190
    %p192 = scmp.eq.s32.totalorder %s20, 0
    %p193 = por %p191, %p192
    %s195 = sadd.s32 %s194, 1
    %p198 = scmp.eq.s32.totalorder %s14, 1
    %p199 = scmp.ne.s32.totalorder %s194, %s196
    %p200 = scmp.eq.s32.totalorder %s14, 0
    %p201 = por %p199, %p200
    %p202 = scmp.ne.s32.totalorder %s194, %s196
    %p203 = scmp.eq.s32.totalorder %s19, 1
    %p204 = por %p202, %p203
    %p205 = scmp.ne.s32.totalorder %s196, %s197
    %p206 = scmp.eq.s32.totalorder %s19, 0
    %p207 = por %p205, %p206
    %p208 = scmp.ne.s32.totalorder %s196, %s197
    %p209 = scmp.eq.s32.totalorder %s20, 1
    %p210 = por %p208, %p209
    %p212 = scmp.ne.s32.totalorder %s197, %s211
    %p213 = scmp.eq.s32.totalorder %s20, 0
    %p214 = por %p212, %p213
    %s215 = ssub.s32 %s14, %s21
    %p216 = scmp.eq.s32.totalorder %s215, 0
    %s218 = sadd.s32 %s217, 1
    %s219 = scalar_select %p216, %s217, %s218
    %p222 = pneg %p216
    %p223 = scmp.eq.s32.totalorder %s14, 1
    %p224 = por %p222, %p223
    %p225 = scmp.ne.s32.totalorder %s217, %s220
    %p226 = scmp.eq.s32.totalorder %s14, 0
    %p227 = por %p225, %p226
    %p228 = scmp.ne.s32.totalorder %s217, %s220
    %p229 = scmp.eq.s32.totalorder %s19, 1
    %p230 = por %p228, %p229
    %p231 = scmp.ne.s32.totalorder %s220, %s221
    %p232 = scmp.eq.s32.totalorder %s19, 0
    %p233 = por %p231, %p232
    %p234 = scmp.ne.s32.totalorder %s220, %s221
    %p235 = scmp.eq.s32.totalorder %s20, 1
    %p236 = por %p234, %p235
    %p238 = scmp.ne.s32.totalorder %s221, %s237
    %p239 = scmp.eq.s32.totalorder %s20, 0
    %p240 = por %p238, %p239
    %p241 = scmp.le.s32.totalorder 1, %s14
    %p242 = scmp.lt.s32.totalorder %s14, 3
    %p243 = pnand %p241, %p242
    %p244 = pneg %p243
    // Predicated region
    $region9: #{morf_prediction_branch2.65} parent=5 // pred_check
      _
    $region10: #{morf_prediction_branch2.65} parent=5 // pred_check_branch
      %246 = sbr.rel (%p243) target = $region12
    $region11: #{morf_prediction_branch2.65} parent=5 // pred_region
      %s247 = ssub.s32 %s14, 1
      // Predicated region
      $region13: #{morf_prediction_branch2.65} parent=11 // pred_check
        %p248 = pneg %p165
      $region14: #{morf_prediction_branch2.65} parent=11 // pred_check_branch
        %250 = sbr.rel (%p248) target = $region16
      $region15: #{morf_prediction_branch2.65} parent=11 // pred_region
        _
      $region16: #{morf_prediction_branch2.65} parent=11 // pred_fallthru
        _
      // Predicated region
      $region17: #{morf_prediction_branch2.65} parent=11 // pred_check
        %p251 = pneg %p186
      $region18: #{morf_prediction_branch2.65} parent=11 // pred_check_branch
        %253 = sbr.rel (%p251) target = $region20
      $region19: #{morf_prediction_branch2.65} parent=11 // pred_region
        _
      $region20: #{morf_prediction_branch2.65} parent=11 // pred_fallthru
        _
      // Predicated region
      $region21: #{morf_prediction_branch2.65} parent=11 // pred_check
        %p254 = pneg %p207
      $region22: #{morf_prediction_branch2.65} parent=11 // pred_check_branch
        %256 = sbr.rel (%p254) target = $region24
      $region23: #{morf_prediction_branch2.65} parent=11 // pred_region
        _
      $region24: #{morf_prediction_branch2.65} parent=11 // pred_fallthru
        _
    $region12: #{morf_prediction_branch2.65} parent=5 // pred_fallthru
      _
    %p257 = scmp.lt.s32.totalorder %s14, 2
    // Predicated region
    $region25: #{morf_prediction_branch2.65} parent=5 // pred_check
      %p258 = pneg %p257
    $region26: #{morf_prediction_branch2.65} parent=5 // pred_check_branch
      %260 = sbr.rel (%p258) target = $region28
    $region27: #{morf_prediction_branch2.65} parent=5 // pred_region
      // Predicated region
      $region29: #{morf_prediction_branch2.65} parent=27 // pred_check
        %p261 = pneg %p34
      $region30: #{morf_prediction_branch2.65} parent=27 // pred_check_branch
        %263 = sbr.rel (%p261) target = $region32
      $region31: #{morf_prediction_branch2.65} parent=27 // pred_region
        %p264 = scmp.lt.s32.totalorder %s14, 1
        %s265 = scalar_select %p264, %s14, 1
        %s266 = smul.addr %s265, 8
        %s267 = scalar_lea.vmem %s0, %s266
      $region32: #{morf_prediction_branch2.65} parent=27 // pred_fallthru
        _
      // Predicated region
      $region33: #{morf_prediction_branch2.65} parent=27 // pred_check
        %p268 = pneg %p60
      $region34: #{morf_prediction_branch2.65} parent=27 // pred_check_branch
        %270 = sbr.rel (%p268) target = $region36
      $region35: #{morf_prediction_branch2.65} parent=27 // pred_region
        %p271 = scmp.lt.s32.totalorder %s14, 1
        %s272 = scalar_select %p271, %s14, 1
        %s273 = smul.addr %s272, 8
        %s274 = scalar_lea.vmem %s1, %s273
      $region36: #{morf_prediction_branch2.65} parent=27 // pred_fallthru
        _
      // Predicated region
      $region37: #{morf_prediction_branch2.65} parent=27 // pred_check
        %p275 = pneg %p86
      $region38: #{morf_prediction_branch2.65} parent=27 // pred_check_branch
        %277 = sbr.rel (%p275) target = $region40
      $region39: #{morf_prediction_branch2.65} parent=27 // pred_region
        %p278 = scmp.lt.s32.totalorder %s14, 1
        %s279 = scalar_select %p278, %s14, 1
        %s280 = smul.addr %s279, 8
        %s281 = scalar_lea.vmem %s2, %s280
      $region40: #{morf_prediction_branch2.65} parent=27 // pred_fallthru
        _
      // Predicated region
      $region41: #{morf_prediction_branch2.65} parent=27 // pred_check
        %p282 = pneg %p112
      $region42: #{morf_prediction_branch2.65} parent=27 // pred_check_branch
        %284 = sbr.rel (%p282) target = $region44
      $region43: #{morf_prediction_branch2.65} parent=27 // pred_region
        %p285 = scmp.lt.s32.totalorder %s14, 1
        %s286 = scalar_select %p285, %s14, 1
        %s287 = smul.addr %s286, 8
        %s288 = scalar_lea.vmem %s3, %s287
      $region44: #{morf_prediction_branch2.65} parent=27 // pred_fallthru
        _
      // Predicated region
      $region45: #{morf_prediction_branch2.65} parent=27 // pred_check
        %p289 = pneg %p138
      $region46: #{morf_prediction_branch2.65} parent=27 // pred_check_branch
        %291 = sbr.rel (%p289) target = $region48
      $region47: #{morf_prediction_branch2.65} parent=27 // pred_region
        %p292 = scmp.lt.s32.totalorder %s14, 1
        %s293 = scalar_select %p292, %s14, 1
        %s294 = smul.addr %s293, 8
        %s295 = scalar_lea.vmem %s4, %s294
      $region48: #{morf_prediction_branch2.65} parent=27 // pred_fallthru
        _
    $region28: #{morf_prediction_branch2.65} parent=5 // pred_fallthru
      _
    %p296 = scmp.le.s32.totalorder 1, %s14
    %p297 = scmp.lt.s32.totalorder %s14, 3
    %p298 = pnand %p296, %p297
    %p299 = pneg %p298
    // Predicated region
    $region49: #{morf_prediction_branch2.65} parent=5 // pred_check
      _
    $region50: #{morf_prediction_branch2.65} parent=5 // pred_check_branch
      %301 = sbr.rel (%p298) target = $region52
    $region51: #{morf_prediction_branch2.65} parent=5 // pred_region
      %s302 = ssub.s32 %s14, 1
      %p303 = scmp.lt.s32.totalorder %s19, 1
      %s304 = scalar_select %p303, %s19, 1
      %s305 = smul.addr %s304, 8
      %s306 = scalar_lea.vmem %s0, %s305
      %p307 = pneg %p40
      %p308 = pneg %p37
      %p309 = scmp.lt.s32.totalorder %s19, 1
      %s310 = scalar_select %p309, %s19, 1
      %s311 = smul.addr %s310, 8
      %s312 = scalar_lea.vmem %s1, %s311
      %p313 = pneg %p66
      %p314 = pneg %p63
      %p315 = scmp.lt.s32.totalorder %s19, 1
      %s316 = scalar_select %p315, %s19, 1
      %s317 = smul.addr %s316, 8
      %s318 = scalar_lea.vmem %s2, %s317
      %p319 = pneg %p92
      %p320 = pneg %p89
      %p321 = scmp.lt.s32.totalorder %s19, 1
      %s322 = scalar_select %p321, %s19, 1
      %s323 = smul.addr %s322, 8
      %s324 = scalar_lea.vmem %s3, %s323
      %p325 = pneg %p118
      %p326 = pneg %p115
      %p327 = scmp.lt.s32.totalorder %s19, 1
      %s328 = scalar_select %p327, %s19, 1
      %s329 = smul.addr %s328, 8
      %s330 = scalar_lea.vmem %s4, %s329
      %p331 = pneg %p144
      %p332 = pneg %p141
      %p333 = pneg %p165
      %p334 = pneg %p162
      %p335 = pneg %p186
      %p336 = pneg %p183
      %p337 = pneg %p207
      %p338 = pneg %p204
      %p339 = pneg %p233
      %p340 = pneg %p230
      %p341 = scmp.lt.s32.totalorder %s19, 1
      %s342 = scalar_select %p341, %s19, 1
      %s343 = smul.addr %s342, 8
      %s344 = scalar_lea.vmem %s8, %s343
      %p345 = scmp.lt.s32.totalorder %s19, 1
      %s346 = scalar_select %p345, %s19, 1
      %s347 = smul.addr %s346, 8
      %s348 = scalar_lea.vmem %s0, %s347
      %p349 = scmp.lt.s32.totalorder %s19, 1
      %s350 = scalar_select %p349, %s19, 1
      %s351 = smul.addr %s350, 8
      %s352 = scalar_lea.vmem %s1, %s351
      %p353 = scmp.lt.s32.totalorder %s19, 1
      %s354 = scalar_select %p353, %s19, 1
      %s355 = smul.addr %s354, 8
      %s356 = scalar_lea.vmem %s2, %s355
      %p357 = scmp.lt.s32.totalorder %s19, 1
      %s358 = scalar_select %p357, %s19, 1
      %s359 = smul.addr %s358, 8
      %s360 = scalar_lea.vmem %s3, %s359
      %p361 = scmp.lt.s32.totalorder %s19, 1
      %s362 = scalar_select %p361, %s19, 1
      %s363 = smul.addr %s362, 8
      %s364 = scalar_lea.vmem %s4, %s363
      %p365 = scmp.lt.s32.totalorder %s19, 1
      %s366 = scalar_select %p365, %s19, 1
      %s367 = smul.addr %s366, 8
      %s368 = scalar_lea.vmem %s8, %s367
      %v369 = vld [vmem:[%s348] sm:$0xff]
      %v370 = vld [vmem:[%s352] sm:$0xff]
      %v371 = vld [vmem:[%s7] sm:$0x1]
      %v373 = vlaneseq
      %v374 = vshrl.u32 %v373, 7
      %v375 = vsub.s32 0, %v374
      %v376 = vrot.slane %v371, %v375
      %v378 = vadd.f32 %v370, %v376
      %vm379 = vcmp.gt.f32.partialorder %v378, 20.0
      %v380 = vmin.f32 %v378, 20.0
      %v381 = vmul.f32 %v380, 1.442695
      %v382 = vpow.pop %v381
      %v383 = vadd.f32 %v382, 1.0
      %v384 = vlog2.pop %v383
      %v385 = vmul.f32 %v384, 0.6931472
      %v386 = vmul.f32 -0.5, %v382
      %v387 = vadd.f32 %v386, 1.0
      %v388 = vmul.f32 %v387, %v382
      %v389 = vand.u32 2147483647, %v382
      %vm390 = vcmp.lt.f32.partialorder %v389, 0.0004427343
      %v391 = vsel %vm390, %v388, %v385
      %v392 = vsel %vm379, %v378, %v391
      %v393 = vld [vmem:[%s5] sm:$0xff]
      %v394 = vld [vmem:[%s5 + $0x8] sm:$0xff]
      %v395 = vld [vmem:[%s360] sm:$0xff]
      %v397 = vcombine.high %v392, %v392
      %v399 = vunpack.c.l.s4 1966171168
      %v400 = vunpack.c.0.s8 %v399
      %v401 = vlaneseq
      %v402 = vshrl.u32 %v401, 7
      %v403 = vsub.s32 %v400, %v402
      %v404 = vrot.slane %v392, %v403
      %v406 = vunpack.c.l.s4 1966171168
      %v407 = vunpack.c.0.s8 %v406
      %v408 = vlaneseq
      %v409 = vshrl.u32 %v408, 7
      %v410 = vsub.s32 %v407, %v409
      %v411 = vrot.slane %v397, %v410
      %v412 = vcombine.high %v404, %v404
      %v413 = vcombine.high %v411, %v411
      %v415 = vunpack.c.l.s4 1966171168
      %v416 = vunpack.c.0.s8 %v415
      %v417 = vlaneseq
      %v418 = vshrl.u32 %v417, 7
      %v419 = vsub.s32 %v416, %v418
      %v420 = vrot.slane %v404, %v419
      %v422 = vunpack.c.l.s4 1966171168
      %v423 = vunpack.c.0.s8 %v422
      %v424 = vlaneseq
      %v425 = vshrl.u32 %v424, 7
      %v426 = vsub.s32 %v423, %v425
      %v427 = vrot.slane %v411, %v426
      %v429 = vunpack.c.l.s4 1966171168
      %v430 = vunpack.c.0.s8 %v429
      %v431 = vlaneseq
      %v432 = vshrl.u32 %v431, 7
      %v433 = vsub.s32 %v430, %v432
      %v434 = vrot.slane %v412, %v433
      %v436 = vunpack.c.l.s4 1966171168
      %v437 = vunpack.c.0.s8 %v436
      %v438 = vlaneseq
      %v439 = vshrl.u32 %v438, 7
      %v440 = vsub.s32 %v437, %v439
      %v441 = vrot.slane %v413, %v440
      %v442 = vcombine.high %v420, %v420
      %v443 = vcombine.high %v427, %v427
      %v444 = vcombine.high %v434, %v434
      %v445 = vcombine.high %v441, %v441
      %v446 = vlaneseq
      %v447 = vshrl.u32 %v446, 7
      %v448 = vsub.s32 0, %v447
      %v449 = vrot.slane %v420, %v448
      %v450 = vlaneseq
      %v451 = vshrl.u32 %v450, 7
      %v452 = vsub.s32 0, %v451
      %v453 = vrot.slane %v434, %v452
      %v454 = vlaneseq
      %v455 = vshrl.u32 %v454, 7
      %v456 = vsub.s32 0, %v455
      %v457 = vrot.slane %v442, %v456
      %v458 = vlaneseq
      %v459 = vshrl.u32 %v458, 7
      %v460 = vsub.s32 0, %v459
      %v461 = vrot.slane %v444, %v460
      %v462 = vlaneseq
      %v463 = vshrl.u32 %v462, 7
      %v464 = vsub.s32 0, %v463
      %v465 = vrot.slane %v427, %v464
      %v466 = vlaneseq
      %v467 = vshrl.u32 %v466, 7
      %v468 = vsub.s32 0, %v467
      %v469 = vrot.slane %v441, %v468
      %v470 = vlaneseq
      %v471 = vshrl.u32 %v470, 7
      %v472 = vsub.s32 0, %v471
      %v473 = vrot.slane %v443, %v472
      %v474 = vlaneseq
      %v475 = vshrl.u32 %v474, 7
      %v476 = vsub.s32 0, %v475
      %v477 = vrot.slane %v445, %v476
      %v486 = vmul.f32 %v449, %v393
      %v487 = vmul.f32 %v449, %v394
      %v488 = vmul.f32 %v453, %v393
      %v489 = vmul.f32 %v453, %v394
      %v490 = vmul.f32 %v457, %v393
      %v491 = vmul.f32 %v457, %v394
      %v492 = vmul.f32 %v461, %v393
      %v493 = vmul.f32 %v461, %v394
      %v494 = vmul.f32 %v465, %v393
      %v495 = vmul.f32 %v465, %v394
      %v496 = vmul.f32 %v469, %v393
      %v497 = vmul.f32 %v469, %v394
      %v498 = vmul.f32 %v473, %v393
      %v499 = vmul.f32 %v473, %v394
      %v500 = vmul.f32 %v477, %v393
      %v501 = vmul.f32 %v477, %v394
      %v502 = vmul.f32 %v486, 1.442695
      %v503 = vpow.pop %v502
      %v504 = vmul.f32 %v487, 1.442695
      %v505 = vpow.pop %v504
      %v506 = vmul.f32 %v488, 1.442695
      %v507 = vpow.pop %v506
      %v508 = vmul.f32 %v489, 1.442695
      %v509 = vpow.pop %v508
      %v510 = vmul.f32 %v490, 1.442695
      %v511 = vpow.pop %v510
      %v512 = vmul.f32 %v491, 1.442695
      %v513 = vpow.pop %v512
      %v514 = vmul.f32 %v492, 1.442695
      %v515 = vpow.pop %v514
      %v516 = vmul.f32 %v493, 1.442695
      %v517 = vpow.pop %v516
      %v518 = vmul.f32 %v494, 1.442695
      %v519 = vpow.pop %v518
      %v520 = vmul.f32 %v495, 1.442695
      %v521 = vpow.pop %v520
      %v522 = vmul.f32 %v496, 1.442695
      %v523 = vpow.pop %v522
      %v524 = vmul.f32 %v497, 1.442695
      %v525 = vpow.pop %v524
      %v526 = vmul.f32 %v498, 1.442695
      %v527 = vpow.pop %v526
      %v528 = vmul.f32 %v499, 1.442695
      %v529 = vpow.pop %v528
      %v530 = vmul.f32 %v500, 1.442695
      %v531 = vpow.pop %v530
      %v532 = vmul.f32 %v501, 1.442695
      %v533 = vpow.pop %v532
      %vm534 = vcmask 523264
      %535 = vst.msk [vmem:[#allocation2] sm:$0xff] %vm534, %v503
      %536 = vst.msk [vmem:[#allocation2 + $0x8] sm:$0xff] %vm534, %v505
      %537 = vst.msk [vmem:[#allocation2 + $0x10] sm:$0xff] %vm534, %v507
      %538 = vst.msk [vmem:[#allocation2 + $0x18] sm:$0xff] %vm534, %v509
      %539 = vst.msk [vmem:[#allocation2 + $0x20] sm:$0xff] %vm534, %v511
      %540 = vst.msk [vmem:[#allocation2 + $0x28] sm:$0xff] %vm534, %v513
      %541 = vst.msk [vmem:[#allocation2 + $0x30] sm:$0xff] %vm534, %v515
      %542 = vst.msk [vmem:[#allocation2 + $0x38] sm:$0xff] %vm534, %v517
      %543 = vst.msk [vmem:[#allocation2 + $0x40] sm:$0xff] %vm534, %v519
      %544 = vst.msk [vmem:[#allocation2 + $0x48] sm:$0xff] %vm534, %v521
      %545 = vst.msk [vmem:[#allocation2 + $0x50] sm:$0xff] %vm534, %v523
      %546 = vst.msk [vmem:[#allocation2 + $0x58] sm:$0xff] %vm534, %v525
      %547 = vst.msk [vmem:[#allocation2 + $0x60] sm:$0xff] %vm534, %v527
      %548 = vst.msk [vmem:[#allocation2 + $0x68] sm:$0xff] %vm534, %v529
      %549 = vst.msk [vmem:[#allocation2 + $0x70] sm:$0xff] %vm534, %v531
      %550 = vst.msk [vmem:[#allocation2 + $0x78] sm:$0xff] %vm534, %v533
      %v551 = vmul.f32 %v392, %v369
      %v553 = vcombine.high %v551, %v551
      %v555 = vunpack.c.l.s4 1966171168
      %v556 = vunpack.c.0.s8 %v555
      %v557 = vlaneseq
      %v558 = vshrl.u32 %v557, 7
      %v559 = vsub.s32 %v556, %v558
      %v560 = vrot.slane %v551, %v559
      %v562 = vunpack.c.l.s4 1966171168
      %v563 = vunpack.c.0.s8 %v562
      %v564 = vlaneseq
      %v565 = vshrl.u32 %v564, 7
      %v566 = vsub.s32 %v563, %v565
      %v567 = vrot.slane %v553, %v566
      %v568 = vcombine.high %v560, %v560
      %v569 = vcombine.high %v567, %v567
      %v571 = vunpack.c.l.s4 1966171168
      %v572 = vunpack.c.0.s8 %v571
      %v573 = vlaneseq
      %v574 = vshrl.u32 %v573, 7
      %v575 = vsub.s32 %v572, %v574
      %v576 = vrot.slane %v560, %v575
      %v578 = vunpack.c.l.s4 1966171168
      %v579 = vunpack.c.0.s8 %v578
      %v580 = vlaneseq
      %v581 = vshrl.u32 %v580, 7
      %v582 = vsub.s32 %v579, %v581
      %v583 = vrot.slane %v567, %v582
      %v585 = vunpack.c.l.s4 1966171168
      %v586 = vunpack.c.0.s8 %v585
      %v587 = vlaneseq
      %v588 = vshrl.u32 %v587, 7
      %v589 = vsub.s32 %v586, %v588
      %v590 = vrot.slane %v568, %v589
      %v592 = vunpack.c.l.s4 1966171168
      %v593 = vunpack.c.0.s8 %v592
      %v594 = vlaneseq
      %v595 = vshrl.u32 %v594, 7
      %v596 = vsub.s32 %v593, %v595
      %v597 = vrot.slane %v569, %v596
      %v598 = vcombine.high %v576, %v576
      %v599 = vcombine.high %v583, %v583
      %v600 = vcombine.high %v590, %v590
      %v601 = vcombine.high %v597, %v597
      %v602 = vlaneseq
      %v603 = vshrl.u32 %v602, 7
      %v604 = vsub.s32 0, %v603
      %v605 = vrot.slane %v395, %v604
      %607 = vbcast.lane.b32.xlu0 %v605, 256
      %v608 = vpop.permute.xlu0 %607
      %s610 = sor.u32 256, 8
      %611 = vbcast.lane.b32.xlu0 %v605, %s610
      %v612 = vpop.permute.xlu0 %611
      %v613 = vlaneseq
      %v614 = vshrl.u32 %v613, 7
      %v615 = vsub.s32 1, %v614
      %v616 = vrot.slane %v395, %v615
      %618 = vbcast.lane.b32.xlu0 %v616, 256
      %v619 = vpop.permute.xlu0 %618
      %s621 = sor.u32 256, 8
      %622 = vbcast.lane.b32.xlu0 %v616, %s621
      %v623 = vpop.permute.xlu0 %622
      %v624 = vlaneseq
      %v625 = vshrl.u32 %v624, 7
      %v626 = vsub.s32 2, %v625
      %v627 = vrot.slane %v395, %v626
      %629 = vbcast.lane.b32.xlu0 %v627, 256
      %v630 = vpop.permute.xlu0 %629
      %s632 = sor.u32 256, 8
      %633 = vbcast.lane.b32.xlu0 %v627, %s632
      %v634 = vpop.permute.xlu0 %633
      %v635 = vlaneseq
      %v636 = vshrl.u32 %v635, 7
      %v637 = vsub.s32 3, %v636
      %v638 = vrot.slane %v395, %v637
      %640 = vbcast.lane.b32.xlu0 %v638, 256
      %v641 = vpop.permute.xlu0 %640
      %s643 = sor.u32 256, 8
      %644 = vbcast.lane.b32.xlu0 %v638, %s643
      %v645 = vpop.permute.xlu0 %644
      %v646 = vlaneseq
      %v647 = vshrl.u32 %v646, 7
      %v648 = vsub.s32 4, %v647
      %v649 = vrot.slane %v395, %v648
      %651 = vbcast.lane.b32.xlu0 %v649, 256
      %v652 = vpop.permute.xlu0 %651
      %s654 = sor.u32 256, 8
      %655 = vbcast.lane.b32.xlu0 %v649, %s654
      %v656 = vpop.permute.xlu0 %655
      %v657 = vlaneseq
      %v658 = vshrl.u32 %v657, 7
      %v659 = vsub.s32 5, %v658
      %v660 = vrot.slane %v395, %v659
      %662 = vbcast.lane.b32.xlu0 %v660, 256
      %v663 = vpop.permute.xlu0 %662
      %s665 = sor.u32 256, 8
      %666 = vbcast.lane.b32.xlu0 %v660, %s665
      %v667 = vpop.permute.xlu0 %666
      %v668 = vlaneseq
      %v669 = vshrl.u32 %v668, 7
      %v670 = vsub.s32 6, %v669
      %v671 = vrot.slane %v395, %v670
      %673 = vbcast.lane.b32.xlu0 %v671, 256
      %v674 = vpop.permute.xlu0 %673
      %s676 = sor.u32 256, 8
      %677 = vbcast.lane.b32.xlu0 %v671, %s676
      %v678 = vpop.permute.xlu0 %677
      %v679 = vlaneseq
      %v680 = vshrl.u32 %v679, 7
      %v681 = vsub.s32 7, %v680
      %v682 = vrot.slane %v395, %v681
      %684 = vbcast.lane.b32.xlu0 %v682, 256
      %v685 = vpop.permute.xlu0 %684
      %s687 = sor.u32 256, 8
      %688 = vbcast.lane.b32.xlu0 %v682, %s687
      %v689 = vpop.permute.xlu0 %688
      %v690 = vlaneseq
      %v691 = vshrl.u32 %v690, 7
      %v692 = vsub.s32 0, %v691
      %v693 = vrot.slane %v576, %v692
      %v694 = vlaneseq
      %v695 = vshrl.u32 %v694, 7
      %v696 = vsub.s32 0, %v695
      %v697 = vrot.slane %v590, %v696
      %v698 = vlaneseq
      %v699 = vshrl.u32 %v698, 7
      %v700 = vsub.s32 0, %v699
      %v701 = vrot.slane %v598, %v700
      %v702 = vlaneseq
      %v703 = vshrl.u32 %v702, 7
      %v704 = vsub.s32 0, %v703
      %v705 = vrot.slane %v600, %v704
      %v706 = vlaneseq
      %v707 = vshrl.u32 %v706, 7
      %v708 = vsub.s32 0, %v707
      %v709 = vrot.slane %v583, %v708
      %v710 = vlaneseq
      %v711 = vshrl.u32 %v710, 7
      %v712 = vsub.s32 0, %v711
      %v713 = vrot.slane %v597, %v712
      %v714 = vlaneseq
      %v715 = vshrl.u32 %v714, 7
      %v716 = vsub.s32 0, %v715
      %v717 = vrot.slane %v599, %v716
      %v718 = vlaneseq
      %v719 = vshrl.u32 %v718, 7
      %v720 = vsub.s32 0, %v719
      %v721 = vrot.slane %v601, %v720
      %v730 = vmul.f32 %v693, %v608
      %v731 = vmul.f32 %v693, %v612
      %v732 = vmul.f32 %v697, %v619
      %v733 = vmul.f32 %v697, %v623
      %v734 = vmul.f32 %v701, %v630
      %v735 = vmul.f32 %v701, %v634
      %v736 = vmul.f32 %v705, %v641
      %v737 = vmul.f32 %v705, %v645
      %v738 = vmul.f32 %v709, %v652
      %v739 = vmul.f32 %v709, %v656
      %v740 = vmul.f32 %v713, %v663
      %v741 = vmul.f32 %v713, %v667
      %v742 = vmul.f32 %v717, %v674
      %v743 = vmul.f32 %v717, %v678
      %v744 = vmul.f32 %v721, %v685
      %v745 = vmul.f32 %v721, %v689
      %746 = vst.msk [vmem:[#allocation3] sm:$0xff] %vm534, %v730
      %747 = vst.msk [vmem:[#allocation3 + $0x8] sm:$0xff] %vm534, %v731
      %748 = vst.msk [vmem:[#allocation3 + $0x10] sm:$0xff] %vm534, %v732
      %749 = vst.msk [vmem:[#allocation3 + $0x18] sm:$0xff] %vm534, %v733
      %750 = vst.msk [vmem:[#allocation3 + $0x20] sm:$0xff] %vm534, %v734
      %751 = vst.msk [vmem:[#allocation3 + $0x28] sm:$0xff] %vm534, %v735
      %752 = vst.msk [vmem:[#allocation3 + $0x30] sm:$0xff] %vm534, %v736
      %753 = vst.msk [vmem:[#allocation3 + $0x38] sm:$0xff] %vm534, %v737
      %754 = vst.msk [vmem:[#allocation3 + $0x40] sm:$0xff] %vm534, %v738
      %755 = vst.msk [vmem:[#allocation3 + $0x48] sm:$0xff] %vm534, %v739
      %756 = vst.msk [vmem:[#allocation3 + $0x50] sm:$0xff] %vm534, %v740
      %757 = vst.msk [vmem:[#allocation3 + $0x58] sm:$0xff] %vm534, %v741
      %758 = vst.msk [vmem:[#allocation3 + $0x60] sm:$0xff] %vm534, %v742
      %759 = vst.msk [vmem:[#allocation3 + $0x68] sm:$0xff] %vm534, %v743
      %760 = vst.msk [vmem:[#allocation3 + $0x70] sm:$0xff] %vm534, %v744
      %761 = vst.msk [vmem:[#allocation3 + $0x78] sm:$0xff] %vm534, %v745
      %v762 = vld [vmem:[#allocation2] sm:$0xff]
      %v763 = vld [vmem:[#allocation2 + $0x8] sm:$0xff]
      %v764 = vmul.f32 %v762, 0.0
      %v765 = vmul.f32 %v763, 0.0
      %v766 = vld [vmem:[#allocation3] sm:$0xff]
      %v767 = vld [vmem:[#allocation3 + $0x8] sm:$0xff]
      %v768 = vadd.f32 %v764, %v766
      %v769 = vadd.f32 %v765, %v767
      %770 = vst.msk [vmem:[#allocation3] sm:$0xff] %vm534, %v768
      %771 = vst.msk [vmem:[#allocation3 + $0x8] sm:$0xff] %vm534, %v769
      %s772 = scalar_lea.vmem [#allocation2], 16
      %v773 = vld [vmem:[%s772] sm:$0xff]
      %v774 = vld [vmem:[%s772 + $0x8] sm:$0xff]
      %v775 = vmul.f32 %v773, %v768
      %v776 = vmul.f32 %v774, %v769
      %s777 = scalar_lea.vmem [#allocation3], 16
      %v778 = vld [vmem:[%s777] sm:$0xff]
      %v779 = vld [vmem:[%s777 + $0x8] sm:$0xff]
      %v780 = vadd.f32 %v775, %v778
      %v781 = vadd.f32 %v776, %v779
      %782 = vst.msk [vmem:[%s777] sm:$0xff] %vm534, %v780
      %783 = vst.msk [vmem:[%s777 + $0x8] sm:$0xff] %vm534, %v781
      %s784 = scalar_lea.vmem [#allocation2], 32
      %v785 = vld [vmem:[%s784] sm:$0xff]
      %v786 = vld [vmem:[%s784 + $0x8] sm:$0xff]
      %v787 = vmul.f32 %v785, %v780
      %v788 = vmul.f32 %v786, %v781
      %s789 = scalar_lea.vmem [#allocation3], 32
      %v790 = vld [vmem:[%s789] sm:$0xff]
      %v791 = vld [vmem:[%s789 + $0x8] sm:$0xff]
      %v792 = vadd.f32 %v787, %v790
      %v793 = vadd.f32 %v788, %v791
      %794 = vst.msk [vmem:[%s789] sm:$0xff] %vm534, %v792
      %795 = vst.msk [vmem:[%s789 + $0x8] sm:$0xff] %vm534, %v793
      %s796 = scalar_lea.vmem [#allocation2], 48
      %v797 = vld [vmem:[%s796] sm:$0xff]
      %v798 = vld [vmem:[%s796 + $0x8] sm:$0xff]
      %v799 = vmul.f32 %v797, %v792
      %v800 = vmul.f32 %v798, %v793
      %s801 = scalar_lea.vmem [#allocation3], 48
      %v802 = vld [vmem:[%s801] sm:$0xff]
      %v803 = vld [vmem:[%s801 + $0x8] sm:$0xff]
      %v804 = vadd.f32 %v799, %v802
      %v805 = vadd.f32 %v800, %v803
      %806 = vst.msk [vmem:[%s801] sm:$0xff] %vm534, %v804
      %807 = vst.msk [vmem:[%s801 + $0x8] sm:$0xff] %vm534, %v805
      %s808 = scalar_lea.vmem [#allocation2], 64
      %v809 = vld [vmem:[%s808] sm:$0xff]
      %v810 = vld [vmem:[%s808 + $0x8] sm:$0xff]
      %v811 = vmul.f32 %v809, %v804
      %v812 = vmul.f32 %v810, %v805
      %s813 = scalar_lea.vmem [#allocation3], 64
      %v814 = vld [vmem:[%s813] sm:$0xff]
      %v815 = vld [vmem:[%s813 + $0x8] sm:$0xff]
      %v816 = vadd.f32 %v811, %v814
      %v817 = vadd.f32 %v812, %v815
      %818 = vst.msk [vmem:[%s813] sm:$0xff] %vm534, %v816
      %819 = vst.msk [vmem:[%s813 + $0x8] sm:$0xff] %vm534, %v817
      %s820 = scalar_lea.vmem [#allocation2], 80
      %v821 = vld [vmem:[%s820] sm:$0xff]
      %v822 = vld [vmem:[%s820 + $0x8] sm:$0xff]
      %v823 = vmul.f32 %v821, %v816
      %v824 = vmul.f32 %v822, %v817
      %s825 = scalar_lea.vmem [#allocation3], 80
      %v826 = vld [vmem:[%s825] sm:$0xff]
      %v827 = vld [vmem:[%s825 + $0x8] sm:$0xff]
      %v828 = vadd.f32 %v823, %v826
      %v829 = vadd.f32 %v824, %v827
      %830 = vst.msk [vmem:[%s825] sm:$0xff] %vm534, %v828
      %831 = vst.msk [vmem:[%s825 + $0x8] sm:$0xff] %vm534, %v829
      %s832 = scalar_lea.vmem [#allocation2], 96
      %v833 = vld [vmem:[%s832] sm:$0xff]
      %v834 = vld [vmem:[%s832 + $0x8] sm:$0xff]
      %v835 = vmul.f32 %v833, %v828
      %v836 = vmul.f32 %v834, %v829
      %s837 = scalar_lea.vmem [#allocation3], 96
      %v838 = vld [vmem:[%s837] sm:$0xff]
      %v839 = vld [vmem:[%s837 + $0x8] sm:$0xff]
      %v840 = vadd.f32 %v835, %v838
      %v841 = vadd.f32 %v836, %v839
      %842 = vst.msk [vmem:[%s837] sm:$0xff] %vm534, %v840
      %843 = vst.msk [vmem:[%s837 + $0x8] sm:$0xff] %vm534, %v841
      %s844 = scalar_lea.vmem [#allocation2], 112
      %v845 = vld [vmem:[%s844] sm:$0xff]
      %v846 = vld [vmem:[%s844 + $0x8] sm:$0xff]
      %v847 = vmul.f32 %v845, %v840
      %v848 = vmul.f32 %v846, %v841
      %s849 = scalar_lea.vmem [#allocation3], 112
      %v850 = vld [vmem:[%s849] sm:$0xff]
      %v851 = vld [vmem:[%s849 + $0x8] sm:$0xff]
      %v852 = vadd.f32 %v847, %v850
      %v853 = vadd.f32 %v848, %v851
      %854 = vst.msk [vmem:[%s849] sm:$0xff] %vm534, %v852
      %855 = vst.msk [vmem:[%s849 + $0x8] sm:$0xff] %vm534, %v853
      %v856 = vld [vmem:[%s364] sm:$0xff]
      %v857 = vld [vmem:[#allocation3] sm:$0xff]
      %v858 = vld [vmem:[#allocation3 + $0x8] sm:$0xff]
      %v859 = vld [vmem:[#allocation3 + $0x10] sm:$0xff]
      %v860 = vld [vmem:[#allocation3 + $0x18] sm:$0xff]
      %v861 = vld [vmem:[#allocation3 + $0x20] sm:$0xff]
      %v862 = vld [vmem:[#allocation3 + $0x28] sm:$0xff]
      %v863 = vld [vmem:[#allocation3 + $0x30] sm:$0xff]
      %v864 = vld [vmem:[#allocation3 + $0x38] sm:$0xff]
      %v865 = vld [vmem:[#allocation3 + $0x40] sm:$0xff]
      %v866 = vld [vmem:[#allocation3 + $0x48] sm:$0xff]
      %v867 = vld [vmem:[#allocation3 + $0x50] sm:$0xff]
      %v868 = vld [vmem:[#allocation3 + $0x58] sm:$0xff]
      %v869 = vld [vmem:[#allocation3 + $0x60] sm:$0xff]
      %v870 = vld [vmem:[#allocation3 + $0x68] sm:$0xff]
      %v871 = vld [vmem:[#allocation3 + $0x70] sm:$0xff]
      %v872 = vld [vmem:[#allocation3 + $0x78] sm:$0xff]
      %v873 = vlaneseq
      %v874 = vshrl.u32 %v873, 7
      %v875 = vsub.s32 0, %v874
      %v876 = vrot.slane %v856, %v875
      %878 = vbcast.lane.b32.xlu0 %v876, 256
      %v879 = vpop.permute.xlu0 %878
      %s881 = sor.u32 256, 8
      %882 = vbcast.lane.b32.xlu0 %v876, %s881
      %v883 = vpop.permute.xlu0 %882
      %v884 = vlaneseq
      %v885 = vshrl.u32 %v884, 7
      %v886 = vsub.s32 1, %v885
      %v887 = vrot.slane %v856, %v886
      %889 = vbcast.lane.b32.xlu0 %v887, 256
      %v890 = vpop.permute.xlu0 %889
      %s892 = sor.u32 256, 8
      %893 = vbcast.lane.b32.xlu0 %v887, %s892
      %v894 = vpop.permute.xlu0 %893
      %v895 = vlaneseq
      %v896 = vshrl.u32 %v895, 7
      %v897 = vsub.s32 2, %v896
      %v898 = vrot.slane %v856, %v897
      %900 = vbcast.lane.b32.xlu0 %v898, 256
      %v901 = vpop.permute.xlu0 %900
      %s903 = sor.u32 256, 8
      %904 = vbcast.lane.b32.xlu0 %v898, %s903
      %v905 = vpop.permute.xlu0 %904
      %v906 = vlaneseq
      %v907 = vshrl.u32 %v906, 7
      %v908 = vsub.s32 3, %v907
      %v909 = vrot.slane %v856, %v908
      %911 = vbcast.lane.b32.xlu0 %v909, 256
      %v912 = vpop.permute.xlu0 %911
      %s914 = sor.u32 256, 8
      %915 = vbcast.lane.b32.xlu0 %v909, %s914
      %v916 = vpop.permute.xlu0 %915
      %v917 = vlaneseq
      %v918 = vshrl.u32 %v917, 7
      %v919 = vsub.s32 4, %v918
      %v920 = vrot.slane %v856, %v919
      %922 = vbcast.lane.b32.xlu0 %v920, 256
      %v923 = vpop.permute.xlu0 %922
      %s925 = sor.u32 256, 8
      %926 = vbcast.lane.b32.xlu0 %v920, %s925
      %v927 = vpop.permute.xlu0 %926
      %v928 = vlaneseq
      %v929 = vshrl.u32 %v928, 7
      %v930 = vsub.s32 5, %v929
      %v931 = vrot.slane %v856, %v930
      %933 = vbcast.lane.b32.xlu0 %v931, 256
      %v934 = vpop.permute.xlu0 %933
      %s936 = sor.u32 256, 8
      %937 = vbcast.lane.b32.xlu0 %v931, %s936
      %v938 = vpop.permute.xlu0 %937
      %v939 = vlaneseq
      %v940 = vshrl.u32 %v939, 7
      %v941 = vsub.s32 6, %v940
      %v942 = vrot.slane %v856, %v941
      %944 = vbcast.lane.b32.xlu0 %v942, 256
      %v945 = vpop.permute.xlu0 %944
      %s947 = sor.u32 256, 8
      %948 = vbcast.lane.b32.xlu0 %v942, %s947
      %v949 = vpop.permute.xlu0 %948
      %v950 = vlaneseq
      %v951 = vshrl.u32 %v950, 7
      %v952 = vsub.s32 7, %v951
      %v953 = vrot.slane %v856, %v952
      %955 = vbcast.lane.b32.xlu0 %v953, 256
      %v956 = vpop.permute.xlu0 %955
      %s958 = sor.u32 256, 8
      %959 = vbcast.lane.b32.xlu0 %v953, %s958
      %v960 = vpop.permute.xlu0 %959
      %v961 = vmul.f32 %v857, %v879
      %v962 = vmul.f32 %v858, %v883
      %v963 = vmul.f32 %v859, %v890
      %v964 = vmul.f32 %v860, %v894
      %v965 = vmul.f32 %v861, %v901
      %v966 = vmul.f32 %v862, %v905
      %v967 = vmul.f32 %v863, %v912
      %v968 = vmul.f32 %v864, %v916
      %v969 = vmul.f32 %v865, %v923
      %v970 = vmul.f32 %v866, %v927
      %v971 = vmul.f32 %v867, %v934
      %v972 = vmul.f32 %v868, %v938
      %v973 = vmul.f32 %v869, %v945
      %v974 = vmul.f32 %v870, %v949
      %v975 = vmul.f32 %v871, %v956
      %v976 = vmul.f32 %v872, %v960
      %v977 = vsel %vm534, %v961, 0.0
      %v978 = vsel %vm534, %v962, 0.0
      %v979 = vadd.f32 %v977, %v978
      %v980 = vrot.slane %v979, 4
      %v981 = vadd.f32 %v979, %v980
      %v982 = vrot.slane %v981, 2
      %v983 = vadd.f32 %v981, %v982
      %v984 = vrot.slane %v983, 1
      %v985 = vadd.f32 %v983, %v984
      %v986 = vsel %vm534, %v963, 0.0
      %v987 = vsel %vm534, %v964, 0.0
      %v988 = vadd.f32 %v986, %v987
      %v989 = vrot.slane %v988, 4
      %v990 = vadd.f32 %v988, %v989
      %v991 = vrot.slane %v990, 2
      %v992 = vadd.f32 %v990, %v991
      %v993 = vrot.slane %v992, 1
      %v994 = vadd.f32 %v992, %v993
      %v995 = vsel %vm534, %v965, 0.0
      %v996 = vsel %vm534, %v966, 0.0
      %v997 = vadd.f32 %v995, %v996
      %v998 = vrot.slane %v997, 4
      %v999 = vadd.f32 %v997, %v998
      %v1000 = vrot.slane %v999, 2
      %v1001 = vadd.f32 %v999, %v1000
      %v1002 = vrot.slane %v1001, 1
      %v1003 = vadd.f32 %v1001, %v1002
      %v1004 = vsel %vm534, %v967, 0.0
      %v1005 = vsel %vm534, %v968, 0.0
      %v1006 = vadd.f32 %v1004, %v1005
      %v1007 = vrot.slane %v1006, 4
      %v1008 = vadd.f32 %v1006, %v1007
      %v1009 = vrot.slane %v1008, 2
      %v1010 = vadd.f32 %v1008, %v1009
      %v1011 = vrot.slane %v1010, 1
      %v1012 = vadd.f32 %v1010, %v1011
      %v1013 = vsel %vm534, %v969, 0.0
      %v1014 = vsel %vm534, %v970, 0.0
      %v1015 = vadd.f32 %v1013, %v1014
      %v1016 = vrot.slane %v1015, 4
      %v1017 = vadd.f32 %v1015, %v1016
      %v1018 = vrot.slane %v1017, 2
      %v1019 = vadd.f32 %v1017, %v1018
      %v1020 = vrot.slane %v1019, 1
      %v1021 = vadd.f32 %v1019, %v1020
      %v1022 = vsel %vm534, %v971, 0.0
      %v1023 = vsel %vm534, %v972, 0.0
      %v1024 = vadd.f32 %v1022, %v1023
      %v1025 = vrot.slane %v1024, 4
      %v1026 = vadd.f32 %v1024, %v1025
      %v1027 = vrot.slane %v1026, 2
      %v1028 = vadd.f32 %v1026, %v1027
      %v1029 = vrot.slane %v1028, 1
      %v1030 = vadd.f32 %v1028, %v1029
      %v1031 = vsel %vm534, %v973, 0.0
      %v1032 = vsel %vm534, %v974, 0.0
      %v1033 = vadd.f32 %v1031, %v1032
      %v1034 = vrot.slane %v1033, 4
      %v1035 = vadd.f32 %v1033, %v1034
      %v1036 = vrot.slane %v1035, 2
      %v1037 = vadd.f32 %v1035, %v1036
      %v1038 = vrot.slane %v1037, 1
      %v1039 = vadd.f32 %v1037, %v1038
      %v1040 = vsel %vm534, %v975, 0.0
      %v1041 = vsel %vm534, %v976, 0.0
      %v1042 = vadd.f32 %v1040, %v1041
      %v1043 = vrot.slane %v1042, 4
      %v1044 = vadd.f32 %v1042, %v1043
      %v1045 = vrot.slane %v1044, 2
      %v1046 = vadd.f32 %v1044, %v1045
      %v1047 = vrot.slane %v1046, 1
      %v1048 = vadd.f32 %v1046, %v1047
      %v1049 = vld [vmem:[%s6] sm:$0x1]
      %v1051 = vlaneseq
      %v1052 = vshrl.u32 %v1051, 7
      %v1053 = vsub.s32 0, %v1052
      %v1054 = vrot.slane %v1049, %v1053
      %v1056 = vmul.f32 %v369, %v1054
      %v1058 = vrot.slane %v1056, 1
      %v1059 = vrot.slane %v1056, 2
      %v1060 = vrot.slane %v1056, 3
      %v1061 = vrot.slane %v1056, 4
      %v1062 = vrot.slane %v1056, 5
      %v1063 = vrot.slane %v1056, 6
      %v1064 = vrot.slane %v1056, 7
      %v1073 = vadd.f32 %v985, %v1056
      %v1074 = vadd.f32 %v994, %v1058
      %v1075 = vadd.f32 %v1003, %v1059
      %v1076 = vadd.f32 %v1012, %v1060
      %v1077 = vadd.f32 %v1021, %v1061
      %v1078 = vadd.f32 %v1030, %v1062
      %v1079 = vadd.f32 %v1039, %v1063
      %v1080 = vadd.f32 %v1048, %v1064
      %v1081 = vld [vmem:[%s356] sm:$0xff]
      %v1082 = vxor.u32 %v1081, 2147483648
      %v1083 = vmul.f32 %v1082, 1.442695
      %v1084 = vpow.pop %v1083
      %v1085 = vadd.f32 %v1084, 1.0
      %v1086 = vrcp.pop %v1085
      %v1087 = vmul.f32 1.0, %v1086
      %v1088 = vmul.f32 %v1081, %v1087
      %v1090 = vrot.slane %v1088, 1
      %v1091 = vrot.slane %v1088, 2
      %v1092 = vrot.slane %v1088, 3
      %v1093 = vrot.slane %v1088, 4
      %v1094 = vrot.slane %v1088, 5
      %v1095 = vrot.slane %v1088, 6
      %v1096 = vrot.slane %v1088, 7
      %v1105 = vmul.f32 %v1073, %v1088
      %v1106 = vmul.f32 %v1074, %v1090
      %v1107 = vmul.f32 %v1075, %v1091
      %v1108 = vmul.f32 %v1076, %v1092
      %v1109 = vmul.f32 %v1077, %v1093
      %v1110 = vmul.f32 %v1078, %v1094
      %v1111 = vmul.f32 %v1079, %v1095
      %v1112 = vmul.f32 %v1080, %v1096
      %v1121 = vrot.slane %v1106, 7
      %vm1122 = vcmask 1041409
      %v1123 = vsel %vm1122, %v1121, %v1105
      %v1124 = vrot.slane %v1107, 6
      %vm1125 = vcmask 1042434
      %v1126 = vsel %vm1125, %v1124, %v1123
      %v1127 = vrot.slane %v1108, 5
      %vm1128 = vcmask 1043459
      %v1129 = vsel %vm1128, %v1127, %v1126
      %v1130 = vrot.slane %v1109, 4
      %vm1131 = vcmask 1044484
      %v1132 = vsel %vm1131, %v1130, %v1129
      %v1133 = vrot.slane %v1110, 3
      %vm1134 = vcmask 1045509
      %v1135 = vsel %vm1134, %v1133, %v1132
      %v1136 = vrot.slane %v1111, 2
      %vm1137 = vcmask 1046534
      %v1138 = vsel %vm1137, %v1136, %v1135
      %v1139 = vrot.slane %v1112, 1
      %vm1140 = vcmask 1047559
      %v1141 = vsel %vm1140, %v1139, %v1138
      %1143 = vst.msk [vmem:[%s368] sm:$0xff] %vm534, %v1141
      %p1144 = scmp.lt.s32.totalorder %s19, 1
      %s1145 = scalar_select %p1144, %s19, 1
      %s1146 = smul.addr %s1145, 8
      %s1147 = scalar_lea.vmem %s8, %s1146
      // Predicated region
      $region53: #{morf_prediction_branch2.65} parent=51 // pred_check
        %p1148 = pneg %p230
      $region54: #{morf_prediction_branch2.65} parent=51 // pred_check_branch
        %1150 = sbr.rel (%p1148) target = $region56
      $region55: #{morf_prediction_branch2.65} parent=51 // pred_region
        _
      $region56: #{morf_prediction_branch2.65} parent=51 // pred_fallthru
        _
    $region52: #{morf_prediction_branch2.65} parent=5 // pred_fallthru
      _
    %p1151 = scmp.le.s32.totalorder 2, %s14
    // Predicated region
    $region57: #{morf_prediction_branch2.65} parent=5 // pred_check
      %p1152 = pneg %p1151
    $region58: #{morf_prediction_branch2.65} parent=5 // pred_check_branch
      %1154 = sbr.rel (%p1152) target = $region60
    $region59: #{morf_prediction_branch2.65} parent=5 // pred_region
      %s1155 = ssub.s32 %s14, 2
      // Predicated region
      $region61: #{morf_prediction_branch2.65} parent=59 // pred_check
        %p1156 = pneg %p236
      $region62: #{morf_prediction_branch2.65} parent=59 // pred_check_branch
        %1158 = sbr.rel (%p1156) target = $region64
      $region63: #{morf_prediction_branch2.65} parent=59 // pred_region
        %p1159 = scmp.lt.s32.totalorder %s20, 1
        %s1160 = scalar_select %p1159, %s20, 1
        %s1161 = smul.addr %s1160, 8
        %s1162 = scalar_lea.vmem %s8, %s1161
      $region64: #{morf_prediction_branch2.65} parent=59 // pred_fallthru
        _
    $region60: #{morf_prediction_branch2.65} parent=5 // pred_fallthru
      _
  $region6: #{morf_prediction_branch2.65} parent=0 // loop_footer
    %s18 = sadd.s32 1, %s14
  $region7: #{morf_prediction_branch2.65} parent=0 // loop_footer_branch
    %13 = sbr.rel target = $region3
  $region8: #{morf_prediction_branch2.65} parent=0 // loop_exit
    _

// kernel: morf_prediction_branch2.67
$region0: #{morf_prediction_branch2.67}
  #allocation0 [shape = 'u32[]', space=smem, size = 0x4, offset = 0x4, fixed_abs, tag = 'smem constant byte address 0x4 - core index']
  #allocation1 [shape = 'u32[144,128]{1,0:T(1,128)}', space=vmem, size = 0x12000, scoped, tag = 'internal scratch']
  #allocation2 [shape = 'f32[16,128]{1,0:T(8,128)}', space=vmem, size = 0x2000, scoped, tag = 'scratch operand']
  %s0 = inlined_call_operand.vmem [shape: f32[16,128], index: 0, kind: input, shape index: {}]
  %s1 = inlined_call_operand.vmem [shape: bf16[128,128], index: 1, kind: input, shape index: {}]
  %s2 = inlined_call_operand.vmem [shape: f32[1,128], index: 2, kind: input, shape index: {}]
  %s3 = inlined_call_operand.vmem [shape: bf16[16,128], index: 3, kind: output, shape index: {}]
  %s4 = sld [smem:[#allocation0]]
  $region30: #{morf_prediction_branch2.67} parent=0
    _
  %s6 = ssub.s32 1, %s4
  %s7 = scalar_select 0, %s6, %s4
  // Predicated region
  $region2: #{morf_prediction_branch2.67} parent=0 // pred_check
    _
  $region3: #{morf_prediction_branch2.67} parent=0 // pred_check_branch
    %9 = sbr.rel (0) target = $region5
  $region4: #{morf_prediction_branch2.67} parent=0 // pred_region
    _
  $region5: #{morf_prediction_branch2.67} parent=0 // pred_fallthru
    _
  // Predicated region
  $region6: #{morf_prediction_branch2.67} parent=0 // pred_check
    _
  $region7: #{morf_prediction_branch2.67} parent=0 // pred_check_branch
    %11 = sbr.rel (0) target = $region9
  $region8: #{morf_prediction_branch2.67} parent=0 // pred_region
    _
  $region9: #{morf_prediction_branch2.67} parent=0 // pred_fallthru
    _
  // Predicated region
  $region10: #{morf_prediction_branch2.67} parent=0 // pred_check
    _
  $region11: #{morf_prediction_branch2.67} parent=0 // pred_check_branch
    %13 = sbr.rel (0) target = $region13
  $region12: #{morf_prediction_branch2.67} parent=0 // pred_region
    _
  $region13: #{morf_prediction_branch2.67} parent=0 // pred_fallthru
    _
  %p15 = scmp.eq.s32.totalorder 0, 0
  // Predicated region
  $region14: #{morf_prediction_branch2.67} parent=0 // pred_check
    %p16 = pneg %p15
  $region15: #{morf_prediction_branch2.67} parent=0 // pred_check_branch
    %18 = sbr.rel (%p16) target = $region17
  $region16: #{morf_prediction_branch2.67} parent=0 // pred_region
    %19 = vst [vmem:[#allocation2] sm:$0xff] 0.0
    %20 = vst [vmem:[#allocation2 + $0x8] sm:$0xff] 0.0
  $region17: #{morf_prediction_branch2.67} parent=0 // pred_fallthru
    _
  %v21 = vld [vmem:[%s0] sm:$0xff]
  %v22 = vld [vmem:[%s0 + $0x8] sm:$0xff]
  %v23 = vpack.c.bf16 %v22, %v21
  %v24 = vld [vmem:[#allocation2] sm:$0xff]
  %v25 = vld [vmem:[#allocation2 + $0x8] sm:$0xff]
  %v26 = vld [vmem:[%s1] sm:$0xf]
  %v27 = vld [vmem:[%s1 + $0x4] sm:$0xf]
  %v28 = vld [vmem:[%s1 + $0x8] sm:$0xf]
  %v29 = vld [vmem:[%s1 + $0xc] sm:$0xf]
  %v30 = vld [vmem:[%s1 + $0x10] sm:$0xf]
  %v31 = vld [vmem:[%s1 + $0x14] sm:$0xf]
  %v32 = vld [vmem:[%s1 + $0x18] sm:$0xf]
  %v33 = vld [vmem:[%s1 + $0x1c] sm:$0xf]
  %v34 = vld [vmem:[%s1 + $0x20] sm:$0xf]
  %v35 = vld [vmem:[%s1 + $0x24] sm:$0xf]
  %v36 = vld [vmem:[%s1 + $0x28] sm:$0xf]
  %v37 = vld [vmem:[%s1 + $0x2c] sm:$0xf]
  %v38 = vld [vmem:[%s1 + $0x30] sm:$0xf]
  %v39 = vld [vmem:[%s1 + $0x34] sm:$0xf]
  %v40 = vld [vmem:[%s1 + $0x38] sm:$0xf]
  %v41 = vld [vmem:[%s1 + $0x3c] sm:$0xf]
  %v58 = vunpack.c.l.b16 %v26
  %v59 = vunpack.c.l.b16 %v27
  %v60 = vunpack.c.l.b16 %v28
  %v61 = vunpack.c.l.b16 %v29
  %v62 = vunpack.c.l.b16 %v30
  %v63 = vunpack.c.l.b16 %v31
  %v64 = vunpack.c.l.b16 %v32
  %v65 = vunpack.c.l.b16 %v33
  %v66 = vunpack.c.l.b16 %v34
  %v67 = vunpack.c.l.b16 %v35
  %v68 = vunpack.c.l.b16 %v36
  %v69 = vunpack.c.l.b16 %v37
  %v70 = vunpack.c.l.b16 %v38
  %v71 = vunpack.c.l.b16 %v39
  %v72 = vunpack.c.l.b16 %v40
  %v73 = vunpack.c.l.b16 %v41
  %v74 = vpack.c.b16 %v59, %v58
  %v75 = vpack.c.b16 %v61, %v60
  %v76 = vpack.c.b16 %v63, %v62
  %v77 = vpack.c.b16 %v65, %v64
  %v78 = vpack.c.b16 %v67, %v66
  %v79 = vpack.c.b16 %v69, %v68
  %v80 = vpack.c.b16 %v71, %v70
  %v81 = vpack.c.b16 %v73, %v72
  %90 = vmatprep.subr.bf16.mxu0 0
  %91 = vmatpush1.bf16.msra.mxu0 %v74
  %92 = vmatprep.subr.bf16.mxu0 0
  %93 = vmatpush1.bf16.msra.mxu0 %v75
  %94 = vmatprep.subr.bf16.mxu0 0
  %95 = vmatpush1.bf16.msra.mxu0 %v76
  %96 = vmatprep.subr.bf16.mxu0 0
  %97 = vmatpush1.bf16.msra.mxu0 %v77
  %98 = vmatprep.subr.bf16.mxu0 0
  %99 = vmatpush1.bf16.msra.mxu0 %v78
  %100 = vmatprep.subr.bf16.mxu0 0
  %101 = vmatpush1.bf16.msra.mxu0 %v79
  %102 = vmatprep.subr.bf16.mxu0 0
  %103 = vmatpush1.bf16.msra.mxu0 %v80
  %104 = vmatprep.subr.bf16.mxu0 0
  %105 = vmatpush1.bf16.msra.mxu0 %v81
  %106 = vmatprep.subr.bf16.mxu0 0
  %107 = vmatpush1.bf16.msra.mxu0 0
  %108 = vmatprep.subr.bf16.mxu0 0
  %109 = vmatpush1.bf16.msra.mxu0 0
  %110 = vmatprep.subr.bf16.mxu0 0
  %111 = vmatpush1.bf16.msra.mxu0 0
  %112 = vmatprep.subr.bf16.mxu0 0
  %113 = vmatpush1.bf16.msra.mxu0 0
  %114 = vmatprep.subr.bf16.mxu0 0
  %115 = vmatpush1.bf16.msra.mxu0 0
  %116 = vmatprep.subr.bf16.mxu0 0
  %117 = vmatpush1.bf16.msra.mxu0 0
  %118 = vmatprep.subr.bf16.mxu0 0
  %119 = vmatpush1.bf16.msra.mxu0 0
  %120 = vmatprep.subr.bf16.mxu0 0
  %121 = vmatpush1.bf16.msra.mxu0 0
  %122 = vmatprep.mubr.bf16.mxu0 0
  %123 = vmatmul.mubr.bf16.gmra.mrb[0].mxu0 %v23
  %v124 = vpop.f32.mrb[0].mxu0
  %v125 = vadd.f32 0.0, %v124
  %v126 = vpop.f32.mrb[0].mxu0
  %v127 = vpop.f32.mrb[0].mxu0
  %v128 = vadd.f32 0.0, %v127
  %v129 = vpop.f32.mrb[0].mxu0
  %130 = vdwg.mxu0
  %v131 = vadd.f32 %v24, %v125
  %v132 = vadd.f32 %v25, %v128
  %133 = vst [vmem:[#allocation2] sm:$0xff] %v131
  %134 = vst [vmem:[#allocation2 + $0x8] sm:$0xff] %v132
  // Predicated region
  $region18: #{morf_prediction_branch2.67} parent=0 // pred_check
    %p135 = pneg %p15
  $region19: #{morf_prediction_branch2.67} parent=0 // pred_check_branch
    %137 = sbr.rel (%p135) target = $region21
  $region20: #{morf_prediction_branch2.67} parent=0 // pred_region
    %v138 = vld [vmem:[#allocation2] sm:$0xff]
    %v139 = vld [vmem:[#allocation2 + $0x8] sm:$0xff]
    %v140 = vld [vmem:[%s2] sm:$0x1]
    %v142 = vlaneseq
    %v143 = vshrl.u32 %v142, 7
    %v144 = vsub.s32 0, %v143
    %v145 = vrot.slane %v140, %v144
    %v147 = vadd.f32 %v138, %v145
    %v148 = vadd.f32 %v139, %v145
    %v149 = vmul.f32 %v147, 0.5
    %v150 = vmul.f32 %v148, 0.5
    %v151 = vmul.f32 %v147, 0.044715
    %v152 = vmul.f32 %v148, 0.044715
    %v153 = vmul.f32 %v151, %v147
    %v154 = vmul.f32 %v152, %v148
    %v155 = vmul.f32 %v153, %v147
    %v156 = vmul.f32 %v154, %v148
    %v157 = vadd.f32 %v147, %v155
    %v158 = vadd.f32 %v148, %v156
    %v159 = vmul.f32 %v157, 0.7978846
    %v160 = vmul.f32 %v158, 0.7978846
    %v161 = vtanh.pop %v159
    %v162 = vtanh.pop %v160
    %v163 = vadd.f32 %v161, 1.0
    %v164 = vadd.f32 %v162, 1.0
    %v165 = vmul.f32 %v149, %v163
    %v166 = vmul.f32 %v150, %v164
    %v167 = vpack.c.bf16 %v166, %v165
    %v169 = vunpack.c.l.b16 %v167
    %v170 = vunpack.c.h.b16 %v167
    %v171 = vpack.c.b16 %v169, %v169
    %v172 = vpack.c.b16 %v170, %v170
    %175 = vst [vmem:[%s3] sm:$0xf] %v171
    %176 = vst [vmem:[%s3 + $0x4] sm:$0xf] %v172
  $region21: #{morf_prediction_branch2.67} parent=0 // pred_fallthru
    _
  // Predicated region
  $region22: #{morf_prediction_branch2.67} parent=0 // pred_check
    _
  $region23: #{morf_prediction_branch2.67} parent=0 // pred_check_branch
    %178 = sbr.rel (0) target = $region25
  $region24: #{morf_prediction_branch2.67} parent=0 // pred_region
    _
  $region25: #{morf_prediction_branch2.67} parent=0 // pred_fallthru
    _
  // Predicated region
  $region26: #{morf_prediction_branch2.67} parent=0 // pred_check
    _
  $region27: #{morf_prediction_branch2.67} parent=0 // pred_check_branch
    %180 = sbr.rel (0) target = $region29
  $region28: #{morf_prediction_branch2.67} parent=0 // pred_region
    _
  $region29: #{morf_prediction_branch2.67} parent=0 // pred_fallthru
    _

// kernel: morf_prediction_branch2.69
$region0: #{morf_prediction_branch2.69}
  #allocation0 [shape = 'u32[]', space=smem, size = 0x4, offset = 0x4, fixed_abs, tag = 'smem constant byte address 0x4 - core index']
  #allocation1 [shape = 'u32[144,128]{1,0:T(1,128)}', space=vmem, size = 0x12000, scoped, tag = 'internal scratch']
  %s0 = inlined_call_operand.vmem [shape: f32[16,64], index: 0, kind: input, shape index: {}]
  %s1 = inlined_call_operand.vmem [shape: f32[1,64], index: 1, kind: input, shape index: {}]
  %s2 = inlined_call_operand.vmem [shape: f32[1,64], index: 2, kind: input, shape index: {}]
  %s3 = inlined_call_operand.hbm [shape: f32[16,64], index: 3, kind: output, shape index: {}]
  %s4 = sld [smem:[#allocation0]]
  $region22: #{morf_prediction_branch2.69} parent=0
    _
  %s6 = ssub.s32 1, %s4
  %s7 = scalar_select 0, %s6, %s4
  $region1: #{morf_prediction_branch2.69} parent=0
    #allocation2 [shape = 'u8[8192]{0}', space=vmem, size = 0x2000, scoped, tag = 'output window, operand 0, single buffered']
    #allocation3 [shape = 's32[1]{0}', space=sflag, size = 0x4, scoped, tag = 'scoped memory for morf_prediction_branch2.69']
    %8 = vsyncpa [#allocation3], 0
    // Predicated region
    $region2: #{morf_prediction_branch2.69} parent=1 // pred_check
      _
    $region3: #{morf_prediction_branch2.69} parent=1 // pred_check_branch
      %10 = sbr.rel (0) target = $region5
    $region4: #{morf_prediction_branch2.69} parent=1 // pred_region
      _
    $region5: #{morf_prediction_branch2.69} parent=1 // pred_fallthru
      _
    // Predicated region
    $region6: #{morf_prediction_branch2.69} parent=1 // pred_check
      _
    $region7: #{morf_prediction_branch2.69} parent=1 // pred_check_branch
      %12 = sbr.rel (0) target = $region9
    $region8: #{morf_prediction_branch2.69} parent=1 // pred_region
      _
    $region9: #{morf_prediction_branch2.69} parent=1 // pred_fallthru
      _
    // Predicated region
    $region10: #{morf_prediction_branch2.69} parent=1 // pred_check
      _
    $region11: #{morf_prediction_branch2.69} parent=1 // pred_check_branch
      %14 = sbr.rel (0) target = $region13
    $region12: #{morf_prediction_branch2.69} parent=1 // pred_region
      _
    $region13: #{morf_prediction_branch2.69} parent=1 // pred_fallthru
      _
    %v15 = vld [vmem:[%s0] sm:$0xff]
    %v16 = vld [vmem:[%s0 + $0x8] sm:$0xff]
    %vm17 = vcmask 523264
    %v18 = vsel %vm17, %v15, 0.0
    %19 = vadd.xlane.f32.xlu0 %v18
    %v20 = vpop.xlane.xlu0 %19
    %v21 = vsel %vm17, %v16, 0.0
    %22 = vadd.xlane.f32.xlu0 %v21
    %v23 = vpop.xlane.xlu0 %22
    %v24 = vrcp.pop 64.0
    %v25 = vmul.f32 %v20, %v24
    %v26 = vmul.f32 %v23, %v24
    %v27 = vmul.f32 %v15, %v15
    %v28 = vmul.f32 %v16, %v16
    %v29 = vsel %vm17, %v27, 0.0
    %30 = vadd.xlane.f32.xlu0 %v29
    %v31 = vpop.xlane.xlu0 %30
    %v32 = vsel %vm17, %v28, 0.0
    %33 = vadd.xlane.f32.xlu0 %v32
    %v34 = vpop.xlane.xlu0 %33
    %v35 = vmul.f32 %v31, %v24
    %v36 = vmul.f32 %v34, %v24
    %v37 = vsub.f32 %v15, %v25
    %v38 = vsub.f32 %v16, %v26
    %v39 = vmul.f32 %v25, %v25
    %v40 = vmul.f32 %v26, %v26
    %v41 = vsub.f32 %v35, %v39
    %v42 = vsub.f32 %v36, %v40
    %v43 = vadd.f32 %v41, 1e-05
    %v44 = vadd.f32 %v42, 1e-05
    %v45 = vrsqrt.pop %v43
    %v46 = vrsqrt.pop %v44
    %v47 = vmul.f32 %v37, %v45
    %v48 = vmul.f32 %v38, %v46
    %v49 = vld [vmem:[%s1] sm:$0x1]
    %v51 = vlaneseq
    %v52 = vshrl.u32 %v51, 7
    %v53 = vsub.s32 0, %v52
    %v54 = vrot.slane %v49, %v53
    %v56 = vmul.f32 %v47, %v54
    %v57 = vmul.f32 %v48, %v54
    %v58 = vld [vmem:[%s2] sm:$0x1]
    %v60 = vlaneseq
    %v61 = vshrl.u32 %v60, 7
    %v62 = vsub.s32 0, %v61
    %v63 = vrot.slane %v58, %v62
    %v65 = vadd.f32 %v56, %v63
    %v66 = vadd.f32 %v57, %v63
    %67 = vst.msk [vmem:[#allocation2] sm:$0xff] %vm17, %v65
    %68 = vst.msk [vmem:[#allocation2 + $0x8] sm:$0xff] %vm17, %v66
    // Predicated region
    $region14: #{morf_prediction_branch2.69} parent=1 // pred_check
      _
    $region15: #{morf_prediction_branch2.69} parent=1 // pred_check_branch
      %70 = sbr.rel (0) target = $region17
    $region16: #{morf_prediction_branch2.69} parent=1 // pred_region
      %s72 = ssub.s32 256, 256
      %73 = vsyncadd [#allocation3], %s72
      %s74 = sshll.u32 [#allocation2], 4
      %s75 = int_to_ptr.vmem [resolvable:$true] %s74
      %80 = dma.vmem_to_hbm [thread:$0]  %s75, 256, %s3, [#allocation3], 128, 128, 8
    $region17: #{morf_prediction_branch2.69} parent=1 // pred_fallthru
      _
    // Predicated region
    $region18: #{morf_prediction_branch2.69} parent=1 // pred_check
      _
    $region19: #{morf_prediction_branch2.69} parent=1 // pred_check_branch
      %82 = sbr.rel (0) target = $region21
    $region20: #{morf_prediction_branch2.69} parent=1 // pred_region
      %83 = dma.done [#allocation3], 256
    $region21: #{morf_prediction_branch2.69} parent=1 // pred_fallthru
      _
    %84 = vsyncpa [#allocation3], 1

</llo_original>
